<compile_context>
chip_gen: v7x
topology: tpu7x:2x2x1
jax: 0.10.0
libtpu: 0.0.40
codegen_flags: <defaults>
</compile_context>

<pallas_src>
import functools

import jax
import jax.numpy as jnp
import numpy as np
from jax.experimental import pallas as pl
from jax.experimental.pallas import tpu as pltpu


# ----------------------------------------------------------------------------
# Kernel 1: fused 3x3 conv + bias + ReLU + 1x1 heads + paired softmax.
# One (batch, row-tile) per grid step.  Cmid is chunked; each chunk is accumulated
# across the 9 conv taps in registers and folded straight into the heads matmul.
# ----------------------------------------------------------------------------
def _rpn_fused_kernel(x_ref, wc_ref, bc_ref, wh_ref, bh_ref,
                      prob_ref, bbox_ref, *, th, n_anchors, cmid_chunk):
    # x_ref:   (1, H+2, W+2, Cin)  padded NHWC image (same block for all row tiles of n)
    # wc_ref:  (9, Cin, Cmid)      conv weight, taps flattened as dy*3+dx
    # bc_ref:  (1, Cmid)           conv bias (f32)
    # wh_ref:  (Cmid, P)           concat [cls(2A) | bbox(4A) | zero-pad] 1x1 weights
    # bh_ref:  (1, P)              concat biases (f32, zero-padded)
    # prob_ref:(1, 2A, TH*W)       NCHW-flat cls prob block  (lane-dense)
    # bbox_ref:(1, 4A, TH*W)       NCHW-flat bbox pred block (lane-dense)
    h = pl.program_id(1)
    W = x_ref.shape[2] - 2
    Cin = x_ref.shape[3]
    Cmid = wc_ref.shape[2]
    P = wh_ref.shape[1]
    A = n_anchors
    thw = th * W
    row0 = pl.multiple_of(h * th, th)

    n_chunks = Cmid // cmid_chunk
    heads = jnp.zeros((thw, P), jnp.float32)          # f32 heads accumulator (register)

    for c in range(n_chunks):
        c0 = c * cmid_chunk
        # --- conv chunk: 9 shifted (thw, Cin) x (Cin, chunk) matmuls, register acc ---
        acc = jnp.zeros((thw, cmid_chunk), jnp.float32)
        for dy in range(3):
            for dx in range(3):
                # NOTE: for W % 8 != 0 this reshape costs a relayout copy; for the
                # lane-dense tiles picked by _pick_row_tile it is layout-preserving.
                patch = x_ref[0, pl.ds(row0 + dy, th), pl.ds(dx, W), :]
                w_tap = wc_ref[dy * 3 + dx, :, pl.ds(c0, cmid_chunk)]
                acc = acc + jnp.dot(patch.reshape(thw, Cin), w_tap,
                                    preferred_element_type=jnp.float32)
        conv = jnp.maximum(acc + bc_ref[0, pl.ds(c0, cmid_chunk)], 0.0)  # bias+ReLU, f32
        # --- fold this chunk's contribution into the fused heads matmul -------------
        heads = heads + jnp.dot(conv.astype(wh_ref.dtype),
                                wh_ref[pl.ds(c0, cmid_chunk), :],
                                preferred_element_type=jnp.float32)

    heads = heads + bh_ref[0, :]
    heads_t = heads.T                                  # (P, thw), channel-major

    # paired softmax: channel a vs a+A (== view(N,2,A*H,W) -> softmax(dim=1) -> view back)
    bg = heads_t[0:A, :]
    fg = heads_t[A:2 * A, :]
    m = jnp.maximum(bg, fg)
    eb = jnp.exp(bg - m)
    ef = jnp.exp(fg - m)
    # approx reciprocal runs on the EUP slot; probabilities are ~1e-3 approximate.
    inv = pl.reciprocal(eb + ef, approx=True)
    prob = jnp.concatenate([eb * inv, ef * inv], axis=0)      # one contiguous 2A store
    prob_ref[0, :, :] = prob.astype(prob_ref.dtype)
    bbox_ref[0, :, :] = heads_t[2 * A:6 * A, :].astype(bbox_ref.dtype)


# ----------------------------------------------------------------------------
# Kernel 2: smooth-L1 bbox loss (_smooth_l1_loss, dim=[1,2,3] then batch mean),
# tiled over flat (rows, lanes) chunks with a cross-step VMEM accumulator.
# ----------------------------------------------------------------------------
def _smooth_l1_kernel(pred_ref, tgt_ref, iw_ref, ow_ref, out_ref, acc_ref,
                      *, sigma2, inv_batch):
    i = pl.program_id(0)

    @pl.when(i == 0)
    def _init():
        acc_ref[...] = jnp.zeros_like(acc_ref)

    diff = pred_ref[...] - tgt_ref[...]
    in_diff = iw_ref[...] * diff
    abs_d = jnp.abs(in_diff)
    sign = (abs_d < (1.0 / sigma2)).astype(jnp.float32)
    in_loss = in_diff * in_diff * (sigma2 / 2.0) * sign \
        + (abs_d - 0.5 / sigma2) * (1.0 - sign)
    acc_ref[...] += ow_ref[...] * in_loss

    @pl.when(i == pl.num_programs(0) - 1)
    def _finalize():
        col = jnp.sum(acc_ref[...], axis=1, keepdims=True)        # (rows, 1)
        out_ref[...] = jnp.sum(col, axis=0, keepdims=True) * inv_batch


# ----------------------------------------------------------------------------
# Wrappers
# ----------------------------------------------------------------------------
def _pick_row_tile(H, W, target_min=256, target_max=1024):
    """Pick a row tile t (divisor of H).  thw = t*W must be %128==0 (lane-dense stores,
    legal BlockSpec) or t == H (full extent, always legal).  Prefer thw in
    [target_min, target_max] to keep the 256-wide v6e/v7x MXU fed."""
    dense = [t for t in range(1, H + 1) if H % t == 0 and (t * W) % 128 == 0]
    good = [t for t in dense if target_min <= t * W <= target_max]
    if good:
        return max(good)
    capped = [t for t in dense if t * W <= target_max]
    if capped:
        return max(capped)
    return H                      # full-extent fallback: always a legal block


def rpn_conv_heads(x_pad, wc, bc, wh, bh, *, th, n_anchors, cmid_chunk):
    """Fused conv3x3+ReLU+1x1 heads; returns NCHW-flat (N, C, H*W) tensors."""
    N, Hp, Wp, Cin = x_pad.shape
    H, W = Hp - 2, Wp - 2
    Cmid = wc.shape[-1]
    P = wh.shape[-1]
    ncs = 2 * n_anchors
    ncb = 4 * n_anchors
    n_h = H // th
    thw = th * W

    if Cmid % cmid_chunk != 0:
        cmid_chunk = Cmid

    kernel = functools.partial(_rpn_fused_kernel, th=th, n_anchors=n_anchors,
                               cmid_chunk=cmid_chunk)

    # scoped-VMEM budget from the actual tile footprint (double buffers counted once),
    # +25% headroom, clamped well under v7x's 64 MiB.
    isz = x_pad.dtype.itemsize
    est = (2 * Hp * Wp * Cin * isz                       # input image (per-batch block)
           + 2 * (wc.size + wh.size) * wc.dtype.itemsize # weights
           + 2 * (bc.size + bh.size) * 4                 # biases (f32)
           + 2 * (ncs + ncb) * thw * 4)                  # output blocks
    vmem_limit = int(max(16 << 20, min(int(est * 1.25), 52 << 20)))

    prob, bbox = pl.pallas_call(
        kernel,
        out_shape=(jax.ShapeDtypeStruct((N, ncs, H * W), jnp.float32),
                   jax.ShapeDtypeStruct((N, ncb, H * W), jnp.float32)),
        grid=(N, n_h),
        in_specs=[
            pl.BlockSpec((1, Hp, Wp, Cin), lambda n, h: (n, 0, 0, 0)),
            pl.BlockSpec((9, Cin, Cmid), lambda n, h: (0, 0, 0)),
            pl.BlockSpec((1, Cmid), lambda n, h: (0, 0)),
            pl.BlockSpec((Cmid, P), lambda n, h: (0, 0)),
            pl.BlockSpec((1, P), lambda n, h: (0, 0)),
        ],
        out_specs=(pl.BlockSpec((1, ncs, thw), lambda n, h: (n, 0, h)),
                   pl.BlockSpec((1, ncb, thw), lambda n, h: (n, 0, h))),
        compiler_params=pltpu.CompilerParams(
            dimension_semantics=("parallel", "parallel"),
            vmem_limit_bytes=vmem_limit),
    )(x_pad, wc, bc, wh, bh)
    return prob, bbox


def smooth_l1_loss(bbox_pred, bbox_targets, inside_w, outside_w, sigma=3.0,
                   lanes=512, rows_per_step=128):
    N = bbox_pred.shape[0]
    sigma2 = float(sigma) ** 2
    total = bbox_pred.size

    # shrink the block for tiny inputs, keep sublanes a multiple of 8
    rows_total = -(-total // lanes)
    rows_per_step = max(8, min(rows_per_step, -(-rows_total // 8) * 8))
    chunk = lanes * rows_per_step
    n_steps = -(-total // chunk)
    padded_rows = n_steps * rows_per_step
    padded = padded_rows * lanes

    def prep(a):
        a = a.reshape(-1).astype(jnp.float32)
        if padded != total:
            a = jnp.pad(a, (0, padded - total))   # zero pad -> zero loss contribution
        return a.reshape(padded_rows, lanes)

    kernel = functools.partial(_smooth_l1_kernel, sigma2=sigma2, inv_batch=1.0 / N)
    out = pl.pallas_call(
        kernel,
        out_shape=jax.ShapeDtypeStruct((1, 1), jnp.float32),
        grid=(n_steps,),
        in_specs=[pl.BlockSpec((rows_per_step, lanes), lambda i: (i, 0))] * 4,
        out_specs=pl.BlockSpec((1, 1), lambda i: (0, 0)),
        scratch_shapes=[pltpu.VMEM((rows_per_step, lanes), jnp.float32)],
        compiler_params=pltpu.CompilerParams(dimension_semantics=("arbitrary",)),
    )(prep(bbox_pred), prep(bbox_targets), prep(inside_w), prep(outside_w))
    return out[0, 0]


def init_rpn_params(key, din, mid=512, n_anchors=9, scale=0.05):
    # Shapes mirror the PyTorch module: Conv2d(din,512,3), Conv2d(512,2A,1), Conv2d(512,4A,1)
    k = jax.random.split(key, 6)
    return dict(
        w_conv=jax.random.normal(k[0], (3, 3, din, mid), jnp.float32) * scale,
        b_conv=jax.random.normal(k[1], (mid,), jnp.float32) * scale,
        w_cls=jax.random.normal(k[2], (mid, 2 * n_anchors), jnp.float32) * scale,
        b_cls=jax.random.normal(k[3], (2 * n_anchors,), jnp.float32) * scale,
        w_bbox=jax.random.normal(k[4], (mid, 4 * n_anchors), jnp.float32) * scale,
        b_bbox=jax.random.normal(k[5], (4 * n_anchors,), jnp.float32) * scale,
    )


def rpn_forward(base_feat_nchw, params, *, row_tile=None, use_bf16=True,
                cmid_chunk=128):
    """Eval-mode _RPN.forward.  base_feat is NCHW (PyTorch convention).

    use_bf16=True feeds bf16 operands to both matmuls (f32 accumulation & softmax math).
    cmid_chunk: 128 is safe on all generations; 256 is a good choice on v6e/v7x.
    """
    N, Cin, H, W = base_feat_nchw.shape
    Cmid = params["w_conv"].shape[-1]
    A = params["w_cls"].shape[-1] // 2

    if (row_tile is None or H % row_tile != 0
            or ((row_tile * W) % 128 != 0 and row_tile != H)):
        row_tile = _pick_row_tile(H, W)

    cdt = jnp.bfloat16 if use_bf16 else jnp.float32

    # NCHW -> NHWC (channels on the lane axis) + pad=1 halo for the 3x3 conv, fused into
    # one XLA copy.  TODO(synk): fold this transpose/pad into the kernel to save the
    # extra HBM pass of the input activation.
    x = jnp.transpose(base_feat_nchw, (0, 2, 3, 1))
    x_pad = jnp.pad(x, ((0, 0), (1, 1), (1, 1), (0, 0))).astype(cdt)

    # fused head weights [cls | bbox], zero-padded to a multiple of 8 output channels
    # (aligned transpose inside the kernel; padded rows are never read back).
    nh = 6 * A
    P = -(-nh // 8) * 8
    wc = params["w_conv"].reshape(9, Cin, Cmid).astype(cdt)
    bc = params["b_conv"].reshape(1, Cmid).astype(jnp.float32)
    wh = jnp.concatenate([params["w_cls"], params["w_bbox"]], axis=1)
    wh = jnp.pad(wh, ((0, 0), (0, P - nh))).astype(cdt)
    bh = jnp.concatenate([params["b_cls"], params["b_bbox"]])
    bh = jnp.pad(bh, (0, P - nh)).reshape(1, P).astype(jnp.float32)

    prob_flat, bbox_flat = rpn_conv_heads(x_pad, wc, bc, wh, bh,
                                          th=row_tile, n_anchors=A,
                                          cmid_chunk=cmid_chunk)
    # outputs are already channel-major; this reshape is free (no transpose).
    rpn_cls_prob = prob_flat.reshape(N, 2 * A, H, W)
    rpn_bbox_pred = bbox_flat.reshape(N, 4 * A, H, W)

    # TODO(synk): rois = _ProposalLayer(rpn_cls_prob, rpn_bbox_pred, im_info) and the
    # training-time _AnchorTargetLayer / cross-entropy cls loss are not implemented.
    return rpn_cls_prob, rpn_bbox_pred, jnp.float32(0.0), jnp.float32(0.0)


# ----------------------------------------------------------------------------
# Pure-JAX references (correctness check only)
# ----------------------------------------------------------------------------
def _ref_forward(x_nchw, params):
    x = jnp.transpose(x_nchw, (0, 2, 3, 1))
    conv1 = jax.lax.conv_general_dilated(
        x, params["w_conv"], (1, 1), "SAME",
        dimension_numbers=("NHWC", "HWIO", "NHWC")) + params["b_conv"]
    conv1 = jnp.maximum(conv1, 0.0)
    score = jnp.einsum("nhwc,ck->nhwk", conv1, params["w_cls"]) + params["b_cls"]
    A = score.shape[-1] // 2
    bg, fg = score[..., :A], score[..., A:]
    m = jnp.maximum(bg, fg)
    eb, ef = jnp.exp(bg - m), jnp.exp(fg - m)
    prob = jnp.concatenate([eb / (eb + ef), ef / (eb + ef)], axis=-1)
    bbox = jnp.einsum("nhwc,ck->nhwk", conv1, params["w_bbox"]) + params["b_bbox"]
    return jnp.transpose(prob, (0, 3, 1, 2)), jnp.transpose(bbox, (0, 3, 1, 2))


def _ref_smooth_l1(pred, tgt, iw, ow, sigma=3.0):
    sigma2 = sigma ** 2
    d = iw * (pred - tgt)
    ad = jnp.abs(d)
    sign = (ad < 1.0 / sigma2).astype(jnp.float32)
    loss = d * d * (sigma2 / 2.0) * sign + (ad - 0.5 / sigma2) * (1.0 - sign)
    return jnp.sum(ow * loss, axis=(1, 2, 3)).mean()


if __name__ == "__main__":
    key = jax.random.PRNGKey(0)
    k_feat, k_par, k_tgt, k_iw, k_ow = jax.random.split(key, 5)

    # small shapes: batch=2, din=8 input channels, 16x16 feature map; the module's
    # internal widths (512 mid, 2*9 cls, 4*9 bbox channels) are kept as-is.
    N, din, H, W = 2, 8, 16, 16
    base_feat = jax.random.normal(k_feat, (N, din, H, W), jnp.float32)
    params = init_rpn_params(k_par, din)

    ref_prob, ref_bbox = _ref_forward(base_feat, params)

    # 1) f32 path with an explicit small row tile (exercises multi-row-tile grid,
    #    grid=(2,2), thw=128) at tight tolerance.
    cls32, bbox32, _, _ = rpn_forward(base_feat, params, row_tile=8, use_bf16=False)
    jax.block_until_ready((cls32, bbox32))
    np.testing.assert_allclose(np.asarray(cls32), np.asarray(ref_prob),
                               rtol=2e-3, atol=2e-3)
    np.testing.assert_allclose(np.asarray(bbox32), np.asarray(ref_bbox),
                               rtol=2e-3, atol=2e-3)

    # 2) default perf path: bf16 matmul operands, auto row tile (thw=256, grid=(2,1)).
    cls_prob, bbox_pred, loss_cls, loss_bbox = rpn_forward(base_feat, params)
    jax.block_until_ready((cls_prob, bbox_pred, loss_cls, loss_bbox))
    np.testing.assert_allclose(np.asarray(cls_prob), np.asarray(ref_prob),
                               rtol=2e-2, atol=2e-2)
    np.testing.assert_allclose(np.asarray(bbox_pred), np.asarray(ref_bbox),
                               rtol=2e-2, atol=2e-2)

    # 3) smooth-L1 loss kernel with synthetic anchor targets
    #    (real targets come from _AnchorTargetLayer, which is out of scope).
    tgt = jax.random.normal(k_tgt, bbox_pred.shape, jnp.float32)
    iw = (jax.random.uniform(k_iw, bbox_pred.shape) > 0.5).astype(jnp.float32)
    ow = jax.random.uniform(k_ow, bbox_pred.shape, jnp.float32)
    loss = smooth_l1_loss(bbox_pred, tgt, iw, ow, sigma=3.0)
    jax.block_until_ready(loss)
    ref_loss = _ref_smooth_l1(bbox_pred, tgt, iw, ow, sigma=3.0)
    np.testing.assert_allclose(float(loss), float(ref_loss), rtol=2e-3, atol=2e-3)

    print("KERNEL_OK")
</pallas_src>

<mosaic_0001>
module attributes {stable_mosaic.version = 11 : i64} {
  func.func @_rpn_fused_kernel(%arg0: i32, %arg1: i32, %arg2: memref<1x18x18x8xf32, #tpu.memory_space<vmem>>, %arg3: memref<9x8x512xf32, #tpu.memory_space<vmem>>, %arg4: memref<1x512xf32, #tpu.memory_space<vmem>>, %arg5: memref<512x56xf32, #tpu.memory_space<vmem>>, %arg6: memref<1x56xf32, #tpu.memory_space<vmem>>, %arg7: memref<1x18x128xf32, #tpu.memory_space<vmem>>, %arg8: memref<1x36x128xf32, #tpu.memory_space<vmem>>) attributes {dimension_semantics = [#tpu.dimension_semantics<parallel>, #tpu.dimension_semantics<parallel>], iteration_bounds = array<i64: 2, 2>, scalar_prefetch = 0 : i64, scratch_operands = 0 : i64, tpu.core_type = #tpu.core_type<tc>, window_params = [{transform_indices = @transform_0, window_bounds = array<i64: 1, 18, 18, 8>}, {pipeline_mode = #tpu.pipeline_mode<synchronous>, transform_indices = @transform_1, window_bounds = array<i64: 9, 8, 512>}, {pipeline_mode = #tpu.pipeline_mode<synchronous>, transform_indices = @transform_2, window_bounds = array<i64: 1, 512>}, {pipeline_mode = #tpu.pipeline_mode<synchronous>, transform_indices = @transform_3, window_bounds = array<i64: 512, 56>}, {pipeline_mode = #tpu.pipeline_mode<synchronous>, transform_indices = @transform_4, window_bounds = array<i64: 1, 56>}, {transform_indices = @transform_5, window_bounds = array<i64: 1, 18, 128>}, {transform_indices = @transform_6, window_bounds = array<i64: 1, 36, 128>}]} {
    %c8_i32 = arith.constant 8 : i32
    %0 = arith.muli %arg1, %c8_i32 : i32
    %1 = tpu.assume_multiple %0, 8 : i32
    %cst = arith.constant 0.000000e+00 : f32
    %2 = vector.broadcast %cst : f32 to vector<128x56xf32>
    %cst_0 = arith.constant 0.000000e+00 : f32
    %3 = vector.broadcast %cst_0 : f32 to vector<128x128xf32>
    %c0_i32 = arith.constant 0 : i32
    %4 = arith.addi %1, %c0_i32 : i32
    %c0 = arith.constant 0 : index
    %5 = arith.index_cast %4 : i32 to index
    %c0_1 = arith.constant 0 : index
    %c0_2 = arith.constant 0 : index
    %6 = vector.load %arg2[%c0, %5, %c0_1, %c0_2] : memref<1x18x18x8xf32, #tpu.memory_space<vmem>>, vector<1x8x16x8xf32>
    %7 = vector.shape_cast %6 : vector<1x8x16x8xf32> to vector<8x16x8xf32>
    %c0_3 = arith.constant 0 : index
    %c0_4 = arith.constant 0 : index
    %c0_5 = arith.constant 0 : index
    %8 = vector.load %arg3[%c0_3, %c0_4, %c0_5] : memref<9x8x512xf32, #tpu.memory_space<vmem>>, vector<1x8x128xf32>
    %9 = vector.shape_cast %8 : vector<1x8x128xf32> to vector<8x128xf32>
    %10 = vector.shape_cast %7 : vector<8x16x8xf32> to vector<128x8xf32>
    %cst_6 = arith.constant dense<0.000000e+00> : vector<128x128xf32>
    %11 = tpu.matmul %10, %9, %cst_6 {dimension_numbers = #tpu.dot_dimension_numbers<[1], [0], [0], [1], [0, 0, 1, 1], [], []>} : vector<128x8xf32>, vector<8x128xf32>, vector<128x128xf32> -> vector<128x128xf32>
    %12 = arith.addf %3, %11 : vector<128x128xf32>
    %c0_i32_7 = arith.constant 0 : i32
    %13 = arith.addi %1, %c0_i32_7 : i32
    %c0_8 = arith.constant 0 : index
    %14 = arith.index_cast %13 : i32 to index
    %c1 = arith.constant 1 : index
    %c0_9 = arith.constant 0 : index
    %15 = vector.load %arg2[%c0_8, %14, %c1, %c0_9] : memref<1x18x18x8xf32, #tpu.memory_space<vmem>>, vector<1x8x16x8xf32>
    %16 = vector.shape_cast %15 : vector<1x8x16x8xf32> to vector<8x16x8xf32>
    %c1_10 = arith.constant 1 : index
    %c0_11 = arith.constant 0 : index
    %c0_12 = arith.constant 0 : index
    %17 = vector.load %arg3[%c1_10, %c0_11, %c0_12] : memref<9x8x512xf32, #tpu.memory_space<vmem>>, vector<1x8x128xf32>
    %18 = vector.shape_cast %17 : vector<1x8x128xf32> to vector<8x128xf32>
    %19 = vector.shape_cast %16 : vector<8x16x8xf32> to vector<128x8xf32>
    %cst_13 = arith.constant dense<0.000000e+00> : vector<128x128xf32>
    %20 = tpu.matmul %19, %18, %cst_13 {dimension_numbers = #tpu.dot_dimension_numbers<[1], [0], [0], [1], [0, 0, 1, 1], [], []>} : vector<128x8xf32>, vector<8x128xf32>, vector<128x128xf32> -> vector<128x128xf32>
    %21 = arith.addf %12, %20 : vector<128x128xf32>
    %c0_i32_14 = arith.constant 0 : i32
    %22 = arith.addi %1, %c0_i32_14 : i32
    %c0_15 = arith.constant 0 : index
    %23 = arith.index_cast %22 : i32 to index
    %c2 = arith.constant 2 : index
    %c0_16 = arith.constant 0 : index
    %24 = vector.load %arg2[%c0_15, %23, %c2, %c0_16] : memref<1x18x18x8xf32, #tpu.memory_space<vmem>>, vector<1x8x16x8xf32>
    %25 = vector.shape_cast %24 : vector<1x8x16x8xf32> to vector<8x16x8xf32>
    %c2_17 = arith.constant 2 : index
    %c0_18 = arith.constant 0 : index
    %c0_19 = arith.constant 0 : index
    %26 = vector.load %arg3[%c2_17, %c0_18, %c0_19] : memref<9x8x512xf32, #tpu.memory_space<vmem>>, vector<1x8x128xf32>
    %27 = vector.shape_cast %26 : vector<1x8x128xf32> to vector<8x128xf32>
    %28 = vector.shape_cast %25 : vector<8x16x8xf32> to vector<128x8xf32>
    %cst_20 = arith.constant dense<0.000000e+00> : vector<128x128xf32>
    %29 = tpu.matmul %28, %27, %cst_20 {dimension_numbers = #tpu.dot_dimension_numbers<[1], [0], [0], [1], [0, 0, 1, 1], [], []>} : vector<128x8xf32>, vector<8x128xf32>, vector<128x128xf32> -> vector<128x128xf32>
    %30 = arith.addf %21, %29 : vector<128x128xf32>
    %c1_i32 = arith.constant 1 : i32
    %31 = arith.addi %1, %c1_i32 : i32
    %c0_21 = arith.constant 0 : index
    %32 = arith.index_cast %31 : i32 to index
    %c0_22 = arith.constant 0 : index
    %c0_23 = arith.constant 0 : index
    %33 = vector.load %arg2[%c0_21, %32, %c0_22, %c0_23] : memref<1x18x18x8xf32, #tpu.memory_space<vmem>>, vector<1x8x16x8xf32>
    %34 = vector.shape_cast %33 : vector<1x8x16x8xf32> to vector<8x16x8xf32>
    %c3 = arith.constant 3 : index
    %c0_24 = arith.constant 0 : index
    %c0_25 = arith.constant 0 : index
    %35 = vector.load %arg3[%c3, %c0_24, %c0_25] : memref<9x8x512xf32, #tpu.memory_space<vmem>>, vector<1x8x128xf32>
    %36 = vector.shape_cast %35 : vector<1x8x128xf32> to vector<8x128xf32>
    %37 = vector.shape_cast %34 : vector<8x16x8xf32> to vector<128x8xf32>
    %cst_26 = arith.constant dense<0.000000e+00> : vector<128x128xf32>
    %38 = tpu.matmul %37, %36, %cst_26 {dimension_numbers = #tpu.dot_dimension_numbers<[1], [0], [0], [1], [0, 0, 1, 1], [], []>} : vector<128x8xf32>, vector<8x128xf32>, vector<128x128xf32> -> vector<128x128xf32>
    %39 = arith.addf %30, %38 : vector<128x128xf32>
    %c1_i32_27 = arith.constant 1 : i32
    %40 = arith.addi %1, %c1_i32_27 : i32
    %c0_28 = arith.constant 0 : index
    %41 = arith.index_cast %40 : i32 to index
    %c1_29 = arith.constant 1 : index
    %c0_30 = arith.constant 0 : index
    %42 = vector.load %arg2[%c0_28, %41, %c1_29, %c0_30] : memref<1x18x18x8xf32, #tpu.memory_space<vmem>>, vector<1x8x16x8xf32>
    %43 = vector.shape_cast %42 : vector<1x8x16x8xf32> to vector<8x16x8xf32>
    %c4 = arith.constant 4 : index
    %c0_31 = arith.constant 0 : index
    %c0_32 = arith.constant 0 : index
    %44 = vector.load %arg3[%c4, %c0_31, %c0_32] : memref<9x8x512xf32, #tpu.memory_space<vmem>>, vector<1x8x128xf32>
    %45 = vector.shape_cast %44 : vector<1x8x128xf32> to vector<8x128xf32>
    %46 = vector.shape_cast %43 : vector<8x16x8xf32> to vector<128x8xf32>
    %cst_33 = arith.constant dense<0.000000e+00> : vector<128x128xf32>
    %47 = tpu.matmul %46, %45, %cst_33 {dimension_numbers = #tpu.dot_dimension_numbers<[1], [0], [0], [1], [0, 0, 1, 1], [], []>} : vector<128x8xf32>, vector<8x128xf32>, vector<128x128xf32> -> vector<128x128xf32>
    %48 = arith.addf %39, %47 : vector<128x128xf32>
    %c1_i32_34 = arith.constant 1 : i32
    %49 = arith.addi %1, %c1_i32_34 : i32
    %c0_35 = arith.constant 0 : index
    %50 = arith.index_cast %49 : i32 to index
    %c2_36 = arith.constant 2 : index
    %c0_37 = arith.constant 0 : index
    %51 = vector.load %arg2[%c0_35, %50, %c2_36, %c0_37] : memref<1x18x18x8xf32, #tpu.memory_space<vmem>>, vector<1x8x16x8xf32>
    %52 = vector.shape_cast %51 : vector<1x8x16x8xf32> to vector<8x16x8xf32>
    %c5 = arith.constant 5 : index
    %c0_38 = arith.constant 0 : index
    %c0_39 = arith.constant 0 : index
    %53 = vector.load %arg3[%c5, %c0_38, %c0_39] : memref<9x8x512xf32, #tpu.memory_space<vmem>>, vector<1x8x128xf32>
    %54 = vector.shape_cast %53 : vector<1x8x128xf32> to vector<8x128xf32>
    %55 = vector.shape_cast %52 : vector<8x16x8xf32> to vector<128x8xf32>
    %cst_40 = arith.constant dense<0.000000e+00> : vector<128x128xf32>
    %56 = tpu.matmul %55, %54, %cst_40 {dimension_numbers = #tpu.dot_dimension_numbers<[1], [0], [0], [1], [0, 0, 1, 1], [], []>} : vector<128x8xf32>, vector<8x128xf32>, vector<128x128xf32> -> vector<128x128xf32>
    %57 = arith.addf %48, %56 : vector<128x128xf32>
    %c2_i32 = arith.constant 2 : i32
    %58 = arith.addi %1, %c2_i32 : i32
    %c0_41 = arith.constant 0 : index
    %59 = arith.index_cast %58 : i32 to index
    %c0_42 = arith.constant 0 : index
    %c0_43 = arith.constant 0 : index
    %60 = vector.load %arg2[%c0_41, %59, %c0_42, %c0_43] : memref<1x18x18x8xf32, #tpu.memory_space<vmem>>, vector<1x8x16x8xf32>
    %61 = vector.shape_cast %60 : vector<1x8x16x8xf32> to vector<8x16x8xf32>
    %c6 = arith.constant 6 : index
    %c0_44 = arith.constant 0 : index
    %c0_45 = arith.constant 0 : index
    %62 = vector.load %arg3[%c6, %c0_44, %c0_45] : memref<9x8x512xf32, #tpu.memory_space<vmem>>, vector<1x8x128xf32>
    %63 = vector.shape_cast %62 : vector<1x8x128xf32> to vector<8x128xf32>
    %64 = vector.shape_cast %61 : vector<8x16x8xf32> to vector<128x8xf32>
    %cst_46 = arith.constant dense<0.000000e+00> : vector<128x128xf32>
    %65 = tpu.matmul %64, %63, %cst_46 {dimension_numbers = #tpu.dot_dimension_numbers<[1], [0], [0], [1], [0, 0, 1, 1], [], []>} : vector<128x8xf32>, vector<8x128xf32>, vector<128x128xf32> -> vector<128x128xf32>
    %66 = arith.addf %57, %65 : vector<128x128xf32>
    %c2_i32_47 = arith.constant 2 : i32
    %67 = arith.addi %1, %c2_i32_47 : i32
    %c0_48 = arith.constant 0 : index
    %68 = arith.index_cast %67 : i32 to index
    %c1_49 = arith.constant 1 : index
    %c0_50 = arith.constant 0 : index
    %69 = vector.load %arg2[%c0_48, %68, %c1_49, %c0_50] : memref<1x18x18x8xf32, #tpu.memory_space<vmem>>, vector<1x8x16x8xf32>
    %70 = vector.shape_cast %69 : vector<1x8x16x8xf32> to vector<8x16x8xf32>
    %c7 = arith.constant 7 : index
    %c0_51 = arith.constant 0 : index
    %c0_52 = arith.constant 0 : index
    %71 = vector.load %arg3[%c7, %c0_51, %c0_52] : memref<9x8x512xf32, #tpu.memory_space<vmem>>, vector<1x8x128xf32>
    %72 = vector.shape_cast %71 : vector<1x8x128xf32> to vector<8x128xf32>
    %73 = vector.shape_cast %70 : vector<8x16x8xf32> to vector<128x8xf32>
    %cst_53 = arith.constant dense<0.000000e+00> : vector<128x128xf32>
    %74 = tpu.matmul %73, %72, %cst_53 {dimension_numbers = #tpu.dot_dimension_numbers<[1], [0], [0], [1], [0, 0, 1, 1], [], []>} : vector<128x8xf32>, vector<8x128xf32>, vector<128x128xf32> -> vector<128x128xf32>
    %75 = arith.addf %66, %74 : vector<128x128xf32>
    %c2_i32_54 = arith.constant 2 : i32
    %76 = arith.addi %1, %c2_i32_54 : i32
    %c0_55 = arith.constant 0 : index
    %77 = arith.index_cast %76 : i32 to index
    %c2_56 = arith.constant 2 : index
    %c0_57 = arith.constant 0 : index
    %78 = vector.load %arg2[%c0_55, %77, %c2_56, %c0_57] : memref<1x18x18x8xf32, #tpu.memory_space<vmem>>, vector<1x8x16x8xf32>
    %79 = vector.shape_cast %78 : vector<1x8x16x8xf32> to vector<8x16x8xf32>
    %c8 = arith.constant 8 : index
    %c0_58 = arith.constant 0 : index
    %c0_59 = arith.constant 0 : index
    %80 = vector.load %arg3[%c8, %c0_58, %c0_59] : memref<9x8x512xf32, #tpu.memory_space<vmem>>, vector<1x8x128xf32>
    %81 = vector.shape_cast %80 : vector<1x8x128xf32> to vector<8x128xf32>
    %82 = vector.shape_cast %79 : vector<8x16x8xf32> to vector<128x8xf32>
    %cst_60 = arith.constant dense<0.000000e+00> : vector<128x128xf32>
    %83 = tpu.matmul %82, %81, %cst_60 {dimension_numbers = #tpu.dot_dimension_numbers<[1], [0], [0], [1], [0, 0, 1, 1], [], []>} : vector<128x8xf32>, vector<8x128xf32>, vector<128x128xf32> -> vector<128x128xf32>
    %84 = arith.addf %75, %83 : vector<128x128xf32>
    %c0_61 = arith.constant 0 : index
    %c0_62 = arith.constant 0 : index
    %85 = vector.load %arg4[%c0_61, %c0_62] : memref<1x512xf32, #tpu.memory_space<vmem>>, vector<1x128xf32>
    %86 = vector.shape_cast %85 : vector<1x128xf32> to vector<128xf32>
    %87 = vector.shape_cast %86 : vector<128xf32> to vector<1x128xf32>
    %88 = vector.broadcast %87 : vector<1x128xf32> to vector<128x128xf32>
    %89 = arith.addf %84, %88 : vector<128x128xf32>
    %cst_63 = arith.constant 0.000000e+00 : f32
    %90 = vector.broadcast %cst_63 : f32 to vector<128x128xf32>
    %91 = arith.maximumf %89, %90 : vector<128x128xf32>
    %c0_64 = arith.constant 0 : index
    %c0_65 = arith.constant 0 : index
    %92 = vector.load %arg5[%c0_64, %c0_65] : memref<512x56xf32, #tpu.memory_space<vmem>>, vector<128x56xf32>
    %cst_66 = arith.constant dense<0.000000e+00> : vector<128x56xf32>
    %93 = tpu.matmul %91, %92, %cst_66 {dimension_numbers = #tpu.dot_dimension_numbers<[1], [0], [0], [1], [0, 0, 1, 1], [], []>} : vector<128x128xf32>, vector<128x56xf32>, vector<128x56xf32> -> vector<128x56xf32>
    %94 = arith.addf %2, %93 : vector<128x56xf32>
    %cst_67 = arith.constant 0.000000e+00 : f32
    %95 = vector.broadcast %cst_67 : f32 to vector<128x128xf32>
    %c0_i32_68 = arith.constant 0 : i32
    %96 = arith.addi %1, %c0_i32_68 : i32
    %c0_69 = arith.constant 0 : index
    %97 = arith.index_cast %96 : i32 to index
    %c0_70 = arith.constant 0 : index
    %c0_71 = arith.constant 0 : index
    %98 = vector.load %arg2[%c0_69, %97, %c0_70, %c0_71] : memref<1x18x18x8xf32, #tpu.memory_space<vmem>>, vector<1x8x16x8xf32>
    %99 = vector.shape_cast %98 : vector<1x8x16x8xf32> to vector<8x16x8xf32>
    %c0_72 = arith.constant 0 : index
    %c0_73 = arith.constant 0 : index
    %c128 = arith.constant 128 : index
    %100 = vector.load %arg3[%c0_72, %c0_73, %c128] : memref<9x8x512xf32, #tpu.memory_space<vmem>>, vector<1x8x128xf32>
    %101 = vector.shape_cast %100 : vector<1x8x128xf32> to vector<8x128xf32>
    %102 = vector.shape_cast %99 : vector<8x16x8xf32> to vector<128x8xf32>
    %cst_74 = arith.constant dense<0.000000e+00> : vector<128x128xf32>
    %103 = tpu.matmul %102, %101, %cst_74 {dimension_numbers = #tpu.dot_dimension_numbers<[1], [0], [0], [1], [0, 0, 1, 1], [], []>} : vector<128x8xf32>, vector<8x128xf32>, vector<128x128xf32> -> vector<128x128xf32>
    %104 = arith.addf %95, %103 : vector<128x128xf32>
    %c0_i32_75 = arith.constant 0 : i32
    %105 = arith.addi %1, %c0_i32_75 : i32
    %c0_76 = arith.constant 0 : index
    %106 = arith.index_cast %105 : i32 to index
    %c1_77 = arith.constant 1 : index
    %c0_78 = arith.constant 0 : index
    %107 = vector.load %arg2[%c0_76, %106, %c1_77, %c0_78] : memref<1x18x18x8xf32, #tpu.memory_space<vmem>>, vector<1x8x16x8xf32>
    %108 = vector.shape_cast %107 : vector<1x8x16x8xf32> to vector<8x16x8xf32>
    %c1_79 = arith.constant 1 : index
    %c0_80 = arith.constant 0 : index
    %c128_81 = arith.constant 128 : index
    %109 = vector.load %arg3[%c1_79, %c0_80, %c128_81] : memref<9x8x512xf32, #tpu.memory_space<vmem>>, vector<1x8x128xf32>
    %110 = vector.shape_cast %109 : vector<1x8x128xf32> to vector<8x128xf32>
    %111 = vector.shape_cast %108 : vector<8x16x8xf32> to vector<128x8xf32>
    %cst_82 = arith.constant dense<0.000000e+00> : vector<128x128xf32>
    %112 = tpu.matmul %111, %110, %cst_82 {dimension_numbers = #tpu.dot_dimension_numbers<[1], [0], [0], [1], [0, 0, 1, 1], [], []>} : vector<128x8xf32>, vector<8x128xf32>, vector<128x128xf32> -> vector<128x128xf32>
    %113 = arith.addf %104, %112 : vector<128x128xf32>
    %c0_i32_83 = arith.constant 0 : i32
    %114 = arith.addi %1, %c0_i32_83 : i32
    %c0_84 = arith.constant 0 : index
    %115 = arith.index_cast %114 : i32 to index
    %c2_85 = arith.constant 2 : index
    %c0_86 = arith.constant 0 : index
    %116 = vector.load %arg2[%c0_84, %115, %c2_85, %c0_86] : memref<1x18x18x8xf32, #tpu.memory_space<vmem>>, vector<1x8x16x8xf32>
    %117 = vector.shape_cast %116 : vector<1x8x16x8xf32> to vector<8x16x8xf32>
    %c2_87 = arith.constant 2 : index
    %c0_88 = arith.constant 0 : index
    %c128_89 = arith.constant 128 : index
    %118 = vector.load %arg3[%c2_87, %c0_88, %c128_89] : memref<9x8x512xf32, #tpu.memory_space<vmem>>, vector<1x8x128xf32>
    %119 = vector.shape_cast %118 : vector<1x8x128xf32> to vector<8x128xf32>
    %120 = vector.shape_cast %117 : vector<8x16x8xf32> to vector<128x8xf32>
    %cst_90 = arith.constant dense<0.000000e+00> : vector<128x128xf32>
    %121 = tpu.matmul %120, %119, %cst_90 {dimension_numbers = #tpu.dot_dimension_numbers<[1], [0], [0], [1], [0, 0, 1, 1], [], []>} : vector<128x8xf32>, vector<8x128xf32>, vector<128x128xf32> -> vector<128x128xf32>
    %122 = arith.addf %113, %121 : vector<128x128xf32>
    %c1_i32_91 = arith.constant 1 : i32
    %123 = arith.addi %1, %c1_i32_91 : i32
    %c0_92 = arith.constant 0 : index
    %124 = arith.index_cast %123 : i32 to index
    %c0_93 = arith.constant 0 : index
    %c0_94 = arith.constant 0 : index
    %125 = vector.load %arg2[%c0_92, %124, %c0_93, %c0_94] : memref<1x18x18x8xf32, #tpu.memory_space<vmem>>, vector<1x8x16x8xf32>
    %126 = vector.shape_cast %125 : vector<1x8x16x8xf32> to vector<8x16x8xf32>
    %c3_95 = arith.constant 3 : index
    %c0_96 = arith.constant 0 : index
    %c128_97 = arith.constant 128 : index
    %127 = vector.load %arg3[%c3_95, %c0_96, %c128_97] : memref<9x8x512xf32, #tpu.memory_space<vmem>>, vector<1x8x128xf32>
    %128 = vector.shape_cast %127 : vector<1x8x128xf32> to vector<8x128xf32>
    %129 = vector.shape_cast %126 : vector<8x16x8xf32> to vector<128x8xf32>
    %cst_98 = arith.constant dense<0.000000e+00> : vector<128x128xf32>
    %130 = tpu.matmul %129, %128, %cst_98 {dimension_numbers = #tpu.dot_dimension_numbers<[1], [0], [0], [1], [0, 0, 1, 1], [], []>} : vector<128x8xf32>, vector<8x128xf32>, vector<128x128xf32> -> vector<128x128xf32>
    %131 = arith.addf %122, %130 : vector<128x128xf32>
    %c1_i32_99 = arith.constant 1 : i32
    %132 = arith.addi %1, %c1_i32_99 : i32
    %c0_100 = arith.constant 0 : index
    %133 = arith.index_cast %132 : i32 to index
    %c1_101 = arith.constant 1 : index
    %c0_102 = arith.constant 0 : index
    %134 = vector.load %arg2[%c0_100, %133, %c1_101, %c0_102] : memref<1x18x18x8xf32, #tpu.memory_space<vmem>>, vector<1x8x16x8xf32>
    %135 = vector.shape_cast %134 : vector<1x8x16x8xf32> to vector<8x16x8xf32>
    %c4_103 = arith.constant 4 : index
    %c0_104 = arith.constant 0 : index
    %c128_105 = arith.constant 128 : index
    %136 = vector.load %arg3[%c4_103, %c0_104, %c128_105] : memref<9x8x512xf32, #tpu.memory_space<vmem>>, vector<1x8x128xf32>
    %137 = vector.shape_cast %136 : vector<1x8x128xf32> to vector<8x128xf32>
    %138 = vector.shape_cast %135 : vector<8x16x8xf32> to vector<128x8xf32>
    %cst_106 = arith.constant dense<0.000000e+00> : vector<128x128xf32>
    %139 = tpu.matmul %138, %137, %cst_106 {dimension_numbers = #tpu.dot_dimension_numbers<[1], [0], [0], [1], [0, 0, 1, 1], [], []>} : vector<128x8xf32>, vector<8x128xf32>, vector<128x128xf32> -> vector<128x128xf32>
    %140 = arith.addf %131, %139 : vector<128x128xf32>
    %c1_i32_107 = arith.constant 1 : i32
    %141 = arith.addi %1, %c1_i32_107 : i32
    %c0_108 = arith.constant 0 : index
    %142 = arith.index_cast %141 : i32 to index
    %c2_109 = arith.constant 2 : index
    %c0_110 = arith.constant 0 : index
    %143 = vector.load %arg2[%c0_108, %142, %c2_109, %c0_110] : memref<1x18x18x8xf32, #tpu.memory_space<vmem>>, vector<1x8x16x8xf32>
    %144 = vector.shape_cast %143 : vector<1x8x16x8xf32> to vector<8x16x8xf32>
    %c5_111 = arith.constant 5 : index
    %c0_112 = arith.constant 0 : index
    %c128_113 = arith.constant 128 : index
    %145 = vector.load %arg3[%c5_111, %c0_112, %c128_113] : memref<9x8x512xf32, #tpu.memory_space<vmem>>, vector<1x8x128xf32>
    %146 = vector.shape_cast %145 : vector<1x8x128xf32> to vector<8x128xf32>
    %147 = vector.shape_cast %144 : vector<8x16x8xf32> to vector<128x8xf32>
    %cst_114 = arith.constant dense<0.000000e+00> : vector<128x128xf32>
    %148 = tpu.matmul %147, %146, %cst_114 {dimension_numbers = #tpu.dot_dimension_numbers<[1], [0], [0], [1], [0, 0, 1, 1], [], []>} : vector<128x8xf32>, vector<8x128xf32>, vector<128x128xf32> -> vector<128x128xf32>
    %149 = arith.addf %140, %148 : vector<128x128xf32>
    %c2_i32_115 = arith.constant 2 : i32
    %150 = arith.addi %1, %c2_i32_115 : i32
    %c0_116 = arith.constant 0 : index
    %151 = arith.index_cast %150 : i32 to index
    %c0_117 = arith.constant 0 : index
    %c0_118 = arith.constant 0 : index
    %152 = vector.load %arg2[%c0_116, %151, %c0_117, %c0_118] : memref<1x18x18x8xf32, #tpu.memory_space<vmem>>, vector<1x8x16x8xf32>
    %153 = vector.shape_cast %152 : vector<1x8x16x8xf32> to vector<8x16x8xf32>
    %c6_119 = arith.constant 6 : index
    %c0_120 = arith.constant 0 : index
    %c128_121 = arith.constant 128 : index
    %154 = vector.load %arg3[%c6_119, %c0_120, %c128_121] : memref<9x8x512xf32, #tpu.memory_space<vmem>>, vector<1x8x128xf32>
    %155 = vector.shape_cast %154 : vector<1x8x128xf32> to vector<8x128xf32>
    %156 = vector.shape_cast %153 : vector<8x16x8xf32> to vector<128x8xf32>
    %cst_122 = arith.constant dense<0.000000e+00> : vector<128x128xf32>
    %157 = tpu.matmul %156, %155, %cst_122 {dimension_numbers = #tpu.dot_dimension_numbers<[1], [0], [0], [1], [0, 0, 1, 1], [], []>} : vector<128x8xf32>, vector<8x128xf32>, vector<128x128xf32> -> vector<128x128xf32>
    %158 = arith.addf %149, %157 : vector<128x128xf32>
    %c2_i32_123 = arith.constant 2 : i32
    %159 = arith.addi %1, %c2_i32_123 : i32
    %c0_124 = arith.constant 0 : index
    %160 = arith.index_cast %159 : i32 to index
    %c1_125 = arith.constant 1 : index
    %c0_126 = arith.constant 0 : index
    %161 = vector.load %arg2[%c0_124, %160, %c1_125, %c0_126] : memref<1x18x18x8xf32, #tpu.memory_space<vmem>>, vector<1x8x16x8xf32>
    %162 = vector.shape_cast %161 : vector<1x8x16x8xf32> to vector<8x16x8xf32>
    %c7_127 = arith.constant 7 : index
    %c0_128 = arith.constant 0 : index
    %c128_129 = arith.constant 128 : index
    %163 = vector.load %arg3[%c7_127, %c0_128, %c128_129] : memref<9x8x512xf32, #tpu.memory_space<vmem>>, vector<1x8x128xf32>
    %164 = vector.shape_cast %163 : vector<1x8x128xf32> to vector<8x128xf32>
    %165 = vector.shape_cast %162 : vector<8x16x8xf32> to vector<128x8xf32>
    %cst_130 = arith.constant dense<0.000000e+00> : vector<128x128xf32>
    %166 = tpu.matmul %165, %164, %cst_130 {dimension_numbers = #tpu.dot_dimension_numbers<[1], [0], [0], [1], [0, 0, 1, 1], [], []>} : vector<128x8xf32>, vector<8x128xf32>, vector<128x128xf32> -> vector<128x128xf32>
    %167 = arith.addf %158, %166 : vector<128x128xf32>
    %c2_i32_131 = arith.constant 2 : i32
    %168 = arith.addi %1, %c2_i32_131 : i32
    %c0_132 = arith.constant 0 : index
    %169 = arith.index_cast %168 : i32 to index
    %c2_133 = arith.constant 2 : index
    %c0_134 = arith.constant 0 : index
    %170 = vector.load %arg2[%c0_132, %169, %c2_133, %c0_134] : memref<1x18x18x8xf32, #tpu.memory_space<vmem>>, vector<1x8x16x8xf32>
    %171 = vector.shape_cast %170 : vector<1x8x16x8xf32> to vector<8x16x8xf32>
    %c8_135 = arith.constant 8 : index
    %c0_136 = arith.constant 0 : index
    %c128_137 = arith.constant 128 : index
    %172 = vector.load %arg3[%c8_135, %c0_136, %c128_137] : memref<9x8x512xf32, #tpu.memory_space<vmem>>, vector<1x8x128xf32>
    %173 = vector.shape_cast %172 : vector<1x8x128xf32> to vector<8x128xf32>
    %174 = vector.shape_cast %171 : vector<8x16x8xf32> to vector<128x8xf32>
    %cst_138 = arith.constant dense<0.000000e+00> : vector<128x128xf32>
    %175 = tpu.matmul %174, %173, %cst_138 {dimension_numbers = #tpu.dot_dimension_numbers<[1], [0], [0], [1], [0, 0, 1, 1], [], []>} : vector<128x8xf32>, vector<8x128xf32>, vector<128x128xf32> -> vector<128x128xf32>
    %176 = arith.addf %167, %175 : vector<128x128xf32>
    %c0_139 = arith.constant 0 : index
    %c128_140 = arith.constant 128 : index
    %177 = vector.load %arg4[%c0_139, %c128_140] : memref<1x512xf32, #tpu.memory_space<vmem>>, vector<1x128xf32>
    %178 = vector.shape_cast %177 : vector<1x128xf32> to vector<128xf32>
    %179 = vector.shape_cast %178 : vector<128xf32> to vector<1x128xf32>
    %180 = vector.broadcast %179 : vector<1x128xf32> to vector<128x128xf32>
    %181 = arith.addf %176, %180 : vector<128x128xf32>
    %cst_141 = arith.constant 0.000000e+00 : f32
    %182 = vector.broadcast %cst_141 : f32 to vector<128x128xf32>
    %183 = arith.maximumf %181, %182 : vector<128x128xf32>
    %c128_142 = arith.constant 128 : index
    %c0_143 = arith.constant 0 : index
    %184 = vector.load %arg5[%c128_142, %c0_143] : memref<512x56xf32, #tpu.memory_space<vmem>>, vector<128x56xf32>
    %cst_144 = arith.constant dense<0.000000e+00> : vector<128x56xf32>
    %185 = tpu.matmul %183, %184, %cst_144 {dimension_numbers = #tpu.dot_dimension_numbers<[1], [0], [0], [1], [0, 0, 1, 1], [], []>} : vector<128x128xf32>, vector<128x56xf32>, vector<128x56xf32> -> vector<128x56xf32>
    %186 = arith.addf %94, %185 : vector<128x56xf32>
    %cst_145 = arith.constant 0.000000e+00 : f32
    %187 = vector.broadcast %cst_145 : f32 to vector<128x128xf32>
    %c0_i32_146 = arith.constant 0 : i32
    %188 = arith.addi %1, %c0_i32_146 : i32
    %c0_147 = arith.constant 0 : index
    %189 = arith.index_cast %188 : i32 to index
    %c0_148 = arith.constant 0 : index
    %c0_149 = arith.constant 0 : index
    %190 = vector.load %arg2[%c0_147, %189, %c0_148, %c0_149] : memref<1x18x18x8xf32, #tpu.memory_space<vmem>>, vector<1x8x16x8xf32>
    %191 = vector.shape_cast %190 : vector<1x8x16x8xf32> to vector<8x16x8xf32>
    %c0_150 = arith.constant 0 : index
    %c0_151 = arith.constant 0 : index
    %c256 = arith.constant 256 : index
    %192 = vector.load %arg3[%c0_150, %c0_151, %c256] : memref<9x8x512xf32, #tpu.memory_space<vmem>>, vector<1x8x128xf32>
    %193 = vector.shape_cast %192 : vector<1x8x128xf32> to vector<8x128xf32>
    %194 = vector.shape_cast %191 : vector<8x16x8xf32> to vector<128x8xf32>
    %cst_152 = arith.constant dense<0.000000e+00> : vector<128x128xf32>
    %195 = tpu.matmul %194, %193, %cst_152 {dimension_numbers = #tpu.dot_dimension_numbers<[1], [0], [0], [1], [0, 0, 1, 1], [], []>} : vector<128x8xf32>, vector<8x128xf32>, vector<128x128xf32> -> vector<128x128xf32>
    %196 = arith.addf %187, %195 : vector<128x128xf32>
    %c0_i32_153 = arith.constant 0 : i32
    %197 = arith.addi %1, %c0_i32_153 : i32
    %c0_154 = arith.constant 0 : index
    %198 = arith.index_cast %197 : i32 to index
    %c1_155 = arith.constant 1 : index
    %c0_156 = arith.constant 0 : index
    %199 = vector.load %arg2[%c0_154, %198, %c1_155, %c0_156] : memref<1x18x18x8xf32, #tpu.memory_space<vmem>>, vector<1x8x16x8xf32>
    %200 = vector.shape_cast %199 : vector<1x8x16x8xf32> to vector<8x16x8xf32>
    %c1_157 = arith.constant 1 : index
    %c0_158 = arith.constant 0 : index
    %c256_159 = arith.constant 256 : index
    %201 = vector.load %arg3[%c1_157, %c0_158, %c256_159] : memref<9x8x512xf32, #tpu.memory_space<vmem>>, vector<1x8x128xf32>
    %202 = vector.shape_cast %201 : vector<1x8x128xf32> to vector<8x128xf32>
    %203 = vector.shape_cast %200 : vector<8x16x8xf32> to vector<128x8xf32>
    %cst_160 = arith.constant dense<0.000000e+00> : vector<128x128xf32>
    %204 = tpu.matmul %203, %202, %cst_160 {dimension_numbers = #tpu.dot_dimension_numbers<[1], [0], [0], [1], [0, 0, 1, 1], [], []>} : vector<128x8xf32>, vector<8x128xf32>, vector<128x128xf32> -> vector<128x128xf32>
    %205 = arith.addf %196, %204 : vector<128x128xf32>
    %c0_i32_161 = arith.constant 0 : i32
    %206 = arith.addi %1, %c0_i32_161 : i32
    %c0_162 = arith.constant 0 : index
    %207 = arith.index_cast %206 : i32 to index
    %c2_163 = arith.constant 2 : index
    %c0_164 = arith.constant 0 : index
    %208 = vector.load %arg2[%c0_162, %207, %c2_163, %c0_164] : memref<1x18x18x8xf32, #tpu.memory_space<vmem>>, vector<1x8x16x8xf32>
    %209 = vector.shape_cast %208 : vector<1x8x16x8xf32> to vector<8x16x8xf32>
    %c2_165 = arith.constant 2 : index
    %c0_166 = arith.constant 0 : index
    %c256_167 = arith.constant 256 : index
    %210 = vector.load %arg3[%c2_165, %c0_166, %c256_167] : memref<9x8x512xf32, #tpu.memory_space<vmem>>, vector<1x8x128xf32>
    %211 = vector.shape_cast %210 : vector<1x8x128xf32> to vector<8x128xf32>
    %212 = vector.shape_cast %209 : vector<8x16x8xf32> to vector<128x8xf32>
    %cst_168 = arith.constant dense<0.000000e+00> : vector<128x128xf32>
    %213 = tpu.matmul %212, %211, %cst_168 {dimension_numbers = #tpu.dot_dimension_numbers<[1], [0], [0], [1], [0, 0, 1, 1], [], []>} : vector<128x8xf32>, vector<8x128xf32>, vector<128x128xf32> -> vector<128x128xf32>
    %214 = arith.addf %205, %213 : vector<128x128xf32>
    %c1_i32_169 = arith.constant 1 : i32
    %215 = arith.addi %1, %c1_i32_169 : i32
    %c0_170 = arith.constant 0 : index
    %216 = arith.index_cast %215 : i32 to index
    %c0_171 = arith.constant 0 : index
    %c0_172 = arith.constant 0 : index
    %217 = vector.load %arg2[%c0_170, %216, %c0_171, %c0_172] : memref<1x18x18x8xf32, #tpu.memory_space<vmem>>, vector<1x8x16x8xf32>
    %218 = vector.shape_cast %217 : vector<1x8x16x8xf32> to vector<8x16x8xf32>
    %c3_173 = arith.constant 3 : index
    %c0_174 = arith.constant 0 : index
    %c256_175 = arith.constant 256 : index
    %219 = vector.load %arg3[%c3_173, %c0_174, %c256_175] : memref<9x8x512xf32, #tpu.memory_space<vmem>>, vector<1x8x128xf32>
    %220 = vector.shape_cast %219 : vector<1x8x128xf32> to vector<8x128xf32>
    %221 = vector.shape_cast %218 : vector<8x16x8xf32> to vector<128x8xf32>
    %cst_176 = arith.constant dense<0.000000e+00> : vector<128x128xf32>
    %222 = tpu.matmul %221, %220, %cst_176 {dimension_numbers = #tpu.dot_dimension_numbers<[1], [0], [0], [1], [0, 0, 1, 1], [], []>} : vector<128x8xf32>, vector<8x128xf32>, vector<128x128xf32> -> vector<128x128xf32>
    %223 = arith.addf %214, %222 : vector<128x128xf32>
    %c1_i32_177 = arith.constant 1 : i32
    %224 = arith.addi %1, %c1_i32_177 : i32
    %c0_178 = arith.constant 0 : index
    %225 = arith.index_cast %224 : i32 to index
    %c1_179 = arith.constant 1 : index
    %c0_180 = arith.constant 0 : index
    %226 = vector.load %arg2[%c0_178, %225, %c1_179, %c0_180] : memref<1x18x18x8xf32, #tpu.memory_space<vmem>>, vector<1x8x16x8xf32>
    %227 = vector.shape_cast %226 : vector<1x8x16x8xf32> to vector<8x16x8xf32>
    %c4_181 = arith.constant 4 : index
    %c0_182 = arith.constant 0 : index
    %c256_183 = arith.constant 256 : index
    %228 = vector.load %arg3[%c4_181, %c0_182, %c256_183] : memref<9x8x512xf32, #tpu.memory_space<vmem>>, vector<1x8x128xf32>
    %229 = vector.shape_cast %228 : vector<1x8x128xf32> to vector<8x128xf32>
    %230 = vector.shape_cast %227 : vector<8x16x8xf32> to vector<128x8xf32>
    %cst_184 = arith.constant dense<0.000000e+00> : vector<128x128xf32>
    %231 = tpu.matmul %230, %229, %cst_184 {dimension_numbers = #tpu.dot_dimension_numbers<[1], [0], [0], [1], [0, 0, 1, 1], [], []>} : vector<128x8xf32>, vector<8x128xf32>, vector<128x128xf32> -> vector<128x128xf32>
    %232 = arith.addf %223, %231 : vector<128x128xf32>
    %c1_i32_185 = arith.constant 1 : i32
    %233 = arith.addi %1, %c1_i32_185 : i32
    %c0_186 = arith.constant 0 : index
    %234 = arith.index_cast %233 : i32 to index
    %c2_187 = arith.constant 2 : index
    %c0_188 = arith.constant 0 : index
    %235 = vector.load %arg2[%c0_186, %234, %c2_187, %c0_188] : memref<1x18x18x8xf32, #tpu.memory_space<vmem>>, vector<1x8x16x8xf32>
    %236 = vector.shape_cast %235 : vector<1x8x16x8xf32> to vector<8x16x8xf32>
    %c5_189 = arith.constant 5 : index
    %c0_190 = arith.constant 0 : index
    %c256_191 = arith.constant 256 : index
    %237 = vector.load %arg3[%c5_189, %c0_190, %c256_191] : memref<9x8x512xf32, #tpu.memory_space<vmem>>, vector<1x8x128xf32>
    %238 = vector.shape_cast %237 : vector<1x8x128xf32> to vector<8x128xf32>
    %239 = vector.shape_cast %236 : vector<8x16x8xf32> to vector<128x8xf32>
    %cst_192 = arith.constant dense<0.000000e+00> : vector<128x128xf32>
    %240 = tpu.matmul %239, %238, %cst_192 {dimension_numbers = #tpu.dot_dimension_numbers<[1], [0], [0], [1], [0, 0, 1, 1], [], []>} : vector<128x8xf32>, vector<8x128xf32>, vector<128x128xf32> -> vector<128x128xf32>
    %241 = arith.addf %232, %240 : vector<128x128xf32>
    %c2_i32_193 = arith.constant 2 : i32
    %242 = arith.addi %1, %c2_i32_193 : i32
    %c0_194 = arith.constant 0 : index
    %243 = arith.index_cast %242 : i32 to index
    %c0_195 = arith.constant 0 : index
    %c0_196 = arith.constant 0 : index
    %244 = vector.load %arg2[%c0_194, %243, %c0_195, %c0_196] : memref<1x18x18x8xf32, #tpu.memory_space<vmem>>, vector<1x8x16x8xf32>
    %245 = vector.shape_cast %244 : vector<1x8x16x8xf32> to vector<8x16x8xf32>
    %c6_197 = arith.constant 6 : index
    %c0_198 = arith.constant 0 : index
    %c256_199 = arith.constant 256 : index
    %246 = vector.load %arg3[%c6_197, %c0_198, %c256_199] : memref<9x8x512xf32, #tpu.memory_space<vmem>>, vector<1x8x128xf32>
    %247 = vector.shape_cast %246 : vector<1x8x128xf32> to vector<8x128xf32>
    %248 = vector.shape_cast %245 : vector<8x16x8xf32> to vector<128x8xf32>
    %cst_200 = arith.constant dense<0.000000e+00> : vector<128x128xf32>
    %249 = tpu.matmul %248, %247, %cst_200 {dimension_numbers = #tpu.dot_dimension_numbers<[1], [0], [0], [1], [0, 0, 1, 1], [], []>} : vector<128x8xf32>, vector<8x128xf32>, vector<128x128xf32> -> vector<128x128xf32>
    %250 = arith.addf %241, %249 : vector<128x128xf32>
    %c2_i32_201 = arith.constant 2 : i32
    %251 = arith.addi %1, %c2_i32_201 : i32
    %c0_202 = arith.constant 0 : index
    %252 = arith.index_cast %251 : i32 to index
    %c1_203 = arith.constant 1 : index
    %c0_204 = arith.constant 0 : index
    %253 = vector.load %arg2[%c0_202, %252, %c1_203, %c0_204] : memref<1x18x18x8xf32, #tpu.memory_space<vmem>>, vector<1x8x16x8xf32>
    %254 = vector.shape_cast %253 : vector<1x8x16x8xf32> to vector<8x16x8xf32>
    %c7_205 = arith.constant 7 : index
    %c0_206 = arith.constant 0 : index
    %c256_207 = arith.constant 256 : index
    %255 = vector.load %arg3[%c7_205, %c0_206, %c256_207] : memref<9x8x512xf32, #tpu.memory_space<vmem>>, vector<1x8x128xf32>
    %256 = vector.shape_cast %255 : vector<1x8x128xf32> to vector<8x128xf32>
    %257 = vector.shape_cast %254 : vector<8x16x8xf32> to vector<128x8xf32>
    %cst_208 = arith.constant dense<0.000000e+00> : vector<128x128xf32>
    %258 = tpu.matmul %257, %256, %cst_208 {dimension_numbers = #tpu.dot_dimension_numbers<[1], [0], [0], [1], [0, 0, 1, 1], [], []>} : vector<128x8xf32>, vector<8x128xf32>, vector<128x128xf32> -> vector<128x128xf32>
    %259 = arith.addf %250, %258 : vector<128x128xf32>
    %c2_i32_209 = arith.constant 2 : i32
    %260 = arith.addi %1, %c2_i32_209 : i32
    %c0_210 = arith.constant 0 : index
    %261 = arith.index_cast %260 : i32 to index
    %c2_211 = arith.constant 2 : index
    %c0_212 = arith.constant 0 : index
    %262 = vector.load %arg2[%c0_210, %261, %c2_211, %c0_212] : memref<1x18x18x8xf32, #tpu.memory_space<vmem>>, vector<1x8x16x8xf32>
    %263 = vector.shape_cast %262 : vector<1x8x16x8xf32> to vector<8x16x8xf32>
    %c8_213 = arith.constant 8 : index
    %c0_214 = arith.constant 0 : index
    %c256_215 = arith.constant 256 : index
    %264 = vector.load %arg3[%c8_213, %c0_214, %c256_215] : memref<9x8x512xf32, #tpu.memory_space<vmem>>, vector<1x8x128xf32>
    %265 = vector.shape_cast %264 : vector<1x8x128xf32> to vector<8x128xf32>
    %266 = vector.shape_cast %263 : vector<8x16x8xf32> to vector<128x8xf32>
    %cst_216 = arith.constant dense<0.000000e+00> : vector<128x128xf32>
    %267 = tpu.matmul %266, %265, %cst_216 {dimension_numbers = #tpu.dot_dimension_numbers<[1], [0], [0], [1], [0, 0, 1, 1], [], []>} : vector<128x8xf32>, vector<8x128xf32>, vector<128x128xf32> -> vector<128x128xf32>
    %268 = arith.addf %259, %267 : vector<128x128xf32>
    %c0_217 = arith.constant 0 : index
    %c256_218 = arith.constant 256 : index
    %269 = vector.load %arg4[%c0_217, %c256_218] : memref<1x512xf32, #tpu.memory_space<vmem>>, vector<1x128xf32>
    %270 = vector.shape_cast %269 : vector<1x128xf32> to vector<128xf32>
    %271 = vector.shape_cast %270 : vector<128xf32> to vector<1x128xf32>
    %272 = vector.broadcast %271 : vector<1x128xf32> to vector<128x128xf32>
    %273 = arith.addf %268, %272 : vector<128x128xf32>
    %cst_219 = arith.constant 0.000000e+00 : f32
    %274 = vector.broadcast %cst_219 : f32 to vector<128x128xf32>
    %275 = arith.maximumf %273, %274 : vector<128x128xf32>
    %c256_220 = arith.constant 256 : index
    %c0_221 = arith.constant 0 : index
    %276 = vector.load %arg5[%c256_220, %c0_221] : memref<512x56xf32, #tpu.memory_space<vmem>>, vector<128x56xf32>
    %cst_222 = arith.constant dense<0.000000e+00> : vector<128x56xf32>
    %277 = tpu.matmul %275, %276, %cst_222 {dimension_numbers = #tpu.dot_dimension_numbers<[1], [0], [0], [1], [0, 0, 1, 1], [], []>} : vector<128x128xf32>, vector<128x56xf32>, vector<128x56xf32> -> vector<128x56xf32>
    %278 = arith.addf %186, %277 : vector<128x56xf32>
    %cst_223 = arith.constant 0.000000e+00 : f32
    %279 = vector.broadcast %cst_223 : f32 to vector<128x128xf32>
    %c0_i32_224 = arith.constant 0 : i32
    %280 = arith.addi %1, %c0_i32_224 : i32
    %c0_225 = arith.constant 0 : index
    %281 = arith.index_cast %280 : i32 to index
    %c0_226 = arith.constant 0 : index
    %c0_227 = arith.constant 0 : index
    %282 = vector.load %arg2[%c0_225, %281, %c0_226, %c0_227] : memref<1x18x18x8xf32, #tpu.memory_space<vmem>>, vector<1x8x16x8xf32>
    %283 = vector.shape_cast %282 : vector<1x8x16x8xf32> to vector<8x16x8xf32>
    %c0_228 = arith.constant 0 : index
    %c0_229 = arith.constant 0 : index
    %c384 = arith.constant 384 : index
    %284 = vector.load %arg3[%c0_228, %c0_229, %c384] : memref<9x8x512xf32, #tpu.memory_space<vmem>>, vector<1x8x128xf32>
    %285 = vector.shape_cast %284 : vector<1x8x128xf32> to vector<8x128xf32>
    %286 = vector.shape_cast %283 : vector<8x16x8xf32> to vector<128x8xf32>
    %cst_230 = arith.constant dense<0.000000e+00> : vector<128x128xf32>
    %287 = tpu.matmul %286, %285, %cst_230 {dimension_numbers = #tpu.dot_dimension_numbers<[1], [0], [0], [1], [0, 0, 1, 1], [], []>} : vector<128x8xf32>, vector<8x128xf32>, vector<128x128xf32> -> vector<128x128xf32>
    %288 = arith.addf %279, %287 : vector<128x128xf32>
    %c0_i32_231 = arith.constant 0 : i32
    %289 = arith.addi %1, %c0_i32_231 : i32
    %c0_232 = arith.constant 0 : index
    %290 = arith.index_cast %289 : i32 to index
    %c1_233 = arith.constant 1 : index
    %c0_234 = arith.constant 0 : index
    %291 = vector.load %arg2[%c0_232, %290, %c1_233, %c0_234] : memref<1x18x18x8xf32, #tpu.memory_space<vmem>>, vector<1x8x16x8xf32>
    %292 = vector.shape_cast %291 : vector<1x8x16x8xf32> to vector<8x16x8xf32>
    %c1_235 = arith.constant 1 : index
    %c0_236 = arith.constant 0 : index
    %c384_237 = arith.constant 384 : index
    %293 = vector.load %arg3[%c1_235, %c0_236, %c384_237] : memref<9x8x512xf32, #tpu.memory_space<vmem>>, vector<1x8x128xf32>
    %294 = vector.shape_cast %293 : vector<1x8x128xf32> to vector<8x128xf32>
    %295 = vector.shape_cast %292 : vector<8x16x8xf32> to vector<128x8xf32>
    %cst_238 = arith.constant dense<0.000000e+00> : vector<128x128xf32>
    %296 = tpu.matmul %295, %294, %cst_238 {dimension_numbers = #tpu.dot_dimension_numbers<[1], [0], [0], [1], [0, 0, 1, 1], [], []>} : vector<128x8xf32>, vector<8x128xf32>, vector<128x128xf32> -> vector<128x128xf32>
    %297 = arith.addf %288, %296 : vector<128x128xf32>
    %c0_i32_239 = arith.constant 0 : i32
    %298 = arith.addi %1, %c0_i32_239 : i32
    %c0_240 = arith.constant 0 : index
    %299 = arith.index_cast %298 : i32 to index
    %c2_241 = arith.constant 2 : index
    %c0_242 = arith.constant 0 : index
    %300 = vector.load %arg2[%c0_240, %299, %c2_241, %c0_242] : memref<1x18x18x8xf32, #tpu.memory_space<vmem>>, vector<1x8x16x8xf32>
    %301 = vector.shape_cast %300 : vector<1x8x16x8xf32> to vector<8x16x8xf32>
    %c2_243 = arith.constant 2 : index
    %c0_244 = arith.constant 0 : index
    %c384_245 = arith.constant 384 : index
    %302 = vector.load %arg3[%c2_243, %c0_244, %c384_245] : memref<9x8x512xf32, #tpu.memory_space<vmem>>, vector<1x8x128xf32>
    %303 = vector.shape_cast %302 : vector<1x8x128xf32> to vector<8x128xf32>
    %304 = vector.shape_cast %301 : vector<8x16x8xf32> to vector<128x8xf32>
    %cst_246 = arith.constant dense<0.000000e+00> : vector<128x128xf32>
    %305 = tpu.matmul %304, %303, %cst_246 {dimension_numbers = #tpu.dot_dimension_numbers<[1], [0], [0], [1], [0, 0, 1, 1], [], []>} : vector<128x8xf32>, vector<8x128xf32>, vector<128x128xf32> -> vector<128x128xf32>
    %306 = arith.addf %297, %305 : vector<128x128xf32>
    %c1_i32_247 = arith.constant 1 : i32
    %307 = arith.addi %1, %c1_i32_247 : i32
    %c0_248 = arith.constant 0 : index
    %308 = arith.index_cast %307 : i32 to index
    %c0_249 = arith.constant 0 : index
    %c0_250 = arith.constant 0 : index
    %309 = vector.load %arg2[%c0_248, %308, %c0_249, %c0_250] : memref<1x18x18x8xf32, #tpu.memory_space<vmem>>, vector<1x8x16x8xf32>
    %310 = vector.shape_cast %309 : vector<1x8x16x8xf32> to vector<8x16x8xf32>
    %c3_251 = arith.constant 3 : index
    %c0_252 = arith.constant 0 : index
    %c384_253 = arith.constant 384 : index
    %311 = vector.load %arg3[%c3_251, %c0_252, %c384_253] : memref<9x8x512xf32, #tpu.memory_space<vmem>>, vector<1x8x128xf32>
    %312 = vector.shape_cast %311 : vector<1x8x128xf32> to vector<8x128xf32>
    %313 = vector.shape_cast %310 : vector<8x16x8xf32> to vector<128x8xf32>
    %cst_254 = arith.constant dense<0.000000e+00> : vector<128x128xf32>
    %314 = tpu.matmul %313, %312, %cst_254 {dimension_numbers = #tpu.dot_dimension_numbers<[1], [0], [0], [1], [0, 0, 1, 1], [], []>} : vector<128x8xf32>, vector<8x128xf32>, vector<128x128xf32> -> vector<128x128xf32>
    %315 = arith.addf %306, %314 : vector<128x128xf32>
    %c1_i32_255 = arith.constant 1 : i32
    %316 = arith.addi %1, %c1_i32_255 : i32
    %c0_256 = arith.constant 0 : index
    %317 = arith.index_cast %316 : i32 to index
    %c1_257 = arith.constant 1 : index
    %c0_258 = arith.constant 0 : index
    %318 = vector.load %arg2[%c0_256, %317, %c1_257, %c0_258] : memref<1x18x18x8xf32, #tpu.memory_space<vmem>>, vector<1x8x16x8xf32>
    %319 = vector.shape_cast %318 : vector<1x8x16x8xf32> to vector<8x16x8xf32>
    %c4_259 = arith.constant 4 : index
    %c0_260 = arith.constant 0 : index
    %c384_261 = arith.constant 384 : index
    %320 = vector.load %arg3[%c4_259, %c0_260, %c384_261] : memref<9x8x512xf32, #tpu.memory_space<vmem>>, vector<1x8x128xf32>
    %321 = vector.shape_cast %320 : vector<1x8x128xf32> to vector<8x128xf32>
    %322 = vector.shape_cast %319 : vector<8x16x8xf32> to vector<128x8xf32>
    %cst_262 = arith.constant dense<0.000000e+00> : vector<128x128xf32>
    %323 = tpu.matmul %322, %321, %cst_262 {dimension_numbers = #tpu.dot_dimension_numbers<[1], [0], [0], [1], [0, 0, 1, 1], [], []>} : vector<128x8xf32>, vector<8x128xf32>, vector<128x128xf32> -> vector<128x128xf32>
    %324 = arith.addf %315, %323 : vector<128x128xf32>
    %c1_i32_263 = arith.constant 1 : i32
    %325 = arith.addi %1, %c1_i32_263 : i32
    %c0_264 = arith.constant 0 : index
    %326 = arith.index_cast %325 : i32 to index
    %c2_265 = arith.constant 2 : index
    %c0_266 = arith.constant 0 : index
    %327 = vector.load %arg2[%c0_264, %326, %c2_265, %c0_266] : memref<1x18x18x8xf32, #tpu.memory_space<vmem>>, vector<1x8x16x8xf32>
    %328 = vector.shape_cast %327 : vector<1x8x16x8xf32> to vector<8x16x8xf32>
    %c5_267 = arith.constant 5 : index
    %c0_268 = arith.constant 0 : index
    %c384_269 = arith.constant 384 : index
    %329 = vector.load %arg3[%c5_267, %c0_268, %c384_269] : memref<9x8x512xf32, #tpu.memory_space<vmem>>, vector<1x8x128xf32>
    %330 = vector.shape_cast %329 : vector<1x8x128xf32> to vector<8x128xf32>
    %331 = vector.shape_cast %328 : vector<8x16x8xf32> to vector<128x8xf32>
    %cst_270 = arith.constant dense<0.000000e+00> : vector<128x128xf32>
    %332 = tpu.matmul %331, %330, %cst_270 {dimension_numbers = #tpu.dot_dimension_numbers<[1], [0], [0], [1], [0, 0, 1, 1], [], []>} : vector<128x8xf32>, vector<8x128xf32>, vector<128x128xf32> -> vector<128x128xf32>
    %333 = arith.addf %324, %332 : vector<128x128xf32>
    %c2_i32_271 = arith.constant 2 : i32
    %334 = arith.addi %1, %c2_i32_271 : i32
    %c0_272 = arith.constant 0 : index
    %335 = arith.index_cast %334 : i32 to index
    %c0_273 = arith.constant 0 : index
    %c0_274 = arith.constant 0 : index
    %336 = vector.load %arg2[%c0_272, %335, %c0_273, %c0_274] : memref<1x18x18x8xf32, #tpu.memory_space<vmem>>, vector<1x8x16x8xf32>
    %337 = vector.shape_cast %336 : vector<1x8x16x8xf32> to vector<8x16x8xf32>
    %c6_275 = arith.constant 6 : index
    %c0_276 = arith.constant 0 : index
    %c384_277 = arith.constant 384 : index
    %338 = vector.load %arg3[%c6_275, %c0_276, %c384_277] : memref<9x8x512xf32, #tpu.memory_space<vmem>>, vector<1x8x128xf32>
    %339 = vector.shape_cast %338 : vector<1x8x128xf32> to vector<8x128xf32>
    %340 = vector.shape_cast %337 : vector<8x16x8xf32> to vector<128x8xf32>
    %cst_278 = arith.constant dense<0.000000e+00> : vector<128x128xf32>
    %341 = tpu.matmul %340, %339, %cst_278 {dimension_numbers = #tpu.dot_dimension_numbers<[1], [0], [0], [1], [0, 0, 1, 1], [], []>} : vector<128x8xf32>, vector<8x128xf32>, vector<128x128xf32> -> vector<128x128xf32>
    %342 = arith.addf %333, %341 : vector<128x128xf32>
    %c2_i32_279 = arith.constant 2 : i32
    %343 = arith.addi %1, %c2_i32_279 : i32
    %c0_280 = arith.constant 0 : index
    %344 = arith.index_cast %343 : i32 to index
    %c1_281 = arith.constant 1 : index
    %c0_282 = arith.constant 0 : index
    %345 = vector.load %arg2[%c0_280, %344, %c1_281, %c0_282] : memref<1x18x18x8xf32, #tpu.memory_space<vmem>>, vector<1x8x16x8xf32>
    %346 = vector.shape_cast %345 : vector<1x8x16x8xf32> to vector<8x16x8xf32>
    %c7_283 = arith.constant 7 : index
    %c0_284 = arith.constant 0 : index
    %c384_285 = arith.constant 384 : index
    %347 = vector.load %arg3[%c7_283, %c0_284, %c384_285] : memref<9x8x512xf32, #tpu.memory_space<vmem>>, vector<1x8x128xf32>
    %348 = vector.shape_cast %347 : vector<1x8x128xf32> to vector<8x128xf32>
    %349 = vector.shape_cast %346 : vector<8x16x8xf32> to vector<128x8xf32>
    %cst_286 = arith.constant dense<0.000000e+00> : vector<128x128xf32>
    %350 = tpu.matmul %349, %348, %cst_286 {dimension_numbers = #tpu.dot_dimension_numbers<[1], [0], [0], [1], [0, 0, 1, 1], [], []>} : vector<128x8xf32>, vector<8x128xf32>, vector<128x128xf32> -> vector<128x128xf32>
    %351 = arith.addf %342, %350 : vector<128x128xf32>
    %c2_i32_287 = arith.constant 2 : i32
    %352 = arith.addi %1, %c2_i32_287 : i32
    %c0_288 = arith.constant 0 : index
    %353 = arith.index_cast %352 : i32 to index
    %c2_289 = arith.constant 2 : index
    %c0_290 = arith.constant 0 : index
    %354 = vector.load %arg2[%c0_288, %353, %c2_289, %c0_290] : memref<1x18x18x8xf32, #tpu.memory_space<vmem>>, vector<1x8x16x8xf32>
    %355 = vector.shape_cast %354 : vector<1x8x16x8xf32> to vector<8x16x8xf32>
    %c8_291 = arith.constant 8 : index
    %c0_292 = arith.constant 0 : index
    %c384_293 = arith.constant 384 : index
    %356 = vector.load %arg3[%c8_291, %c0_292, %c384_293] : memref<9x8x512xf32, #tpu.memory_space<vmem>>, vector<1x8x128xf32>
    %357 = vector.shape_cast %356 : vector<1x8x128xf32> to vector<8x128xf32>
    %358 = vector.shape_cast %355 : vector<8x16x8xf32> to vector<128x8xf32>
    %cst_294 = arith.constant dense<0.000000e+00> : vector<128x128xf32>
    %359 = tpu.matmul %358, %357, %cst_294 {dimension_numbers = #tpu.dot_dimension_numbers<[1], [0], [0], [1], [0, 0, 1, 1], [], []>} : vector<128x8xf32>, vector<8x128xf32>, vector<128x128xf32> -> vector<128x128xf32>
    %360 = arith.addf %351, %359 : vector<128x128xf32>
    %c0_295 = arith.constant 0 : index
    %c384_296 = arith.constant 384 : index
    %361 = vector.load %arg4[%c0_295, %c384_296] : memref<1x512xf32, #tpu.memory_space<vmem>>, vector<1x128xf32>
    %362 = vector.shape_cast %361 : vector<1x128xf32> to vector<128xf32>
    %363 = vector.shape_cast %362 : vector<128xf32> to vector<1x128xf32>
    %364 = vector.broadcast %363 : vector<1x128xf32> to vector<128x128xf32>
    %365 = arith.addf %360, %364 : vector<128x128xf32>
    %cst_297 = arith.constant 0.000000e+00 : f32
    %366 = vector.broadcast %cst_297 : f32 to vector<128x128xf32>
    %367 = arith.maximumf %365, %366 : vector<128x128xf32>
    %c384_298 = arith.constant 384 : index
    %c0_299 = arith.constant 0 : index
    %368 = vector.load %arg5[%c384_298, %c0_299] : memref<512x56xf32, #tpu.memory_space<vmem>>, vector<128x56xf32>
    %cst_300 = arith.constant dense<0.000000e+00> : vector<128x56xf32>
    %369 = tpu.matmul %367, %368, %cst_300 {dimension_numbers = #tpu.dot_dimension_numbers<[1], [0], [0], [1], [0, 0, 1, 1], [], []>} : vector<128x128xf32>, vector<128x56xf32>, vector<128x56xf32> -> vector<128x56xf32>
    %370 = arith.addf %278, %369 : vector<128x56xf32>
    %c0_301 = arith.constant 0 : index
    %c0_302 = arith.constant 0 : index
    %371 = vector.load %arg6[%c0_301, %c0_302] : memref<1x56xf32, #tpu.memory_space<vmem>>, vector<1x56xf32>
    %372 = vector.shape_cast %371 : vector<1x56xf32> to vector<56xf32>
    %373 = vector.shape_cast %372 : vector<56xf32> to vector<1x56xf32>
    %374 = vector.broadcast %373 : vector<1x56xf32> to vector<128x56xf32>
    %375 = arith.addf %370, %374 : vector<128x56xf32>
    %376 = tpu.transpose %375, [1, 0] : vector<128x56xf32> -> vector<56x128xf32>
    %377 = vector.extract_strided_slice %376 {offsets = [0, 0], sizes = [9, 128], strides = [1, 1]} : vector<56x128xf32> to vector<9x128xf32>
    %378 = vector.extract_strided_slice %376 {offsets = [9, 0], sizes = [9, 128], strides = [1, 1]} : vector<56x128xf32> to vector<9x128xf32>
    %379 = arith.maximumf %377, %378 : vector<9x128xf32>
    %380 = arith.subf %377, %379 : vector<9x128xf32>
    %381 = math.exp %380 : vector<9x128xf32>
    %382 = arith.subf %378, %379 : vector<9x128xf32>
    %383 = math.exp %382 : vector<9x128xf32>
    %384 = arith.addf %381, %383 : vector<9x128xf32>
    %385 = tpu.reciprocal %384 {approx = true} : vector<9x128xf32> -> vector<9x128xf32>
    %386 = arith.mulf %381, %385 : vector<9x128xf32>
    %387 = arith.mulf %383, %385 : vector<9x128xf32>
    %388 = tpu.concatenate %386, %387 in 0 : vector<9x128xf32>, vector<9x128xf32> -> vector<18x128xf32>
    %c0_303 = arith.constant 0 : index
    %c0_304 = arith.constant 0 : index
    %c0_305 = arith.constant 0 : index
    %389 = vector.load %arg7[%c0_303, %c0_304, %c0_305] : memref<1x18x128xf32, #tpu.memory_space<vmem>>, vector<1x18x128xf32>
    %390 = vector.shape_cast %389 : vector<1x18x128xf32> to vector<18x128xf32>
    %391 = vector.shape_cast %388 : vector<18x128xf32> to vector<1x18x128xf32>
    tpu.vector_store %arg7[%c0_303, %c0_304, %c0_305], %391 {strides = array<i32>} : memref<1x18x128xf32, #tpu.memory_space<vmem>>, vector<1x18x128xf32>,
    %392 = vector.extract_strided_slice %376 {offsets = [18, 0], sizes = [36, 128], strides = [1, 1]} : vector<56x128xf32> to vector<36x128xf32>
    %c0_306 = arith.constant 0 : index
    %c0_307 = arith.constant 0 : index
    %c0_308 = arith.constant 0 : index
    %393 = vector.load %arg8[%c0_306, %c0_307, %c0_308] : memref<1x36x128xf32, #tpu.memory_space<vmem>>, vector<1x36x128xf32>
    %394 = vector.shape_cast %393 : vector<1x36x128xf32> to vector<36x128xf32>
    %395 = vector.shape_cast %392 : vector<36x128xf32> to vector<1x36x128xf32>
    tpu.vector_store %arg8[%c0_306, %c0_307, %c0_308], %395 {strides = array<i32>} : memref<1x36x128xf32, #tpu.memory_space<vmem>>, vector<1x36x128xf32>,
    return
  }
  func.func @transform_0(%arg0: i32, %arg1: i32) -> (i32, i32, i32, i32) {
    %c0_i32 = arith.constant 0 : i32
    %c0_i32_0 = arith.constant 0 : i32
    %c0_i32_1 = arith.constant 0 : i32
    %c0_i32_2 = arith.constant 0 : i32
    return %arg0, %c0_i32, %c0_i32_0, %c0_i32_1 : i32, i32, i32, i32
  }
  func.func @transform_1(%arg0: i32, %arg1: i32) -> (i32, i32, i32) {
    %c0_i32 = arith.constant 0 : i32
    %c0_i32_0 = arith.constant 0 : i32
    %c0_i32_1 = arith.constant 0 : i32
    %c0_i32_2 = arith.constant 0 : i32
    return %c0_i32, %c0_i32_0, %c0_i32_1 : i32, i32, i32
  }
  func.func @transform_2(%arg0: i32, %arg1: i32) -> (i32, i32) {
    %c0_i32 = arith.constant 0 : i32
    %c0_i32_0 = arith.constant 0 : i32
    %c0_i32_1 = arith.constant 0 : i32
    return %c0_i32, %c0_i32_0 : i32, i32
  }
  func.func @transform_3(%arg0: i32, %arg1: i32) -> (i32, i32) {
    %c0_i32 = arith.constant 0 : i32
    %c0_i32_0 = arith.constant 0 : i32
    %c0_i32_1 = arith.constant 0 : i32
    return %c0_i32, %c0_i32_0 : i32, i32
  }
  func.func @transform_4(%arg0: i32, %arg1: i32) -> (i32, i32) {
    %c0_i32 = arith.constant 0 : i32
    %c0_i32_0 = arith.constant 0 : i32
    %c0_i32_1 = arith.constant 0 : i32
    return %c0_i32, %c0_i32_0 : i32, i32
  }
  func.func @transform_5(%arg0: i32, %arg1: i32) -> (i32, i32, i32) {
    %c0_i32 = arith.constant 0 : i32
    %c0_i32_0 = arith.constant 0 : i32
    return %arg0, %c0_i32, %arg1 : i32, i32, i32
  }
  func.func @transform_6(%arg0: i32, %arg1: i32) -> (i32, i32, i32) {
    %c0_i32 = arith.constant 0 : i32
    %c0_i32_0 = arith.constant 0 : i32
    return %arg0, %c0_i32, %arg1 : i32, i32, i32
  }
}

</mosaic_0001>

<llo_original>
// kernel: tpu_custom_call.1
$region0: #{tpu_custom_call.1}
  #allocation0 [shape = 'u32[]', space=smem, size = 0x4, offset = 0x4, fixed_abs, tag = 'smem constant byte address 0x4 - core index']
  #allocation1 [shape = 'u32[144,128]{1,0:T(1,128)}', space=vmem, size = 0x12000, scoped, tag = 'internal scratch']
  %s0 = inlined_call_operand.vmem [shape: f32[2,18,18,8], index: 0, kind: input, shape index: {}]
  %s1 = inlined_call_operand.vmem [shape: f32[9,8,512], index: 1, kind: input, shape index: {}]
  %s2 = inlined_call_operand.vmem [shape: f32[1,512], index: 2, kind: input, shape index: {}]
  %s3 = inlined_call_operand.vmem [shape: f32[512,56], index: 3, kind: input, shape index: {}]
  %s4 = inlined_call_operand.vmem [shape: f32[1,56], index: 4, kind: input, shape index: {}]
  %s5 = inlined_call_operand.vmem [shape: f32[2,18,256], index: 5, kind: output, shape index: {0}]
  %s6 = inlined_call_operand.vmem [shape: f32[2,36,256], index: 6, kind: output, shape index: {1}]
  %7 = xla_tuple %s5, %s6
  %s8 = sld [smem:[#allocation0]]
  $region129: #{tpu_custom_call.1} parent=0
    _
  %s10 = ssub.s32 1, %s8
  %s11 = scalar_select 0, %s10, %s8
  $region1: #{tpu_custom_call.1} parent=0
    #allocation2 [shape = 'u8[24576]{0}', space=vmem, size = 0x6000, scoped, tag = 'output window, operand 0']
    #allocation3 [shape = 'u8[40960]{0}', space=vmem, size = 0xa000, scoped, tag = 'output window, operand 1']
    loop: start=0, step=1, limit=6
    $region2: #{tpu_custom_call.1} parent=1 // loop_pre_header
      _
    $region3: #{tpu_custom_call.1} parent=1 // loop_header
      %s13 = sphi 0, %s17
      %p14 = scmp.ge.s32.totalorder %s13, 6
      %s20 = sphi 0, %s32
      %s21 = sphi 0, %s28
      %s22 = sphi 0, %s20
      %s23 = sphi 0, %s21
      %s24 = sphi 0, %s22
      %s25 = sphi 0, %s23
      %s35 = sphi 0, %s37
      %s38 = sphi 0, %s35
      %s39 = sphi 0, %s38
      %s55 = sphi 0, %s39
      %s59 = sphi 0, %s59
      %s61 = sphi 0, %s59
      %s62 = sphi 0, %s61
      %s76 = sphi 0, %s62
      %s80 = sphi 0, %s80
      %s82 = sphi 0, %s80
      %s83 = sphi 0, %s82
      %s97 = sphi 0, %s83
      %s101 = sphi 0, %s101
      %s103 = sphi 0, %s101
      %s104 = sphi 0, %s103
      %s118 = sphi 0, %s104
      %s122 = sphi 0, %s122
      %s124 = sphi 0, %s122
      %s125 = sphi 0, %s124
      %s139 = sphi 0, %s125
      %s147 = sphi 0, %s149
      %s150 = sphi 0, %s147
      %s151 = sphi 0, %s150
      %s167 = sphi 0, %s151
      %s175 = sphi 0, %s177
      %s178 = sphi 0, %s175
      %s179 = sphi 0, %s178
      %s195 = sphi 0, %s179
    $region4: #{tpu_custom_call.1} parent=1 // loop_header_branch
      %16 = sbr.rel (%p14) target = $region8
    $region5: #{tpu_custom_call.1} parent=1 // loop_body
      %s18 = ssub.s32 %s13, 1
      %s19 = ssub.s32 %s13, 2
      %s26 = sadd.s32 1, %s21
      %p27 = scmp.ge.s32.totalorder %s26, 2
      %s28 = scalar_select %p27, 0, %s26
      %s29 = sadd.s32 1, %s20
      %s30 = scalar_select %p27, %s29, %s20
      %p31 = scmp.ge.s32.totalorder %s30, 2
      %s32 = scalar_select %p31, 0, %s30
      %s33 = ssub.s32 %s20, %s32
      %p34 = scmp.eq.s32.totalorder %s33, 0
      %s36 = sadd.s32 %s35, 1
      %s37 = scalar_select %p34, %s35, %s36
      %p40 = pneg %p34
      %p41 = scmp.eq.s32.totalorder %s13, 3
      %p42 = por %p40, %p41
      %p43 = scmp.ne.s32.totalorder %s35, %s38
      %p44 = scmp.eq.s32.totalorder %s13, 0
      %p45 = por %p43, %p44
      %p46 = scmp.ne.s32.totalorder %s35, %s38
      %p47 = scmp.eq.s32.totalorder %s18, 3
      %p48 = por %p46, %p47
      %p49 = scmp.ne.s32.totalorder %s38, %s39
      %p50 = scmp.eq.s32.totalorder %s18, 0
      %p51 = por %p49, %p50
      %p52 = scmp.ne.s32.totalorder %s38, %s39
      %p53 = scmp.eq.s32.totalorder %s19, 3
      %p54 = por %p52, %p53
      %p56 = scmp.ne.s32.totalorder %s39, %s55
      %p57 = scmp.eq.s32.totalorder %s19, 0
      %p58 = por %p56, %p57
      %s60 = sadd.s32 %s59, 1
      %p63 = scmp.eq.s32.totalorder %s13, 3
      %p64 = scmp.ne.s32.totalorder %s59, %s61
      %p65 = scmp.eq.s32.totalorder %s13, 0
      %p66 = por %p64, %p65
      %p67 = scmp.ne.s32.totalorder %s59, %s61
      %p68 = scmp.eq.s32.totalorder %s18, 3
      %p69 = por %p67, %p68
      %p70 = scmp.ne.s32.totalorder %s61, %s62
      %p71 = scmp.eq.s32.totalorder %s18, 0
      %p72 = por %p70, %p71
      %p73 = scmp.ne.s32.totalorder %s61, %s62
      %p74 = scmp.eq.s32.totalorder %s19, 3
      %p75 = por %p73, %p74
      %p77 = scmp.ne.s32.totalorder %s62, %s76
      %p78 = scmp.eq.s32.totalorder %s19, 0
      %p79 = por %p77, %p78
      %s81 = sadd.s32 %s80, 1
      %p84 = scmp.eq.s32.totalorder %s13, 3
      %p85 = scmp.ne.s32.totalorder %s80, %s82
      %p86 = scmp.eq.s32.totalorder %s13, 0
      %p87 = por %p85, %p86
      %p88 = scmp.ne.s32.totalorder %s80, %s82
      %p89 = scmp.eq.s32.totalorder %s18, 3
      %p90 = por %p88, %p89
      %p91 = scmp.ne.s32.totalorder %s82, %s83
      %p92 = scmp.eq.s32.totalorder %s18, 0
      %p93 = por %p91, %p92
      %p94 = scmp.ne.s32.totalorder %s82, %s83
      %p95 = scmp.eq.s32.totalorder %s19, 3
      %p96 = por %p94, %p95
      %p98 = scmp.ne.s32.totalorder %s83, %s97
      %p99 = scmp.eq.s32.totalorder %s19, 0
      %p100 = por %p98, %p99
      %s102 = sadd.s32 %s101, 1
      %p105 = scmp.eq.s32.totalorder %s13, 3
      %p106 = scmp.ne.s32.totalorder %s101, %s103
      %p107 = scmp.eq.s32.totalorder %s13, 0
      %p108 = por %p106, %p107
      %p109 = scmp.ne.s32.totalorder %s101, %s103
      %p110 = scmp.eq.s32.totalorder %s18, 3
      %p111 = por %p109, %p110
      %p112 = scmp.ne.s32.totalorder %s103, %s104
      %p113 = scmp.eq.s32.totalorder %s18, 0
      %p114 = por %p112, %p113
      %p115 = scmp.ne.s32.totalorder %s103, %s104
      %p116 = scmp.eq.s32.totalorder %s19, 3
      %p117 = por %p115, %p116
      %p119 = scmp.ne.s32.totalorder %s104, %s118
      %p120 = scmp.eq.s32.totalorder %s19, 0
      %p121 = por %p119, %p120
      %s123 = sadd.s32 %s122, 1
      %p126 = scmp.eq.s32.totalorder %s13, 3
      %p127 = scmp.ne.s32.totalorder %s122, %s124
      %p128 = scmp.eq.s32.totalorder %s13, 0
      %p129 = por %p127, %p128
      %p130 = scmp.ne.s32.totalorder %s122, %s124
      %p131 = scmp.eq.s32.totalorder %s18, 3
      %p132 = por %p130, %p131
      %p133 = scmp.ne.s32.totalorder %s124, %s125
      %p134 = scmp.eq.s32.totalorder %s18, 0
      %p135 = por %p133, %p134
      %p136 = scmp.ne.s32.totalorder %s124, %s125
      %p137 = scmp.eq.s32.totalorder %s19, 3
      %p138 = por %p136, %p137
      %p140 = scmp.ne.s32.totalorder %s125, %s139
      %p141 = scmp.eq.s32.totalorder %s19, 0
      %p142 = por %p140, %p141
      %s143 = ssub.s32 %s20, %s32
      %s144 = ssub.s32 %s21, %s28
      %s145 = sor.u32 %s143, %s144
      %p146 = scmp.eq.s32.totalorder %s145, 0
      %s148 = sadd.s32 %s147, 1
      %s149 = scalar_select %p146, %s147, %s148
      %p152 = pneg %p146
      %p153 = scmp.eq.s32.totalorder %s13, 3
      %p154 = por %p152, %p153
      %p155 = scmp.ne.s32.totalorder %s147, %s150
      %p156 = scmp.eq.s32.totalorder %s13, 0
      %p157 = por %p155, %p156
      %p158 = scmp.ne.s32.totalorder %s147, %s150
      %p159 = scmp.eq.s32.totalorder %s18, 3
      %p160 = por %p158, %p159
      %p161 = scmp.ne.s32.totalorder %s150, %s151
      %p162 = scmp.eq.s32.totalorder %s18, 0
      %p163 = por %p161, %p162
      %p164 = scmp.ne.s32.totalorder %s150, %s151
      %p165 = scmp.eq.s32.totalorder %s19, 3
      %p166 = por %p164, %p165
      %p168 = scmp.ne.s32.totalorder %s151, %s167
      %p169 = scmp.eq.s32.totalorder %s19, 0
      %p170 = por %p168, %p169
      %s171 = ssub.s32 %s20, %s32
      %s172 = ssub.s32 %s21, %s28
      %s173 = sor.u32 %s171, %s172
      %p174 = scmp.eq.s32.totalorder %s173, 0
      %s176 = sadd.s32 %s175, 1
      %s177 = scalar_select %p174, %s175, %s176
      %p180 = pneg %p174
      %p181 = scmp.eq.s32.totalorder %s13, 3
      %p182 = por %p180, %p181
      %p183 = scmp.ne.s32.totalorder %s175, %s178
      %p184 = scmp.eq.s32.totalorder %s13, 0
      %p185 = por %p183, %p184
      %p186 = scmp.ne.s32.totalorder %s175, %s178
      %p187 = scmp.eq.s32.totalorder %s18, 3
      %p188 = por %p186, %p187
      %p189 = scmp.ne.s32.totalorder %s178, %s179
      %p190 = scmp.eq.s32.totalorder %s18, 0
      %p191 = por %p189, %p190
      %p192 = scmp.ne.s32.totalorder %s178, %s179
      %p193 = scmp.eq.s32.totalorder %s19, 3
      %p194 = por %p192, %p193
      %p196 = scmp.ne.s32.totalorder %s179, %s195
      %p197 = scmp.eq.s32.totalorder %s19, 0
      %p198 = por %p196, %p197
      %p199 = scmp.le.s32.totalorder 1, %s13
      %p200 = scmp.lt.s32.totalorder %s13, 5
      %p201 = pnand %p199, %p200
      %p202 = pneg %p201
      // Predicated region
      $region9: #{tpu_custom_call.1} parent=5 // pred_check
        _
      $region10: #{tpu_custom_call.1} parent=5 // pred_check_branch
        %204 = sbr.rel (%p201) target = $region12
      $region11: #{tpu_custom_call.1} parent=5 // pred_region
        %s205 = ssub.s32 %s13, 1
        // Predicated region
        $region13: #{tpu_custom_call.1} parent=11 // pred_check
          %p206 = pneg %p72
        $region14: #{tpu_custom_call.1} parent=11 // pred_check_branch
          %208 = sbr.rel (%p206) target = $region16
        $region15: #{tpu_custom_call.1} parent=11 // pred_region
          _
        $region16: #{tpu_custom_call.1} parent=11 // pred_fallthru
          _
        // Predicated region
        $region17: #{tpu_custom_call.1} parent=11 // pred_check
          %p209 = pneg %p93
        $region18: #{tpu_custom_call.1} parent=11 // pred_check_branch
          %211 = sbr.rel (%p209) target = $region20
        $region19: #{tpu_custom_call.1} parent=11 // pred_region
          _
        $region20: #{tpu_custom_call.1} parent=11 // pred_fallthru
          _
        // Predicated region
        $region21: #{tpu_custom_call.1} parent=11 // pred_check
          %p212 = pneg %p114
        $region22: #{tpu_custom_call.1} parent=11 // pred_check_branch
          %214 = sbr.rel (%p212) target = $region24
        $region23: #{tpu_custom_call.1} parent=11 // pred_region
          _
        $region24: #{tpu_custom_call.1} parent=11 // pred_fallthru
          _
        // Predicated region
        $region25: #{tpu_custom_call.1} parent=11 // pred_check
          %p215 = pneg %p135
        $region26: #{tpu_custom_call.1} parent=11 // pred_check_branch
          %217 = sbr.rel (%p215) target = $region28
        $region27: #{tpu_custom_call.1} parent=11 // pred_region
          _
        $region28: #{tpu_custom_call.1} parent=11 // pred_fallthru
          _
      $region12: #{tpu_custom_call.1} parent=5 // pred_fallthru
        _
      %p218 = scmp.lt.s32.totalorder %s13, 4
      // Predicated region
      $region29: #{tpu_custom_call.1} parent=5 // pred_check
        %p219 = pneg %p218
      $region30: #{tpu_custom_call.1} parent=5 // pred_check_branch
        %221 = sbr.rel (%p219) target = $region32
      $region31: #{tpu_custom_call.1} parent=5 // pred_region
        // Predicated region
        $region33: #{tpu_custom_call.1} parent=31 // pred_check
          %p222 = pneg %p45
        $region34: #{tpu_custom_call.1} parent=31 // pred_check_branch
          %224 = sbr.rel (%p222) target = $region36
        $region35: #{tpu_custom_call.1} parent=31 // pred_region
          %p225 = scmp.lt.s32.totalorder %s20, 1
          %s226 = scalar_select %p225, %s20, 1
          %s227 = smul.addr %s226, 54
          %s228 = smul.addr %s227, 8
          %s229 = scalar_lea.vmem %s0, %s228
        $region36: #{tpu_custom_call.1} parent=31 // pred_fallthru
          _
      $region32: #{tpu_custom_call.1} parent=5 // pred_fallthru
        _
      %p230 = scmp.le.s32.totalorder 1, %s13
      %p231 = scmp.lt.s32.totalorder %s13, 5
      %p232 = pnand %p230, %p231
      %p233 = pneg %p232
      // Predicated region
      $region37: #{tpu_custom_call.1} parent=5 // pred_check
        _
      $region38: #{tpu_custom_call.1} parent=5 // pred_check_branch
        %235 = sbr.rel (%p232) target = $region40
      $region39: #{tpu_custom_call.1} parent=5 // pred_region
        %s236 = ssub.s32 %s13, 1
        %p237 = scmp.lt.s32.totalorder %s22, 1
        %s238 = scalar_select %p237, %s22, 1
        %s239 = smul.addr %s238, 54
        %s240 = smul.addr %s239, 8
        %s241 = scalar_lea.vmem %s0, %s240
        %p242 = pneg %p51
        %p243 = pneg %p48
        %p244 = pneg %p72
        %p245 = pneg %p69
        %p246 = pneg %p93
        %p247 = pneg %p90
        %p248 = pneg %p114
        %p249 = pneg %p111
        %p250 = pneg %p135
        %p251 = pneg %p132
        %p252 = pneg %p163
        %p253 = pneg %p160
        %s254 = sand.u32 %s150, 1
        %s255 = sand.u32 %s150, 1
        %s256 = smul.addr %s255, 24
        %s257 = scalar_lea.vmem [#allocation2], %s256
        %p258 = pneg %p191
        %p259 = pneg %p188
        %s260 = sand.u32 %s178, 1
        %s261 = sand.u32 %s178, 1
        %s262 = smul.addr %s261, 40
        %s263 = scalar_lea.vmem [#allocation3], %s262
        %p264 = scmp.lt.s32.totalorder %s22, 1
        %s265 = scalar_select %p264, %s22, 1
        %s266 = smul.addr %s265, 54
        %s267 = smul.addr %s266, 8
        %s268 = scalar_lea.vmem %s0, %s267
        %s269 = smul.u32 %s23, 8
        %s270 = smul.u32 %s269, 24
        %s271 = scalar_lea.vmem %s268, %s270
        %v272 = vld [vmem:[%s271] sm:$0xff]
        %v273 = vld [vmem:[%s271 + $0x8] sm:$0xff]
        %v274 = vld [vmem:[%s271 + $0x18] sm:$0xff]
        %v275 = vld [vmem:[%s271 + $0x20] sm:$0xff]
        %v276 = vld [vmem:[%s271 + $0x30] sm:$0xff]
        %v277 = vld [vmem:[%s271 + $0x38] sm:$0xff]
        %v278 = vld [vmem:[%s271 + $0x48] sm:$0xff]
        %v279 = vld [vmem:[%s271 + $0x50] sm:$0xff]
        %v280 = vld [vmem:[%s271 + $0x60] sm:$0xff]
        %v281 = vld [vmem:[%s271 + $0x68] sm:$0xff]
        %v282 = vld [vmem:[%s271 + $0x78] sm:$0xff]
        %v283 = vld [vmem:[%s271 + $0x80] sm:$0xff]
        %v284 = vld [vmem:[%s271 + $0x90] sm:$0xff]
        %v285 = vld [vmem:[%s271 + $0x98] sm:$0xff]
        %v286 = vld [vmem:[%s271 + $0xa8] sm:$0xff]
        %v287 = vld [vmem:[%s271 + $0xb0] sm:$0xff]
        %v288 = vld [vmem:[%s1] sm:$0xff]
        %v289 = vld [vmem:[%s271 + $0x1] sm:$0xff]
        %v290 = vld [vmem:[%s271 + $0x9] sm:$0xff]
        %v291 = vld [vmem:[%s271 + $0x19] sm:$0xff]
        %v292 = vld [vmem:[%s271 + $0x21] sm:$0xff]
        %v293 = vld [vmem:[%s271 + $0x31] sm:$0xff]
        %v294 = vld [vmem:[%s271 + $0x39] sm:$0xff]
        %v295 = vld [vmem:[%s271 + $0x49] sm:$0xff]
        %v296 = vld [vmem:[%s271 + $0x51] sm:$0xff]
        %v297 = vld [vmem:[%s271 + $0x61] sm:$0xff]
        %v298 = vld [vmem:[%s271 + $0x69] sm:$0xff]
        %v299 = vld [vmem:[%s271 + $0x79] sm:$0xff]
        %v300 = vld [vmem:[%s271 + $0x81] sm:$0xff]
        %v301 = vld [vmem:[%s271 + $0x91] sm:$0xff]
        %v302 = vld [vmem:[%s271 + $0x99] sm:$0xff]
        %v303 = vld [vmem:[%s271 + $0xa9] sm:$0xff]
        %v304 = vld [vmem:[%s271 + $0xb1] sm:$0xff]
        %s305 = scalar_lea.vmem %s1, 32
        %v306 = vld [vmem:[%s305] sm:$0xff]
        %vm307 = vcmask 64512
        %v309 = vsel %vm307, %v289, 0
        %v312 = vsel %vm307, %v290, 0
        %v315 = vsel %vm307, %v291, 0
        %v318 = vsel %vm307, %v292, 0
        %v321 = vsel %vm307, %v293, 0
        %v324 = vsel %vm307, %v294, 0
        %v327 = vsel %vm307, %v295, 0
        %v330 = vsel %vm307, %v296, 0
        %v333 = vsel %vm307, %v297, 0
        %v336 = vsel %vm307, %v298, 0
        %v339 = vsel %vm307, %v299, 0
        %v342 = vsel %vm307, %v300, 0
        %v345 = vsel %vm307, %v301, 0
        %v348 = vsel %vm307, %v302, 0
        %v351 = vsel %vm307, %v303, 0
        %v354 = vsel %vm307, %v304, 0
        %356 = vmatprep.subr.mxu0 0.0
        %357 = vmatpush1.msra.mxu0 %v306
        %358 = vmatprep.subr.mxu0 0.0
        %359 = vmatpush1.msra.mxu0 0.0
        %360 = vmatprep.subr.mxu0 0.0
        %361 = vmatpush1.msra.mxu0 0.0
        %362 = vmatprep.subr.mxu0 0.0
        %363 = vmatpush1.msra.mxu0 0.0
        %364 = vmatprep.subr.mxu0 0.0
        %365 = vmatpush1.msra.mxu0 0.0
        %366 = vmatprep.subr.mxu0 0.0
        %367 = vmatpush1.msra.mxu0 0.0
        %368 = vmatprep.subr.mxu0 0.0
        %369 = vmatpush1.msra.mxu0 0.0
        %370 = vmatprep.subr.mxu0 0.0
        %371 = vmatpush1.msra.mxu0 0.0
        %372 = vmatprep.subr.mxu0 0.0
        %373 = vmatpush1.msra.mxu0 0.0
        %374 = vmatprep.subr.mxu0 0.0
        %375 = vmatpush1.msra.mxu0 0.0
        %376 = vmatprep.subr.mxu0 0.0
        %377 = vmatpush1.msra.mxu0 0.0
        %378 = vmatprep.subr.mxu0 0.0
        %379 = vmatpush1.msra.mxu0 0.0
        %380 = vmatprep.subr.mxu0 0.0
        %381 = vmatpush1.msra.mxu0 0.0
        %382 = vmatprep.subr.mxu0 0.0
        %383 = vmatpush1.msra.mxu0 0.0
        %384 = vmatprep.subr.mxu0 0.0
        %385 = vmatpush1.msra.mxu0 0.0
        %386 = vmatprep.subr.mxu0 0.0
        %387 = vmatpush1.msra.mxu0 0.0
        %388 = vmatprep.subr.mxu0 0.0
        %389 = vmatpush1.msra.mxu0 0.0
        %390 = vmatprep.subr.mxu0 0.0
        %391 = vmatpush1.msra.mxu0 0.0
        %392 = vmatprep.subr.mxu0 0.0
        %393 = vmatpush1.msra.mxu0 0.0
        %394 = vmatprep.subr.mxu0 0.0
        %395 = vmatpush1.msra.mxu0 0.0
        %396 = vmatprep.subr.mxu0 0.0
        %397 = vmatpush1.msra.mxu0 0.0
        %398 = vmatprep.subr.mxu0 0.0
        %399 = vmatpush1.msra.mxu0 0.0
        %400 = vmatprep.subr.mxu0 0.0
        %401 = vmatpush1.msra.mxu0 0.0
        %402 = vmatprep.subr.mxu0 0.0
        %403 = vmatpush1.msra.mxu0 0.0
        %404 = vmatprep.subr.mxu0 0.0
        %405 = vmatpush1.msra.mxu0 0.0
        %406 = vmatprep.subr.mxu0 0.0
        %407 = vmatpush1.msra.mxu0 0.0
        %408 = vmatprep.subr.mxu0 0.0
        %409 = vmatpush1.msra.mxu0 0.0
        %410 = vmatprep.subr.mxu0 0.0
        %411 = vmatpush1.msra.mxu0 0.0
        %412 = vmatprep.subr.mxu0 0.0
        %413 = vmatpush1.msra.mxu0 0.0
        %414 = vmatprep.subr.mxu0 0.0
        %415 = vmatpush1.msra.mxu0 0.0
        %416 = vmatprep.subr.mxu0 0.0
        %417 = vmatpush1.msra.mxu0 0.0
        %418 = vmatprep.subr.mxu0 0.0
        %419 = vmatpush1.msra.mxu0 0.0
        %420 = vmatprep.mubr.f32.mxu0 0.0
        %421 = vmatmul.mubr.f32.gmra.mrb[0].mxu0 %v309
        %v422 = vpop.f32.mrb[0].mxu0
        %v423 = vadd.f32 0.0, %v422
        %v424 = vpop.f32.mrb[0].mxu0
        %425 = vmatprep.mubr.f32.mxu0 0.0
        %426 = vmatmul.mubr.f32.gmra.mrb[0].mxu0 %v312
        %v427 = vpop.f32.mrb[0].mxu0
        %v428 = vadd.f32 0.0, %v427
        %v429 = vpop.f32.mrb[0].mxu0
        %430 = vmatprep.mubr.f32.mxu0 0.0
        %431 = vmatmul.mubr.f32.gmra.mrb[0].mxu0 %v315
        %v432 = vpop.f32.mrb[0].mxu0
        %v433 = vadd.f32 0.0, %v432
        %v434 = vpop.f32.mrb[0].mxu0
        %435 = vmatprep.mubr.f32.mxu0 0.0
        %436 = vmatmul.mubr.f32.gmra.mrb[0].mxu0 %v318
        %v437 = vpop.f32.mrb[0].mxu0
        %v438 = vadd.f32 0.0, %v437
        %v439 = vpop.f32.mrb[0].mxu0
        %440 = vmatprep.mubr.f32.mxu0 0.0
        %441 = vmatmul.mubr.f32.gmra.mrb[0].mxu0 %v321
        %v442 = vpop.f32.mrb[0].mxu0
        %v443 = vadd.f32 0.0, %v442
        %v444 = vpop.f32.mrb[0].mxu0
        %445 = vmatprep.mubr.f32.mxu0 0.0
        %446 = vmatmul.mubr.f32.gmra.mrb[0].mxu0 %v324
        %v447 = vpop.f32.mrb[0].mxu0
        %v448 = vadd.f32 0.0, %v447
        %v449 = vpop.f32.mrb[0].mxu0
        %450 = vmatprep.mubr.f32.mxu0 0.0
        %451 = vmatmul.mubr.f32.gmra.mrb[0].mxu0 %v327
        %v452 = vpop.f32.mrb[0].mxu0
        %v453 = vadd.f32 0.0, %v452
        %v454 = vpop.f32.mrb[0].mxu0
        %455 = vmatprep.mubr.f32.mxu0 0.0
        %456 = vmatmul.mubr.f32.gmra.mrb[0].mxu0 %v330
        %v457 = vpop.f32.mrb[0].mxu0
        %v458 = vadd.f32 0.0, %v457
        %v459 = vpop.f32.mrb[0].mxu0
        %460 = vmatprep.mubr.f32.mxu0 0.0
        %461 = vmatmul.mubr.f32.gmra.mrb[0].mxu0 %v333
        %v462 = vpop.f32.mrb[0].mxu0
        %v463 = vadd.f32 0.0, %v462
        %v464 = vpop.f32.mrb[0].mxu0
        %465 = vmatprep.mubr.f32.mxu0 0.0
        %466 = vmatmul.mubr.f32.gmra.mrb[0].mxu0 %v336
        %v467 = vpop.f32.mrb[0].mxu0
        %v468 = vadd.f32 0.0, %v467
        %v469 = vpop.f32.mrb[0].mxu0
        %470 = vmatprep.mubr.f32.mxu0 0.0
        %471 = vmatmul.mubr.f32.gmra.mrb[0].mxu0 %v339
        %v472 = vpop.f32.mrb[0].mxu0
        %v473 = vadd.f32 0.0, %v472
        %v474 = vpop.f32.mrb[0].mxu0
        %475 = vmatprep.mubr.f32.mxu0 0.0
        %476 = vmatmul.mubr.f32.gmra.mrb[0].mxu0 %v342
        %v477 = vpop.f32.mrb[0].mxu0
        %v478 = vadd.f32 0.0, %v477
        %v479 = vpop.f32.mrb[0].mxu0
        %480 = vmatprep.mubr.f32.mxu0 0.0
        %481 = vmatmul.mubr.f32.gmra.mrb[0].mxu0 %v345
        %v482 = vpop.f32.mrb[0].mxu0
        %v483 = vadd.f32 0.0, %v482
        %v484 = vpop.f32.mrb[0].mxu0
        %485 = vmatprep.mubr.f32.mxu0 0.0
        %486 = vmatmul.mubr.f32.gmra.mrb[0].mxu0 %v348
        %v487 = vpop.f32.mrb[0].mxu0
        %v488 = vadd.f32 0.0, %v487
        %v489 = vpop.f32.mrb[0].mxu0
        %490 = vmatprep.mubr.f32.mxu0 0.0
        %491 = vmatmul.mubr.f32.gmra.mrb[0].mxu0 %v351
        %v492 = vpop.f32.mrb[0].mxu0
        %v493 = vadd.f32 0.0, %v492
        %v494 = vpop.f32.mrb[0].mxu0
        %495 = vmatprep.mubr.f32.mxu0 0.0
        %496 = vmatmul.mubr.f32.gmra.mrb[0].mxu0 %v354
        %v497 = vpop.f32.mrb[0].mxu0
        %v498 = vadd.f32 0.0, %v497
        %v499 = vpop.f32.mrb[0].mxu0
        %500 = vdwg.mxu0
        %v502 = vsel %vm307, %v272, 0
        %v505 = vsel %vm307, %v273, 0
        %v508 = vsel %vm307, %v274, 0
        %v511 = vsel %vm307, %v275, 0
        %v514 = vsel %vm307, %v276, 0
        %v517 = vsel %vm307, %v277, 0
        %v520 = vsel %vm307, %v278, 0
        %v523 = vsel %vm307, %v279, 0
        %v526 = vsel %vm307, %v280, 0
        %v529 = vsel %vm307, %v281, 0
        %v532 = vsel %vm307, %v282, 0
        %v535 = vsel %vm307, %v283, 0
        %v538 = vsel %vm307, %v284, 0
        %v541 = vsel %vm307, %v285, 0
        %v544 = vsel %vm307, %v286, 0
        %v547 = vsel %vm307, %v287, 0
        %549 = vmatprep.subr.mxu0 0.0
        %550 = vmatpush1.msra.mxu0 %v288
        %551 = vmatprep.subr.mxu0 0.0
        %552 = vmatpush1.msra.mxu0 0.0
        %553 = vmatprep.subr.mxu0 0.0
        %554 = vmatpush1.msra.mxu0 0.0
        %555 = vmatprep.subr.mxu0 0.0
        %556 = vmatpush1.msra.mxu0 0.0
        %557 = vmatprep.subr.mxu0 0.0
        %558 = vmatpush1.msra.mxu0 0.0
        %559 = vmatprep.subr.mxu0 0.0
        %560 = vmatpush1.msra.mxu0 0.0
        %561 = vmatprep.subr.mxu0 0.0
        %562 = vmatpush1.msra.mxu0 0.0
        %563 = vmatprep.subr.mxu0 0.0
        %564 = vmatpush1.msra.mxu0 0.0
        %565 = vmatprep.subr.mxu0 0.0
        %566 = vmatpush1.msra.mxu0 0.0
        %567 = vmatprep.subr.mxu0 0.0
        %568 = vmatpush1.msra.mxu0 0.0
        %569 = vmatprep.subr.mxu0 0.0
        %570 = vmatpush1.msra.mxu0 0.0
        %571 = vmatprep.subr.mxu0 0.0
        %572 = vmatpush1.msra.mxu0 0.0
        %573 = vmatprep.subr.mxu0 0.0
        %574 = vmatpush1.msra.mxu0 0.0
        %575 = vmatprep.subr.mxu0 0.0
        %576 = vmatpush1.msra.mxu0 0.0
        %577 = vmatprep.subr.mxu0 0.0
        %578 = vmatpush1.msra.mxu0 0.0
        %579 = vmatprep.subr.mxu0 0.0
        %580 = vmatpush1.msra.mxu0 0.0
        %581 = vmatprep.subr.mxu0 0.0
        %582 = vmatpush1.msra.mxu0 0.0
        %583 = vmatprep.subr.mxu0 0.0
        %584 = vmatpush1.msra.mxu0 0.0
        %585 = vmatprep.subr.mxu0 0.0
        %586 = vmatpush1.msra.mxu0 0.0
        %587 = vmatprep.subr.mxu0 0.0
        %588 = vmatpush1.msra.mxu0 0.0
        %589 = vmatprep.subr.mxu0 0.0
        %590 = vmatpush1.msra.mxu0 0.0
        %591 = vmatprep.subr.mxu0 0.0
        %592 = vmatpush1.msra.mxu0 0.0
        %593 = vmatprep.subr.mxu0 0.0
        %594 = vmatpush1.msra.mxu0 0.0
        %595 = vmatprep.subr.mxu0 0.0
        %596 = vmatpush1.msra.mxu0 0.0
        %597 = vmatprep.subr.mxu0 0.0
        %598 = vmatpush1.msra.mxu0 0.0
        %599 = vmatprep.subr.mxu0 0.0
        %600 = vmatpush1.msra.mxu0 0.0
        %601 = vmatprep.subr.mxu0 0.0
        %602 = vmatpush1.msra.mxu0 0.0
        %603 = vmatprep.subr.mxu0 0.0
        %604 = vmatpush1.msra.mxu0 0.0
        %605 = vmatprep.subr.mxu0 0.0
        %606 = vmatpush1.msra.mxu0 0.0
        %607 = vmatprep.subr.mxu0 0.0
        %608 = vmatpush1.msra.mxu0 0.0
        %609 = vmatprep.subr.mxu0 0.0
        %610 = vmatpush1.msra.mxu0 0.0
        %611 = vmatprep.subr.mxu0 0.0
        %612 = vmatpush1.msra.mxu0 0.0
        %613 = vmatprep.mubr.f32.mxu0 0.0
        %614 = vmatmul.mubr.f32.gmra.mrb[0].mxu0 %v502
        %v615 = vpop.f32.mrb[0].mxu0
        %v616 = vadd.f32 %v423, %v615
        %v617 = vpop.f32.mrb[0].mxu0
        %618 = vmatprep.mubr.f32.mxu0 0.0
        %619 = vmatmul.mubr.f32.gmra.mrb[0].mxu0 %v505
        %v620 = vpop.f32.mrb[0].mxu0
        %v621 = vadd.f32 %v428, %v620
        %v622 = vpop.f32.mrb[0].mxu0
        %623 = vmatprep.mubr.f32.mxu0 0.0
        %624 = vmatmul.mubr.f32.gmra.mrb[0].mxu0 %v508
        %v625 = vpop.f32.mrb[0].mxu0
        %v626 = vadd.f32 %v433, %v625
        %v627 = vpop.f32.mrb[0].mxu0
        %628 = vmatprep.mubr.f32.mxu0 0.0
        %629 = vmatmul.mubr.f32.gmra.mrb[0].mxu0 %v511
        %v630 = vpop.f32.mrb[0].mxu0
        %v631 = vadd.f32 %v438, %v630
        %v632 = vpop.f32.mrb[0].mxu0
        %633 = vmatprep.mubr.f32.mxu0 0.0
        %634 = vmatmul.mubr.f32.gmra.mrb[0].mxu0 %v514
        %v635 = vpop.f32.mrb[0].mxu0
        %v636 = vadd.f32 %v443, %v635
        %v637 = vpop.f32.mrb[0].mxu0
        %638 = vmatprep.mubr.f32.mxu0 0.0
        %639 = vmatmul.mubr.f32.gmra.mrb[0].mxu0 %v517
        %v640 = vpop.f32.mrb[0].mxu0
        %v641 = vadd.f32 %v448, %v640
        %v642 = vpop.f32.mrb[0].mxu0
        %643 = vmatprep.mubr.f32.mxu0 0.0
        %644 = vmatmul.mubr.f32.gmra.mrb[0].mxu0 %v520
        %v645 = vpop.f32.mrb[0].mxu0
        %v646 = vadd.f32 %v453, %v645
        %v647 = vpop.f32.mrb[0].mxu0
        %648 = vmatprep.mubr.f32.mxu0 0.0
        %649 = vmatmul.mubr.f32.gmra.mrb[0].mxu0 %v523
        %v650 = vpop.f32.mrb[0].mxu0
        %v651 = vadd.f32 %v458, %v650
        %v652 = vpop.f32.mrb[0].mxu0
        %653 = vmatprep.mubr.f32.mxu0 0.0
        %654 = vmatmul.mubr.f32.gmra.mrb[0].mxu0 %v526
        %v655 = vpop.f32.mrb[0].mxu0
        %v656 = vadd.f32 %v463, %v655
        %v657 = vpop.f32.mrb[0].mxu0
        %658 = vmatprep.mubr.f32.mxu0 0.0
        %659 = vmatmul.mubr.f32.gmra.mrb[0].mxu0 %v529
        %v660 = vpop.f32.mrb[0].mxu0
        %v661 = vadd.f32 %v468, %v660
        %v662 = vpop.f32.mrb[0].mxu0
        %663 = vmatprep.mubr.f32.mxu0 0.0
        %664 = vmatmul.mubr.f32.gmra.mrb[0].mxu0 %v532
        %v665 = vpop.f32.mrb[0].mxu0
        %v666 = vadd.f32 %v473, %v665
        %v667 = vpop.f32.mrb[0].mxu0
        %668 = vmatprep.mubr.f32.mxu0 0.0
        %669 = vmatmul.mubr.f32.gmra.mrb[0].mxu0 %v535
        %v670 = vpop.f32.mrb[0].mxu0
        %v671 = vadd.f32 %v478, %v670
        %v672 = vpop.f32.mrb[0].mxu0
        %673 = vmatprep.mubr.f32.mxu0 0.0
        %674 = vmatmul.mubr.f32.gmra.mrb[0].mxu0 %v538
        %v675 = vpop.f32.mrb[0].mxu0
        %v676 = vadd.f32 %v483, %v675
        %v677 = vpop.f32.mrb[0].mxu0
        %678 = vmatprep.mubr.f32.mxu0 0.0
        %679 = vmatmul.mubr.f32.gmra.mrb[0].mxu0 %v541
        %v680 = vpop.f32.mrb[0].mxu0
        %v681 = vadd.f32 %v488, %v680
        %v682 = vpop.f32.mrb[0].mxu0
        %683 = vmatprep.mubr.f32.mxu0 0.0
        %684 = vmatmul.mubr.f32.gmra.mrb[0].mxu0 %v544
        %v685 = vpop.f32.mrb[0].mxu0
        %v686 = vadd.f32 %v493, %v685
        %v687 = vpop.f32.mrb[0].mxu0
        %688 = vmatprep.mubr.f32.mxu0 0.0
        %689 = vmatmul.mubr.f32.gmra.mrb[0].mxu0 %v547
        %v690 = vpop.f32.mrb[0].mxu0
        %v691 = vadd.f32 %v498, %v690
        %v692 = vpop.f32.mrb[0].mxu0
        %693 = vdwg.mxu0
        %v694 = vld [vmem:[%s271 + $0x2] sm:$0xff]
        %v695 = vld [vmem:[%s271 + $0xa] sm:$0xff]
        %v696 = vld [vmem:[%s271 + $0x1a] sm:$0xff]
        %v697 = vld [vmem:[%s271 + $0x22] sm:$0xff]
        %v698 = vld [vmem:[%s271 + $0x32] sm:$0xff]
        %v699 = vld [vmem:[%s271 + $0x3a] sm:$0xff]
        %v700 = vld [vmem:[%s271 + $0x4a] sm:$0xff]
        %v701 = vld [vmem:[%s271 + $0x52] sm:$0xff]
        %v702 = vld [vmem:[%s271 + $0x62] sm:$0xff]
        %v703 = vld [vmem:[%s271 + $0x6a] sm:$0xff]
        %v704 = vld [vmem:[%s271 + $0x7a] sm:$0xff]
        %v705 = vld [vmem:[%s271 + $0x82] sm:$0xff]
        %v706 = vld [vmem:[%s271 + $0x92] sm:$0xff]
        %v707 = vld [vmem:[%s271 + $0x9a] sm:$0xff]
        %v708 = vld [vmem:[%s271 + $0xaa] sm:$0xff]
        %v709 = vld [vmem:[%s271 + $0xb2] sm:$0xff]
        %s710 = scalar_lea.vmem %s1, 64
        %v711 = vld [vmem:[%s710] sm:$0xff]
        %v713 = vsel %vm307, %v694, 0
        %v716 = vsel %vm307, %v695, 0
        %v719 = vsel %vm307, %v696, 0
        %v722 = vsel %vm307, %v697, 0
        %v725 = vsel %vm307, %v698, 0
        %v728 = vsel %vm307, %v699, 0
        %v731 = vsel %vm307, %v700, 0
        %v734 = vsel %vm307, %v701, 0
        %v737 = vsel %vm307, %v702, 0
        %v740 = vsel %vm307, %v703, 0
        %v743 = vsel %vm307, %v704, 0
        %v746 = vsel %vm307, %v705, 0
        %v749 = vsel %vm307, %v706, 0
        %v752 = vsel %vm307, %v707, 0
        %v755 = vsel %vm307, %v708, 0
        %v758 = vsel %vm307, %v709, 0
        %760 = vmatprep.subr.mxu0 0.0
        %761 = vmatpush1.msra.mxu0 %v711
        %762 = vmatprep.subr.mxu0 0.0
        %763 = vmatpush1.msra.mxu0 0.0
        %764 = vmatprep.subr.mxu0 0.0
        %765 = vmatpush1.msra.mxu0 0.0
        %766 = vmatprep.subr.mxu0 0.0
        %767 = vmatpush1.msra.mxu0 0.0
        %768 = vmatprep.subr.mxu0 0.0
        %769 = vmatpush1.msra.mxu0 0.0
        %770 = vmatprep.subr.mxu0 0.0
        %771 = vmatpush1.msra.mxu0 0.0
        %772 = vmatprep.subr.mxu0 0.0
        %773 = vmatpush1.msra.mxu0 0.0
        %774 = vmatprep.subr.mxu0 0.0
        %775 = vmatpush1.msra.mxu0 0.0
        %776 = vmatprep.subr.mxu0 0.0
        %777 = vmatpush1.msra.mxu0 0.0
        %778 = vmatprep.subr.mxu0 0.0
        %779 = vmatpush1.msra.mxu0 0.0
        %780 = vmatprep.subr.mxu0 0.0
        %781 = vmatpush1.msra.mxu0 0.0
        %782 = vmatprep.subr.mxu0 0.0
        %783 = vmatpush1.msra.mxu0 0.0
        %784 = vmatprep.subr.mxu0 0.0
        %785 = vmatpush1.msra.mxu0 0.0
        %786 = vmatprep.subr.mxu0 0.0
        %787 = vmatpush1.msra.mxu0 0.0
        %788 = vmatprep.subr.mxu0 0.0
        %789 = vmatpush1.msra.mxu0 0.0
        %790 = vmatprep.subr.mxu0 0.0
        %791 = vmatpush1.msra.mxu0 0.0
        %792 = vmatprep.subr.mxu0 0.0
        %793 = vmatpush1.msra.mxu0 0.0
        %794 = vmatprep.subr.mxu0 0.0
        %795 = vmatpush1.msra.mxu0 0.0
        %796 = vmatprep.subr.mxu0 0.0
        %797 = vmatpush1.msra.mxu0 0.0
        %798 = vmatprep.subr.mxu0 0.0
        %799 = vmatpush1.msra.mxu0 0.0
        %800 = vmatprep.subr.mxu0 0.0
        %801 = vmatpush1.msra.mxu0 0.0
        %802 = vmatprep.subr.mxu0 0.0
        %803 = vmatpush1.msra.mxu0 0.0
        %804 = vmatprep.subr.mxu0 0.0
        %805 = vmatpush1.msra.mxu0 0.0
        %806 = vmatprep.subr.mxu0 0.0
        %807 = vmatpush1.msra.mxu0 0.0
        %808 = vmatprep.subr.mxu0 0.0
        %809 = vmatpush1.msra.mxu0 0.0
        %810 = vmatprep.subr.mxu0 0.0
        %811 = vmatpush1.msra.mxu0 0.0
        %812 = vmatprep.subr.mxu0 0.0
        %813 = vmatpush1.msra.mxu0 0.0
        %814 = vmatprep.subr.mxu0 0.0
        %815 = vmatpush1.msra.mxu0 0.0
        %816 = vmatprep.subr.mxu0 0.0
        %817 = vmatpush1.msra.mxu0 0.0
        %818 = vmatprep.subr.mxu0 0.0
        %819 = vmatpush1.msra.mxu0 0.0
        %820 = vmatprep.subr.mxu0 0.0
        %821 = vmatpush1.msra.mxu0 0.0
        %822 = vmatprep.subr.mxu0 0.0
        %823 = vmatpush1.msra.mxu0 0.0
        %824 = vmatprep.mubr.f32.mxu0 0.0
        %825 = vmatmul.mubr.f32.gmra.mrb[0].mxu0 %v713
        %v826 = vpop.f32.mrb[0].mxu0
        %v827 = vadd.f32 0.0, %v826
        %v828 = vpop.f32.mrb[0].mxu0
        %829 = vmatprep.mubr.f32.mxu0 0.0
        %830 = vmatmul.mubr.f32.gmra.mrb[0].mxu0 %v716
        %v831 = vpop.f32.mrb[0].mxu0
        %v832 = vadd.f32 0.0, %v831
        %v833 = vpop.f32.mrb[0].mxu0
        %834 = vmatprep.mubr.f32.mxu0 0.0
        %835 = vmatmul.mubr.f32.gmra.mrb[0].mxu0 %v719
        %v836 = vpop.f32.mrb[0].mxu0
        %v837 = vadd.f32 0.0, %v836
        %v838 = vpop.f32.mrb[0].mxu0
        %839 = vmatprep.mubr.f32.mxu0 0.0
        %840 = vmatmul.mubr.f32.gmra.mrb[0].mxu0 %v722
        %v841 = vpop.f32.mrb[0].mxu0
        %v842 = vadd.f32 0.0, %v841
        %v843 = vpop.f32.mrb[0].mxu0
        %844 = vmatprep.mubr.f32.mxu0 0.0
        %845 = vmatmul.mubr.f32.gmra.mrb[0].mxu0 %v725
        %v846 = vpop.f32.mrb[0].mxu0
        %v847 = vadd.f32 0.0, %v846
        %v848 = vpop.f32.mrb[0].mxu0
        %849 = vmatprep.mubr.f32.mxu0 0.0
        %850 = vmatmul.mubr.f32.gmra.mrb[0].mxu0 %v728
        %v851 = vpop.f32.mrb[0].mxu0
        %v852 = vadd.f32 0.0, %v851
        %v853 = vpop.f32.mrb[0].mxu0
        %854 = vmatprep.mubr.f32.mxu0 0.0
        %855 = vmatmul.mubr.f32.gmra.mrb[0].mxu0 %v731
        %v856 = vpop.f32.mrb[0].mxu0
        %v857 = vadd.f32 0.0, %v856
        %v858 = vpop.f32.mrb[0].mxu0
        %859 = vmatprep.mubr.f32.mxu0 0.0
        %860 = vmatmul.mubr.f32.gmra.mrb[0].mxu0 %v734
        %v861 = vpop.f32.mrb[0].mxu0
        %v862 = vadd.f32 0.0, %v861
        %v863 = vpop.f32.mrb[0].mxu0
        %864 = vmatprep.mubr.f32.mxu0 0.0
        %865 = vmatmul.mubr.f32.gmra.mrb[0].mxu0 %v737
        %v866 = vpop.f32.mrb[0].mxu0
        %v867 = vadd.f32 0.0, %v866
        %v868 = vpop.f32.mrb[0].mxu0
        %869 = vmatprep.mubr.f32.mxu0 0.0
        %870 = vmatmul.mubr.f32.gmra.mrb[0].mxu0 %v740
        %v871 = vpop.f32.mrb[0].mxu0
        %v872 = vadd.f32 0.0, %v871
        %v873 = vpop.f32.mrb[0].mxu0
        %874 = vmatprep.mubr.f32.mxu0 0.0
        %875 = vmatmul.mubr.f32.gmra.mrb[0].mxu0 %v743
        %v876 = vpop.f32.mrb[0].mxu0
        %v877 = vadd.f32 0.0, %v876
        %v878 = vpop.f32.mrb[0].mxu0
        %879 = vmatprep.mubr.f32.mxu0 0.0
        %880 = vmatmul.mubr.f32.gmra.mrb[0].mxu0 %v746
        %v881 = vpop.f32.mrb[0].mxu0
        %v882 = vadd.f32 0.0, %v881
        %v883 = vpop.f32.mrb[0].mxu0
        %884 = vmatprep.mubr.f32.mxu0 0.0
        %885 = vmatmul.mubr.f32.gmra.mrb[0].mxu0 %v749
        %v886 = vpop.f32.mrb[0].mxu0
        %v887 = vadd.f32 0.0, %v886
        %v888 = vpop.f32.mrb[0].mxu0
        %889 = vmatprep.mubr.f32.mxu0 0.0
        %890 = vmatmul.mubr.f32.gmra.mrb[0].mxu0 %v752
        %v891 = vpop.f32.mrb[0].mxu0
        %v892 = vadd.f32 0.0, %v891
        %v893 = vpop.f32.mrb[0].mxu0
        %894 = vmatprep.mubr.f32.mxu0 0.0
        %895 = vmatmul.mubr.f32.gmra.mrb[0].mxu0 %v755
        %v896 = vpop.f32.mrb[0].mxu0
        %v897 = vadd.f32 0.0, %v896
        %v898 = vpop.f32.mrb[0].mxu0
        %899 = vmatprep.mubr.f32.mxu0 0.0
        %900 = vmatmul.mubr.f32.gmra.mrb[0].mxu0 %v758
        %v901 = vpop.f32.mrb[0].mxu0
        %v902 = vadd.f32 0.0, %v901
        %v903 = vpop.f32.mrb[0].mxu0
        %904 = vdwg.mxu0
        %v905 = vadd.f32 %v616, %v827
        %v906 = vadd.f32 %v621, %v832
        %v907 = vadd.f32 %v626, %v837
        %v908 = vadd.f32 %v631, %v842
        %v909 = vadd.f32 %v636, %v847
        %v910 = vadd.f32 %v641, %v852
        %v911 = vadd.f32 %v646, %v857
        %v912 = vadd.f32 %v651, %v862
        %v913 = vadd.f32 %v656, %v867
        %v914 = vadd.f32 %v661, %v872
        %v915 = vadd.f32 %v666, %v877
        %v916 = vadd.f32 %v671, %v882
        %v917 = vadd.f32 %v676, %v887
        %v918 = vadd.f32 %v681, %v892
        %v919 = vadd.f32 %v686, %v897
        %v920 = vadd.f32 %v691, %v902
        %s921 = sadd.s32 %s269, 1
        %s922 = smul.u32 %s921, 24
        %s923 = scalar_lea.vmem %s268, %s922
        %v924 = vld [vmem:[%s923] sm:$0xff]
        %v925 = vld [vmem:[%s923 + $0x8] sm:$0xff]
        %v926 = vld [vmem:[%s923 + $0x18] sm:$0xff]
        %v927 = vld [vmem:[%s923 + $0x20] sm:$0xff]
        %v928 = vld [vmem:[%s923 + $0x30] sm:$0xff]
        %v929 = vld [vmem:[%s923 + $0x38] sm:$0xff]
        %v930 = vld [vmem:[%s923 + $0x48] sm:$0xff]
        %v931 = vld [vmem:[%s923 + $0x50] sm:$0xff]
        %v932 = vld [vmem:[%s923 + $0x60] sm:$0xff]
        %v933 = vld [vmem:[%s923 + $0x68] sm:$0xff]
        %v934 = vld [vmem:[%s923 + $0x78] sm:$0xff]
        %v935 = vld [vmem:[%s923 + $0x80] sm:$0xff]
        %v936 = vld [vmem:[%s923 + $0x90] sm:$0xff]
        %v937 = vld [vmem:[%s923 + $0x98] sm:$0xff]
        %v938 = vld [vmem:[%s923 + $0xa8] sm:$0xff]
        %v939 = vld [vmem:[%s923 + $0xb0] sm:$0xff]
        %s940 = scalar_lea.vmem %s1, 96
        %v941 = vld [vmem:[%s940] sm:$0xff]
        %v943 = vsel %vm307, %v924, 0
        %v946 = vsel %vm307, %v925, 0
        %v949 = vsel %vm307, %v926, 0
        %v952 = vsel %vm307, %v927, 0
        %v955 = vsel %vm307, %v928, 0
        %v958 = vsel %vm307, %v929, 0
        %v961 = vsel %vm307, %v930, 0
        %v964 = vsel %vm307, %v931, 0
        %v967 = vsel %vm307, %v932, 0
        %v970 = vsel %vm307, %v933, 0
        %v973 = vsel %vm307, %v934, 0
        %v976 = vsel %vm307, %v935, 0
        %v979 = vsel %vm307, %v936, 0
        %v982 = vsel %vm307, %v937, 0
        %v985 = vsel %vm307, %v938, 0
        %v988 = vsel %vm307, %v939, 0
        %990 = vmatprep.subr.mxu0 0.0
        %991 = vmatpush1.msra.mxu0 %v941
        %992 = vmatprep.subr.mxu0 0.0
        %993 = vmatpush1.msra.mxu0 0.0
        %994 = vmatprep.subr.mxu0 0.0
        %995 = vmatpush1.msra.mxu0 0.0
        %996 = vmatprep.subr.mxu0 0.0
        %997 = vmatpush1.msra.mxu0 0.0
        %998 = vmatprep.subr.mxu0 0.0
        %999 = vmatpush1.msra.mxu0 0.0
        %1000 = vmatprep.subr.mxu0 0.0
        %1001 = vmatpush1.msra.mxu0 0.0
        %1002 = vmatprep.subr.mxu0 0.0
        %1003 = vmatpush1.msra.mxu0 0.0
        %1004 = vmatprep.subr.mxu0 0.0
        %1005 = vmatpush1.msra.mxu0 0.0
        %1006 = vmatprep.subr.mxu0 0.0
        %1007 = vmatpush1.msra.mxu0 0.0
        %1008 = vmatprep.subr.mxu0 0.0
        %1009 = vmatpush1.msra.mxu0 0.0
        %1010 = vmatprep.subr.mxu0 0.0
        %1011 = vmatpush1.msra.mxu0 0.0
        %1012 = vmatprep.subr.mxu0 0.0
        %1013 = vmatpush1.msra.mxu0 0.0
        %1014 = vmatprep.subr.mxu0 0.0
        %1015 = vmatpush1.msra.mxu0 0.0
        %1016 = vmatprep.subr.mxu0 0.0
        %1017 = vmatpush1.msra.mxu0 0.0
        %1018 = vmatprep.subr.mxu0 0.0
        %1019 = vmatpush1.msra.mxu0 0.0
        %1020 = vmatprep.subr.mxu0 0.0
        %1021 = vmatpush1.msra.mxu0 0.0
        %1022 = vmatprep.subr.mxu0 0.0
        %1023 = vmatpush1.msra.mxu0 0.0
        %1024 = vmatprep.subr.mxu0 0.0
        %1025 = vmatpush1.msra.mxu0 0.0
        %1026 = vmatprep.subr.mxu0 0.0
        %1027 = vmatpush1.msra.mxu0 0.0
        %1028 = vmatprep.subr.mxu0 0.0
        %1029 = vmatpush1.msra.mxu0 0.0
        %1030 = vmatprep.subr.mxu0 0.0
        %1031 = vmatpush1.msra.mxu0 0.0
        %1032 = vmatprep.subr.mxu0 0.0
        %1033 = vmatpush1.msra.mxu0 0.0
        %1034 = vmatprep.subr.mxu0 0.0
        %1035 = vmatpush1.msra.mxu0 0.0
        %1036 = vmatprep.subr.mxu0 0.0
        %1037 = vmatpush1.msra.mxu0 0.0
        %1038 = vmatprep.subr.mxu0 0.0
        %1039 = vmatpush1.msra.mxu0 0.0
        %1040 = vmatprep.subr.mxu0 0.0
        %1041 = vmatpush1.msra.mxu0 0.0
        %1042 = vmatprep.subr.mxu0 0.0
        %1043 = vmatpush1.msra.mxu0 0.0
        %1044 = vmatprep.subr.mxu0 0.0
        %1045 = vmatpush1.msra.mxu0 0.0
        %1046 = vmatprep.subr.mxu0 0.0
        %1047 = vmatpush1.msra.mxu0 0.0
        %1048 = vmatprep.subr.mxu0 0.0
        %1049 = vmatpush1.msra.mxu0 0.0
        %1050 = vmatprep.subr.mxu0 0.0
        %1051 = vmatpush1.msra.mxu0 0.0
        %1052 = vmatprep.subr.mxu0 0.0
        %1053 = vmatpush1.msra.mxu0 0.0
        %1054 = vmatprep.mubr.f32.mxu0 0.0
        %1055 = vmatmul.mubr.f32.gmra.mrb[0].mxu0 %v943
        %v1056 = vpop.f32.mrb[0].mxu0
        %v1057 = vadd.f32 0.0, %v1056
        %v1058 = vpop.f32.mrb[0].mxu0
        %1059 = vmatprep.mubr.f32.mxu0 0.0
        %1060 = vmatmul.mubr.f32.gmra.mrb[0].mxu0 %v946
        %v1061 = vpop.f32.mrb[0].mxu0
        %v1062 = vadd.f32 0.0, %v1061
        %v1063 = vpop.f32.mrb[0].mxu0
        %1064 = vmatprep.mubr.f32.mxu0 0.0
        %1065 = vmatmul.mubr.f32.gmra.mrb[0].mxu0 %v949
        %v1066 = vpop.f32.mrb[0].mxu0
        %v1067 = vadd.f32 0.0, %v1066
        %v1068 = vpop.f32.mrb[0].mxu0
        %1069 = vmatprep.mubr.f32.mxu0 0.0
        %1070 = vmatmul.mubr.f32.gmra.mrb[0].mxu0 %v952
        %v1071 = vpop.f32.mrb[0].mxu0
        %v1072 = vadd.f32 0.0, %v1071
        %v1073 = vpop.f32.mrb[0].mxu0
        %1074 = vmatprep.mubr.f32.mxu0 0.0
        %1075 = vmatmul.mubr.f32.gmra.mrb[0].mxu0 %v955
        %v1076 = vpop.f32.mrb[0].mxu0
        %v1077 = vadd.f32 0.0, %v1076
        %v1078 = vpop.f32.mrb[0].mxu0
        %1079 = vmatprep.mubr.f32.mxu0 0.0
        %1080 = vmatmul.mubr.f32.gmra.mrb[0].mxu0 %v958
        %v1081 = vpop.f32.mrb[0].mxu0
        %v1082 = vadd.f32 0.0, %v1081
        %v1083 = vpop.f32.mrb[0].mxu0
        %1084 = vmatprep.mubr.f32.mxu0 0.0
        %1085 = vmatmul.mubr.f32.gmra.mrb[0].mxu0 %v961
        %v1086 = vpop.f32.mrb[0].mxu0
        %v1087 = vadd.f32 0.0, %v1086
        %v1088 = vpop.f32.mrb[0].mxu0
        %1089 = vmatprep.mubr.f32.mxu0 0.0
        %1090 = vmatmul.mubr.f32.gmra.mrb[0].mxu0 %v964
        %v1091 = vpop.f32.mrb[0].mxu0
        %v1092 = vadd.f32 0.0, %v1091
        %v1093 = vpop.f32.mrb[0].mxu0
        %1094 = vmatprep.mubr.f32.mxu0 0.0
        %1095 = vmatmul.mubr.f32.gmra.mrb[0].mxu0 %v967
        %v1096 = vpop.f32.mrb[0].mxu0
        %v1097 = vadd.f32 0.0, %v1096
        %v1098 = vpop.f32.mrb[0].mxu0
        %1099 = vmatprep.mubr.f32.mxu0 0.0
        %1100 = vmatmul.mubr.f32.gmra.mrb[0].mxu0 %v970
        %v1101 = vpop.f32.mrb[0].mxu0
        %v1102 = vadd.f32 0.0, %v1101
        %v1103 = vpop.f32.mrb[0].mxu0
        %1104 = vmatprep.mubr.f32.mxu0 0.0
        %1105 = vmatmul.mubr.f32.gmra.mrb[0].mxu0 %v973
        %v1106 = vpop.f32.mrb[0].mxu0
        %v1107 = vadd.f32 0.0, %v1106
        %v1108 = vpop.f32.mrb[0].mxu0
        %1109 = vmatprep.mubr.f32.mxu0 0.0
        %1110 = vmatmul.mubr.f32.gmra.mrb[0].mxu0 %v976
        %v1111 = vpop.f32.mrb[0].mxu0
        %v1112 = vadd.f32 0.0, %v1111
        %v1113 = vpop.f32.mrb[0].mxu0
        %1114 = vmatprep.mubr.f32.mxu0 0.0
        %1115 = vmatmul.mubr.f32.gmra.mrb[0].mxu0 %v979
        %v1116 = vpop.f32.mrb[0].mxu0
        %v1117 = vadd.f32 0.0, %v1116
        %v1118 = vpop.f32.mrb[0].mxu0
        %1119 = vmatprep.mubr.f32.mxu0 0.0
        %1120 = vmatmul.mubr.f32.gmra.mrb[0].mxu0 %v982
        %v1121 = vpop.f32.mrb[0].mxu0
        %v1122 = vadd.f32 0.0, %v1121
        %v1123 = vpop.f32.mrb[0].mxu0
        %1124 = vmatprep.mubr.f32.mxu0 0.0
        %1125 = vmatmul.mubr.f32.gmra.mrb[0].mxu0 %v985
        %v1126 = vpop.f32.mrb[0].mxu0
        %v1127 = vadd.f32 0.0, %v1126
        %v1128 = vpop.f32.mrb[0].mxu0
        %1129 = vmatprep.mubr.f32.mxu0 0.0
        %1130 = vmatmul.mubr.f32.gmra.mrb[0].mxu0 %v988
        %v1131 = vpop.f32.mrb[0].mxu0
        %v1132 = vadd.f32 0.0, %v1131
        %v1133 = vpop.f32.mrb[0].mxu0
        %1134 = vdwg.mxu0
        %v1135 = vadd.f32 %v905, %v1057
        %v1136 = vadd.f32 %v906, %v1062
        %v1137 = vadd.f32 %v907, %v1067
        %v1138 = vadd.f32 %v908, %v1072
        %v1139 = vadd.f32 %v909, %v1077
        %v1140 = vadd.f32 %v910, %v1082
        %v1141 = vadd.f32 %v911, %v1087
        %v1142 = vadd.f32 %v912, %v1092
        %v1143 = vadd.f32 %v913, %v1097
        %v1144 = vadd.f32 %v914, %v1102
        %v1145 = vadd.f32 %v915, %v1107
        %v1146 = vadd.f32 %v916, %v1112
        %v1147 = vadd.f32 %v917, %v1117
        %v1148 = vadd.f32 %v918, %v1122
        %v1149 = vadd.f32 %v919, %v1127
        %v1150 = vadd.f32 %v920, %v1132
        %v1151 = vld [vmem:[%s923 + $0x1] sm:$0xff]
        %v1152 = vld [vmem:[%s923 + $0x9] sm:$0xff]
        %v1153 = vld [vmem:[%s923 + $0x19] sm:$0xff]
        %v1154 = vld [vmem:[%s923 + $0x21] sm:$0xff]
        %v1155 = vld [vmem:[%s923 + $0x31] sm:$0xff]
        %v1156 = vld [vmem:[%s923 + $0x39] sm:$0xff]
        %v1157 = vld [vmem:[%s923 + $0x49] sm:$0xff]
        %v1158 = vld [vmem:[%s923 + $0x51] sm:$0xff]
        %v1159 = vld [vmem:[%s923 + $0x61] sm:$0xff]
        %v1160 = vld [vmem:[%s923 + $0x69] sm:$0xff]
        %v1161 = vld [vmem:[%s923 + $0x79] sm:$0xff]
        %v1162 = vld [vmem:[%s923 + $0x81] sm:$0xff]
        %v1163 = vld [vmem:[%s923 + $0x91] sm:$0xff]
        %v1164 = vld [vmem:[%s923 + $0x99] sm:$0xff]
        %v1165 = vld [vmem:[%s923 + $0xa9] sm:$0xff]
        %v1166 = vld [vmem:[%s923 + $0xb1] sm:$0xff]
        %s1167 = scalar_lea.vmem %s1, 128
        %v1168 = vld [vmem:[%s1167] sm:$0xff]
        %v1170 = vsel %vm307, %v1151, 0
        %v1173 = vsel %vm307, %v1152, 0
        %v1176 = vsel %vm307, %v1153, 0
        %v1179 = vsel %vm307, %v1154, 0
        %v1182 = vsel %vm307, %v1155, 0
        %v1185 = vsel %vm307, %v1156, 0
        %v1188 = vsel %vm307, %v1157, 0
        %v1191 = vsel %vm307, %v1158, 0
        %v1194 = vsel %vm307, %v1159, 0
        %v1197 = vsel %vm307, %v1160, 0
        %v1200 = vsel %vm307, %v1161, 0
        %v1203 = vsel %vm307, %v1162, 0
        %v1206 = vsel %vm307, %v1163, 0
        %v1209 = vsel %vm307, %v1164, 0
        %v1212 = vsel %vm307, %v1165, 0
        %v1215 = vsel %vm307, %v1166, 0
        %1217 = vmatprep.subr.mxu0 0.0
        %1218 = vmatpush1.msra.mxu0 %v1168
        %1219 = vmatprep.subr.mxu0 0.0
        %1220 = vmatpush1.msra.mxu0 0.0
        %1221 = vmatprep.subr.mxu0 0.0
        %1222 = vmatpush1.msra.mxu0 0.0
        %1223 = vmatprep.subr.mxu0 0.0
        %1224 = vmatpush1.msra.mxu0 0.0
        %1225 = vmatprep.subr.mxu0 0.0
        %1226 = vmatpush1.msra.mxu0 0.0
        %1227 = vmatprep.subr.mxu0 0.0
        %1228 = vmatpush1.msra.mxu0 0.0
        %1229 = vmatprep.subr.mxu0 0.0
        %1230 = vmatpush1.msra.mxu0 0.0
        %1231 = vmatprep.subr.mxu0 0.0
        %1232 = vmatpush1.msra.mxu0 0.0
        %1233 = vmatprep.subr.mxu0 0.0
        %1234 = vmatpush1.msra.mxu0 0.0
        %1235 = vmatprep.subr.mxu0 0.0
        %1236 = vmatpush1.msra.mxu0 0.0
        %1237 = vmatprep.subr.mxu0 0.0
        %1238 = vmatpush1.msra.mxu0 0.0
        %1239 = vmatprep.subr.mxu0 0.0
        %1240 = vmatpush1.msra.mxu0 0.0
        %1241 = vmatprep.subr.mxu0 0.0
        %1242 = vmatpush1.msra.mxu0 0.0
        %1243 = vmatprep.subr.mxu0 0.0
        %1244 = vmatpush1.msra.mxu0 0.0
        %1245 = vmatprep.subr.mxu0 0.0
        %1246 = vmatpush1.msra.mxu0 0.0
        %1247 = vmatprep.subr.mxu0 0.0
        %1248 = vmatpush1.msra.mxu0 0.0
        %1249 = vmatprep.subr.mxu0 0.0
        %1250 = vmatpush1.msra.mxu0 0.0
        %1251 = vmatprep.subr.mxu0 0.0
        %1252 = vmatpush1.msra.mxu0 0.0
        %1253 = vmatprep.subr.mxu0 0.0
        %1254 = vmatpush1.msra.mxu0 0.0
        %1255 = vmatprep.subr.mxu0 0.0
        %1256 = vmatpush1.msra.mxu0 0.0
        %1257 = vmatprep.subr.mxu0 0.0
        %1258 = vmatpush1.msra.mxu0 0.0
        %1259 = vmatprep.subr.mxu0 0.0
        %1260 = vmatpush1.msra.mxu0 0.0
        %1261 = vmatprep.subr.mxu0 0.0
        %1262 = vmatpush1.msra.mxu0 0.0
        %1263 = vmatprep.subr.mxu0 0.0
        %1264 = vmatpush1.msra.mxu0 0.0
        %1265 = vmatprep.subr.mxu0 0.0
        %1266 = vmatpush1.msra.mxu0 0.0
        %1267 = vmatprep.subr.mxu0 0.0
        %1268 = vmatpush1.msra.mxu0 0.0
        %1269 = vmatprep.subr.mxu0 0.0
        %1270 = vmatpush1.msra.mxu0 0.0
        %1271 = vmatprep.subr.mxu0 0.0
        %1272 = vmatpush1.msra.mxu0 0.0
        %1273 = vmatprep.subr.mxu0 0.0
        %1274 = vmatpush1.msra.mxu0 0.0
        %1275 = vmatprep.subr.mxu0 0.0
        %1276 = vmatpush1.msra.mxu0 0.0
        %1277 = vmatprep.subr.mxu0 0.0
        %1278 = vmatpush1.msra.mxu0 0.0
        %1279 = vmatprep.subr.mxu0 0.0
        %1280 = vmatpush1.msra.mxu0 0.0
        %1281 = vmatprep.mubr.f32.mxu0 0.0
        %1282 = vmatmul.mubr.f32.gmra.mrb[0].mxu0 %v1170
        %v1283 = vpop.f32.mrb[0].mxu0
        %v1284 = vadd.f32 0.0, %v1283
        %v1285 = vpop.f32.mrb[0].mxu0
        %1286 = vmatprep.mubr.f32.mxu0 0.0
        %1287 = vmatmul.mubr.f32.gmra.mrb[0].mxu0 %v1173
        %v1288 = vpop.f32.mrb[0].mxu0
        %v1289 = vadd.f32 0.0, %v1288
        %v1290 = vpop.f32.mrb[0].mxu0
        %1291 = vmatprep.mubr.f32.mxu0 0.0
        %1292 = vmatmul.mubr.f32.gmra.mrb[0].mxu0 %v1176
        %v1293 = vpop.f32.mrb[0].mxu0
        %v1294 = vadd.f32 0.0, %v1293
        %v1295 = vpop.f32.mrb[0].mxu0
        %1296 = vmatprep.mubr.f32.mxu0 0.0
        %1297 = vmatmul.mubr.f32.gmra.mrb[0].mxu0 %v1179
        %v1298 = vpop.f32.mrb[0].mxu0
        %v1299 = vadd.f32 0.0, %v1298
        %v1300 = vpop.f32.mrb[0].mxu0
        %1301 = vmatprep.mubr.f32.mxu0 0.0
        %1302 = vmatmul.mubr.f32.gmra.mrb[0].mxu0 %v1182
        %v1303 = vpop.f32.mrb[0].mxu0
        %v1304 = vadd.f32 0.0, %v1303
        %v1305 = vpop.f32.mrb[0].mxu0
        %1306 = vmatprep.mubr.f32.mxu0 0.0
        %1307 = vmatmul.mubr.f32.gmra.mrb[0].mxu0 %v1185
        %v1308 = vpop.f32.mrb[0].mxu0
        %v1309 = vadd.f32 0.0, %v1308
        %v1310 = vpop.f32.mrb[0].mxu0
        %1311 = vmatprep.mubr.f32.mxu0 0.0
        %1312 = vmatmul.mubr.f32.gmra.mrb[0].mxu0 %v1188
        %v1313 = vpop.f32.mrb[0].mxu0
        %v1314 = vadd.f32 0.0, %v1313
        %v1315 = vpop.f32.mrb[0].mxu0
        %1316 = vmatprep.mubr.f32.mxu0 0.0
        %1317 = vmatmul.mubr.f32.gmra.mrb[0].mxu0 %v1191
        %v1318 = vpop.f32.mrb[0].mxu0
        %v1319 = vadd.f32 0.0, %v1318
        %v1320 = vpop.f32.mrb[0].mxu0
        %1321 = vmatprep.mubr.f32.mxu0 0.0
        %1322 = vmatmul.mubr.f32.gmra.mrb[0].mxu0 %v1194
        %v1323 = vpop.f32.mrb[0].mxu0
        %v1324 = vadd.f32 0.0, %v1323
        %v1325 = vpop.f32.mrb[0].mxu0
        %1326 = vmatprep.mubr.f32.mxu0 0.0
        %1327 = vmatmul.mubr.f32.gmra.mrb[0].mxu0 %v1197
        %v1328 = vpop.f32.mrb[0].mxu0
        %v1329 = vadd.f32 0.0, %v1328
        %v1330 = vpop.f32.mrb[0].mxu0
        %1331 = vmatprep.mubr.f32.mxu0 0.0
        %1332 = vmatmul.mubr.f32.gmra.mrb[0].mxu0 %v1200
        %v1333 = vpop.f32.mrb[0].mxu0
        %v1334 = vadd.f32 0.0, %v1333
        %v1335 = vpop.f32.mrb[0].mxu0
        %1336 = vmatprep.mubr.f32.mxu0 0.0
        %1337 = vmatmul.mubr.f32.gmra.mrb[0].mxu0 %v1203
        %v1338 = vpop.f32.mrb[0].mxu0
        %v1339 = vadd.f32 0.0, %v1338
        %v1340 = vpop.f32.mrb[0].mxu0
        %1341 = vmatprep.mubr.f32.mxu0 0.0
        %1342 = vmatmul.mubr.f32.gmra.mrb[0].mxu0 %v1206
        %v1343 = vpop.f32.mrb[0].mxu0
        %v1344 = vadd.f32 0.0, %v1343
        %v1345 = vpop.f32.mrb[0].mxu0
        %1346 = vmatprep.mubr.f32.mxu0 0.0
        %1347 = vmatmul.mubr.f32.gmra.mrb[0].mxu0 %v1209
        %v1348 = vpop.f32.mrb[0].mxu0
        %v1349 = vadd.f32 0.0, %v1348
        %v1350 = vpop.f32.mrb[0].mxu0
        %1351 = vmatprep.mubr.f32.mxu0 0.0
        %1352 = vmatmul.mubr.f32.gmra.mrb[0].mxu0 %v1212
        %v1353 = vpop.f32.mrb[0].mxu0
        %v1354 = vadd.f32 0.0, %v1353
        %v1355 = vpop.f32.mrb[0].mxu0
        %1356 = vmatprep.mubr.f32.mxu0 0.0
        %1357 = vmatmul.mubr.f32.gmra.mrb[0].mxu0 %v1215
        %v1358 = vpop.f32.mrb[0].mxu0
        %v1359 = vadd.f32 0.0, %v1358
        %v1360 = vpop.f32.mrb[0].mxu0
        %1361 = vdwg.mxu0
        %v1362 = vadd.f32 %v1135, %v1284
        %v1363 = vadd.f32 %v1136, %v1289
        %v1364 = vadd.f32 %v1137, %v1294
        %v1365 = vadd.f32 %v1138, %v1299
        %v1366 = vadd.f32 %v1139, %v1304
        %v1367 = vadd.f32 %v1140, %v1309
        %v1368 = vadd.f32 %v1141, %v1314
        %v1369 = vadd.f32 %v1142, %v1319
        %v1370 = vadd.f32 %v1143, %v1324
        %v1371 = vadd.f32 %v1144, %v1329
        %v1372 = vadd.f32 %v1145, %v1334
        %v1373 = vadd.f32 %v1146, %v1339
        %v1374 = vadd.f32 %v1147, %v1344
        %v1375 = vadd.f32 %v1148, %v1349
        %v1376 = vadd.f32 %v1149, %v1354
        %v1377 = vadd.f32 %v1150, %v1359
        %v1378 = vld [vmem:[%s923 + $0x2] sm:$0xff]
        %v1379 = vld [vmem:[%s923 + $0xa] sm:$0xff]
        %v1380 = vld [vmem:[%s923 + $0x1a] sm:$0xff]
        %v1381 = vld [vmem:[%s923 + $0x22] sm:$0xff]
        %v1382 = vld [vmem:[%s923 + $0x32] sm:$0xff]
        %v1383 = vld [vmem:[%s923 + $0x3a] sm:$0xff]
        %v1384 = vld [vmem:[%s923 + $0x4a] sm:$0xff]
        %v1385 = vld [vmem:[%s923 + $0x52] sm:$0xff]
        %v1386 = vld [vmem:[%s923 + $0x62] sm:$0xff]
        %v1387 = vld [vmem:[%s923 + $0x6a] sm:$0xff]
        %v1388 = vld [vmem:[%s923 + $0x7a] sm:$0xff]
        %v1389 = vld [vmem:[%s923 + $0x82] sm:$0xff]
        %v1390 = vld [vmem:[%s923 + $0x92] sm:$0xff]
        %v1391 = vld [vmem:[%s923 + $0x9a] sm:$0xff]
        %v1392 = vld [vmem:[%s923 + $0xaa] sm:$0xff]
        %v1393 = vld [vmem:[%s923 + $0xb2] sm:$0xff]
        %s1394 = scalar_lea.vmem %s1, 160
        %v1395 = vld [vmem:[%s1394] sm:$0xff]
        %v1397 = vsel %vm307, %v1378, 0
        %v1400 = vsel %vm307, %v1379, 0
        %v1403 = vsel %vm307, %v1380, 0
        %v1406 = vsel %vm307, %v1381, 0
        %v1409 = vsel %vm307, %v1382, 0
        %v1412 = vsel %vm307, %v1383, 0
        %v1415 = vsel %vm307, %v1384, 0
        %v1418 = vsel %vm307, %v1385, 0
        %v1421 = vsel %vm307, %v1386, 0
        %v1424 = vsel %vm307, %v1387, 0
        %v1427 = vsel %vm307, %v1388, 0
        %v1430 = vsel %vm307, %v1389, 0
        %v1433 = vsel %vm307, %v1390, 0
        %v1436 = vsel %vm307, %v1391, 0
        %v1439 = vsel %vm307, %v1392, 0
        %v1442 = vsel %vm307, %v1393, 0
        %1444 = vmatprep.subr.mxu0 0.0
        %1445 = vmatpush1.msra.mxu0 %v1395
        %1446 = vmatprep.subr.mxu0 0.0
        %1447 = vmatpush1.msra.mxu0 0.0
        %1448 = vmatprep.subr.mxu0 0.0
        %1449 = vmatpush1.msra.mxu0 0.0
        %1450 = vmatprep.subr.mxu0 0.0
        %1451 = vmatpush1.msra.mxu0 0.0
        %1452 = vmatprep.subr.mxu0 0.0
        %1453 = vmatpush1.msra.mxu0 0.0
        %1454 = vmatprep.subr.mxu0 0.0
        %1455 = vmatpush1.msra.mxu0 0.0
        %1456 = vmatprep.subr.mxu0 0.0
        %1457 = vmatpush1.msra.mxu0 0.0
        %1458 = vmatprep.subr.mxu0 0.0
        %1459 = vmatpush1.msra.mxu0 0.0
        %1460 = vmatprep.subr.mxu0 0.0
        %1461 = vmatpush1.msra.mxu0 0.0
        %1462 = vmatprep.subr.mxu0 0.0
        %1463 = vmatpush1.msra.mxu0 0.0
        %1464 = vmatprep.subr.mxu0 0.0
        %1465 = vmatpush1.msra.mxu0 0.0
        %1466 = vmatprep.subr.mxu0 0.0
        %1467 = vmatpush1.msra.mxu0 0.0
        %1468 = vmatprep.subr.mxu0 0.0
        %1469 = vmatpush1.msra.mxu0 0.0
        %1470 = vmatprep.subr.mxu0 0.0
        %1471 = vmatpush1.msra.mxu0 0.0
        %1472 = vmatprep.subr.mxu0 0.0
        %1473 = vmatpush1.msra.mxu0 0.0
        %1474 = vmatprep.subr.mxu0 0.0
        %1475 = vmatpush1.msra.mxu0 0.0
        %1476 = vmatprep.subr.mxu0 0.0
        %1477 = vmatpush1.msra.mxu0 0.0
        %1478 = vmatprep.subr.mxu0 0.0
        %1479 = vmatpush1.msra.mxu0 0.0
        %1480 = vmatprep.subr.mxu0 0.0
        %1481 = vmatpush1.msra.mxu0 0.0
        %1482 = vmatprep.subr.mxu0 0.0
        %1483 = vmatpush1.msra.mxu0 0.0
        %1484 = vmatprep.subr.mxu0 0.0
        %1485 = vmatpush1.msra.mxu0 0.0
        %1486 = vmatprep.subr.mxu0 0.0
        %1487 = vmatpush1.msra.mxu0 0.0
        %1488 = vmatprep.subr.mxu0 0.0
        %1489 = vmatpush1.msra.mxu0 0.0
        %1490 = vmatprep.subr.mxu0 0.0
        %1491 = vmatpush1.msra.mxu0 0.0
        %1492 = vmatprep.subr.mxu0 0.0
        %1493 = vmatpush1.msra.mxu0 0.0
        %1494 = vmatprep.subr.mxu0 0.0
        %1495 = vmatpush1.msra.mxu0 0.0
        %1496 = vmatprep.subr.mxu0 0.0
        %1497 = vmatpush1.msra.mxu0 0.0
        %1498 = vmatprep.subr.mxu0 0.0
        %1499 = vmatpush1.msra.mxu0 0.0
        %1500 = vmatprep.subr.mxu0 0.0
        %1501 = vmatpush1.msra.mxu0 0.0
        %1502 = vmatprep.subr.mxu0 0.0
        %1503 = vmatpush1.msra.mxu0 0.0
        %1504 = vmatprep.subr.mxu0 0.0
        %1505 = vmatpush1.msra.mxu0 0.0
        %1506 = vmatprep.subr.mxu0 0.0
        %1507 = vmatpush1.msra.mxu0 0.0
        %1508 = vmatprep.mubr.f32.mxu0 0.0
        %1509 = vmatmul.mubr.f32.gmra.mrb[0].mxu0 %v1397
        %v1510 = vpop.f32.mrb[0].mxu0
        %v1511 = vadd.f32 0.0, %v1510
        %v1512 = vpop.f32.mrb[0].mxu0
        %1513 = vmatprep.mubr.f32.mxu0 0.0
        %1514 = vmatmul.mubr.f32.gmra.mrb[0].mxu0 %v1400
        %v1515 = vpop.f32.mrb[0].mxu0
        %v1516 = vadd.f32 0.0, %v1515
        %v1517 = vpop.f32.mrb[0].mxu0
        %1518 = vmatprep.mubr.f32.mxu0 0.0
        %1519 = vmatmul.mubr.f32.gmra.mrb[0].mxu0 %v1403
        %v1520 = vpop.f32.mrb[0].mxu0
        %v1521 = vadd.f32 0.0, %v1520
        %v1522 = vpop.f32.mrb[0].mxu0
        %1523 = vmatprep.mubr.f32.mxu0 0.0
        %1524 = vmatmul.mubr.f32.gmra.mrb[0].mxu0 %v1406
        %v1525 = vpop.f32.mrb[0].mxu0
        %v1526 = vadd.f32 0.0, %v1525
        %v1527 = vpop.f32.mrb[0].mxu0
        %1528 = vmatprep.mubr.f32.mxu0 0.0
        %1529 = vmatmul.mubr.f32.gmra.mrb[0].mxu0 %v1409
        %v1530 = vpop.f32.mrb[0].mxu0
        %v1531 = vadd.f32 0.0, %v1530
        %v1532 = vpop.f32.mrb[0].mxu0
        %1533 = vmatprep.mubr.f32.mxu0 0.0
        %1534 = vmatmul.mubr.f32.gmra.mrb[0].mxu0 %v1412
        %v1535 = vpop.f32.mrb[0].mxu0
        %v1536 = vadd.f32 0.0, %v1535
        %v1537 = vpop.f32.mrb[0].mxu0
        %1538 = vmatprep.mubr.f32.mxu0 0.0
        %1539 = vmatmul.mubr.f32.gmra.mrb[0].mxu0 %v1415
        %v1540 = vpop.f32.mrb[0].mxu0
        %v1541 = vadd.f32 0.0, %v1540
        %v1542 = vpop.f32.mrb[0].mxu0
        %1543 = vmatprep.mubr.f32.mxu0 0.0
        %1544 = vmatmul.mubr.f32.gmra.mrb[0].mxu0 %v1418
        %v1545 = vpop.f32.mrb[0].mxu0
        %v1546 = vadd.f32 0.0, %v1545
        %v1547 = vpop.f32.mrb[0].mxu0
        %1548 = vmatprep.mubr.f32.mxu0 0.0
        %1549 = vmatmul.mubr.f32.gmra.mrb[0].mxu0 %v1421
        %v1550 = vpop.f32.mrb[0].mxu0
        %v1551 = vadd.f32 0.0, %v1550
        %v1552 = vpop.f32.mrb[0].mxu0
        %1553 = vmatprep.mubr.f32.mxu0 0.0
        %1554 = vmatmul.mubr.f32.gmra.mrb[0].mxu0 %v1424
        %v1555 = vpop.f32.mrb[0].mxu0
        %v1556 = vadd.f32 0.0, %v1555
        %v1557 = vpop.f32.mrb[0].mxu0
        %1558 = vmatprep.mubr.f32.mxu0 0.0
        %1559 = vmatmul.mubr.f32.gmra.mrb[0].mxu0 %v1427
        %v1560 = vpop.f32.mrb[0].mxu0
        %v1561 = vadd.f32 0.0, %v1560
        %v1562 = vpop.f32.mrb[0].mxu0
        %1563 = vmatprep.mubr.f32.mxu0 0.0
        %1564 = vmatmul.mubr.f32.gmra.mrb[0].mxu0 %v1430
        %v1565 = vpop.f32.mrb[0].mxu0
        %v1566 = vadd.f32 0.0, %v1565
        %v1567 = vpop.f32.mrb[0].mxu0
        %1568 = vmatprep.mubr.f32.mxu0 0.0
        %1569 = vmatmul.mubr.f32.gmra.mrb[0].mxu0 %v1433
        %v1570 = vpop.f32.mrb[0].mxu0
        %v1571 = vadd.f32 0.0, %v1570
        %v1572 = vpop.f32.mrb[0].mxu0
        %1573 = vmatprep.mubr.f32.mxu0 0.0
        %1574 = vmatmul.mubr.f32.gmra.mrb[0].mxu0 %v1436
        %v1575 = vpop.f32.mrb[0].mxu0
        %v1576 = vadd.f32 0.0, %v1575
        %v1577 = vpop.f32.mrb[0].mxu0
        %1578 = vmatprep.mubr.f32.mxu0 0.0
        %1579 = vmatmul.mubr.f32.gmra.mrb[0].mxu0 %v1439
        %v1580 = vpop.f32.mrb[0].mxu0
        %v1581 = vadd.f32 0.0, %v1580
        %v1582 = vpop.f32.mrb[0].mxu0
        %1583 = vmatprep.mubr.f32.mxu0 0.0
        %1584 = vmatmul.mubr.f32.gmra.mrb[0].mxu0 %v1442
        %v1585 = vpop.f32.mrb[0].mxu0
        %v1586 = vadd.f32 0.0, %v1585
        %v1587 = vpop.f32.mrb[0].mxu0
        %1588 = vdwg.mxu0
        %v1589 = vadd.f32 %v1362, %v1511
        %v1590 = vadd.f32 %v1363, %v1516
        %v1591 = vadd.f32 %v1364, %v1521
        %v1592 = vadd.f32 %v1365, %v1526
        %v1593 = vadd.f32 %v1366, %v1531
        %v1594 = vadd.f32 %v1367, %v1536
        %v1595 = vadd.f32 %v1368, %v1541
        %v1596 = vadd.f32 %v1369, %v1546
        %v1597 = vadd.f32 %v1370, %v1551
        %v1598 = vadd.f32 %v1371, %v1556
        %v1599 = vadd.f32 %v1372, %v1561
        %v1600 = vadd.f32 %v1373, %v1566
        %v1601 = vadd.f32 %v1374, %v1571
        %v1602 = vadd.f32 %v1375, %v1576
        %v1603 = vadd.f32 %v1376, %v1581
        %v1604 = vadd.f32 %v1377, %v1586
        %s1605 = sadd.s32 %s269, 2
        %s1606 = smul.u32 %s1605, 24
        %s1607 = scalar_lea.vmem %s268, %s1606
        %v1608 = vld [vmem:[%s1607] sm:$0xff]
        %v1609 = vld [vmem:[%s1607 + $0x8] sm:$0xff]
        %v1610 = vld [vmem:[%s1607 + $0x18] sm:$0xff]
        %v1611 = vld [vmem:[%s1607 + $0x20] sm:$0xff]
        %v1612 = vld [vmem:[%s1607 + $0x30] sm:$0xff]
        %v1613 = vld [vmem:[%s1607 + $0x38] sm:$0xff]
        %v1614 = vld [vmem:[%s1607 + $0x48] sm:$0xff]
        %v1615 = vld [vmem:[%s1607 + $0x50] sm:$0xff]
        %v1616 = vld [vmem:[%s1607 + $0x60] sm:$0xff]
        %v1617 = vld [vmem:[%s1607 + $0x68] sm:$0xff]
        %v1618 = vld [vmem:[%s1607 + $0x78] sm:$0xff]
        %v1619 = vld [vmem:[%s1607 + $0x80] sm:$0xff]
        %v1620 = vld [vmem:[%s1607 + $0x90] sm:$0xff]
        %v1621 = vld [vmem:[%s1607 + $0x98] sm:$0xff]
        %v1622 = vld [vmem:[%s1607 + $0xa8] sm:$0xff]
        %v1623 = vld [vmem:[%s1607 + $0xb0] sm:$0xff]
        %s1624 = scalar_lea.vmem %s1, 192
        %v1625 = vld [vmem:[%s1624] sm:$0xff]
        %v1627 = vsel %vm307, %v1608, 0
        %v1630 = vsel %vm307, %v1609, 0
        %v1633 = vsel %vm307, %v1610, 0
        %v1636 = vsel %vm307, %v1611, 0
        %v1639 = vsel %vm307, %v1612, 0
        %v1642 = vsel %vm307, %v1613, 0
        %v1645 = vsel %vm307, %v1614, 0
        %v1648 = vsel %vm307, %v1615, 0
        %v1651 = vsel %vm307, %v1616, 0
        %v1654 = vsel %vm307, %v1617, 0
        %v1657 = vsel %vm307, %v1618, 0
        %v1660 = vsel %vm307, %v1619, 0
        %v1663 = vsel %vm307, %v1620, 0
        %v1666 = vsel %vm307, %v1621, 0
        %v1669 = vsel %vm307, %v1622, 0
        %v1672 = vsel %vm307, %v1623, 0
        %1674 = vmatprep.subr.mxu0 0.0
        %1675 = vmatpush1.msra.mxu0 %v1625
        %1676 = vmatprep.subr.mxu0 0.0
        %1677 = vmatpush1.msra.mxu0 0.0
        %1678 = vmatprep.subr.mxu0 0.0
        %1679 = vmatpush1.msra.mxu0 0.0
        %1680 = vmatprep.subr.mxu0 0.0
        %1681 = vmatpush1.msra.mxu0 0.0
        %1682 = vmatprep.subr.mxu0 0.0
        %1683 = vmatpush1.msra.mxu0 0.0
        %1684 = vmatprep.subr.mxu0 0.0
        %1685 = vmatpush1.msra.mxu0 0.0
        %1686 = vmatprep.subr.mxu0 0.0
        %1687 = vmatpush1.msra.mxu0 0.0
        %1688 = vmatprep.subr.mxu0 0.0
        %1689 = vmatpush1.msra.mxu0 0.0
        %1690 = vmatprep.subr.mxu0 0.0
        %1691 = vmatpush1.msra.mxu0 0.0
        %1692 = vmatprep.subr.mxu0 0.0
        %1693 = vmatpush1.msra.mxu0 0.0
        %1694 = vmatprep.subr.mxu0 0.0
        %1695 = vmatpush1.msra.mxu0 0.0
        %1696 = vmatprep.subr.mxu0 0.0
        %1697 = vmatpush1.msra.mxu0 0.0
        %1698 = vmatprep.subr.mxu0 0.0
        %1699 = vmatpush1.msra.mxu0 0.0
        %1700 = vmatprep.subr.mxu0 0.0
        %1701 = vmatpush1.msra.mxu0 0.0
        %1702 = vmatprep.subr.mxu0 0.0
        %1703 = vmatpush1.msra.mxu0 0.0
        %1704 = vmatprep.subr.mxu0 0.0
        %1705 = vmatpush1.msra.mxu0 0.0
        %1706 = vmatprep.subr.mxu0 0.0
        %1707 = vmatpush1.msra.mxu0 0.0
        %1708 = vmatprep.subr.mxu0 0.0
        %1709 = vmatpush1.msra.mxu0 0.0
        %1710 = vmatprep.subr.mxu0 0.0
        %1711 = vmatpush1.msra.mxu0 0.0
        %1712 = vmatprep.subr.mxu0 0.0
        %1713 = vmatpush1.msra.mxu0 0.0
        %1714 = vmatprep.subr.mxu0 0.0
        %1715 = vmatpush1.msra.mxu0 0.0
        %1716 = vmatprep.subr.mxu0 0.0
        %1717 = vmatpush1.msra.mxu0 0.0
        %1718 = vmatprep.subr.mxu0 0.0
        %1719 = vmatpush1.msra.mxu0 0.0
        %1720 = vmatprep.subr.mxu0 0.0
        %1721 = vmatpush1.msra.mxu0 0.0
        %1722 = vmatprep.subr.mxu0 0.0
        %1723 = vmatpush1.msra.mxu0 0.0
        %1724 = vmatprep.subr.mxu0 0.0
        %1725 = vmatpush1.msra.mxu0 0.0
        %1726 = vmatprep.subr.mxu0 0.0
        %1727 = vmatpush1.msra.mxu0 0.0
        %1728 = vmatprep.subr.mxu0 0.0
        %1729 = vmatpush1.msra.mxu0 0.0
        %1730 = vmatprep.subr.mxu0 0.0
        %1731 = vmatpush1.msra.mxu0 0.0
        %1732 = vmatprep.subr.mxu0 0.0
        %1733 = vmatpush1.msra.mxu0 0.0
        %1734 = vmatprep.subr.mxu0 0.0
        %1735 = vmatpush1.msra.mxu0 0.0
        %1736 = vmatprep.subr.mxu0 0.0
        %1737 = vmatpush1.msra.mxu0 0.0
        %1738 = vmatprep.mubr.f32.mxu0 0.0
        %1739 = vmatmul.mubr.f32.gmra.mrb[0].mxu0 %v1627
        %v1740 = vpop.f32.mrb[0].mxu0
        %v1741 = vadd.f32 0.0, %v1740
        %v1742 = vpop.f32.mrb[0].mxu0
        %1743 = vmatprep.mubr.f32.mxu0 0.0
        %1744 = vmatmul.mubr.f32.gmra.mrb[0].mxu0 %v1630
        %v1745 = vpop.f32.mrb[0].mxu0
        %v1746 = vadd.f32 0.0, %v1745
        %v1747 = vpop.f32.mrb[0].mxu0
        %1748 = vmatprep.mubr.f32.mxu0 0.0
        %1749 = vmatmul.mubr.f32.gmra.mrb[0].mxu0 %v1633
        %v1750 = vpop.f32.mrb[0].mxu0
        %v1751 = vadd.f32 0.0, %v1750
        %v1752 = vpop.f32.mrb[0].mxu0
        %1753 = vmatprep.mubr.f32.mxu0 0.0
        %1754 = vmatmul.mubr.f32.gmra.mrb[0].mxu0 %v1636
        %v1755 = vpop.f32.mrb[0].mxu0
        %v1756 = vadd.f32 0.0, %v1755
        %v1757 = vpop.f32.mrb[0].mxu0
        %1758 = vmatprep.mubr.f32.mxu0 0.0
        %1759 = vmatmul.mubr.f32.gmra.mrb[0].mxu0 %v1639
        %v1760 = vpop.f32.mrb[0].mxu0
        %v1761 = vadd.f32 0.0, %v1760
        %v1762 = vpop.f32.mrb[0].mxu0
        %1763 = vmatprep.mubr.f32.mxu0 0.0
        %1764 = vmatmul.mubr.f32.gmra.mrb[0].mxu0 %v1642
        %v1765 = vpop.f32.mrb[0].mxu0
        %v1766 = vadd.f32 0.0, %v1765
        %v1767 = vpop.f32.mrb[0].mxu0
        %1768 = vmatprep.mubr.f32.mxu0 0.0
        %1769 = vmatmul.mubr.f32.gmra.mrb[0].mxu0 %v1645
        %v1770 = vpop.f32.mrb[0].mxu0
        %v1771 = vadd.f32 0.0, %v1770
        %v1772 = vpop.f32.mrb[0].mxu0
        %1773 = vmatprep.mubr.f32.mxu0 0.0
        %1774 = vmatmul.mubr.f32.gmra.mrb[0].mxu0 %v1648
        %v1775 = vpop.f32.mrb[0].mxu0
        %v1776 = vadd.f32 0.0, %v1775
        %v1777 = vpop.f32.mrb[0].mxu0
        %1778 = vmatprep.mubr.f32.mxu0 0.0
        %1779 = vmatmul.mubr.f32.gmra.mrb[0].mxu0 %v1651
        %v1780 = vpop.f32.mrb[0].mxu0
        %v1781 = vadd.f32 0.0, %v1780
        %v1782 = vpop.f32.mrb[0].mxu0
        %1783 = vmatprep.mubr.f32.mxu0 0.0
        %1784 = vmatmul.mubr.f32.gmra.mrb[0].mxu0 %v1654
        %v1785 = vpop.f32.mrb[0].mxu0
        %v1786 = vadd.f32 0.0, %v1785
        %v1787 = vpop.f32.mrb[0].mxu0
        %1788 = vmatprep.mubr.f32.mxu0 0.0
        %1789 = vmatmul.mubr.f32.gmra.mrb[0].mxu0 %v1657
        %v1790 = vpop.f32.mrb[0].mxu0
        %v1791 = vadd.f32 0.0, %v1790
        %v1792 = vpop.f32.mrb[0].mxu0
        %1793 = vmatprep.mubr.f32.mxu0 0.0
        %1794 = vmatmul.mubr.f32.gmra.mrb[0].mxu0 %v1660
        %v1795 = vpop.f32.mrb[0].mxu0
        %v1796 = vadd.f32 0.0, %v1795
        %v1797 = vpop.f32.mrb[0].mxu0
        %1798 = vmatprep.mubr.f32.mxu0 0.0
        %1799 = vmatmul.mubr.f32.gmra.mrb[0].mxu0 %v1663
        %v1800 = vpop.f32.mrb[0].mxu0
        %v1801 = vadd.f32 0.0, %v1800
        %v1802 = vpop.f32.mrb[0].mxu0
        %1803 = vmatprep.mubr.f32.mxu0 0.0
        %1804 = vmatmul.mubr.f32.gmra.mrb[0].mxu0 %v1666
        %v1805 = vpop.f32.mrb[0].mxu0
        %v1806 = vadd.f32 0.0, %v1805
        %v1807 = vpop.f32.mrb[0].mxu0
        %1808 = vmatprep.mubr.f32.mxu0 0.0
        %1809 = vmatmul.mubr.f32.gmra.mrb[0].mxu0 %v1669
        %v1810 = vpop.f32.mrb[0].mxu0
        %v1811 = vadd.f32 0.0, %v1810
        %v1812 = vpop.f32.mrb[0].mxu0
        %1813 = vmatprep.mubr.f32.mxu0 0.0
        %1814 = vmatmul.mubr.f32.gmra.mrb[0].mxu0 %v1672
        %v1815 = vpop.f32.mrb[0].mxu0
        %v1816 = vadd.f32 0.0, %v1815
        %v1817 = vpop.f32.mrb[0].mxu0
        %1818 = vdwg.mxu0
        %v1819 = vadd.f32 %v1589, %v1741
        %v1820 = vadd.f32 %v1590, %v1746
        %v1821 = vadd.f32 %v1591, %v1751
        %v1822 = vadd.f32 %v1592, %v1756
        %v1823 = vadd.f32 %v1593, %v1761
        %v1824 = vadd.f32 %v1594, %v1766
        %v1825 = vadd.f32 %v1595, %v1771
        %v1826 = vadd.f32 %v1596, %v1776
        %v1827 = vadd.f32 %v1597, %v1781
        %v1828 = vadd.f32 %v1598, %v1786
        %v1829 = vadd.f32 %v1599, %v1791
        %v1830 = vadd.f32 %v1600, %v1796
        %v1831 = vadd.f32 %v1601, %v1801
        %v1832 = vadd.f32 %v1602, %v1806
        %v1833 = vadd.f32 %v1603, %v1811
        %v1834 = vadd.f32 %v1604, %v1816
        %v1835 = vld [vmem:[%s1607 + $0x1] sm:$0xff]
        %v1836 = vld [vmem:[%s1607 + $0x9] sm:$0xff]
        %v1837 = vld [vmem:[%s1607 + $0x19] sm:$0xff]
        %v1838 = vld [vmem:[%s1607 + $0x21] sm:$0xff]
        %v1839 = vld [vmem:[%s1607 + $0x31] sm:$0xff]
        %v1840 = vld [vmem:[%s1607 + $0x39] sm:$0xff]
        %v1841 = vld [vmem:[%s1607 + $0x49] sm:$0xff]
        %v1842 = vld [vmem:[%s1607 + $0x51] sm:$0xff]
        %v1843 = vld [vmem:[%s1607 + $0x61] sm:$0xff]
        %v1844 = vld [vmem:[%s1607 + $0x69] sm:$0xff]
        %v1845 = vld [vmem:[%s1607 + $0x79] sm:$0xff]
        %v1846 = vld [vmem:[%s1607 + $0x81] sm:$0xff]
        %v1847 = vld [vmem:[%s1607 + $0x91] sm:$0xff]
        %v1848 = vld [vmem:[%s1607 + $0x99] sm:$0xff]
        %v1849 = vld [vmem:[%s1607 + $0xa9] sm:$0xff]
        %v1850 = vld [vmem:[%s1607 + $0xb1] sm:$0xff]
        %s1851 = scalar_lea.vmem %s1, 224
        %v1852 = vld [vmem:[%s1851] sm:$0xff]
        %v1854 = vsel %vm307, %v1835, 0
        %v1857 = vsel %vm307, %v1836, 0
        %v1860 = vsel %vm307, %v1837, 0
        %v1863 = vsel %vm307, %v1838, 0
        %v1866 = vsel %vm307, %v1839, 0
        %v1869 = vsel %vm307, %v1840, 0
        %v1872 = vsel %vm307, %v1841, 0
        %v1875 = vsel %vm307, %v1842, 0
        %v1878 = vsel %vm307, %v1843, 0
        %v1881 = vsel %vm307, %v1844, 0
        %v1884 = vsel %vm307, %v1845, 0
        %v1887 = vsel %vm307, %v1846, 0
        %v1890 = vsel %vm307, %v1847, 0
        %v1893 = vsel %vm307, %v1848, 0
        %v1896 = vsel %vm307, %v1849, 0
        %v1899 = vsel %vm307, %v1850, 0
        %1901 = vmatprep.subr.mxu0 0.0
        %1902 = vmatpush1.msra.mxu0 %v1852
        %1903 = vmatprep.subr.mxu0 0.0
        %1904 = vmatpush1.msra.mxu0 0.0
        %1905 = vmatprep.subr.mxu0 0.0
        %1906 = vmatpush1.msra.mxu0 0.0
        %1907 = vmatprep.subr.mxu0 0.0
        %1908 = vmatpush1.msra.mxu0 0.0
        %1909 = vmatprep.subr.mxu0 0.0
        %1910 = vmatpush1.msra.mxu0 0.0
        %1911 = vmatprep.subr.mxu0 0.0
        %1912 = vmatpush1.msra.mxu0 0.0
        %1913 = vmatprep.subr.mxu0 0.0
        %1914 = vmatpush1.msra.mxu0 0.0
        %1915 = vmatprep.subr.mxu0 0.0
        %1916 = vmatpush1.msra.mxu0 0.0
        %1917 = vmatprep.subr.mxu0 0.0
        %1918 = vmatpush1.msra.mxu0 0.0
        %1919 = vmatprep.subr.mxu0 0.0
        %1920 = vmatpush1.msra.mxu0 0.0
        %1921 = vmatprep.subr.mxu0 0.0
        %1922 = vmatpush1.msra.mxu0 0.0
        %1923 = vmatprep.subr.mxu0 0.0
        %1924 = vmatpush1.msra.mxu0 0.0
        %1925 = vmatprep.subr.mxu0 0.0
        %1926 = vmatpush1.msra.mxu0 0.0
        %1927 = vmatprep.subr.mxu0 0.0
        %1928 = vmatpush1.msra.mxu0 0.0
        %1929 = vmatprep.subr.mxu0 0.0
        %1930 = vmatpush1.msra.mxu0 0.0
        %1931 = vmatprep.subr.mxu0 0.0
        %1932 = vmatpush1.msra.mxu0 0.0
        %1933 = vmatprep.subr.mxu0 0.0
        %1934 = vmatpush1.msra.mxu0 0.0
        %1935 = vmatprep.subr.mxu0 0.0
        %1936 = vmatpush1.msra.mxu0 0.0
        %1937 = vmatprep.subr.mxu0 0.0
        %1938 = vmatpush1.msra.mxu0 0.0
        %1939 = vmatprep.subr.mxu0 0.0
        %1940 = vmatpush1.msra.mxu0 0.0
        %1941 = vmatprep.subr.mxu0 0.0
        %1942 = vmatpush1.msra.mxu0 0.0
        %1943 = vmatprep.subr.mxu0 0.0
        %1944 = vmatpush1.msra.mxu0 0.0
        %1945 = vmatprep.subr.mxu0 0.0
        %1946 = vmatpush1.msra.mxu0 0.0
        %1947 = vmatprep.subr.mxu0 0.0
        %1948 = vmatpush1.msra.mxu0 0.0
        %1949 = vmatprep.subr.mxu0 0.0
        %1950 = vmatpush1.msra.mxu0 0.0
        %1951 = vmatprep.subr.mxu0 0.0
        %1952 = vmatpush1.msra.mxu0 0.0
        %1953 = vmatprep.subr.mxu0 0.0
        %1954 = vmatpush1.msra.mxu0 0.0
        %1955 = vmatprep.subr.mxu0 0.0
        %1956 = vmatpush1.msra.mxu0 0.0
        %1957 = vmatprep.subr.mxu0 0.0
        %1958 = vmatpush1.msra.mxu0 0.0
        %1959 = vmatprep.subr.mxu0 0.0
        %1960 = vmatpush1.msra.mxu0 0.0
        %1961 = vmatprep.subr.mxu0 0.0
        %1962 = vmatpush1.msra.mxu0 0.0
        %1963 = vmatprep.subr.mxu0 0.0
        %1964 = vmatpush1.msra.mxu0 0.0
        %1965 = vmatprep.mubr.f32.mxu0 0.0
        %1966 = vmatmul.mubr.f32.gmra.mrb[0].mxu0 %v1854
        %v1967 = vpop.f32.mrb[0].mxu0
        %v1968 = vadd.f32 0.0, %v1967
        %v1969 = vpop.f32.mrb[0].mxu0
        %1970 = vmatprep.mubr.f32.mxu0 0.0
        %1971 = vmatmul.mubr.f32.gmra.mrb[0].mxu0 %v1857
        %v1972 = vpop.f32.mrb[0].mxu0
        %v1973 = vadd.f32 0.0, %v1972
        %v1974 = vpop.f32.mrb[0].mxu0
        %1975 = vmatprep.mubr.f32.mxu0 0.0
        %1976 = vmatmul.mubr.f32.gmra.mrb[0].mxu0 %v1860
        %v1977 = vpop.f32.mrb[0].mxu0
        %v1978 = vadd.f32 0.0, %v1977
        %v1979 = vpop.f32.mrb[0].mxu0
        %1980 = vmatprep.mubr.f32.mxu0 0.0
        %1981 = vmatmul.mubr.f32.gmra.mrb[0].mxu0 %v1863
        %v1982 = vpop.f32.mrb[0].mxu0
        %v1983 = vadd.f32 0.0, %v1982
        %v1984 = vpop.f32.mrb[0].mxu0
        %1985 = vmatprep.mubr.f32.mxu0 0.0
        %1986 = vmatmul.mubr.f32.gmra.mrb[0].mxu0 %v1866
        %v1987 = vpop.f32.mrb[0].mxu0
        %v1988 = vadd.f32 0.0, %v1987
        %v1989 = vpop.f32.mrb[0].mxu0
        %1990 = vmatprep.mubr.f32.mxu0 0.0
        %1991 = vmatmul.mubr.f32.gmra.mrb[0].mxu0 %v1869
        %v1992 = vpop.f32.mrb[0].mxu0
        %v1993 = vadd.f32 0.0, %v1992
        %v1994 = vpop.f32.mrb[0].mxu0
        %1995 = vmatprep.mubr.f32.mxu0 0.0
        %1996 = vmatmul.mubr.f32.gmra.mrb[0].mxu0 %v1872
        %v1997 = vpop.f32.mrb[0].mxu0
        %v1998 = vadd.f32 0.0, %v1997
        %v1999 = vpop.f32.mrb[0].mxu0
        %2000 = vmatprep.mubr.f32.mxu0 0.0
        %2001 = vmatmul.mubr.f32.gmra.mrb[0].mxu0 %v1875
        %v2002 = vpop.f32.mrb[0].mxu0
        %v2003 = vadd.f32 0.0, %v2002
        %v2004 = vpop.f32.mrb[0].mxu0
        %2005 = vmatprep.mubr.f32.mxu0 0.0
        %2006 = vmatmul.mubr.f32.gmra.mrb[0].mxu0 %v1878
        %v2007 = vpop.f32.mrb[0].mxu0
        %v2008 = vadd.f32 0.0, %v2007
        %v2009 = vpop.f32.mrb[0].mxu0
        %2010 = vmatprep.mubr.f32.mxu0 0.0
        %2011 = vmatmul.mubr.f32.gmra.mrb[0].mxu0 %v1881
        %v2012 = vpop.f32.mrb[0].mxu0
        %v2013 = vadd.f32 0.0, %v2012
        %v2014 = vpop.f32.mrb[0].mxu0
        %2015 = vmatprep.mubr.f32.mxu0 0.0
        %2016 = vmatmul.mubr.f32.gmra.mrb[0].mxu0 %v1884
        %v2017 = vpop.f32.mrb[0].mxu0
        %v2018 = vadd.f32 0.0, %v2017
        %v2019 = vpop.f32.mrb[0].mxu0
        %2020 = vmatprep.mubr.f32.mxu0 0.0
        %2021 = vmatmul.mubr.f32.gmra.mrb[0].mxu0 %v1887
        %v2022 = vpop.f32.mrb[0].mxu0
        %v2023 = vadd.f32 0.0, %v2022
        %v2024 = vpop.f32.mrb[0].mxu0
        %2025 = vmatprep.mubr.f32.mxu0 0.0
        %2026 = vmatmul.mubr.f32.gmra.mrb[0].mxu0 %v1890
        %v2027 = vpop.f32.mrb[0].mxu0
        %v2028 = vadd.f32 0.0, %v2027
        %v2029 = vpop.f32.mrb[0].mxu0
        %2030 = vmatprep.mubr.f32.mxu0 0.0
        %2031 = vmatmul.mubr.f32.gmra.mrb[0].mxu0 %v1893
        %v2032 = vpop.f32.mrb[0].mxu0
        %v2033 = vadd.f32 0.0, %v2032
        %v2034 = vpop.f32.mrb[0].mxu0
        %2035 = vmatprep.mubr.f32.mxu0 0.0
        %2036 = vmatmul.mubr.f32.gmra.mrb[0].mxu0 %v1896
        %v2037 = vpop.f32.mrb[0].mxu0
        %v2038 = vadd.f32 0.0, %v2037
        %v2039 = vpop.f32.mrb[0].mxu0
        %2040 = vmatprep.mubr.f32.mxu0 0.0
        %2041 = vmatmul.mubr.f32.gmra.mrb[0].mxu0 %v1899
        %v2042 = vpop.f32.mrb[0].mxu0
        %v2043 = vadd.f32 0.0, %v2042
        %v2044 = vpop.f32.mrb[0].mxu0
        %2045 = vdwg.mxu0
        %v2046 = vadd.f32 %v1819, %v1968
        %v2047 = vadd.f32 %v1820, %v1973
        %v2048 = vadd.f32 %v1821, %v1978
        %v2049 = vadd.f32 %v1822, %v1983
        %v2050 = vadd.f32 %v1823, %v1988
        %v2051 = vadd.f32 %v1824, %v1993
        %v2052 = vadd.f32 %v1825, %v1998
        %v2053 = vadd.f32 %v1826, %v2003
        %v2054 = vadd.f32 %v1827, %v2008
        %v2055 = vadd.f32 %v1828, %v2013
        %v2056 = vadd.f32 %v1829, %v2018
        %v2057 = vadd.f32 %v1830, %v2023
        %v2058 = vadd.f32 %v1831, %v2028
        %v2059 = vadd.f32 %v1832, %v2033
        %v2060 = vadd.f32 %v1833, %v2038
        %v2061 = vadd.f32 %v1834, %v2043
        %v2062 = vld [vmem:[%s1607 + $0x2] sm:$0xff]
        %v2063 = vld [vmem:[%s1607 + $0xa] sm:$0xff]
        %v2064 = vld [vmem:[%s1607 + $0x1a] sm:$0xff]
        %v2065 = vld [vmem:[%s1607 + $0x22] sm:$0xff]
        %v2066 = vld [vmem:[%s1607 + $0x32] sm:$0xff]
        %v2067 = vld [vmem:[%s1607 + $0x3a] sm:$0xff]
        %v2068 = vld [vmem:[%s1607 + $0x4a] sm:$0xff]
        %v2069 = vld [vmem:[%s1607 + $0x52] sm:$0xff]
        %v2070 = vld [vmem:[%s1607 + $0x62] sm:$0xff]
        %v2071 = vld [vmem:[%s1607 + $0x6a] sm:$0xff]
        %v2072 = vld [vmem:[%s1607 + $0x7a] sm:$0xff]
        %v2073 = vld [vmem:[%s1607 + $0x82] sm:$0xff]
        %v2074 = vld [vmem:[%s1607 + $0x92] sm:$0xff]
        %v2075 = vld [vmem:[%s1607 + $0x9a] sm:$0xff]
        %v2076 = vld [vmem:[%s1607 + $0xaa] sm:$0xff]
        %v2077 = vld [vmem:[%s1607 + $0xb2] sm:$0xff]
        %s2078 = scalar_lea.vmem %s1, 256
        %v2079 = vld [vmem:[%s2078] sm:$0xff]
        %v2081 = vsel %vm307, %v2062, 0
        %v2084 = vsel %vm307, %v2063, 0
        %v2087 = vsel %vm307, %v2064, 0
        %v2090 = vsel %vm307, %v2065, 0
        %v2093 = vsel %vm307, %v2066, 0
        %v2096 = vsel %vm307, %v2067, 0
        %v2099 = vsel %vm307, %v2068, 0
        %v2102 = vsel %vm307, %v2069, 0
        %v2105 = vsel %vm307, %v2070, 0
        %v2108 = vsel %vm307, %v2071, 0
        %v2111 = vsel %vm307, %v2072, 0
        %v2114 = vsel %vm307, %v2073, 0
        %v2117 = vsel %vm307, %v2074, 0
        %v2120 = vsel %vm307, %v2075, 0
        %v2123 = vsel %vm307, %v2076, 0
        %v2126 = vsel %vm307, %v2077, 0
        %2128 = vmatprep.subr.mxu0 0.0
        %2129 = vmatpush1.msra.mxu0 %v2079
        %2130 = vmatprep.subr.mxu0 0.0
        %2131 = vmatpush1.msra.mxu0 0.0
        %2132 = vmatprep.subr.mxu0 0.0
        %2133 = vmatpush1.msra.mxu0 0.0
        %2134 = vmatprep.subr.mxu0 0.0
        %2135 = vmatpush1.msra.mxu0 0.0
        %2136 = vmatprep.subr.mxu0 0.0
        %2137 = vmatpush1.msra.mxu0 0.0
        %2138 = vmatprep.subr.mxu0 0.0
        %2139 = vmatpush1.msra.mxu0 0.0
        %2140 = vmatprep.subr.mxu0 0.0
        %2141 = vmatpush1.msra.mxu0 0.0
        %2142 = vmatprep.subr.mxu0 0.0
        %2143 = vmatpush1.msra.mxu0 0.0
        %2144 = vmatprep.subr.mxu0 0.0
        %2145 = vmatpush1.msra.mxu0 0.0
        %2146 = vmatprep.subr.mxu0 0.0
        %2147 = vmatpush1.msra.mxu0 0.0
        %2148 = vmatprep.subr.mxu0 0.0
        %2149 = vmatpush1.msra.mxu0 0.0
        %2150 = vmatprep.subr.mxu0 0.0
        %2151 = vmatpush1.msra.mxu0 0.0
        %2152 = vmatprep.subr.mxu0 0.0
        %2153 = vmatpush1.msra.mxu0 0.0
        %2154 = vmatprep.subr.mxu0 0.0
        %2155 = vmatpush1.msra.mxu0 0.0
        %2156 = vmatprep.subr.mxu0 0.0
        %2157 = vmatpush1.msra.mxu0 0.0
        %2158 = vmatprep.subr.mxu0 0.0
        %2159 = vmatpush1.msra.mxu0 0.0
        %2160 = vmatprep.subr.mxu0 0.0
        %2161 = vmatpush1.msra.mxu0 0.0
        %2162 = vmatprep.subr.mxu0 0.0
        %2163 = vmatpush1.msra.mxu0 0.0
        %2164 = vmatprep.subr.mxu0 0.0
        %2165 = vmatpush1.msra.mxu0 0.0
        %2166 = vmatprep.subr.mxu0 0.0
        %2167 = vmatpush1.msra.mxu0 0.0
        %2168 = vmatprep.subr.mxu0 0.0
        %2169 = vmatpush1.msra.mxu0 0.0
        %2170 = vmatprep.subr.mxu0 0.0
        %2171 = vmatpush1.msra.mxu0 0.0
        %2172 = vmatprep.subr.mxu0 0.0
        %2173 = vmatpush1.msra.mxu0 0.0
        %2174 = vmatprep.subr.mxu0 0.0
        %2175 = vmatpush1.msra.mxu0 0.0
        %2176 = vmatprep.subr.mxu0 0.0
        %2177 = vmatpush1.msra.mxu0 0.0
        %2178 = vmatprep.subr.mxu0 0.0
        %2179 = vmatpush1.msra.mxu0 0.0
        %2180 = vmatprep.subr.mxu0 0.0
        %2181 = vmatpush1.msra.mxu0 0.0
        %2182 = vmatprep.subr.mxu0 0.0
        %2183 = vmatpush1.msra.mxu0 0.0
        %2184 = vmatprep.subr.mxu0 0.0
        %2185 = vmatpush1.msra.mxu0 0.0
        %2186 = vmatprep.subr.mxu0 0.0
        %2187 = vmatpush1.msra.mxu0 0.0
        %2188 = vmatprep.subr.mxu0 0.0
        %2189 = vmatpush1.msra.mxu0 0.0
        %2190 = vmatprep.subr.mxu0 0.0
        %2191 = vmatpush1.msra.mxu0 0.0
        %2192 = vmatprep.mubr.f32.mxu0 0.0
        %2193 = vmatmul.mubr.f32.gmra.mrb[0].mxu0 %v2081
        %v2194 = vpop.f32.mrb[0].mxu0
        %v2195 = vadd.f32 0.0, %v2194
        %v2196 = vpop.f32.mrb[0].mxu0
        %2197 = vmatprep.mubr.f32.mxu0 0.0
        %2198 = vmatmul.mubr.f32.gmra.mrb[0].mxu0 %v2084
        %v2199 = vpop.f32.mrb[0].mxu0
        %v2200 = vadd.f32 0.0, %v2199
        %v2201 = vpop.f32.mrb[0].mxu0
        %2202 = vmatprep.mubr.f32.mxu0 0.0
        %2203 = vmatmul.mubr.f32.gmra.mrb[0].mxu0 %v2087
        %v2204 = vpop.f32.mrb[0].mxu0
        %v2205 = vadd.f32 0.0, %v2204
        %v2206 = vpop.f32.mrb[0].mxu0
        %2207 = vmatprep.mubr.f32.mxu0 0.0
        %2208 = vmatmul.mubr.f32.gmra.mrb[0].mxu0 %v2090
        %v2209 = vpop.f32.mrb[0].mxu0
        %v2210 = vadd.f32 0.0, %v2209
        %v2211 = vpop.f32.mrb[0].mxu0
        %2212 = vmatprep.mubr.f32.mxu0 0.0
        %2213 = vmatmul.mubr.f32.gmra.mrb[0].mxu0 %v2093
        %v2214 = vpop.f32.mrb[0].mxu0
        %v2215 = vadd.f32 0.0, %v2214
        %v2216 = vpop.f32.mrb[0].mxu0
        %2217 = vmatprep.mubr.f32.mxu0 0.0
        %2218 = vmatmul.mubr.f32.gmra.mrb[0].mxu0 %v2096
        %v2219 = vpop.f32.mrb[0].mxu0
        %v2220 = vadd.f32 0.0, %v2219
        %v2221 = vpop.f32.mrb[0].mxu0
        %2222 = vmatprep.mubr.f32.mxu0 0.0
        %2223 = vmatmul.mubr.f32.gmra.mrb[0].mxu0 %v2099
        %v2224 = vpop.f32.mrb[0].mxu0
        %v2225 = vadd.f32 0.0, %v2224
        %v2226 = vpop.f32.mrb[0].mxu0
        %2227 = vmatprep.mubr.f32.mxu0 0.0
        %2228 = vmatmul.mubr.f32.gmra.mrb[0].mxu0 %v2102
        %v2229 = vpop.f32.mrb[0].mxu0
        %v2230 = vadd.f32 0.0, %v2229
        %v2231 = vpop.f32.mrb[0].mxu0
        %2232 = vmatprep.mubr.f32.mxu0 0.0
        %2233 = vmatmul.mubr.f32.gmra.mrb[0].mxu0 %v2105
        %v2234 = vpop.f32.mrb[0].mxu0
        %v2235 = vadd.f32 0.0, %v2234
        %v2236 = vpop.f32.mrb[0].mxu0
        %2237 = vmatprep.mubr.f32.mxu0 0.0
        %2238 = vmatmul.mubr.f32.gmra.mrb[0].mxu0 %v2108
        %v2239 = vpop.f32.mrb[0].mxu0
        %v2240 = vadd.f32 0.0, %v2239
        %v2241 = vpop.f32.mrb[0].mxu0
        %2242 = vmatprep.mubr.f32.mxu0 0.0
        %2243 = vmatmul.mubr.f32.gmra.mrb[0].mxu0 %v2111
        %v2244 = vpop.f32.mrb[0].mxu0
        %v2245 = vadd.f32 0.0, %v2244
        %v2246 = vpop.f32.mrb[0].mxu0
        %2247 = vmatprep.mubr.f32.mxu0 0.0
        %2248 = vmatmul.mubr.f32.gmra.mrb[0].mxu0 %v2114
        %v2249 = vpop.f32.mrb[0].mxu0
        %v2250 = vadd.f32 0.0, %v2249
        %v2251 = vpop.f32.mrb[0].mxu0
        %2252 = vmatprep.mubr.f32.mxu0 0.0
        %2253 = vmatmul.mubr.f32.gmra.mrb[0].mxu0 %v2117
        %v2254 = vpop.f32.mrb[0].mxu0
        %v2255 = vadd.f32 0.0, %v2254
        %v2256 = vpop.f32.mrb[0].mxu0
        %2257 = vmatprep.mubr.f32.mxu0 0.0
        %2258 = vmatmul.mubr.f32.gmra.mrb[0].mxu0 %v2120
        %v2259 = vpop.f32.mrb[0].mxu0
        %v2260 = vadd.f32 0.0, %v2259
        %v2261 = vpop.f32.mrb[0].mxu0
        %2262 = vmatprep.mubr.f32.mxu0 0.0
        %2263 = vmatmul.mubr.f32.gmra.mrb[0].mxu0 %v2123
        %v2264 = vpop.f32.mrb[0].mxu0
        %v2265 = vadd.f32 0.0, %v2264
        %v2266 = vpop.f32.mrb[0].mxu0
        %2267 = vmatprep.mubr.f32.mxu0 0.0
        %2268 = vmatmul.mubr.f32.gmra.mrb[0].mxu0 %v2126
        %v2269 = vpop.f32.mrb[0].mxu0
        %v2270 = vadd.f32 0.0, %v2269
        %v2271 = vpop.f32.mrb[0].mxu0
        %2272 = vdwg.mxu0
        %v2273 = vadd.f32 %v2046, %v2195
        %v2274 = vadd.f32 %v2047, %v2200
        %v2275 = vadd.f32 %v2048, %v2205
        %v2276 = vadd.f32 %v2049, %v2210
        %v2277 = vadd.f32 %v2050, %v2215
        %v2278 = vadd.f32 %v2051, %v2220
        %v2279 = vadd.f32 %v2052, %v2225
        %v2280 = vadd.f32 %v2053, %v2230
        %v2281 = vadd.f32 %v2054, %v2235
        %v2282 = vadd.f32 %v2055, %v2240
        %v2283 = vadd.f32 %v2056, %v2245
        %v2284 = vadd.f32 %v2057, %v2250
        %v2285 = vadd.f32 %v2058, %v2255
        %v2286 = vadd.f32 %v2059, %v2260
        %v2287 = vadd.f32 %v2060, %v2265
        %v2288 = vadd.f32 %v2061, %v2270
        %v2289 = vld [vmem:[%s2] sm:$0x1]
        %v2291 = vlaneseq
        %v2292 = vshrl.u32 %v2291, 7
        %v2293 = vsub.s32 0, %v2292
        %v2294 = vrot.slane %v2289, %v2293
        %v2296 = vadd.f32 %v2273, %v2294
        %v2297 = vadd.f32 %v2274, %v2294
        %v2298 = vadd.f32 %v2275, %v2294
        %v2299 = vadd.f32 %v2276, %v2294
        %v2300 = vadd.f32 %v2277, %v2294
        %v2301 = vadd.f32 %v2278, %v2294
        %v2302 = vadd.f32 %v2279, %v2294
        %v2303 = vadd.f32 %v2280, %v2294
        %v2304 = vadd.f32 %v2281, %v2294
        %v2305 = vadd.f32 %v2282, %v2294
        %v2306 = vadd.f32 %v2283, %v2294
        %v2307 = vadd.f32 %v2284, %v2294
        %v2308 = vadd.f32 %v2285, %v2294
        %v2309 = vadd.f32 %v2286, %v2294
        %v2310 = vadd.f32 %v2287, %v2294
        %v2311 = vadd.f32 %v2288, %v2294
        %v2312 = vmax.f32 %v2296, 0.0
        %v2313 = vmax.f32 %v2297, 0.0
        %v2314 = vmax.f32 %v2298, 0.0
        %v2315 = vmax.f32 %v2299, 0.0
        %v2316 = vmax.f32 %v2300, 0.0
        %v2317 = vmax.f32 %v2301, 0.0
        %v2318 = vmax.f32 %v2302, 0.0
        %v2319 = vmax.f32 %v2303, 0.0
        %v2320 = vmax.f32 %v2304, 0.0
        %v2321 = vmax.f32 %v2305, 0.0
        %v2322 = vmax.f32 %v2306, 0.0
        %v2323 = vmax.f32 %v2307, 0.0
        %v2324 = vmax.f32 %v2308, 0.0
        %v2325 = vmax.f32 %v2309, 0.0
        %v2326 = vmax.f32 %v2310, 0.0
        %v2327 = vmax.f32 %v2311, 0.0
        %v2328 = vld [vmem:[%s3] sm:$0xff]
        %v2329 = vld [vmem:[%s3 + $0x8] sm:$0xff]
        %v2330 = vld [vmem:[%s3 + $0x10] sm:$0xff]
        %v2331 = vld [vmem:[%s3 + $0x18] sm:$0xff]
        %v2332 = vld [vmem:[%s3 + $0x20] sm:$0xff]
        %v2333 = vld [vmem:[%s3 + $0x28] sm:$0xff]
        %v2334 = vld [vmem:[%s3 + $0x30] sm:$0xff]
        %v2335 = vld [vmem:[%s3 + $0x38] sm:$0xff]
        %v2336 = vld [vmem:[%s3 + $0x40] sm:$0xff]
        %v2337 = vld [vmem:[%s3 + $0x48] sm:$0xff]
        %v2338 = vld [vmem:[%s3 + $0x50] sm:$0xff]
        %v2339 = vld [vmem:[%s3 + $0x58] sm:$0xff]
        %v2340 = vld [vmem:[%s3 + $0x60] sm:$0xff]
        %v2341 = vld [vmem:[%s3 + $0x68] sm:$0xff]
        %v2342 = vld [vmem:[%s3 + $0x70] sm:$0xff]
        %v2343 = vld [vmem:[%s3 + $0x78] sm:$0xff]
        %v2344 = vld [vmem:[%s1 + $0x8] sm:$0xff]
        %v2345 = vld [vmem:[%s305 + $0x8] sm:$0xff]
        %2346 = vmatprep.subr.mxu0 0.0
        %2347 = vmatpush1.msra.mxu0 %v2345
        %2348 = vmatprep.subr.mxu0 0.0
        %2349 = vmatpush1.msra.mxu0 0.0
        %2350 = vmatprep.subr.mxu0 0.0
        %2351 = vmatpush1.msra.mxu0 0.0
        %2352 = vmatprep.subr.mxu0 0.0
        %2353 = vmatpush1.msra.mxu0 0.0
        %2354 = vmatprep.subr.mxu0 0.0
        %2355 = vmatpush1.msra.mxu0 0.0
        %2356 = vmatprep.subr.mxu0 0.0
        %2357 = vmatpush1.msra.mxu0 0.0
        %2358 = vmatprep.subr.mxu0 0.0
        %2359 = vmatpush1.msra.mxu0 0.0
        %2360 = vmatprep.subr.mxu0 0.0
        %2361 = vmatpush1.msra.mxu0 0.0
        %2362 = vmatprep.subr.mxu0 0.0
        %2363 = vmatpush1.msra.mxu0 0.0
        %2364 = vmatprep.subr.mxu0 0.0
        %2365 = vmatpush1.msra.mxu0 0.0
        %2366 = vmatprep.subr.mxu0 0.0
        %2367 = vmatpush1.msra.mxu0 0.0
        %2368 = vmatprep.subr.mxu0 0.0
        %2369 = vmatpush1.msra.mxu0 0.0
        %2370 = vmatprep.subr.mxu0 0.0
        %2371 = vmatpush1.msra.mxu0 0.0
        %2372 = vmatprep.subr.mxu0 0.0
        %2373 = vmatpush1.msra.mxu0 0.0
        %2374 = vmatprep.subr.mxu0 0.0
        %2375 = vmatpush1.msra.mxu0 0.0
        %2376 = vmatprep.subr.mxu0 0.0
        %2377 = vmatpush1.msra.mxu0 0.0
        %2378 = vmatprep.subr.mxu0 0.0
        %2379 = vmatpush1.msra.mxu0 0.0
        %2380 = vmatprep.subr.mxu0 0.0
        %2381 = vmatpush1.msra.mxu0 0.0
        %2382 = vmatprep.subr.mxu0 0.0
        %2383 = vmatpush1.msra.mxu0 0.0
        %2384 = vmatprep.subr.mxu0 0.0
        %2385 = vmatpush1.msra.mxu0 0.0
        %2386 = vmatprep.subr.mxu0 0.0
        %2387 = vmatpush1.msra.mxu0 0.0
        %2388 = vmatprep.subr.mxu0 0.0
        %2389 = vmatpush1.msra.mxu0 0.0
        %2390 = vmatprep.subr.mxu0 0.0
        %2391 = vmatpush1.msra.mxu0 0.0
        %2392 = vmatprep.subr.mxu0 0.0
        %2393 = vmatpush1.msra.mxu0 0.0
        %2394 = vmatprep.subr.mxu0 0.0
        %2395 = vmatpush1.msra.mxu0 0.0
        %2396 = vmatprep.subr.mxu0 0.0
        %2397 = vmatpush1.msra.mxu0 0.0
        %2398 = vmatprep.subr.mxu0 0.0
        %2399 = vmatpush1.msra.mxu0 0.0
        %2400 = vmatprep.subr.mxu0 0.0
        %2401 = vmatpush1.msra.mxu0 0.0
        %2402 = vmatprep.subr.mxu0 0.0
        %2403 = vmatpush1.msra.mxu0 0.0
        %2404 = vmatprep.subr.mxu0 0.0
        %2405 = vmatpush1.msra.mxu0 0.0
        %2406 = vmatprep.subr.mxu0 0.0
        %2407 = vmatpush1.msra.mxu0 0.0
        %2408 = vmatprep.subr.mxu0 0.0
        %2409 = vmatpush1.msra.mxu0 0.0
        %2410 = vmatprep.mubr.f32.mxu0 0.0
        %2411 = vmatmul.mubr.f32.gmra.mrb[0].mxu0 %v309
        %v2412 = vpop.f32.mrb[0].mxu0
        %v2413 = vadd.f32 0.0, %v2412
        %v2414 = vpop.f32.mrb[0].mxu0
        %2415 = vmatprep.mubr.f32.mxu0 0.0
        %2416 = vmatmul.mubr.f32.gmra.mrb[0].mxu0 %v312
        %v2417 = vpop.f32.mrb[0].mxu0
        %v2418 = vadd.f32 0.0, %v2417
        %v2419 = vpop.f32.mrb[0].mxu0
        %2420 = vmatprep.mubr.f32.mxu0 0.0
        %2421 = vmatmul.mubr.f32.gmra.mrb[0].mxu0 %v315
        %v2422 = vpop.f32.mrb[0].mxu0
        %v2423 = vadd.f32 0.0, %v2422
        %v2424 = vpop.f32.mrb[0].mxu0
        %2425 = vmatprep.mubr.f32.mxu0 0.0
        %2426 = vmatmul.mubr.f32.gmra.mrb[0].mxu0 %v318
        %v2427 = vpop.f32.mrb[0].mxu0
        %v2428 = vadd.f32 0.0, %v2427
        %v2429 = vpop.f32.mrb[0].mxu0
        %2430 = vmatprep.mubr.f32.mxu0 0.0
        %2431 = vmatmul.mubr.f32.gmra.mrb[0].mxu0 %v321
        %v2432 = vpop.f32.mrb[0].mxu0
        %v2433 = vadd.f32 0.0, %v2432
        %v2434 = vpop.f32.mrb[0].mxu0
        %2435 = vmatprep.mubr.f32.mxu0 0.0
        %2436 = vmatmul.mubr.f32.gmra.mrb[0].mxu0 %v324
        %v2437 = vpop.f32.mrb[0].mxu0
        %v2438 = vadd.f32 0.0, %v2437
        %v2439 = vpop.f32.mrb[0].mxu0
        %2440 = vmatprep.mubr.f32.mxu0 0.0
        %2441 = vmatmul.mubr.f32.gmra.mrb[0].mxu0 %v327
        %v2442 = vpop.f32.mrb[0].mxu0
        %v2443 = vadd.f32 0.0, %v2442
        %v2444 = vpop.f32.mrb[0].mxu0
        %2445 = vmatprep.mubr.f32.mxu0 0.0
        %2446 = vmatmul.mubr.f32.gmra.mrb[0].mxu0 %v330
        %v2447 = vpop.f32.mrb[0].mxu0
        %v2448 = vadd.f32 0.0, %v2447
        %v2449 = vpop.f32.mrb[0].mxu0
        %2450 = vmatprep.mubr.f32.mxu0 0.0
        %2451 = vmatmul.mubr.f32.gmra.mrb[0].mxu0 %v333
        %v2452 = vpop.f32.mrb[0].mxu0
        %v2453 = vadd.f32 0.0, %v2452
        %v2454 = vpop.f32.mrb[0].mxu0
        %2455 = vmatprep.mubr.f32.mxu0 0.0
        %2456 = vmatmul.mubr.f32.gmra.mrb[0].mxu0 %v336
        %v2457 = vpop.f32.mrb[0].mxu0
        %v2458 = vadd.f32 0.0, %v2457
        %v2459 = vpop.f32.mrb[0].mxu0
        %2460 = vmatprep.mubr.f32.mxu0 0.0
        %2461 = vmatmul.mubr.f32.gmra.mrb[0].mxu0 %v339
        %v2462 = vpop.f32.mrb[0].mxu0
        %v2463 = vadd.f32 0.0, %v2462
        %v2464 = vpop.f32.mrb[0].mxu0
        %2465 = vmatprep.mubr.f32.mxu0 0.0
        %2466 = vmatmul.mubr.f32.gmra.mrb[0].mxu0 %v342
        %v2467 = vpop.f32.mrb[0].mxu0
        %v2468 = vadd.f32 0.0, %v2467
        %v2469 = vpop.f32.mrb[0].mxu0
        %2470 = vmatprep.mubr.f32.mxu0 0.0
        %2471 = vmatmul.mubr.f32.gmra.mrb[0].mxu0 %v345
        %v2472 = vpop.f32.mrb[0].mxu0
        %v2473 = vadd.f32 0.0, %v2472
        %v2474 = vpop.f32.mrb[0].mxu0
        %2475 = vmatprep.mubr.f32.mxu0 0.0
        %2476 = vmatmul.mubr.f32.gmra.mrb[0].mxu0 %v348
        %v2477 = vpop.f32.mrb[0].mxu0
        %v2478 = vadd.f32 0.0, %v2477
        %v2479 = vpop.f32.mrb[0].mxu0
        %2480 = vmatprep.mubr.f32.mxu0 0.0
        %2481 = vmatmul.mubr.f32.gmra.mrb[0].mxu0 %v351
        %v2482 = vpop.f32.mrb[0].mxu0
        %v2483 = vadd.f32 0.0, %v2482
        %v2484 = vpop.f32.mrb[0].mxu0
        %2485 = vmatprep.mubr.f32.mxu0 0.0
        %2486 = vmatmul.mubr.f32.gmra.mrb[0].mxu0 %v354
        %v2487 = vpop.f32.mrb[0].mxu0
        %v2488 = vadd.f32 0.0, %v2487
        %v2489 = vpop.f32.mrb[0].mxu0
        %2490 = vdwg.mxu0
        %2491 = vmatprep.subr.mxu0 0.0
        %2492 = vmatpush1.msra.mxu0 %v2344
        %2493 = vmatprep.subr.mxu0 0.0
        %2494 = vmatpush1.msra.mxu0 0.0
        %2495 = vmatprep.subr.mxu0 0.0
        %2496 = vmatpush1.msra.mxu0 0.0
        %2497 = vmatprep.subr.mxu0 0.0
        %2498 = vmatpush1.msra.mxu0 0.0
        %2499 = vmatprep.subr.mxu0 0.0
        %2500 = vmatpush1.msra.mxu0 0.0
        %2501 = vmatprep.subr.mxu0 0.0
        %2502 = vmatpush1.msra.mxu0 0.0
        %2503 = vmatprep.subr.mxu0 0.0
        %2504 = vmatpush1.msra.mxu0 0.0
        %2505 = vmatprep.subr.mxu0 0.0
        %2506 = vmatpush1.msra.mxu0 0.0
        %2507 = vmatprep.subr.mxu0 0.0
        %2508 = vmatpush1.msra.mxu0 0.0
        %2509 = vmatprep.subr.mxu0 0.0
        %2510 = vmatpush1.msra.mxu0 0.0
        %2511 = vmatprep.subr.mxu0 0.0
        %2512 = vmatpush1.msra.mxu0 0.0
        %2513 = vmatprep.subr.mxu0 0.0
        %2514 = vmatpush1.msra.mxu0 0.0
        %2515 = vmatprep.subr.mxu0 0.0
        %2516 = vmatpush1.msra.mxu0 0.0
        %2517 = vmatprep.subr.mxu0 0.0
        %2518 = vmatpush1.msra.mxu0 0.0
        %2519 = vmatprep.subr.mxu0 0.0
        %2520 = vmatpush1.msra.mxu0 0.0
        %2521 = vmatprep.subr.mxu0 0.0
        %2522 = vmatpush1.msra.mxu0 0.0
        %2523 = vmatprep.subr.mxu0 0.0
        %2524 = vmatpush1.msra.mxu0 0.0
        %2525 = vmatprep.subr.mxu0 0.0
        %2526 = vmatpush1.msra.mxu0 0.0
        %2527 = vmatprep.subr.mxu0 0.0
        %2528 = vmatpush1.msra.mxu0 0.0
        %2529 = vmatprep.subr.mxu0 0.0
        %2530 = vmatpush1.msra.mxu0 0.0
        %2531 = vmatprep.subr.mxu0 0.0
        %2532 = vmatpush1.msra.mxu0 0.0
        %2533 = vmatprep.subr.mxu0 0.0
        %2534 = vmatpush1.msra.mxu0 0.0
        %2535 = vmatprep.subr.mxu0 0.0
        %2536 = vmatpush1.msra.mxu0 0.0
        %2537 = vmatprep.subr.mxu0 0.0
        %2538 = vmatpush1.msra.mxu0 0.0
        %2539 = vmatprep.subr.mxu0 0.0
        %2540 = vmatpush1.msra.mxu0 0.0
        %2541 = vmatprep.subr.mxu0 0.0
        %2542 = vmatpush1.msra.mxu0 0.0
        %2543 = vmatprep.subr.mxu0 0.0
        %2544 = vmatpush1.msra.mxu0 0.0
        %2545 = vmatprep.subr.mxu0 0.0
        %2546 = vmatpush1.msra.mxu0 0.0
        %2547 = vmatprep.subr.mxu0 0.0
        %2548 = vmatpush1.msra.mxu0 0.0
        %2549 = vmatprep.subr.mxu0 0.0
        %2550 = vmatpush1.msra.mxu0 0.0
        %2551 = vmatprep.subr.mxu0 0.0
        %2552 = vmatpush1.msra.mxu0 0.0
        %2553 = vmatprep.subr.mxu0 0.0
        %2554 = vmatpush1.msra.mxu0 0.0
        %2555 = vmatprep.mubr.f32.mxu0 0.0
        %2556 = vmatmul.mubr.f32.gmra.mrb[0].mxu0 %v502
        %v2557 = vpop.f32.mrb[0].mxu0
        %v2558 = vadd.f32 %v2413, %v2557
        %v2559 = vpop.f32.mrb[0].mxu0
        %2560 = vmatprep.mubr.f32.mxu0 0.0
        %2561 = vmatmul.mubr.f32.gmra.mrb[0].mxu0 %v505
        %v2562 = vpop.f32.mrb[0].mxu0
        %v2563 = vadd.f32 %v2418, %v2562
        %v2564 = vpop.f32.mrb[0].mxu0
        %2565 = vmatprep.mubr.f32.mxu0 0.0
        %2566 = vmatmul.mubr.f32.gmra.mrb[0].mxu0 %v508
        %v2567 = vpop.f32.mrb[0].mxu0
        %v2568 = vadd.f32 %v2423, %v2567
        %v2569 = vpop.f32.mrb[0].mxu0
        %2570 = vmatprep.mubr.f32.mxu0 0.0
        %2571 = vmatmul.mubr.f32.gmra.mrb[0].mxu0 %v511
        %v2572 = vpop.f32.mrb[0].mxu0
        %v2573 = vadd.f32 %v2428, %v2572
        %v2574 = vpop.f32.mrb[0].mxu0
        %2575 = vmatprep.mubr.f32.mxu0 0.0
        %2576 = vmatmul.mubr.f32.gmra.mrb[0].mxu0 %v514
        %v2577 = vpop.f32.mrb[0].mxu0
        %v2578 = vadd.f32 %v2433, %v2577
        %v2579 = vpop.f32.mrb[0].mxu0
        %2580 = vmatprep.mubr.f32.mxu0 0.0
        %2581 = vmatmul.mubr.f32.gmra.mrb[0].mxu0 %v517
        %v2582 = vpop.f32.mrb[0].mxu0
        %v2583 = vadd.f32 %v2438, %v2582
        %v2584 = vpop.f32.mrb[0].mxu0
        %2585 = vmatprep.mubr.f32.mxu0 0.0
        %2586 = vmatmul.mubr.f32.gmra.mrb[0].mxu0 %v520
        %v2587 = vpop.f32.mrb[0].mxu0
        %v2588 = vadd.f32 %v2443, %v2587
        %v2589 = vpop.f32.mrb[0].mxu0
        %2590 = vmatprep.mubr.f32.mxu0 0.0
        %2591 = vmatmul.mubr.f32.gmra.mrb[0].mxu0 %v523
        %v2592 = vpop.f32.mrb[0].mxu0
        %v2593 = vadd.f32 %v2448, %v2592
        %v2594 = vpop.f32.mrb[0].mxu0
        %2595 = vmatprep.mubr.f32.mxu0 0.0
        %2596 = vmatmul.mubr.f32.gmra.mrb[0].mxu0 %v526
        %v2597 = vpop.f32.mrb[0].mxu0
        %v2598 = vadd.f32 %v2453, %v2597
        %v2599 = vpop.f32.mrb[0].mxu0
        %2600 = vmatprep.mubr.f32.mxu0 0.0
        %2601 = vmatmul.mubr.f32.gmra.mrb[0].mxu0 %v529
        %v2602 = vpop.f32.mrb[0].mxu0
        %v2603 = vadd.f32 %v2458, %v2602
        %v2604 = vpop.f32.mrb[0].mxu0
        %2605 = vmatprep.mubr.f32.mxu0 0.0
        %2606 = vmatmul.mubr.f32.gmra.mrb[0].mxu0 %v532
        %v2607 = vpop.f32.mrb[0].mxu0
        %v2608 = vadd.f32 %v2463, %v2607
        %v2609 = vpop.f32.mrb[0].mxu0
        %2610 = vmatprep.mubr.f32.mxu0 0.0
        %2611 = vmatmul.mubr.f32.gmra.mrb[0].mxu0 %v535
        %v2612 = vpop.f32.mrb[0].mxu0
        %v2613 = vadd.f32 %v2468, %v2612
        %v2614 = vpop.f32.mrb[0].mxu0
        %2615 = vmatprep.mubr.f32.mxu0 0.0
        %2616 = vmatmul.mubr.f32.gmra.mrb[0].mxu0 %v538
        %v2617 = vpop.f32.mrb[0].mxu0
        %v2618 = vadd.f32 %v2473, %v2617
        %v2619 = vpop.f32.mrb[0].mxu0
        %2620 = vmatprep.mubr.f32.mxu0 0.0
        %2621 = vmatmul.mubr.f32.gmra.mrb[0].mxu0 %v541
        %v2622 = vpop.f32.mrb[0].mxu0
        %v2623 = vadd.f32 %v2478, %v2622
        %v2624 = vpop.f32.mrb[0].mxu0
        %2625 = vmatprep.mubr.f32.mxu0 0.0
        %2626 = vmatmul.mubr.f32.gmra.mrb[0].mxu0 %v544
        %v2627 = vpop.f32.mrb[0].mxu0
        %v2628 = vadd.f32 %v2483, %v2627
        %v2629 = vpop.f32.mrb[0].mxu0
        %2630 = vmatprep.mubr.f32.mxu0 0.0
        %2631 = vmatmul.mubr.f32.gmra.mrb[0].mxu0 %v547
        %v2632 = vpop.f32.mrb[0].mxu0
        %v2633 = vadd.f32 %v2488, %v2632
        %v2634 = vpop.f32.mrb[0].mxu0
        %2635 = vdwg.mxu0
        %v2636 = vld [vmem:[%s710 + $0x8] sm:$0xff]
        %2637 = vmatprep.subr.mxu0 0.0
        %2638 = vmatpush1.msra.mxu0 %v2636
        %2639 = vmatprep.subr.mxu0 0.0
        %2640 = vmatpush1.msra.mxu0 0.0
        %2641 = vmatprep.subr.mxu0 0.0
        %2642 = vmatpush1.msra.mxu0 0.0
        %2643 = vmatprep.subr.mxu0 0.0
        %2644 = vmatpush1.msra.mxu0 0.0
        %2645 = vmatprep.subr.mxu0 0.0
        %2646 = vmatpush1.msra.mxu0 0.0
        %2647 = vmatprep.subr.mxu0 0.0
        %2648 = vmatpush1.msra.mxu0 0.0
        %2649 = vmatprep.subr.mxu0 0.0
        %2650 = vmatpush1.msra.mxu0 0.0
        %2651 = vmatprep.subr.mxu0 0.0
        %2652 = vmatpush1.msra.mxu0 0.0
        %2653 = vmatprep.subr.mxu0 0.0
        %2654 = vmatpush1.msra.mxu0 0.0
        %2655 = vmatprep.subr.mxu0 0.0
        %2656 = vmatpush1.msra.mxu0 0.0
        %2657 = vmatprep.subr.mxu0 0.0
        %2658 = vmatpush1.msra.mxu0 0.0
        %2659 = vmatprep.subr.mxu0 0.0
        %2660 = vmatpush1.msra.mxu0 0.0
        %2661 = vmatprep.subr.mxu0 0.0
        %2662 = vmatpush1.msra.mxu0 0.0
        %2663 = vmatprep.subr.mxu0 0.0
        %2664 = vmatpush1.msra.mxu0 0.0
        %2665 = vmatprep.subr.mxu0 0.0
        %2666 = vmatpush1.msra.mxu0 0.0
        %2667 = vmatprep.subr.mxu0 0.0
        %2668 = vmatpush1.msra.mxu0 0.0
        %2669 = vmatprep.subr.mxu0 0.0
        %2670 = vmatpush1.msra.mxu0 0.0
        %2671 = vmatprep.subr.mxu0 0.0
        %2672 = vmatpush1.msra.mxu0 0.0
        %2673 = vmatprep.subr.mxu0 0.0
        %2674 = vmatpush1.msra.mxu0 0.0
        %2675 = vmatprep.subr.mxu0 0.0
        %2676 = vmatpush1.msra.mxu0 0.0
        %2677 = vmatprep.subr.mxu0 0.0
        %2678 = vmatpush1.msra.mxu0 0.0
        %2679 = vmatprep.subr.mxu0 0.0
        %2680 = vmatpush1.msra.mxu0 0.0
        %2681 = vmatprep.subr.mxu0 0.0
        %2682 = vmatpush1.msra.mxu0 0.0
        %2683 = vmatprep.subr.mxu0 0.0
        %2684 = vmatpush1.msra.mxu0 0.0
        %2685 = vmatprep.subr.mxu0 0.0
        %2686 = vmatpush1.msra.mxu0 0.0
        %2687 = vmatprep.subr.mxu0 0.0
        %2688 = vmatpush1.msra.mxu0 0.0
        %2689 = vmatprep.subr.mxu0 0.0
        %2690 = vmatpush1.msra.mxu0 0.0
        %2691 = vmatprep.subr.mxu0 0.0
        %2692 = vmatpush1.msra.mxu0 0.0
        %2693 = vmatprep.subr.mxu0 0.0
        %2694 = vmatpush1.msra.mxu0 0.0
        %2695 = vmatprep.subr.mxu0 0.0
        %2696 = vmatpush1.msra.mxu0 0.0
        %2697 = vmatprep.subr.mxu0 0.0
        %2698 = vmatpush1.msra.mxu0 0.0
        %2699 = vmatprep.subr.mxu0 0.0
        %2700 = vmatpush1.msra.mxu0 0.0
        %2701 = vmatprep.mubr.f32.mxu0 0.0
        %2702 = vmatmul.mubr.f32.gmra.mrb[0].mxu0 %v713
        %v2703 = vpop.f32.mrb[0].mxu0
        %v2704 = vadd.f32 0.0, %v2703
        %v2705 = vpop.f32.mrb[0].mxu0
        %2706 = vmatprep.mubr.f32.mxu0 0.0
        %2707 = vmatmul.mubr.f32.gmra.mrb[0].mxu0 %v716
        %v2708 = vpop.f32.mrb[0].mxu0
        %v2709 = vadd.f32 0.0, %v2708
        %v2710 = vpop.f32.mrb[0].mxu0
        %2711 = vmatprep.mubr.f32.mxu0 0.0
        %2712 = vmatmul.mubr.f32.gmra.mrb[0].mxu0 %v719
        %v2713 = vpop.f32.mrb[0].mxu0
        %v2714 = vadd.f32 0.0, %v2713
        %v2715 = vpop.f32.mrb[0].mxu0
        %2716 = vmatprep.mubr.f32.mxu0 0.0
        %2717 = vmatmul.mubr.f32.gmra.mrb[0].mxu0 %v722
        %v2718 = vpop.f32.mrb[0].mxu0
        %v2719 = vadd.f32 0.0, %v2718
        %v2720 = vpop.f32.mrb[0].mxu0
        %2721 = vmatprep.mubr.f32.mxu0 0.0
        %2722 = vmatmul.mubr.f32.gmra.mrb[0].mxu0 %v725
        %v2723 = vpop.f32.mrb[0].mxu0
        %v2724 = vadd.f32 0.0, %v2723
        %v2725 = vpop.f32.mrb[0].mxu0
        %2726 = vmatprep.mubr.f32.mxu0 0.0
        %2727 = vmatmul.mubr.f32.gmra.mrb[0].mxu0 %v728
        %v2728 = vpop.f32.mrb[0].mxu0
        %v2729 = vadd.f32 0.0, %v2728
        %v2730 = vpop.f32.mrb[0].mxu0
        %2731 = vmatprep.mubr.f32.mxu0 0.0
        %2732 = vmatmul.mubr.f32.gmra.mrb[0].mxu0 %v731
        %v2733 = vpop.f32.mrb[0].mxu0
        %v2734 = vadd.f32 0.0, %v2733
        %v2735 = vpop.f32.mrb[0].mxu0
        %2736 = vmatprep.mubr.f32.mxu0 0.0
        %2737 = vmatmul.mubr.f32.gmra.mrb[0].mxu0 %v734
        %v2738 = vpop.f32.mrb[0].mxu0
        %v2739 = vadd.f32 0.0, %v2738
        %v2740 = vpop.f32.mrb[0].mxu0
        %2741 = vmatprep.mubr.f32.mxu0 0.0
        %2742 = vmatmul.mubr.f32.gmra.mrb[0].mxu0 %v737
        %v2743 = vpop.f32.mrb[0].mxu0
        %v2744 = vadd.f32 0.0, %v2743
        %v2745 = vpop.f32.mrb[0].mxu0
        %2746 = vmatprep.mubr.f32.mxu0 0.0
        %2747 = vmatmul.mubr.f32.gmra.mrb[0].mxu0 %v740
        %v2748 = vpop.f32.mrb[0].mxu0
        %v2749 = vadd.f32 0.0, %v2748
        %v2750 = vpop.f32.mrb[0].mxu0
        %2751 = vmatprep.mubr.f32.mxu0 0.0
        %2752 = vmatmul.mubr.f32.gmra.mrb[0].mxu0 %v743
        %v2753 = vpop.f32.mrb[0].mxu0
        %v2754 = vadd.f32 0.0, %v2753
        %v2755 = vpop.f32.mrb[0].mxu0
        %2756 = vmatprep.mubr.f32.mxu0 0.0
        %2757 = vmatmul.mubr.f32.gmra.mrb[0].mxu0 %v746
        %v2758 = vpop.f32.mrb[0].mxu0
        %v2759 = vadd.f32 0.0, %v2758
        %v2760 = vpop.f32.mrb[0].mxu0
        %2761 = vmatprep.mubr.f32.mxu0 0.0
        %2762 = vmatmul.mubr.f32.gmra.mrb[0].mxu0 %v749
        %v2763 = vpop.f32.mrb[0].mxu0
        %v2764 = vadd.f32 0.0, %v2763
        %v2765 = vpop.f32.mrb[0].mxu0
        %2766 = vmatprep.mubr.f32.mxu0 0.0
        %2767 = vmatmul.mubr.f32.gmra.mrb[0].mxu0 %v752
        %v2768 = vpop.f32.mrb[0].mxu0
        %v2769 = vadd.f32 0.0, %v2768
        %v2770 = vpop.f32.mrb[0].mxu0
        %2771 = vmatprep.mubr.f32.mxu0 0.0
        %2772 = vmatmul.mubr.f32.gmra.mrb[0].mxu0 %v755
        %v2773 = vpop.f32.mrb[0].mxu0
        %v2774 = vadd.f32 0.0, %v2773
        %v2775 = vpop.f32.mrb[0].mxu0
        %2776 = vmatprep.mubr.f32.mxu0 0.0
        %2777 = vmatmul.mubr.f32.gmra.mrb[0].mxu0 %v758
        %v2778 = vpop.f32.mrb[0].mxu0
        %v2779 = vadd.f32 0.0, %v2778
        %v2780 = vpop.f32.mrb[0].mxu0
        %2781 = vdwg.mxu0
        %v2782 = vadd.f32 %v2558, %v2704
        %v2783 = vadd.f32 %v2563, %v2709
        %v2784 = vadd.f32 %v2568, %v2714
        %v2785 = vadd.f32 %v2573, %v2719
        %v2786 = vadd.f32 %v2578, %v2724
        %v2787 = vadd.f32 %v2583, %v2729
        %v2788 = vadd.f32 %v2588, %v2734
        %v2789 = vadd.f32 %v2593, %v2739
        %v2790 = vadd.f32 %v2598, %v2744
        %v2791 = vadd.f32 %v2603, %v2749
        %v2792 = vadd.f32 %v2608, %v2754
        %v2793 = vadd.f32 %v2613, %v2759
        %v2794 = vadd.f32 %v2618, %v2764
        %v2795 = vadd.f32 %v2623, %v2769
        %v2796 = vadd.f32 %v2628, %v2774
        %v2797 = vadd.f32 %v2633, %v2779
        %v2798 = vld [vmem:[%s940 + $0x8] sm:$0xff]
        %2799 = vmatprep.subr.mxu0 0.0
        %2800 = vmatpush1.msra.mxu0 %v2798
        %2801 = vmatprep.subr.mxu0 0.0
        %2802 = vmatpush1.msra.mxu0 0.0
        %2803 = vmatprep.subr.mxu0 0.0
        %2804 = vmatpush1.msra.mxu0 0.0
        %2805 = vmatprep.subr.mxu0 0.0
        %2806 = vmatpush1.msra.mxu0 0.0
        %2807 = vmatprep.subr.mxu0 0.0
        %2808 = vmatpush1.msra.mxu0 0.0
        %2809 = vmatprep.subr.mxu0 0.0
        %2810 = vmatpush1.msra.mxu0 0.0
        %2811 = vmatprep.subr.mxu0 0.0
        %2812 = vmatpush1.msra.mxu0 0.0
        %2813 = vmatprep.subr.mxu0 0.0
        %2814 = vmatpush1.msra.mxu0 0.0
        %2815 = vmatprep.subr.mxu0 0.0
        %2816 = vmatpush1.msra.mxu0 0.0
        %2817 = vmatprep.subr.mxu0 0.0
        %2818 = vmatpush1.msra.mxu0 0.0
        %2819 = vmatprep.subr.mxu0 0.0
        %2820 = vmatpush1.msra.mxu0 0.0
        %2821 = vmatprep.subr.mxu0 0.0
        %2822 = vmatpush1.msra.mxu0 0.0
        %2823 = vmatprep.subr.mxu0 0.0
        %2824 = vmatpush1.msra.mxu0 0.0
        %2825 = vmatprep.subr.mxu0 0.0
        %2826 = vmatpush1.msra.mxu0 0.0
        %2827 = vmatprep.subr.mxu0 0.0
        %2828 = vmatpush1.msra.mxu0 0.0
        %2829 = vmatprep.subr.mxu0 0.0
        %2830 = vmatpush1.msra.mxu0 0.0
        %2831 = vmatprep.subr.mxu0 0.0
        %2832 = vmatpush1.msra.mxu0 0.0
        %2833 = vmatprep.subr.mxu0 0.0
        %2834 = vmatpush1.msra.mxu0 0.0
        %2835 = vmatprep.subr.mxu0 0.0
        %2836 = vmatpush1.msra.mxu0 0.0
        %2837 = vmatprep.subr.mxu0 0.0
        %2838 = vmatpush1.msra.mxu0 0.0
        %2839 = vmatprep.subr.mxu0 0.0
        %2840 = vmatpush1.msra.mxu0 0.0
        %2841 = vmatprep.subr.mxu0 0.0
        %2842 = vmatpush1.msra.mxu0 0.0
        %2843 = vmatprep.subr.mxu0 0.0
        %2844 = vmatpush1.msra.mxu0 0.0
        %2845 = vmatprep.subr.mxu0 0.0
        %2846 = vmatpush1.msra.mxu0 0.0
        %2847 = vmatprep.subr.mxu0 0.0
        %2848 = vmatpush1.msra.mxu0 0.0
        %2849 = vmatprep.subr.mxu0 0.0
        %2850 = vmatpush1.msra.mxu0 0.0
        %2851 = vmatprep.subr.mxu0 0.0
        %2852 = vmatpush1.msra.mxu0 0.0
        %2853 = vmatprep.subr.mxu0 0.0
        %2854 = vmatpush1.msra.mxu0 0.0
        %2855 = vmatprep.subr.mxu0 0.0
        %2856 = vmatpush1.msra.mxu0 0.0
        %2857 = vmatprep.subr.mxu0 0.0
        %2858 = vmatpush1.msra.mxu0 0.0
        %2859 = vmatprep.subr.mxu0 0.0
        %2860 = vmatpush1.msra.mxu0 0.0
        %2861 = vmatprep.subr.mxu0 0.0
        %2862 = vmatpush1.msra.mxu0 0.0
        %2863 = vmatprep.mubr.f32.mxu0 0.0
        %2864 = vmatmul.mubr.f32.gmra.mrb[0].mxu0 %v943
        %v2865 = vpop.f32.mrb[0].mxu0
        %v2866 = vadd.f32 0.0, %v2865
        %v2867 = vpop.f32.mrb[0].mxu0
        %2868 = vmatprep.mubr.f32.mxu0 0.0
        %2869 = vmatmul.mubr.f32.gmra.mrb[0].mxu0 %v946
        %v2870 = vpop.f32.mrb[0].mxu0
        %v2871 = vadd.f32 0.0, %v2870
        %v2872 = vpop.f32.mrb[0].mxu0
        %2873 = vmatprep.mubr.f32.mxu0 0.0
        %2874 = vmatmul.mubr.f32.gmra.mrb[0].mxu0 %v949
        %v2875 = vpop.f32.mrb[0].mxu0
        %v2876 = vadd.f32 0.0, %v2875
        %v2877 = vpop.f32.mrb[0].mxu0
        %2878 = vmatprep.mubr.f32.mxu0 0.0
        %2879 = vmatmul.mubr.f32.gmra.mrb[0].mxu0 %v952
        %v2880 = vpop.f32.mrb[0].mxu0
        %v2881 = vadd.f32 0.0, %v2880
        %v2882 = vpop.f32.mrb[0].mxu0
        %2883 = vmatprep.mubr.f32.mxu0 0.0
        %2884 = vmatmul.mubr.f32.gmra.mrb[0].mxu0 %v955
        %v2885 = vpop.f32.mrb[0].mxu0
        %v2886 = vadd.f32 0.0, %v2885
        %v2887 = vpop.f32.mrb[0].mxu0
        %2888 = vmatprep.mubr.f32.mxu0 0.0
        %2889 = vmatmul.mubr.f32.gmra.mrb[0].mxu0 %v958
        %v2890 = vpop.f32.mrb[0].mxu0
        %v2891 = vadd.f32 0.0, %v2890
        %v2892 = vpop.f32.mrb[0].mxu0
        %2893 = vmatprep.mubr.f32.mxu0 0.0
        %2894 = vmatmul.mubr.f32.gmra.mrb[0].mxu0 %v961
        %v2895 = vpop.f32.mrb[0].mxu0
        %v2896 = vadd.f32 0.0, %v2895
        %v2897 = vpop.f32.mrb[0].mxu0
        %2898 = vmatprep.mubr.f32.mxu0 0.0
        %2899 = vmatmul.mubr.f32.gmra.mrb[0].mxu0 %v964
        %v2900 = vpop.f32.mrb[0].mxu0
        %v2901 = vadd.f32 0.0, %v2900
        %v2902 = vpop.f32.mrb[0].mxu0
        %2903 = vmatprep.mubr.f32.mxu0 0.0
        %2904 = vmatmul.mubr.f32.gmra.mrb[0].mxu0 %v967
        %v2905 = vpop.f32.mrb[0].mxu0
        %v2906 = vadd.f32 0.0, %v2905
        %v2907 = vpop.f32.mrb[0].mxu0
        %2908 = vmatprep.mubr.f32.mxu0 0.0
        %2909 = vmatmul.mubr.f32.gmra.mrb[0].mxu0 %v970
        %v2910 = vpop.f32.mrb[0].mxu0
        %v2911 = vadd.f32 0.0, %v2910
        %v2912 = vpop.f32.mrb[0].mxu0
        %2913 = vmatprep.mubr.f32.mxu0 0.0
        %2914 = vmatmul.mubr.f32.gmra.mrb[0].mxu0 %v973
        %v2915 = vpop.f32.mrb[0].mxu0
        %v2916 = vadd.f32 0.0, %v2915
        %v2917 = vpop.f32.mrb[0].mxu0
        %2918 = vmatprep.mubr.f32.mxu0 0.0
        %2919 = vmatmul.mubr.f32.gmra.mrb[0].mxu0 %v976
        %v2920 = vpop.f32.mrb[0].mxu0
        %v2921 = vadd.f32 0.0, %v2920
        %v2922 = vpop.f32.mrb[0].mxu0
        %2923 = vmatprep.mubr.f32.mxu0 0.0
        %2924 = vmatmul.mubr.f32.gmra.mrb[0].mxu0 %v979
        %v2925 = vpop.f32.mrb[0].mxu0
        %v2926 = vadd.f32 0.0, %v2925
        %v2927 = vpop.f32.mrb[0].mxu0
        %2928 = vmatprep.mubr.f32.mxu0 0.0
        %2929 = vmatmul.mubr.f32.gmra.mrb[0].mxu0 %v982
        %v2930 = vpop.f32.mrb[0].mxu0
        %v2931 = vadd.f32 0.0, %v2930
        %v2932 = vpop.f32.mrb[0].mxu0
        %2933 = vmatprep.mubr.f32.mxu0 0.0
        %2934 = vmatmul.mubr.f32.gmra.mrb[0].mxu0 %v985
        %v2935 = vpop.f32.mrb[0].mxu0
        %v2936 = vadd.f32 0.0, %v2935
        %v2937 = vpop.f32.mrb[0].mxu0
        %2938 = vmatprep.mubr.f32.mxu0 0.0
        %2939 = vmatmul.mubr.f32.gmra.mrb[0].mxu0 %v988
        %v2940 = vpop.f32.mrb[0].mxu0
        %v2941 = vadd.f32 0.0, %v2940
        %v2942 = vpop.f32.mrb[0].mxu0
        %2943 = vdwg.mxu0
        %v2944 = vadd.f32 %v2782, %v2866
        %v2945 = vadd.f32 %v2783, %v2871
        %v2946 = vadd.f32 %v2784, %v2876
        %v2947 = vadd.f32 %v2785, %v2881
        %v2948 = vadd.f32 %v2786, %v2886
        %v2949 = vadd.f32 %v2787, %v2891
        %v2950 = vadd.f32 %v2788, %v2896
        %v2951 = vadd.f32 %v2789, %v2901
        %v2952 = vadd.f32 %v2790, %v2906
        %v2953 = vadd.f32 %v2791, %v2911
        %v2954 = vadd.f32 %v2792, %v2916
        %v2955 = vadd.f32 %v2793, %v2921
        %v2956 = vadd.f32 %v2794, %v2926
        %v2957 = vadd.f32 %v2795, %v2931
        %v2958 = vadd.f32 %v2796, %v2936
        %v2959 = vadd.f32 %v2797, %v2941
        %v2960 = vld [vmem:[%s1167 + $0x8] sm:$0xff]
        %2961 = vmatprep.subr.mxu0 0.0
        %2962 = vmatpush1.msra.mxu0 %v2960
        %2963 = vmatprep.subr.mxu0 0.0
        %2964 = vmatpush1.msra.mxu0 0.0
        %2965 = vmatprep.subr.mxu0 0.0
        %2966 = vmatpush1.msra.mxu0 0.0
        %2967 = vmatprep.subr.mxu0 0.0
        %2968 = vmatpush1.msra.mxu0 0.0
        %2969 = vmatprep.subr.mxu0 0.0
        %2970 = vmatpush1.msra.mxu0 0.0
        %2971 = vmatprep.subr.mxu0 0.0
        %2972 = vmatpush1.msra.mxu0 0.0
        %2973 = vmatprep.subr.mxu0 0.0
        %2974 = vmatpush1.msra.mxu0 0.0
        %2975 = vmatprep.subr.mxu0 0.0
        %2976 = vmatpush1.msra.mxu0 0.0
        %2977 = vmatprep.subr.mxu0 0.0
        %2978 = vmatpush1.msra.mxu0 0.0
        %2979 = vmatprep.subr.mxu0 0.0
        %2980 = vmatpush1.msra.mxu0 0.0
        %2981 = vmatprep.subr.mxu0 0.0
        %2982 = vmatpush1.msra.mxu0 0.0
        %2983 = vmatprep.subr.mxu0 0.0
        %2984 = vmatpush1.msra.mxu0 0.0
        %2985 = vmatprep.subr.mxu0 0.0
        %2986 = vmatpush1.msra.mxu0 0.0
        %2987 = vmatprep.subr.mxu0 0.0
        %2988 = vmatpush1.msra.mxu0 0.0
        %2989 = vmatprep.subr.mxu0 0.0
        %2990 = vmatpush1.msra.mxu0 0.0
        %2991 = vmatprep.subr.mxu0 0.0
        %2992 = vmatpush1.msra.mxu0 0.0
        %2993 = vmatprep.subr.mxu0 0.0
        %2994 = vmatpush1.msra.mxu0 0.0
        %2995 = vmatprep.subr.mxu0 0.0
        %2996 = vmatpush1.msra.mxu0 0.0
        %2997 = vmatprep.subr.mxu0 0.0
        %2998 = vmatpush1.msra.mxu0 0.0
        %2999 = vmatprep.subr.mxu0 0.0
        %3000 = vmatpush1.msra.mxu0 0.0
        %3001 = vmatprep.subr.mxu0 0.0
        %3002 = vmatpush1.msra.mxu0 0.0
        %3003 = vmatprep.subr.mxu0 0.0
        %3004 = vmatpush1.msra.mxu0 0.0
        %3005 = vmatprep.subr.mxu0 0.0
        %3006 = vmatpush1.msra.mxu0 0.0
        %3007 = vmatprep.subr.mxu0 0.0
        %3008 = vmatpush1.msra.mxu0 0.0
        %3009 = vmatprep.subr.mxu0 0.0
        %3010 = vmatpush1.msra.mxu0 0.0
        %3011 = vmatprep.subr.mxu0 0.0
        %3012 = vmatpush1.msra.mxu0 0.0
        %3013 = vmatprep.subr.mxu0 0.0
        %3014 = vmatpush1.msra.mxu0 0.0
        %3015 = vmatprep.subr.mxu0 0.0
        %3016 = vmatpush1.msra.mxu0 0.0
        %3017 = vmatprep.subr.mxu0 0.0
        %3018 = vmatpush1.msra.mxu0 0.0
        %3019 = vmatprep.subr.mxu0 0.0
        %3020 = vmatpush1.msra.mxu0 0.0
        %3021 = vmatprep.subr.mxu0 0.0
        %3022 = vmatpush1.msra.mxu0 0.0
        %3023 = vmatprep.subr.mxu0 0.0
        %3024 = vmatpush1.msra.mxu0 0.0
        %3025 = vmatprep.mubr.f32.mxu0 0.0
        %3026 = vmatmul.mubr.f32.gmra.mrb[0].mxu0 %v1170
        %v3027 = vpop.f32.mrb[0].mxu0
        %v3028 = vadd.f32 0.0, %v3027
        %v3029 = vpop.f32.mrb[0].mxu0
        %3030 = vmatprep.mubr.f32.mxu0 0.0
        %3031 = vmatmul.mubr.f32.gmra.mrb[0].mxu0 %v1173
        %v3032 = vpop.f32.mrb[0].mxu0
        %v3033 = vadd.f32 0.0, %v3032
        %v3034 = vpop.f32.mrb[0].mxu0
        %3035 = vmatprep.mubr.f32.mxu0 0.0
        %3036 = vmatmul.mubr.f32.gmra.mrb[0].mxu0 %v1176
        %v3037 = vpop.f32.mrb[0].mxu0
        %v3038 = vadd.f32 0.0, %v3037
        %v3039 = vpop.f32.mrb[0].mxu0
        %3040 = vmatprep.mubr.f32.mxu0 0.0
        %3041 = vmatmul.mubr.f32.gmra.mrb[0].mxu0 %v1179
        %v3042 = vpop.f32.mrb[0].mxu0
        %v3043 = vadd.f32 0.0, %v3042
        %v3044 = vpop.f32.mrb[0].mxu0
        %3045 = vmatprep.mubr.f32.mxu0 0.0
        %3046 = vmatmul.mubr.f32.gmra.mrb[0].mxu0 %v1182
        %v3047 = vpop.f32.mrb[0].mxu0
        %v3048 = vadd.f32 0.0, %v3047
        %v3049 = vpop.f32.mrb[0].mxu0
        %3050 = vmatprep.mubr.f32.mxu0 0.0
        %3051 = vmatmul.mubr.f32.gmra.mrb[0].mxu0 %v1185
        %v3052 = vpop.f32.mrb[0].mxu0
        %v3053 = vadd.f32 0.0, %v3052
        %v3054 = vpop.f32.mrb[0].mxu0
        %3055 = vmatprep.mubr.f32.mxu0 0.0
        %3056 = vmatmul.mubr.f32.gmra.mrb[0].mxu0 %v1188
        %v3057 = vpop.f32.mrb[0].mxu0
        %v3058 = vadd.f32 0.0, %v3057
        %v3059 = vpop.f32.mrb[0].mxu0
        %3060 = vmatprep.mubr.f32.mxu0 0.0
        %3061 = vmatmul.mubr.f32.gmra.mrb[0].mxu0 %v1191
        %v3062 = vpop.f32.mrb[0].mxu0
        %v3063 = vadd.f32 0.0, %v3062
        %v3064 = vpop.f32.mrb[0].mxu0
        %3065 = vmatprep.mubr.f32.mxu0 0.0
        %3066 = vmatmul.mubr.f32.gmra.mrb[0].mxu0 %v1194
        %v3067 = vpop.f32.mrb[0].mxu0
        %v3068 = vadd.f32 0.0, %v3067
        %v3069 = vpop.f32.mrb[0].mxu0
        %3070 = vmatprep.mubr.f32.mxu0 0.0
        %3071 = vmatmul.mubr.f32.gmra.mrb[0].mxu0 %v1197
        %v3072 = vpop.f32.mrb[0].mxu0
        %v3073 = vadd.f32 0.0, %v3072
        %v3074 = vpop.f32.mrb[0].mxu0
        %3075 = vmatprep.mubr.f32.mxu0 0.0
        %3076 = vmatmul.mubr.f32.gmra.mrb[0].mxu0 %v1200
        %v3077 = vpop.f32.mrb[0].mxu0
        %v3078 = vadd.f32 0.0, %v3077
        %v3079 = vpop.f32.mrb[0].mxu0
        %3080 = vmatprep.mubr.f32.mxu0 0.0
        %3081 = vmatmul.mubr.f32.gmra.mrb[0].mxu0 %v1203
        %v3082 = vpop.f32.mrb[0].mxu0
        %v3083 = vadd.f32 0.0, %v3082
        %v3084 = vpop.f32.mrb[0].mxu0
        %3085 = vmatprep.mubr.f32.mxu0 0.0
        %3086 = vmatmul.mubr.f32.gmra.mrb[0].mxu0 %v1206
        %v3087 = vpop.f32.mrb[0].mxu0
        %v3088 = vadd.f32 0.0, %v3087
        %v3089 = vpop.f32.mrb[0].mxu0
        %3090 = vmatprep.mubr.f32.mxu0 0.0
        %3091 = vmatmul.mubr.f32.gmra.mrb[0].mxu0 %v1209
        %v3092 = vpop.f32.mrb[0].mxu0
        %v3093 = vadd.f32 0.0, %v3092
        %v3094 = vpop.f32.mrb[0].mxu0
        %3095 = vmatprep.mubr.f32.mxu0 0.0
        %3096 = vmatmul.mubr.f32.gmra.mrb[0].mxu0 %v1212
        %v3097 = vpop.f32.mrb[0].mxu0
        %v3098 = vadd.f32 0.0, %v3097
        %v3099 = vpop.f32.mrb[0].mxu0
        %3100 = vmatprep.mubr.f32.mxu0 0.0
        %3101 = vmatmul.mubr.f32.gmra.mrb[0].mxu0 %v1215
        %v3102 = vpop.f32.mrb[0].mxu0
        %v3103 = vadd.f32 0.0, %v3102
        %v3104 = vpop.f32.mrb[0].mxu0
        %3105 = vdwg.mxu0
        %v3106 = vadd.f32 %v2944, %v3028
        %v3107 = vadd.f32 %v2945, %v3033
        %v3108 = vadd.f32 %v2946, %v3038
        %v3109 = vadd.f32 %v2947, %v3043
        %v3110 = vadd.f32 %v2948, %v3048
        %v3111 = vadd.f32 %v2949, %v3053
        %v3112 = vadd.f32 %v2950, %v3058
        %v3113 = vadd.f32 %v2951, %v3063
        %v3114 = vadd.f32 %v2952, %v3068
        %v3115 = vadd.f32 %v2953, %v3073
        %v3116 = vadd.f32 %v2954, %v3078
        %v3117 = vadd.f32 %v2955, %v3083
        %v3118 = vadd.f32 %v2956, %v3088
        %v3119 = vadd.f32 %v2957, %v3093
        %v3120 = vadd.f32 %v2958, %v3098
        %v3121 = vadd.f32 %v2959, %v3103
        %v3122 = vld [vmem:[%s1394 + $0x8] sm:$0xff]
        %3123 = vmatprep.subr.mxu0 0.0
        %3124 = vmatpush1.msra.mxu0 %v3122
        %3125 = vmatprep.subr.mxu0 0.0
        %3126 = vmatpush1.msra.mxu0 0.0
        %3127 = vmatprep.subr.mxu0 0.0
        %3128 = vmatpush1.msra.mxu0 0.0
        %3129 = vmatprep.subr.mxu0 0.0
        %3130 = vmatpush1.msra.mxu0 0.0
        %3131 = vmatprep.subr.mxu0 0.0
        %3132 = vmatpush1.msra.mxu0 0.0
        %3133 = vmatprep.subr.mxu0 0.0
        %3134 = vmatpush1.msra.mxu0 0.0
        %3135 = vmatprep.subr.mxu0 0.0
        %3136 = vmatpush1.msra.mxu0 0.0
        %3137 = vmatprep.subr.mxu0 0.0
        %3138 = vmatpush1.msra.mxu0 0.0
        %3139 = vmatprep.subr.mxu0 0.0
        %3140 = vmatpush1.msra.mxu0 0.0
        %3141 = vmatprep.subr.mxu0 0.0
        %3142 = vmatpush1.msra.mxu0 0.0
        %3143 = vmatprep.subr.mxu0 0.0
        %3144 = vmatpush1.msra.mxu0 0.0
        %3145 = vmatprep.subr.mxu0 0.0
        %3146 = vmatpush1.msra.mxu0 0.0
        %3147 = vmatprep.subr.mxu0 0.0
        %3148 = vmatpush1.msra.mxu0 0.0
        %3149 = vmatprep.subr.mxu0 0.0
        %3150 = vmatpush1.msra.mxu0 0.0
        %3151 = vmatprep.subr.mxu0 0.0
        %3152 = vmatpush1.msra.mxu0 0.0
        %3153 = vmatprep.subr.mxu0 0.0
        %3154 = vmatpush1.msra.mxu0 0.0
        %3155 = vmatprep.subr.mxu0 0.0
        %3156 = vmatpush1.msra.mxu0 0.0
        %3157 = vmatprep.subr.mxu0 0.0
        %3158 = vmatpush1.msra.mxu0 0.0
        %3159 = vmatprep.subr.mxu0 0.0
        %3160 = vmatpush1.msra.mxu0 0.0
        %3161 = vmatprep.subr.mxu0 0.0
        %3162 = vmatpush1.msra.mxu0 0.0
        %3163 = vmatprep.subr.mxu0 0.0
        %3164 = vmatpush1.msra.mxu0 0.0
        %3165 = vmatprep.subr.mxu0 0.0
        %3166 = vmatpush1.msra.mxu0 0.0
        %3167 = vmatprep.subr.mxu0 0.0
        %3168 = vmatpush1.msra.mxu0 0.0
        %3169 = vmatprep.subr.mxu0 0.0
        %3170 = vmatpush1.msra.mxu0 0.0
        %3171 = vmatprep.subr.mxu0 0.0
        %3172 = vmatpush1.msra.mxu0 0.0
        %3173 = vmatprep.subr.mxu0 0.0
        %3174 = vmatpush1.msra.mxu0 0.0
        %3175 = vmatprep.subr.mxu0 0.0
        %3176 = vmatpush1.msra.mxu0 0.0
        %3177 = vmatprep.subr.mxu0 0.0
        %3178 = vmatpush1.msra.mxu0 0.0
        %3179 = vmatprep.subr.mxu0 0.0
        %3180 = vmatpush1.msra.mxu0 0.0
        %3181 = vmatprep.subr.mxu0 0.0
        %3182 = vmatpush1.msra.mxu0 0.0
        %3183 = vmatprep.subr.mxu0 0.0
        %3184 = vmatpush1.msra.mxu0 0.0
        %3185 = vmatprep.subr.mxu0 0.0
        %3186 = vmatpush1.msra.mxu0 0.0
        %3187 = vmatprep.mubr.f32.mxu0 0.0
        %3188 = vmatmul.mubr.f32.gmra.mrb[0].mxu0 %v1397
        %v3189 = vpop.f32.mrb[0].mxu0
        %v3190 = vadd.f32 0.0, %v3189
        %v3191 = vpop.f32.mrb[0].mxu0
        %3192 = vmatprep.mubr.f32.mxu0 0.0
        %3193 = vmatmul.mubr.f32.gmra.mrb[0].mxu0 %v1400
        %v3194 = vpop.f32.mrb[0].mxu0
        %v3195 = vadd.f32 0.0, %v3194
        %v3196 = vpop.f32.mrb[0].mxu0
        %3197 = vmatprep.mubr.f32.mxu0 0.0
        %3198 = vmatmul.mubr.f32.gmra.mrb[0].mxu0 %v1403
        %v3199 = vpop.f32.mrb[0].mxu0
        %v3200 = vadd.f32 0.0, %v3199
        %v3201 = vpop.f32.mrb[0].mxu0
        %3202 = vmatprep.mubr.f32.mxu0 0.0
        %3203 = vmatmul.mubr.f32.gmra.mrb[0].mxu0 %v1406
        %v3204 = vpop.f32.mrb[0].mxu0
        %v3205 = vadd.f32 0.0, %v3204
        %v3206 = vpop.f32.mrb[0].mxu0
        %3207 = vmatprep.mubr.f32.mxu0 0.0
        %3208 = vmatmul.mubr.f32.gmra.mrb[0].mxu0 %v1409
        %v3209 = vpop.f32.mrb[0].mxu0
        %v3210 = vadd.f32 0.0, %v3209
        %v3211 = vpop.f32.mrb[0].mxu0
        %3212 = vmatprep.mubr.f32.mxu0 0.0
        %3213 = vmatmul.mubr.f32.gmra.mrb[0].mxu0 %v1412
        %v3214 = vpop.f32.mrb[0].mxu0
        %v3215 = vadd.f32 0.0, %v3214
        %v3216 = vpop.f32.mrb[0].mxu0
        %3217 = vmatprep.mubr.f32.mxu0 0.0
        %3218 = vmatmul.mubr.f32.gmra.mrb[0].mxu0 %v1415
        %v3219 = vpop.f32.mrb[0].mxu0
        %v3220 = vadd.f32 0.0, %v3219
        %v3221 = vpop.f32.mrb[0].mxu0
        %3222 = vmatprep.mubr.f32.mxu0 0.0
        %3223 = vmatmul.mubr.f32.gmra.mrb[0].mxu0 %v1418
        %v3224 = vpop.f32.mrb[0].mxu0
        %v3225 = vadd.f32 0.0, %v3224
        %v3226 = vpop.f32.mrb[0].mxu0
        %3227 = vmatprep.mubr.f32.mxu0 0.0
        %3228 = vmatmul.mubr.f32.gmra.mrb[0].mxu0 %v1421
        %v3229 = vpop.f32.mrb[0].mxu0
        %v3230 = vadd.f32 0.0, %v3229
        %v3231 = vpop.f32.mrb[0].mxu0
        %3232 = vmatprep.mubr.f32.mxu0 0.0
        %3233 = vmatmul.mubr.f32.gmra.mrb[0].mxu0 %v1424
        %v3234 = vpop.f32.mrb[0].mxu0
        %v3235 = vadd.f32 0.0, %v3234
        %v3236 = vpop.f32.mrb[0].mxu0
        %3237 = vmatprep.mubr.f32.mxu0 0.0
        %3238 = vmatmul.mubr.f32.gmra.mrb[0].mxu0 %v1427
        %v3239 = vpop.f32.mrb[0].mxu0
        %v3240 = vadd.f32 0.0, %v3239
        %v3241 = vpop.f32.mrb[0].mxu0
        %3242 = vmatprep.mubr.f32.mxu0 0.0
        %3243 = vmatmul.mubr.f32.gmra.mrb[0].mxu0 %v1430
        %v3244 = vpop.f32.mrb[0].mxu0
        %v3245 = vadd.f32 0.0, %v3244
        %v3246 = vpop.f32.mrb[0].mxu0
        %3247 = vmatprep.mubr.f32.mxu0 0.0
        %3248 = vmatmul.mubr.f32.gmra.mrb[0].mxu0 %v1433
        %v3249 = vpop.f32.mrb[0].mxu0
        %v3250 = vadd.f32 0.0, %v3249
        %v3251 = vpop.f32.mrb[0].mxu0
        %3252 = vmatprep.mubr.f32.mxu0 0.0
        %3253 = vmatmul.mubr.f32.gmra.mrb[0].mxu0 %v1436
        %v3254 = vpop.f32.mrb[0].mxu0
        %v3255 = vadd.f32 0.0, %v3254
        %v3256 = vpop.f32.mrb[0].mxu0
        %3257 = vmatprep.mubr.f32.mxu0 0.0
        %3258 = vmatmul.mubr.f32.gmra.mrb[0].mxu0 %v1439
        %v3259 = vpop.f32.mrb[0].mxu0
        %v3260 = vadd.f32 0.0, %v3259
        %v3261 = vpop.f32.mrb[0].mxu0
        %3262 = vmatprep.mubr.f32.mxu0 0.0
        %3263 = vmatmul.mubr.f32.gmra.mrb[0].mxu0 %v1442
        %v3264 = vpop.f32.mrb[0].mxu0
        %v3265 = vadd.f32 0.0, %v3264
        %v3266 = vpop.f32.mrb[0].mxu0
        %3267 = vdwg.mxu0
        %v3268 = vadd.f32 %v3106, %v3190
        %v3269 = vadd.f32 %v3107, %v3195
        %v3270 = vadd.f32 %v3108, %v3200
        %v3271 = vadd.f32 %v3109, %v3205
        %v3272 = vadd.f32 %v3110, %v3210
        %v3273 = vadd.f32 %v3111, %v3215
        %v3274 = vadd.f32 %v3112, %v3220
        %v3275 = vadd.f32 %v3113, %v3225
        %v3276 = vadd.f32 %v3114, %v3230
        %v3277 = vadd.f32 %v3115, %v3235
        %v3278 = vadd.f32 %v3116, %v3240
        %v3279 = vadd.f32 %v3117, %v3245
        %v3280 = vadd.f32 %v3118, %v3250
        %v3281 = vadd.f32 %v3119, %v3255
        %v3282 = vadd.f32 %v3120, %v3260
        %v3283 = vadd.f32 %v3121, %v3265
        %v3284 = vld [vmem:[%s1624 + $0x8] sm:$0xff]
        %3285 = vmatprep.subr.mxu0 0.0
        %3286 = vmatpush1.msra.mxu0 %v3284
        %3287 = vmatprep.subr.mxu0 0.0
        %3288 = vmatpush1.msra.mxu0 0.0
        %3289 = vmatprep.subr.mxu0 0.0
        %3290 = vmatpush1.msra.mxu0 0.0
        %3291 = vmatprep.subr.mxu0 0.0
        %3292 = vmatpush1.msra.mxu0 0.0
        %3293 = vmatprep.subr.mxu0 0.0
        %3294 = vmatpush1.msra.mxu0 0.0
        %3295 = vmatprep.subr.mxu0 0.0
        %3296 = vmatpush1.msra.mxu0 0.0
        %3297 = vmatprep.subr.mxu0 0.0
        %3298 = vmatpush1.msra.mxu0 0.0
        %3299 = vmatprep.subr.mxu0 0.0
        %3300 = vmatpush1.msra.mxu0 0.0
        %3301 = vmatprep.subr.mxu0 0.0
        %3302 = vmatpush1.msra.mxu0 0.0
        %3303 = vmatprep.subr.mxu0 0.0
        %3304 = vmatpush1.msra.mxu0 0.0
        %3305 = vmatprep.subr.mxu0 0.0
        %3306 = vmatpush1.msra.mxu0 0.0
        %3307 = vmatprep.subr.mxu0 0.0
        %3308 = vmatpush1.msra.mxu0 0.0
        %3309 = vmatprep.subr.mxu0 0.0
        %3310 = vmatpush1.msra.mxu0 0.0
        %3311 = vmatprep.subr.mxu0 0.0
        %3312 = vmatpush1.msra.mxu0 0.0
        %3313 = vmatprep.subr.mxu0 0.0
        %3314 = vmatpush1.msra.mxu0 0.0
        %3315 = vmatprep.subr.mxu0 0.0
        %3316 = vmatpush1.msra.mxu0 0.0
        %3317 = vmatprep.subr.mxu0 0.0
        %3318 = vmatpush1.msra.mxu0 0.0
        %3319 = vmatprep.subr.mxu0 0.0
        %3320 = vmatpush1.msra.mxu0 0.0
        %3321 = vmatprep.subr.mxu0 0.0
        %3322 = vmatpush1.msra.mxu0 0.0
        %3323 = vmatprep.subr.mxu0 0.0
        %3324 = vmatpush1.msra.mxu0 0.0
        %3325 = vmatprep.subr.mxu0 0.0
        %3326 = vmatpush1.msra.mxu0 0.0
        %3327 = vmatprep.subr.mxu0 0.0
        %3328 = vmatpush1.msra.mxu0 0.0
        %3329 = vmatprep.subr.mxu0 0.0
        %3330 = vmatpush1.msra.mxu0 0.0
        %3331 = vmatprep.subr.mxu0 0.0
        %3332 = vmatpush1.msra.mxu0 0.0
        %3333 = vmatprep.subr.mxu0 0.0
        %3334 = vmatpush1.msra.mxu0 0.0
        %3335 = vmatprep.subr.mxu0 0.0
        %3336 = vmatpush1.msra.mxu0 0.0
        %3337 = vmatprep.subr.mxu0 0.0
        %3338 = vmatpush1.msra.mxu0 0.0
        %3339 = vmatprep.subr.mxu0 0.0
        %3340 = vmatpush1.msra.mxu0 0.0
        %3341 = vmatprep.subr.mxu0 0.0
        %3342 = vmatpush1.msra.mxu0 0.0
        %3343 = vmatprep.subr.mxu0 0.0
        %3344 = vmatpush1.msra.mxu0 0.0
        %3345 = vmatprep.subr.mxu0 0.0
        %3346 = vmatpush1.msra.mxu0 0.0
        %3347 = vmatprep.subr.mxu0 0.0
        %3348 = vmatpush1.msra.mxu0 0.0
        %3349 = vmatprep.mubr.f32.mxu0 0.0
        %3350 = vmatmul.mubr.f32.gmra.mrb[0].mxu0 %v1627
        %v3351 = vpop.f32.mrb[0].mxu0
        %v3352 = vadd.f32 0.0, %v3351
        %v3353 = vpop.f32.mrb[0].mxu0
        %3354 = vmatprep.mubr.f32.mxu0 0.0
        %3355 = vmatmul.mubr.f32.gmra.mrb[0].mxu0 %v1630
        %v3356 = vpop.f32.mrb[0].mxu0
        %v3357 = vadd.f32 0.0, %v3356
        %v3358 = vpop.f32.mrb[0].mxu0
        %3359 = vmatprep.mubr.f32.mxu0 0.0
        %3360 = vmatmul.mubr.f32.gmra.mrb[0].mxu0 %v1633
        %v3361 = vpop.f32.mrb[0].mxu0
        %v3362 = vadd.f32 0.0, %v3361
        %v3363 = vpop.f32.mrb[0].mxu0
        %3364 = vmatprep.mubr.f32.mxu0 0.0
        %3365 = vmatmul.mubr.f32.gmra.mrb[0].mxu0 %v1636
        %v3366 = vpop.f32.mrb[0].mxu0
        %v3367 = vadd.f32 0.0, %v3366
        %v3368 = vpop.f32.mrb[0].mxu0
        %3369 = vmatprep.mubr.f32.mxu0 0.0
        %3370 = vmatmul.mubr.f32.gmra.mrb[0].mxu0 %v1639
        %v3371 = vpop.f32.mrb[0].mxu0
        %v3372 = vadd.f32 0.0, %v3371
        %v3373 = vpop.f32.mrb[0].mxu0
        %3374 = vmatprep.mubr.f32.mxu0 0.0
        %3375 = vmatmul.mubr.f32.gmra.mrb[0].mxu0 %v1642
        %v3376 = vpop.f32.mrb[0].mxu0
        %v3377 = vadd.f32 0.0, %v3376
        %v3378 = vpop.f32.mrb[0].mxu0
        %3379 = vmatprep.mubr.f32.mxu0 0.0
        %3380 = vmatmul.mubr.f32.gmra.mrb[0].mxu0 %v1645
        %v3381 = vpop.f32.mrb[0].mxu0
        %v3382 = vadd.f32 0.0, %v3381
        %v3383 = vpop.f32.mrb[0].mxu0
        %3384 = vmatprep.mubr.f32.mxu0 0.0
        %3385 = vmatmul.mubr.f32.gmra.mrb[0].mxu0 %v1648
        %v3386 = vpop.f32.mrb[0].mxu0
        %v3387 = vadd.f32 0.0, %v3386
        %v3388 = vpop.f32.mrb[0].mxu0
        %3389 = vmatprep.mubr.f32.mxu0 0.0
        %3390 = vmatmul.mubr.f32.gmra.mrb[0].mxu0 %v1651
        %v3391 = vpop.f32.mrb[0].mxu0
        %v3392 = vadd.f32 0.0, %v3391
        %v3393 = vpop.f32.mrb[0].mxu0
        %3394 = vmatprep.mubr.f32.mxu0 0.0
        %3395 = vmatmul.mubr.f32.gmra.mrb[0].mxu0 %v1654
        %v3396 = vpop.f32.mrb[0].mxu0
        %v3397 = vadd.f32 0.0, %v3396
        %v3398 = vpop.f32.mrb[0].mxu0
        %3399 = vmatprep.mubr.f32.mxu0 0.0
        %3400 = vmatmul.mubr.f32.gmra.mrb[0].mxu0 %v1657
        %v3401 = vpop.f32.mrb[0].mxu0
        %v3402 = vadd.f32 0.0, %v3401
        %v3403 = vpop.f32.mrb[0].mxu0
        %3404 = vmatprep.mubr.f32.mxu0 0.0
        %3405 = vmatmul.mubr.f32.gmra.mrb[0].mxu0 %v1660
        %v3406 = vpop.f32.mrb[0].mxu0
        %v3407 = vadd.f32 0.0, %v3406
        %v3408 = vpop.f32.mrb[0].mxu0
        %3409 = vmatprep.mubr.f32.mxu0 0.0
        %3410 = vmatmul.mubr.f32.gmra.mrb[0].mxu0 %v1663
        %v3411 = vpop.f32.mrb[0].mxu0
        %v3412 = vadd.f32 0.0, %v3411
        %v3413 = vpop.f32.mrb[0].mxu0
        %3414 = vmatprep.mubr.f32.mxu0 0.0
        %3415 = vmatmul.mubr.f32.gmra.mrb[0].mxu0 %v1666
        %v3416 = vpop.f32.mrb[0].mxu0
        %v3417 = vadd.f32 0.0, %v3416
        %v3418 = vpop.f32.mrb[0].mxu0
        %3419 = vmatprep.mubr.f32.mxu0 0.0
        %3420 = vmatmul.mubr.f32.gmra.mrb[0].mxu0 %v1669
        %v3421 = vpop.f32.mrb[0].mxu0
        %v3422 = vadd.f32 0.0, %v3421
        %v3423 = vpop.f32.mrb[0].mxu0
        %3424 = vmatprep.mubr.f32.mxu0 0.0
        %3425 = vmatmul.mubr.f32.gmra.mrb[0].mxu0 %v1672
        %v3426 = vpop.f32.mrb[0].mxu0
        %v3427 = vadd.f32 0.0, %v3426
        %v3428 = vpop.f32.mrb[0].mxu0
        %3429 = vdwg.mxu0
        %v3430 = vadd.f32 %v3268, %v3352
        %v3431 = vadd.f32 %v3269, %v3357
        %v3432 = vadd.f32 %v3270, %v3362
        %v3433 = vadd.f32 %v3271, %v3367
        %v3434 = vadd.f32 %v3272, %v3372
        %v3435 = vadd.f32 %v3273, %v3377
        %v3436 = vadd.f32 %v3274, %v3382
        %v3437 = vadd.f32 %v3275, %v3387
        %v3438 = vadd.f32 %v3276, %v3392
        %v3439 = vadd.f32 %v3277, %v3397
        %v3440 = vadd.f32 %v3278, %v3402
        %v3441 = vadd.f32 %v3279, %v3407
        %v3442 = vadd.f32 %v3280, %v3412
        %v3443 = vadd.f32 %v3281, %v3417
        %v3444 = vadd.f32 %v3282, %v3422
        %v3445 = vadd.f32 %v3283, %v3427
        %v3446 = vld [vmem:[%s1851 + $0x8] sm:$0xff]
        %3447 = vmatprep.subr.mxu0 0.0
        %3448 = vmatpush1.msra.mxu0 %v3446
        %3449 = vmatprep.subr.mxu0 0.0
        %3450 = vmatpush1.msra.mxu0 0.0
        %3451 = vmatprep.subr.mxu0 0.0
        %3452 = vmatpush1.msra.mxu0 0.0
        %3453 = vmatprep.subr.mxu0 0.0
        %3454 = vmatpush1.msra.mxu0 0.0
        %3455 = vmatprep.subr.mxu0 0.0
        %3456 = vmatpush1.msra.mxu0 0.0
        %3457 = vmatprep.subr.mxu0 0.0
        %3458 = vmatpush1.msra.mxu0 0.0
        %3459 = vmatprep.subr.mxu0 0.0
        %3460 = vmatpush1.msra.mxu0 0.0
        %3461 = vmatprep.subr.mxu0 0.0
        %3462 = vmatpush1.msra.mxu0 0.0
        %3463 = vmatprep.subr.mxu0 0.0
        %3464 = vmatpush1.msra.mxu0 0.0
        %3465 = vmatprep.subr.mxu0 0.0
        %3466 = vmatpush1.msra.mxu0 0.0
        %3467 = vmatprep.subr.mxu0 0.0
        %3468 = vmatpush1.msra.mxu0 0.0
        %3469 = vmatprep.subr.mxu0 0.0
        %3470 = vmatpush1.msra.mxu0 0.0
        %3471 = vmatprep.subr.mxu0 0.0
        %3472 = vmatpush1.msra.mxu0 0.0
        %3473 = vmatprep.subr.mxu0 0.0
        %3474 = vmatpush1.msra.mxu0 0.0
        %3475 = vmatprep.subr.mxu0 0.0
        %3476 = vmatpush1.msra.mxu0 0.0
        %3477 = vmatprep.subr.mxu0 0.0
        %3478 = vmatpush1.msra.mxu0 0.0
        %3479 = vmatprep.subr.mxu0 0.0
        %3480 = vmatpush1.msra.mxu0 0.0
        %3481 = vmatprep.subr.mxu0 0.0
        %3482 = vmatpush1.msra.mxu0 0.0
        %3483 = vmatprep.subr.mxu0 0.0
        %3484 = vmatpush1.msra.mxu0 0.0
        %3485 = vmatprep.subr.mxu0 0.0
        %3486 = vmatpush1.msra.mxu0 0.0
        %3487 = vmatprep.subr.mxu0 0.0
        %3488 = vmatpush1.msra.mxu0 0.0
        %3489 = vmatprep.subr.mxu0 0.0
        %3490 = vmatpush1.msra.mxu0 0.0
        %3491 = vmatprep.subr.mxu0 0.0
        %3492 = vmatpush1.msra.mxu0 0.0
        %3493 = vmatprep.subr.mxu0 0.0
        %3494 = vmatpush1.msra.mxu0 0.0
        %3495 = vmatprep.subr.mxu0 0.0
        %3496 = vmatpush1.msra.mxu0 0.0
        %3497 = vmatprep.subr.mxu0 0.0
        %3498 = vmatpush1.msra.mxu0 0.0
        %3499 = vmatprep.subr.mxu0 0.0
        %3500 = vmatpush1.msra.mxu0 0.0
        %3501 = vmatprep.subr.mxu0 0.0
        %3502 = vmatpush1.msra.mxu0 0.0
        %3503 = vmatprep.subr.mxu0 0.0
        %3504 = vmatpush1.msra.mxu0 0.0
        %3505 = vmatprep.subr.mxu0 0.0
        %3506 = vmatpush1.msra.mxu0 0.0
        %3507 = vmatprep.subr.mxu0 0.0
        %3508 = vmatpush1.msra.mxu0 0.0
        %3509 = vmatprep.subr.mxu0 0.0
        %3510 = vmatpush1.msra.mxu0 0.0
        %3511 = vmatprep.mubr.f32.mxu0 0.0
        %3512 = vmatmul.mubr.f32.gmra.mrb[0].mxu0 %v1854
        %v3513 = vpop.f32.mrb[0].mxu0
        %v3514 = vadd.f32 0.0, %v3513
        %v3515 = vpop.f32.mrb[0].mxu0
        %3516 = vmatprep.mubr.f32.mxu0 0.0
        %3517 = vmatmul.mubr.f32.gmra.mrb[0].mxu0 %v1857
        %v3518 = vpop.f32.mrb[0].mxu0
        %v3519 = vadd.f32 0.0, %v3518
        %v3520 = vpop.f32.mrb[0].mxu0
        %3521 = vmatprep.mubr.f32.mxu0 0.0
        %3522 = vmatmul.mubr.f32.gmra.mrb[0].mxu0 %v1860
        %v3523 = vpop.f32.mrb[0].mxu0
        %v3524 = vadd.f32 0.0, %v3523
        %v3525 = vpop.f32.mrb[0].mxu0
        %3526 = vmatprep.mubr.f32.mxu0 0.0
        %3527 = vmatmul.mubr.f32.gmra.mrb[0].mxu0 %v1863
        %v3528 = vpop.f32.mrb[0].mxu0
        %v3529 = vadd.f32 0.0, %v3528
        %v3530 = vpop.f32.mrb[0].mxu0
        %3531 = vmatprep.mubr.f32.mxu0 0.0
        %3532 = vmatmul.mubr.f32.gmra.mrb[0].mxu0 %v1866
        %v3533 = vpop.f32.mrb[0].mxu0
        %v3534 = vadd.f32 0.0, %v3533
        %v3535 = vpop.f32.mrb[0].mxu0
        %3536 = vmatprep.mubr.f32.mxu0 0.0
        %3537 = vmatmul.mubr.f32.gmra.mrb[0].mxu0 %v1869
        %v3538 = vpop.f32.mrb[0].mxu0
        %v3539 = vadd.f32 0.0, %v3538
        %v3540 = vpop.f32.mrb[0].mxu0
        %3541 = vmatprep.mubr.f32.mxu0 0.0
        %3542 = vmatmul.mubr.f32.gmra.mrb[0].mxu0 %v1872
        %v3543 = vpop.f32.mrb[0].mxu0
        %v3544 = vadd.f32 0.0, %v3543
        %v3545 = vpop.f32.mrb[0].mxu0
        %3546 = vmatprep.mubr.f32.mxu0 0.0
        %3547 = vmatmul.mubr.f32.gmra.mrb[0].mxu0 %v1875
        %v3548 = vpop.f32.mrb[0].mxu0
        %v3549 = vadd.f32 0.0, %v3548
        %v3550 = vpop.f32.mrb[0].mxu0
        %3551 = vmatprep.mubr.f32.mxu0 0.0
        %3552 = vmatmul.mubr.f32.gmra.mrb[0].mxu0 %v1878
        %v3553 = vpop.f32.mrb[0].mxu0
        %v3554 = vadd.f32 0.0, %v3553
        %v3555 = vpop.f32.mrb[0].mxu0
        %3556 = vmatprep.mubr.f32.mxu0 0.0
        %3557 = vmatmul.mubr.f32.gmra.mrb[0].mxu0 %v1881
        %v3558 = vpop.f32.mrb[0].mxu0
        %v3559 = vadd.f32 0.0, %v3558
        %v3560 = vpop.f32.mrb[0].mxu0
        %3561 = vmatprep.mubr.f32.mxu0 0.0
        %3562 = vmatmul.mubr.f32.gmra.mrb[0].mxu0 %v1884
        %v3563 = vpop.f32.mrb[0].mxu0
        %v3564 = vadd.f32 0.0, %v3563
        %v3565 = vpop.f32.mrb[0].mxu0
        %3566 = vmatprep.mubr.f32.mxu0 0.0
        %3567 = vmatmul.mubr.f32.gmra.mrb[0].mxu0 %v1887
        %v3568 = vpop.f32.mrb[0].mxu0
        %v3569 = vadd.f32 0.0, %v3568
        %v3570 = vpop.f32.mrb[0].mxu0
        %3571 = vmatprep.mubr.f32.mxu0 0.0
        %3572 = vmatmul.mubr.f32.gmra.mrb[0].mxu0 %v1890
        %v3573 = vpop.f32.mrb[0].mxu0
        %v3574 = vadd.f32 0.0, %v3573
        %v3575 = vpop.f32.mrb[0].mxu0
        %3576 = vmatprep.mubr.f32.mxu0 0.0
        %3577 = vmatmul.mubr.f32.gmra.mrb[0].mxu0 %v1893
        %v3578 = vpop.f32.mrb[0].mxu0
        %v3579 = vadd.f32 0.0, %v3578
        %v3580 = vpop.f32.mrb[0].mxu0
        %3581 = vmatprep.mubr.f32.mxu0 0.0
        %3582 = vmatmul.mubr.f32.gmra.mrb[0].mxu0 %v1896
        %v3583 = vpop.f32.mrb[0].mxu0
        %v3584 = vadd.f32 0.0, %v3583
        %v3585 = vpop.f32.mrb[0].mxu0
        %3586 = vmatprep.mubr.f32.mxu0 0.0
        %3587 = vmatmul.mubr.f32.gmra.mrb[0].mxu0 %v1899
        %v3588 = vpop.f32.mrb[0].mxu0
        %v3589 = vadd.f32 0.0, %v3588
        %v3590 = vpop.f32.mrb[0].mxu0
        %3591 = vdwg.mxu0
        %v3592 = vadd.f32 %v3430, %v3514
        %v3593 = vadd.f32 %v3431, %v3519
        %v3594 = vadd.f32 %v3432, %v3524
        %v3595 = vadd.f32 %v3433, %v3529
        %v3596 = vadd.f32 %v3434, %v3534
        %v3597 = vadd.f32 %v3435, %v3539
        %v3598 = vadd.f32 %v3436, %v3544
        %v3599 = vadd.f32 %v3437, %v3549
        %v3600 = vadd.f32 %v3438, %v3554
        %v3601 = vadd.f32 %v3439, %v3559
        %v3602 = vadd.f32 %v3440, %v3564
        %v3603 = vadd.f32 %v3441, %v3569
        %v3604 = vadd.f32 %v3442, %v3574
        %v3605 = vadd.f32 %v3443, %v3579
        %v3606 = vadd.f32 %v3444, %v3584
        %v3607 = vadd.f32 %v3445, %v3589
        %v3608 = vld [vmem:[%s2078 + $0x8] sm:$0xff]
        %3609 = vmatprep.subr.mxu0 0.0
        %3610 = vmatpush1.msra.mxu0 %v3608
        %3611 = vmatprep.subr.mxu0 0.0
        %3612 = vmatpush1.msra.mxu0 0.0
        %3613 = vmatprep.subr.mxu0 0.0
        %3614 = vmatpush1.msra.mxu0 0.0
        %3615 = vmatprep.subr.mxu0 0.0
        %3616 = vmatpush1.msra.mxu0 0.0
        %3617 = vmatprep.subr.mxu0 0.0
        %3618 = vmatpush1.msra.mxu0 0.0
        %3619 = vmatprep.subr.mxu0 0.0
        %3620 = vmatpush1.msra.mxu0 0.0
        %3621 = vmatprep.subr.mxu0 0.0
        %3622 = vmatpush1.msra.mxu0 0.0
        %3623 = vmatprep.subr.mxu0 0.0
        %3624 = vmatpush1.msra.mxu0 0.0
        %3625 = vmatprep.subr.mxu0 0.0
        %3626 = vmatpush1.msra.mxu0 0.0
        %3627 = vmatprep.subr.mxu0 0.0
        %3628 = vmatpush1.msra.mxu0 0.0
        %3629 = vmatprep.subr.mxu0 0.0
        %3630 = vmatpush1.msra.mxu0 0.0
        %3631 = vmatprep.subr.mxu0 0.0
        %3632 = vmatpush1.msra.mxu0 0.0
        %3633 = vmatprep.subr.mxu0 0.0
        %3634 = vmatpush1.msra.mxu0 0.0
        %3635 = vmatprep.subr.mxu0 0.0
        %3636 = vmatpush1.msra.mxu0 0.0
        %3637 = vmatprep.subr.mxu0 0.0
        %3638 = vmatpush1.msra.mxu0 0.0
        %3639 = vmatprep.subr.mxu0 0.0
        %3640 = vmatpush1.msra.mxu0 0.0
        %3641 = vmatprep.subr.mxu0 0.0
        %3642 = vmatpush1.msra.mxu0 0.0
        %3643 = vmatprep.subr.mxu0 0.0
        %3644 = vmatpush1.msra.mxu0 0.0
        %3645 = vmatprep.subr.mxu0 0.0
        %3646 = vmatpush1.msra.mxu0 0.0
        %3647 = vmatprep.subr.mxu0 0.0
        %3648 = vmatpush1.msra.mxu0 0.0
        %3649 = vmatprep.subr.mxu0 0.0
        %3650 = vmatpush1.msra.mxu0 0.0
        %3651 = vmatprep.subr.mxu0 0.0
        %3652 = vmatpush1.msra.mxu0 0.0
        %3653 = vmatprep.subr.mxu0 0.0
        %3654 = vmatpush1.msra.mxu0 0.0
        %3655 = vmatprep.subr.mxu0 0.0
        %3656 = vmatpush1.msra.mxu0 0.0
        %3657 = vmatprep.subr.mxu0 0.0
        %3658 = vmatpush1.msra.mxu0 0.0
        %3659 = vmatprep.subr.mxu0 0.0
        %3660 = vmatpush1.msra.mxu0 0.0
        %3661 = vmatprep.subr.mxu0 0.0
        %3662 = vmatpush1.msra.mxu0 0.0
        %3663 = vmatprep.subr.mxu0 0.0
        %3664 = vmatpush1.msra.mxu0 0.0
        %3665 = vmatprep.subr.mxu0 0.0
        %3666 = vmatpush1.msra.mxu0 0.0
        %3667 = vmatprep.subr.mxu0 0.0
        %3668 = vmatpush1.msra.mxu0 0.0
        %3669 = vmatprep.subr.mxu0 0.0
        %3670 = vmatpush1.msra.mxu0 0.0
        %3671 = vmatprep.subr.mxu0 0.0
        %3672 = vmatpush1.msra.mxu0 0.0
        %3673 = vmatprep.mubr.f32.mxu0 0.0
        %3674 = vmatmul.mubr.f32.gmra.mrb[0].mxu0 %v2081
        %v3675 = vpop.f32.mrb[0].mxu0
        %v3676 = vadd.f32 0.0, %v3675
        %v3677 = vpop.f32.mrb[0].mxu0
        %3678 = vmatprep.mubr.f32.mxu0 0.0
        %3679 = vmatmul.mubr.f32.gmra.mrb[0].mxu0 %v2084
        %v3680 = vpop.f32.mrb[0].mxu0
        %v3681 = vadd.f32 0.0, %v3680
        %v3682 = vpop.f32.mrb[0].mxu0
        %3683 = vmatprep.mubr.f32.mxu0 0.0
        %3684 = vmatmul.mubr.f32.gmra.mrb[0].mxu0 %v2087
        %v3685 = vpop.f32.mrb[0].mxu0
        %v3686 = vadd.f32 0.0, %v3685
        %v3687 = vpop.f32.mrb[0].mxu0
        %3688 = vmatprep.mubr.f32.mxu0 0.0
        %3689 = vmatmul.mubr.f32.gmra.mrb[0].mxu0 %v2090
        %v3690 = vpop.f32.mrb[0].mxu0
        %v3691 = vadd.f32 0.0, %v3690
        %v3692 = vpop.f32.mrb[0].mxu0
        %3693 = vmatprep.mubr.f32.mxu0 0.0
        %3694 = vmatmul.mubr.f32.gmra.mrb[0].mxu0 %v2093
        %v3695 = vpop.f32.mrb[0].mxu0
        %v3696 = vadd.f32 0.0, %v3695
        %v3697 = vpop.f32.mrb[0].mxu0
        %3698 = vmatprep.mubr.f32.mxu0 0.0
        %3699 = vmatmul.mubr.f32.gmra.mrb[0].mxu0 %v2096
        %v3700 = vpop.f32.mrb[0].mxu0
        %v3701 = vadd.f32 0.0, %v3700
        %v3702 = vpop.f32.mrb[0].mxu0
        %3703 = vmatprep.mubr.f32.mxu0 0.0
        %3704 = vmatmul.mubr.f32.gmra.mrb[0].mxu0 %v2099
        %v3705 = vpop.f32.mrb[0].mxu0
        %v3706 = vadd.f32 0.0, %v3705
        %v3707 = vpop.f32.mrb[0].mxu0
        %3708 = vmatprep.mubr.f32.mxu0 0.0
        %3709 = vmatmul.mubr.f32.gmra.mrb[0].mxu0 %v2102
        %v3710 = vpop.f32.mrb[0].mxu0
        %v3711 = vadd.f32 0.0, %v3710
        %v3712 = vpop.f32.mrb[0].mxu0
        %3713 = vmatprep.mubr.f32.mxu0 0.0
        %3714 = vmatmul.mubr.f32.gmra.mrb[0].mxu0 %v2105
        %v3715 = vpop.f32.mrb[0].mxu0
        %v3716 = vadd.f32 0.0, %v3715
        %v3717 = vpop.f32.mrb[0].mxu0
        %3718 = vmatprep.mubr.f32.mxu0 0.0
        %3719 = vmatmul.mubr.f32.gmra.mrb[0].mxu0 %v2108
        %v3720 = vpop.f32.mrb[0].mxu0
        %v3721 = vadd.f32 0.0, %v3720
        %v3722 = vpop.f32.mrb[0].mxu0
        %3723 = vmatprep.mubr.f32.mxu0 0.0
        %3724 = vmatmul.mubr.f32.gmra.mrb[0].mxu0 %v2111
        %v3725 = vpop.f32.mrb[0].mxu0
        %v3726 = vadd.f32 0.0, %v3725
        %v3727 = vpop.f32.mrb[0].mxu0
        %3728 = vmatprep.mubr.f32.mxu0 0.0
        %3729 = vmatmul.mubr.f32.gmra.mrb[0].mxu0 %v2114
        %v3730 = vpop.f32.mrb[0].mxu0
        %v3731 = vadd.f32 0.0, %v3730
        %v3732 = vpop.f32.mrb[0].mxu0
        %3733 = vmatprep.mubr.f32.mxu0 0.0
        %3734 = vmatmul.mubr.f32.gmra.mrb[0].mxu0 %v2117
        %v3735 = vpop.f32.mrb[0].mxu0
        %v3736 = vadd.f32 0.0, %v3735
        %v3737 = vpop.f32.mrb[0].mxu0
        %3738 = vmatprep.mubr.f32.mxu0 0.0
        %3739 = vmatmul.mubr.f32.gmra.mrb[0].mxu0 %v2120
        %v3740 = vpop.f32.mrb[0].mxu0
        %v3741 = vadd.f32 0.0, %v3740
        %v3742 = vpop.f32.mrb[0].mxu0
        %3743 = vmatprep.mubr.f32.mxu0 0.0
        %3744 = vmatmul.mubr.f32.gmra.mrb[0].mxu0 %v2123
        %v3745 = vpop.f32.mrb[0].mxu0
        %v3746 = vadd.f32 0.0, %v3745
        %v3747 = vpop.f32.mrb[0].mxu0
        %3748 = vmatprep.mubr.f32.mxu0 0.0
        %3749 = vmatmul.mubr.f32.gmra.mrb[0].mxu0 %v2126
        %v3750 = vpop.f32.mrb[0].mxu0
        %v3751 = vadd.f32 0.0, %v3750
        %v3752 = vpop.f32.mrb[0].mxu0
        %3753 = vdwg.mxu0
        %v3754 = vadd.f32 %v3592, %v3676
        %v3755 = vadd.f32 %v3593, %v3681
        %v3756 = vadd.f32 %v3594, %v3686
        %v3757 = vadd.f32 %v3595, %v3691
        %v3758 = vadd.f32 %v3596, %v3696
        %v3759 = vadd.f32 %v3597, %v3701
        %v3760 = vadd.f32 %v3598, %v3706
        %v3761 = vadd.f32 %v3599, %v3711
        %v3762 = vadd.f32 %v3600, %v3716
        %v3763 = vadd.f32 %v3601, %v3721
        %v3764 = vadd.f32 %v3602, %v3726
        %v3765 = vadd.f32 %v3603, %v3731
        %v3766 = vadd.f32 %v3604, %v3736
        %v3767 = vadd.f32 %v3605, %v3741
        %v3768 = vadd.f32 %v3606, %v3746
        %v3769 = vadd.f32 %v3607, %v3751
        %v3770 = vld [vmem:[%s2 + $0x1] sm:$0x1]
        %v3772 = vlaneseq
        %v3773 = vshrl.u32 %v3772, 7
        %v3774 = vsub.s32 0, %v3773
        %v3775 = vrot.slane %v3770, %v3774
        %v3777 = vadd.f32 %v3754, %v3775
        %v3778 = vadd.f32 %v3755, %v3775
        %v3779 = vadd.f32 %v3756, %v3775
        %v3780 = vadd.f32 %v3757, %v3775
        %v3781 = vadd.f32 %v3758, %v3775
        %v3782 = vadd.f32 %v3759, %v3775
        %v3783 = vadd.f32 %v3760, %v3775
        %v3784 = vadd.f32 %v3761, %v3775
        %v3785 = vadd.f32 %v3762, %v3775
        %v3786 = vadd.f32 %v3763, %v3775
        %v3787 = vadd.f32 %v3764, %v3775
        %v3788 = vadd.f32 %v3765, %v3775
        %v3789 = vadd.f32 %v3766, %v3775
        %v3790 = vadd.f32 %v3767, %v3775
        %v3791 = vadd.f32 %v3768, %v3775
        %v3792 = vadd.f32 %v3769, %v3775
        %v3793 = vmax.f32 %v3777, 0.0
        %v3794 = vmax.f32 %v3778, 0.0
        %v3795 = vmax.f32 %v3779, 0.0
        %v3796 = vmax.f32 %v3780, 0.0
        %v3797 = vmax.f32 %v3781, 0.0
        %v3798 = vmax.f32 %v3782, 0.0
        %v3799 = vmax.f32 %v3783, 0.0
        %v3800 = vmax.f32 %v3784, 0.0
        %v3801 = vmax.f32 %v3785, 0.0
        %v3802 = vmax.f32 %v3786, 0.0
        %v3803 = vmax.f32 %v3787, 0.0
        %v3804 = vmax.f32 %v3788, 0.0
        %v3805 = vmax.f32 %v3789, 0.0
        %v3806 = vmax.f32 %v3790, 0.0
        %v3807 = vmax.f32 %v3791, 0.0
        %v3808 = vmax.f32 %v3792, 0.0
        %v3809 = vld [vmem:[%s3 + $0x80] sm:$0xff]
        %v3810 = vld [vmem:[%s3 + $0x88] sm:$0xff]
        %v3811 = vld [vmem:[%s3 + $0x90] sm:$0xff]
        %v3812 = vld [vmem:[%s3 + $0x98] sm:$0xff]
        %v3813 = vld [vmem:[%s3 + $0xa0] sm:$0xff]
        %v3814 = vld [vmem:[%s3 + $0xa8] sm:$0xff]
        %v3815 = vld [vmem:[%s3 + $0xb0] sm:$0xff]
        %v3816 = vld [vmem:[%s3 + $0xb8] sm:$0xff]
        %v3817 = vld [vmem:[%s3 + $0xc0] sm:$0xff]
        %v3818 = vld [vmem:[%s3 + $0xc8] sm:$0xff]
        %v3819 = vld [vmem:[%s3 + $0xd0] sm:$0xff]
        %v3820 = vld [vmem:[%s3 + $0xd8] sm:$0xff]
        %v3821 = vld [vmem:[%s3 + $0xe0] sm:$0xff]
        %v3822 = vld [vmem:[%s3 + $0xe8] sm:$0xff]
        %v3823 = vld [vmem:[%s3 + $0xf0] sm:$0xff]
        %v3824 = vld [vmem:[%s3 + $0xf8] sm:$0xff]
        %3825 = vmatprep.subr.mxu0 0.0
        %3826 = vmatpush1.msra.mxu0 %v3809
        %3827 = vmatprep.subr.mxu0 0.0
        %3828 = vmatpush1.msra.mxu0 %v3810
        %3829 = vmatprep.subr.mxu0 0.0
        %3830 = vmatpush1.msra.mxu0 %v3811
        %3831 = vmatprep.subr.mxu0 0.0
        %3832 = vmatpush1.msra.mxu0 %v3812
        %3833 = vmatprep.subr.mxu0 0.0
        %3834 = vmatpush1.msra.mxu0 %v3813
        %3835 = vmatprep.subr.mxu0 0.0
        %3836 = vmatpush1.msra.mxu0 %v3814
        %3837 = vmatprep.subr.mxu0 0.0
        %3838 = vmatpush1.msra.mxu0 %v3815
        %3839 = vmatprep.subr.mxu0 0.0
        %3840 = vmatpush1.msra.mxu0 %v3816
        %3841 = vmatprep.subr.mxu0 0.0
        %3842 = vmatpush1.msra.mxu0 %v3817
        %3843 = vmatprep.subr.mxu0 0.0
        %3844 = vmatpush1.msra.mxu0 %v3818
        %3845 = vmatprep.subr.mxu0 0.0
        %3846 = vmatpush1.msra.mxu0 %v3819
        %3847 = vmatprep.subr.mxu0 0.0
        %3848 = vmatpush1.msra.mxu0 %v3820
        %3849 = vmatprep.subr.mxu0 0.0
        %3850 = vmatpush1.msra.mxu0 %v3821
        %3851 = vmatprep.subr.mxu0 0.0
        %3852 = vmatpush1.msra.mxu0 %v3822
        %3853 = vmatprep.subr.mxu0 0.0
        %3854 = vmatpush1.msra.mxu0 %v3823
        %3855 = vmatprep.subr.mxu0 0.0
        %3856 = vmatpush1.msra.mxu0 %v3824
        %3857 = vmatprep.subr.mxu0 0.0
        %3858 = vmatpush1.msra.mxu0 0.0
        %3859 = vmatprep.subr.mxu0 0.0
        %3860 = vmatpush1.msra.mxu0 0.0
        %3861 = vmatprep.subr.mxu0 0.0
        %3862 = vmatpush1.msra.mxu0 0.0
        %3863 = vmatprep.subr.mxu0 0.0
        %3864 = vmatpush1.msra.mxu0 0.0
        %3865 = vmatprep.subr.mxu0 0.0
        %3866 = vmatpush1.msra.mxu0 0.0
        %3867 = vmatprep.subr.mxu0 0.0
        %3868 = vmatpush1.msra.mxu0 0.0
        %3869 = vmatprep.subr.mxu0 0.0
        %3870 = vmatpush1.msra.mxu0 0.0
        %3871 = vmatprep.subr.mxu0 0.0
        %3872 = vmatpush1.msra.mxu0 0.0
        %3873 = vmatprep.subr.mxu0 0.0
        %3874 = vmatpush1.msra.mxu0 0.0
        %3875 = vmatprep.subr.mxu0 0.0
        %3876 = vmatpush1.msra.mxu0 0.0
        %3877 = vmatprep.subr.mxu0 0.0
        %3878 = vmatpush1.msra.mxu0 0.0
        %3879 = vmatprep.subr.mxu0 0.0
        %3880 = vmatpush1.msra.mxu0 0.0
        %3881 = vmatprep.subr.mxu0 0.0
        %3882 = vmatpush1.msra.mxu0 0.0
        %3883 = vmatprep.subr.mxu0 0.0
        %3884 = vmatpush1.msra.mxu0 0.0
        %3885 = vmatprep.subr.mxu0 0.0
        %3886 = vmatpush1.msra.mxu0 0.0
        %3887 = vmatprep.subr.mxu0 0.0
        %3888 = vmatpush1.msra.mxu0 0.0
        %3889 = vmatprep.mubr.f32.mxu0 0.0
        %3890 = vmatmul.mubr.f32.gmra.mrb[0].mxu0 %v3793
        %v3891 = vpop.f32.mrb[0].mxu0
        %v3892 = vadd.f32 0.0, %v3891
        %v3893 = vpop.f32.mrb[0].mxu0
        %3894 = vmatprep.mubr.f32.mxu0 0.0
        %3895 = vmatmul.mubr.f32.gmra.mrb[0].mxu0 %v3794
        %v3896 = vpop.f32.mrb[0].mxu0
        %v3897 = vadd.f32 0.0, %v3896
        %v3898 = vpop.f32.mrb[0].mxu0
        %3899 = vmatprep.mubr.f32.mxu0 0.0
        %3900 = vmatmul.mubr.f32.gmra.mrb[0].mxu0 %v3795
        %v3901 = vpop.f32.mrb[0].mxu0
        %v3902 = vadd.f32 0.0, %v3901
        %v3903 = vpop.f32.mrb[0].mxu0
        %3904 = vmatprep.mubr.f32.mxu0 0.0
        %3905 = vmatmul.mubr.f32.gmra.mrb[0].mxu0 %v3796
        %v3906 = vpop.f32.mrb[0].mxu0
        %v3907 = vadd.f32 0.0, %v3906
        %v3908 = vpop.f32.mrb[0].mxu0
        %3909 = vmatprep.mubr.f32.mxu0 0.0
        %3910 = vmatmul.mubr.f32.gmra.mrb[0].mxu0 %v3797
        %v3911 = vpop.f32.mrb[0].mxu0
        %v3912 = vadd.f32 0.0, %v3911
        %v3913 = vpop.f32.mrb[0].mxu0
        %3914 = vmatprep.mubr.f32.mxu0 0.0
        %3915 = vmatmul.mubr.f32.gmra.mrb[0].mxu0 %v3798
        %v3916 = vpop.f32.mrb[0].mxu0
        %v3917 = vadd.f32 0.0, %v3916
        %v3918 = vpop.f32.mrb[0].mxu0
        %3919 = vmatprep.mubr.f32.mxu0 0.0
        %3920 = vmatmul.mubr.f32.gmra.mrb[0].mxu0 %v3799
        %v3921 = vpop.f32.mrb[0].mxu0
        %v3922 = vadd.f32 0.0, %v3921
        %v3923 = vpop.f32.mrb[0].mxu0
        %3924 = vmatprep.mubr.f32.mxu0 0.0
        %3925 = vmatmul.mubr.f32.gmra.mrb[0].mxu0 %v3800
        %v3926 = vpop.f32.mrb[0].mxu0
        %v3927 = vadd.f32 0.0, %v3926
        %v3928 = vpop.f32.mrb[0].mxu0
        %3929 = vmatprep.mubr.f32.mxu0 0.0
        %3930 = vmatmul.mubr.f32.gmra.mrb[0].mxu0 %v3801
        %v3931 = vpop.f32.mrb[0].mxu0
        %v3932 = vadd.f32 0.0, %v3931
        %v3933 = vpop.f32.mrb[0].mxu0
        %3934 = vmatprep.mubr.f32.mxu0 0.0
        %3935 = vmatmul.mubr.f32.gmra.mrb[0].mxu0 %v3802
        %v3936 = vpop.f32.mrb[0].mxu0
        %v3937 = vadd.f32 0.0, %v3936
        %v3938 = vpop.f32.mrb[0].mxu0
        %3939 = vmatprep.mubr.f32.mxu0 0.0
        %3940 = vmatmul.mubr.f32.gmra.mrb[0].mxu0 %v3803
        %v3941 = vpop.f32.mrb[0].mxu0
        %v3942 = vadd.f32 0.0, %v3941
        %v3943 = vpop.f32.mrb[0].mxu0
        %3944 = vmatprep.mubr.f32.mxu0 0.0
        %3945 = vmatmul.mubr.f32.gmra.mrb[0].mxu0 %v3804
        %v3946 = vpop.f32.mrb[0].mxu0
        %v3947 = vadd.f32 0.0, %v3946
        %v3948 = vpop.f32.mrb[0].mxu0
        %3949 = vmatprep.mubr.f32.mxu0 0.0
        %3950 = vmatmul.mubr.f32.gmra.mrb[0].mxu0 %v3805
        %v3951 = vpop.f32.mrb[0].mxu0
        %v3952 = vadd.f32 0.0, %v3951
        %v3953 = vpop.f32.mrb[0].mxu0
        %3954 = vmatprep.mubr.f32.mxu0 0.0
        %3955 = vmatmul.mubr.f32.gmra.mrb[0].mxu0 %v3806
        %v3956 = vpop.f32.mrb[0].mxu0
        %v3957 = vadd.f32 0.0, %v3956
        %v3958 = vpop.f32.mrb[0].mxu0
        %3959 = vmatprep.mubr.f32.mxu0 0.0
        %3960 = vmatmul.mubr.f32.gmra.mrb[0].mxu0 %v3807
        %v3961 = vpop.f32.mrb[0].mxu0
        %v3962 = vadd.f32 0.0, %v3961
        %v3963 = vpop.f32.mrb[0].mxu0
        %3964 = vmatprep.mubr.f32.mxu0 0.0
        %3965 = vmatmul.mubr.f32.gmra.mrb[0].mxu0 %v3808
        %v3966 = vpop.f32.mrb[0].mxu0
        %v3967 = vadd.f32 0.0, %v3966
        %v3968 = vpop.f32.mrb[0].mxu0
        %3969 = vdwg.mxu0
        %3970 = vmatprep.subr.mxu0 0.0
        %3971 = vmatpush1.msra.mxu0 %v2328
        %3972 = vmatprep.subr.mxu0 0.0
        %3973 = vmatpush1.msra.mxu0 %v2329
        %3974 = vmatprep.subr.mxu0 0.0
        %3975 = vmatpush1.msra.mxu0 %v2330
        %3976 = vmatprep.subr.mxu0 0.0
        %3977 = vmatpush1.msra.mxu0 %v2331
        %3978 = vmatprep.subr.mxu0 0.0
        %3979 = vmatpush1.msra.mxu0 %v2332
        %3980 = vmatprep.subr.mxu0 0.0
        %3981 = vmatpush1.msra.mxu0 %v2333
        %3982 = vmatprep.subr.mxu0 0.0
        %3983 = vmatpush1.msra.mxu0 %v2334
        %3984 = vmatprep.subr.mxu0 0.0
        %3985 = vmatpush1.msra.mxu0 %v2335
        %3986 = vmatprep.subr.mxu0 0.0
        %3987 = vmatpush1.msra.mxu0 %v2336
        %3988 = vmatprep.subr.mxu0 0.0
        %3989 = vmatpush1.msra.mxu0 %v2337
        %3990 = vmatprep.subr.mxu0 0.0
        %3991 = vmatpush1.msra.mxu0 %v2338
        %3992 = vmatprep.subr.mxu0 0.0
        %3993 = vmatpush1.msra.mxu0 %v2339
        %3994 = vmatprep.subr.mxu0 0.0
        %3995 = vmatpush1.msra.mxu0 %v2340
        %3996 = vmatprep.subr.mxu0 0.0
        %3997 = vmatpush1.msra.mxu0 %v2341
        %3998 = vmatprep.subr.mxu0 0.0
        %3999 = vmatpush1.msra.mxu0 %v2342
        %4000 = vmatprep.subr.mxu0 0.0
        %4001 = vmatpush1.msra.mxu0 %v2343
        %4002 = vmatprep.subr.mxu0 0.0
        %4003 = vmatpush1.msra.mxu0 0.0
        %4004 = vmatprep.subr.mxu0 0.0
        %4005 = vmatpush1.msra.mxu0 0.0
        %4006 = vmatprep.subr.mxu0 0.0
        %4007 = vmatpush1.msra.mxu0 0.0
        %4008 = vmatprep.subr.mxu0 0.0
        %4009 = vmatpush1.msra.mxu0 0.0
        %4010 = vmatprep.subr.mxu0 0.0
        %4011 = vmatpush1.msra.mxu0 0.0
        %4012 = vmatprep.subr.mxu0 0.0
        %4013 = vmatpush1.msra.mxu0 0.0
        %4014 = vmatprep.subr.mxu0 0.0
        %4015 = vmatpush1.msra.mxu0 0.0
        %4016 = vmatprep.subr.mxu0 0.0
        %4017 = vmatpush1.msra.mxu0 0.0
        %4018 = vmatprep.subr.mxu0 0.0
        %4019 = vmatpush1.msra.mxu0 0.0
        %4020 = vmatprep.subr.mxu0 0.0
        %4021 = vmatpush1.msra.mxu0 0.0
        %4022 = vmatprep.subr.mxu0 0.0
        %4023 = vmatpush1.msra.mxu0 0.0
        %4024 = vmatprep.subr.mxu0 0.0
        %4025 = vmatpush1.msra.mxu0 0.0
        %4026 = vmatprep.subr.mxu0 0.0
        %4027 = vmatpush1.msra.mxu0 0.0
        %4028 = vmatprep.subr.mxu0 0.0
        %4029 = vmatpush1.msra.mxu0 0.0
        %4030 = vmatprep.subr.mxu0 0.0
        %4031 = vmatpush1.msra.mxu0 0.0
        %4032 = vmatprep.subr.mxu0 0.0
        %4033 = vmatpush1.msra.mxu0 0.0
        %4034 = vmatprep.mubr.f32.mxu0 0.0
        %4035 = vmatmul.mubr.f32.gmra.mrb[0].mxu0 %v2312
        %v4036 = vpop.f32.mrb[0].mxu0
        %v4037 = vadd.f32 %v3892, %v4036
        %v4038 = vpop.f32.mrb[0].mxu0
        %4039 = vmatprep.mubr.f32.mxu0 0.0
        %4040 = vmatmul.mubr.f32.gmra.mrb[0].mxu0 %v2313
        %v4041 = vpop.f32.mrb[0].mxu0
        %v4042 = vadd.f32 %v3897, %v4041
        %v4043 = vpop.f32.mrb[0].mxu0
        %4044 = vmatprep.mubr.f32.mxu0 0.0
        %4045 = vmatmul.mubr.f32.gmra.mrb[0].mxu0 %v2314
        %v4046 = vpop.f32.mrb[0].mxu0
        %v4047 = vadd.f32 %v3902, %v4046
        %v4048 = vpop.f32.mrb[0].mxu0
        %4049 = vmatprep.mubr.f32.mxu0 0.0
        %4050 = vmatmul.mubr.f32.gmra.mrb[0].mxu0 %v2315
        %v4051 = vpop.f32.mrb[0].mxu0
        %v4052 = vadd.f32 %v3907, %v4051
        %v4053 = vpop.f32.mrb[0].mxu0
        %4054 = vmatprep.mubr.f32.mxu0 0.0
        %4055 = vmatmul.mubr.f32.gmra.mrb[0].mxu0 %v2316
        %v4056 = vpop.f32.mrb[0].mxu0
        %v4057 = vadd.f32 %v3912, %v4056
        %v4058 = vpop.f32.mrb[0].mxu0
        %4059 = vmatprep.mubr.f32.mxu0 0.0
        %4060 = vmatmul.mubr.f32.gmra.mrb[0].mxu0 %v2317
        %v4061 = vpop.f32.mrb[0].mxu0
        %v4062 = vadd.f32 %v3917, %v4061
        %v4063 = vpop.f32.mrb[0].mxu0
        %4064 = vmatprep.mubr.f32.mxu0 0.0
        %4065 = vmatmul.mubr.f32.gmra.mrb[0].mxu0 %v2318
        %v4066 = vpop.f32.mrb[0].mxu0
        %v4067 = vadd.f32 %v3922, %v4066
        %v4068 = vpop.f32.mrb[0].mxu0
        %4069 = vmatprep.mubr.f32.mxu0 0.0
        %4070 = vmatmul.mubr.f32.gmra.mrb[0].mxu0 %v2319
        %v4071 = vpop.f32.mrb[0].mxu0
        %v4072 = vadd.f32 %v3927, %v4071
        %v4073 = vpop.f32.mrb[0].mxu0
        %4074 = vmatprep.mubr.f32.mxu0 0.0
        %4075 = vmatmul.mubr.f32.gmra.mrb[0].mxu0 %v2320
        %v4076 = vpop.f32.mrb[0].mxu0
        %v4077 = vadd.f32 %v3932, %v4076
        %v4078 = vpop.f32.mrb[0].mxu0
        %4079 = vmatprep.mubr.f32.mxu0 0.0
        %4080 = vmatmul.mubr.f32.gmra.mrb[0].mxu0 %v2321
        %v4081 = vpop.f32.mrb[0].mxu0
        %v4082 = vadd.f32 %v3937, %v4081
        %v4083 = vpop.f32.mrb[0].mxu0
        %4084 = vmatprep.mubr.f32.mxu0 0.0
        %4085 = vmatmul.mubr.f32.gmra.mrb[0].mxu0 %v2322
        %v4086 = vpop.f32.mrb[0].mxu0
        %v4087 = vadd.f32 %v3942, %v4086
        %v4088 = vpop.f32.mrb[0].mxu0
        %4089 = vmatprep.mubr.f32.mxu0 0.0
        %4090 = vmatmul.mubr.f32.gmra.mrb[0].mxu0 %v2323
        %v4091 = vpop.f32.mrb[0].mxu0
        %v4092 = vadd.f32 %v3947, %v4091
        %v4093 = vpop.f32.mrb[0].mxu0
        %4094 = vmatprep.mubr.f32.mxu0 0.0
        %4095 = vmatmul.mubr.f32.gmra.mrb[0].mxu0 %v2324
        %v4096 = vpop.f32.mrb[0].mxu0
        %v4097 = vadd.f32 %v3952, %v4096
        %v4098 = vpop.f32.mrb[0].mxu0
        %4099 = vmatprep.mubr.f32.mxu0 0.0
        %4100 = vmatmul.mubr.f32.gmra.mrb[0].mxu0 %v2325
        %v4101 = vpop.f32.mrb[0].mxu0
        %v4102 = vadd.f32 %v3957, %v4101
        %v4103 = vpop.f32.mrb[0].mxu0
        %4104 = vmatprep.mubr.f32.mxu0 0.0
        %4105 = vmatmul.mubr.f32.gmra.mrb[0].mxu0 %v2326
        %v4106 = vpop.f32.mrb[0].mxu0
        %v4107 = vadd.f32 %v3962, %v4106
        %v4108 = vpop.f32.mrb[0].mxu0
        %4109 = vmatprep.mubr.f32.mxu0 0.0
        %4110 = vmatmul.mubr.f32.gmra.mrb[0].mxu0 %v2327
        %v4111 = vpop.f32.mrb[0].mxu0
        %v4112 = vadd.f32 %v3967, %v4111
        %v4113 = vpop.f32.mrb[0].mxu0
        %4114 = vdwg.mxu0
        %v4115 = vld [vmem:[%s1 + $0x10] sm:$0xff]
        %v4116 = vld [vmem:[%s305 + $0x10] sm:$0xff]
        %4117 = vmatprep.subr.mxu0 0.0
        %4118 = vmatpush1.msra.mxu0 %v4116
        %4119 = vmatprep.subr.mxu0 0.0
        %4120 = vmatpush1.msra.mxu0 0.0
        %4121 = vmatprep.subr.mxu0 0.0
        %4122 = vmatpush1.msra.mxu0 0.0
        %4123 = vmatprep.subr.mxu0 0.0
        %4124 = vmatpush1.msra.mxu0 0.0
        %4125 = vmatprep.subr.mxu0 0.0
        %4126 = vmatpush1.msra.mxu0 0.0
        %4127 = vmatprep.subr.mxu0 0.0
        %4128 = vmatpush1.msra.mxu0 0.0
        %4129 = vmatprep.subr.mxu0 0.0
        %4130 = vmatpush1.msra.mxu0 0.0
        %4131 = vmatprep.subr.mxu0 0.0
        %4132 = vmatpush1.msra.mxu0 0.0
        %4133 = vmatprep.subr.mxu0 0.0
        %4134 = vmatpush1.msra.mxu0 0.0
        %4135 = vmatprep.subr.mxu0 0.0
        %4136 = vmatpush1.msra.mxu0 0.0
        %4137 = vmatprep.subr.mxu0 0.0
        %4138 = vmatpush1.msra.mxu0 0.0
        %4139 = vmatprep.subr.mxu0 0.0
        %4140 = vmatpush1.msra.mxu0 0.0
        %4141 = vmatprep.subr.mxu0 0.0
        %4142 = vmatpush1.msra.mxu0 0.0
        %4143 = vmatprep.subr.mxu0 0.0
        %4144 = vmatpush1.msra.mxu0 0.0
        %4145 = vmatprep.subr.mxu0 0.0
        %4146 = vmatpush1.msra.mxu0 0.0
        %4147 = vmatprep.subr.mxu0 0.0
        %4148 = vmatpush1.msra.mxu0 0.0
        %4149 = vmatprep.subr.mxu0 0.0
        %4150 = vmatpush1.msra.mxu0 0.0
        %4151 = vmatprep.subr.mxu0 0.0
        %4152 = vmatpush1.msra.mxu0 0.0
        %4153 = vmatprep.subr.mxu0 0.0
        %4154 = vmatpush1.msra.mxu0 0.0
        %4155 = vmatprep.subr.mxu0 0.0
        %4156 = vmatpush1.msra.mxu0 0.0
        %4157 = vmatprep.subr.mxu0 0.0
        %4158 = vmatpush1.msra.mxu0 0.0
        %4159 = vmatprep.subr.mxu0 0.0
        %4160 = vmatpush1.msra.mxu0 0.0
        %4161 = vmatprep.subr.mxu0 0.0
        %4162 = vmatpush1.msra.mxu0 0.0
        %4163 = vmatprep.subr.mxu0 0.0
        %4164 = vmatpush1.msra.mxu0 0.0
        %4165 = vmatprep.subr.mxu0 0.0
        %4166 = vmatpush1.msra.mxu0 0.0
        %4167 = vmatprep.subr.mxu0 0.0
        %4168 = vmatpush1.msra.mxu0 0.0
        %4169 = vmatprep.subr.mxu0 0.0
        %4170 = vmatpush1.msra.mxu0 0.0
        %4171 = vmatprep.subr.mxu0 0.0
        %4172 = vmatpush1.msra.mxu0 0.0
        %4173 = vmatprep.subr.mxu0 0.0
        %4174 = vmatpush1.msra.mxu0 0.0
        %4175 = vmatprep.subr.mxu0 0.0
        %4176 = vmatpush1.msra.mxu0 0.0
        %4177 = vmatprep.subr.mxu0 0.0
        %4178 = vmatpush1.msra.mxu0 0.0
        %4179 = vmatprep.subr.mxu0 0.0
        %4180 = vmatpush1.msra.mxu0 0.0
        %4181 = vmatprep.mubr.f32.mxu0 0.0
        %4182 = vmatmul.mubr.f32.gmra.mrb[0].mxu0 %v309
        %v4183 = vpop.f32.mrb[0].mxu0
        %v4184 = vadd.f32 0.0, %v4183
        %v4185 = vpop.f32.mrb[0].mxu0
        %4186 = vmatprep.mubr.f32.mxu0 0.0
        %4187 = vmatmul.mubr.f32.gmra.mrb[0].mxu0 %v312
        %v4188 = vpop.f32.mrb[0].mxu0
        %v4189 = vadd.f32 0.0, %v4188
        %v4190 = vpop.f32.mrb[0].mxu0
        %4191 = vmatprep.mubr.f32.mxu0 0.0
        %4192 = vmatmul.mubr.f32.gmra.mrb[0].mxu0 %v315
        %v4193 = vpop.f32.mrb[0].mxu0
        %v4194 = vadd.f32 0.0, %v4193
        %v4195 = vpop.f32.mrb[0].mxu0
        %4196 = vmatprep.mubr.f32.mxu0 0.0
        %4197 = vmatmul.mubr.f32.gmra.mrb[0].mxu0 %v318
        %v4198 = vpop.f32.mrb[0].mxu0
        %v4199 = vadd.f32 0.0, %v4198
        %v4200 = vpop.f32.mrb[0].mxu0
        %4201 = vmatprep.mubr.f32.mxu0 0.0
        %4202 = vmatmul.mubr.f32.gmra.mrb[0].mxu0 %v321
        %v4203 = vpop.f32.mrb[0].mxu0
        %v4204 = vadd.f32 0.0, %v4203
        %v4205 = vpop.f32.mrb[0].mxu0
        %4206 = vmatprep.mubr.f32.mxu0 0.0
        %4207 = vmatmul.mubr.f32.gmra.mrb[0].mxu0 %v324
        %v4208 = vpop.f32.mrb[0].mxu0
        %v4209 = vadd.f32 0.0, %v4208
        %v4210 = vpop.f32.mrb[0].mxu0
        %4211 = vmatprep.mubr.f32.mxu0 0.0
        %4212 = vmatmul.mubr.f32.gmra.mrb[0].mxu0 %v327
        %v4213 = vpop.f32.mrb[0].mxu0
        %v4214 = vadd.f32 0.0, %v4213
        %v4215 = vpop.f32.mrb[0].mxu0
        %4216 = vmatprep.mubr.f32.mxu0 0.0
        %4217 = vmatmul.mubr.f32.gmra.mrb[0].mxu0 %v330
        %v4218 = vpop.f32.mrb[0].mxu0
        %v4219 = vadd.f32 0.0, %v4218
        %v4220 = vpop.f32.mrb[0].mxu0
        %4221 = vmatprep.mubr.f32.mxu0 0.0
        %4222 = vmatmul.mubr.f32.gmra.mrb[0].mxu0 %v333
        %v4223 = vpop.f32.mrb[0].mxu0
        %v4224 = vadd.f32 0.0, %v4223
        %v4225 = vpop.f32.mrb[0].mxu0
        %4226 = vmatprep.mubr.f32.mxu0 0.0
        %4227 = vmatmul.mubr.f32.gmra.mrb[0].mxu0 %v336
        %v4228 = vpop.f32.mrb[0].mxu0
        %v4229 = vadd.f32 0.0, %v4228
        %v4230 = vpop.f32.mrb[0].mxu0
        %4231 = vmatprep.mubr.f32.mxu0 0.0
        %4232 = vmatmul.mubr.f32.gmra.mrb[0].mxu0 %v339
        %v4233 = vpop.f32.mrb[0].mxu0
        %v4234 = vadd.f32 0.0, %v4233
        %v4235 = vpop.f32.mrb[0].mxu0
        %4236 = vmatprep.mubr.f32.mxu0 0.0
        %4237 = vmatmul.mubr.f32.gmra.mrb[0].mxu0 %v342
        %v4238 = vpop.f32.mrb[0].mxu0
        %v4239 = vadd.f32 0.0, %v4238
        %v4240 = vpop.f32.mrb[0].mxu0
        %4241 = vmatprep.mubr.f32.mxu0 0.0
        %4242 = vmatmul.mubr.f32.gmra.mrb[0].mxu0 %v345
        %v4243 = vpop.f32.mrb[0].mxu0
        %v4244 = vadd.f32 0.0, %v4243
        %v4245 = vpop.f32.mrb[0].mxu0
        %4246 = vmatprep.mubr.f32.mxu0 0.0
        %4247 = vmatmul.mubr.f32.gmra.mrb[0].mxu0 %v348
        %v4248 = vpop.f32.mrb[0].mxu0
        %v4249 = vadd.f32 0.0, %v4248
        %v4250 = vpop.f32.mrb[0].mxu0
        %4251 = vmatprep.mubr.f32.mxu0 0.0
        %4252 = vmatmul.mubr.f32.gmra.mrb[0].mxu0 %v351
        %v4253 = vpop.f32.mrb[0].mxu0
        %v4254 = vadd.f32 0.0, %v4253
        %v4255 = vpop.f32.mrb[0].mxu0
        %4256 = vmatprep.mubr.f32.mxu0 0.0
        %4257 = vmatmul.mubr.f32.gmra.mrb[0].mxu0 %v354
        %v4258 = vpop.f32.mrb[0].mxu0
        %v4259 = vadd.f32 0.0, %v4258
        %v4260 = vpop.f32.mrb[0].mxu0
        %4261 = vdwg.mxu0
        %4262 = vmatprep.subr.mxu0 0.0
        %4263 = vmatpush1.msra.mxu0 %v4115
        %4264 = vmatprep.subr.mxu0 0.0
        %4265 = vmatpush1.msra.mxu0 0.0
        %4266 = vmatprep.subr.mxu0 0.0
        %4267 = vmatpush1.msra.mxu0 0.0
        %4268 = vmatprep.subr.mxu0 0.0
        %4269 = vmatpush1.msra.mxu0 0.0
        %4270 = vmatprep.subr.mxu0 0.0
        %4271 = vmatpush1.msra.mxu0 0.0
        %4272 = vmatprep.subr.mxu0 0.0
        %4273 = vmatpush1.msra.mxu0 0.0
        %4274 = vmatprep.subr.mxu0 0.0
        %4275 = vmatpush1.msra.mxu0 0.0
        %4276 = vmatprep.subr.mxu0 0.0
        %4277 = vmatpush1.msra.mxu0 0.0
        %4278 = vmatprep.subr.mxu0 0.0
        %4279 = vmatpush1.msra.mxu0 0.0
        %4280 = vmatprep.subr.mxu0 0.0
        %4281 = vmatpush1.msra.mxu0 0.0
        %4282 = vmatprep.subr.mxu0 0.0
        %4283 = vmatpush1.msra.mxu0 0.0
        %4284 = vmatprep.subr.mxu0 0.0
        %4285 = vmatpush1.msra.mxu0 0.0
        %4286 = vmatprep.subr.mxu0 0.0
        %4287 = vmatpush1.msra.mxu0 0.0
        %4288 = vmatprep.subr.mxu0 0.0
        %4289 = vmatpush1.msra.mxu0 0.0
        %4290 = vmatprep.subr.mxu0 0.0
        %4291 = vmatpush1.msra.mxu0 0.0
        %4292 = vmatprep.subr.mxu0 0.0
        %4293 = vmatpush1.msra.mxu0 0.0
        %4294 = vmatprep.subr.mxu0 0.0
        %4295 = vmatpush1.msra.mxu0 0.0
        %4296 = vmatprep.subr.mxu0 0.0
        %4297 = vmatpush1.msra.mxu0 0.0
        %4298 = vmatprep.subr.mxu0 0.0
        %4299 = vmatpush1.msra.mxu0 0.0
        %4300 = vmatprep.subr.mxu0 0.0
        %4301 = vmatpush1.msra.mxu0 0.0
        %4302 = vmatprep.subr.mxu0 0.0
        %4303 = vmatpush1.msra.mxu0 0.0
        %4304 = vmatprep.subr.mxu0 0.0
        %4305 = vmatpush1.msra.mxu0 0.0
        %4306 = vmatprep.subr.mxu0 0.0
        %4307 = vmatpush1.msra.mxu0 0.0
        %4308 = vmatprep.subr.mxu0 0.0
        %4309 = vmatpush1.msra.mxu0 0.0
        %4310 = vmatprep.subr.mxu0 0.0
        %4311 = vmatpush1.msra.mxu0 0.0
        %4312 = vmatprep.subr.mxu0 0.0
        %4313 = vmatpush1.msra.mxu0 0.0
        %4314 = vmatprep.subr.mxu0 0.0
        %4315 = vmatpush1.msra.mxu0 0.0
        %4316 = vmatprep.subr.mxu0 0.0
        %4317 = vmatpush1.msra.mxu0 0.0
        %4318 = vmatprep.subr.mxu0 0.0
        %4319 = vmatpush1.msra.mxu0 0.0
        %4320 = vmatprep.subr.mxu0 0.0
        %4321 = vmatpush1.msra.mxu0 0.0
        %4322 = vmatprep.subr.mxu0 0.0
        %4323 = vmatpush1.msra.mxu0 0.0
        %4324 = vmatprep.subr.mxu0 0.0
        %4325 = vmatpush1.msra.mxu0 0.0
        %4326 = vmatprep.mubr.f32.mxu0 0.0
        %4327 = vmatmul.mubr.f32.gmra.mrb[0].mxu0 %v502
        %v4328 = vpop.f32.mrb[0].mxu0
        %v4329 = vadd.f32 %v4184, %v4328
        %v4330 = vpop.f32.mrb[0].mxu0
        %4331 = vmatprep.mubr.f32.mxu0 0.0
        %4332 = vmatmul.mubr.f32.gmra.mrb[0].mxu0 %v505
        %v4333 = vpop.f32.mrb[0].mxu0
        %v4334 = vadd.f32 %v4189, %v4333
        %v4335 = vpop.f32.mrb[0].mxu0
        %4336 = vmatprep.mubr.f32.mxu0 0.0
        %4337 = vmatmul.mubr.f32.gmra.mrb[0].mxu0 %v508
        %v4338 = vpop.f32.mrb[0].mxu0
        %v4339 = vadd.f32 %v4194, %v4338
        %v4340 = vpop.f32.mrb[0].mxu0
        %4341 = vmatprep.mubr.f32.mxu0 0.0
        %4342 = vmatmul.mubr.f32.gmra.mrb[0].mxu0 %v511
        %v4343 = vpop.f32.mrb[0].mxu0
        %v4344 = vadd.f32 %v4199, %v4343
        %v4345 = vpop.f32.mrb[0].mxu0
        %4346 = vmatprep.mubr.f32.mxu0 0.0
        %4347 = vmatmul.mubr.f32.gmra.mrb[0].mxu0 %v514
        %v4348 = vpop.f32.mrb[0].mxu0
        %v4349 = vadd.f32 %v4204, %v4348
        %v4350 = vpop.f32.mrb[0].mxu0
        %4351 = vmatprep.mubr.f32.mxu0 0.0
        %4352 = vmatmul.mubr.f32.gmra.mrb[0].mxu0 %v517
        %v4353 = vpop.f32.mrb[0].mxu0
        %v4354 = vadd.f32 %v4209, %v4353
        %v4355 = vpop.f32.mrb[0].mxu0
        %4356 = vmatprep.mubr.f32.mxu0 0.0
        %4357 = vmatmul.mubr.f32.gmra.mrb[0].mxu0 %v520
        %v4358 = vpop.f32.mrb[0].mxu0
        %v4359 = vadd.f32 %v4214, %v4358
        %v4360 = vpop.f32.mrb[0].mxu0
        %4361 = vmatprep.mubr.f32.mxu0 0.0
        %4362 = vmatmul.mubr.f32.gmra.mrb[0].mxu0 %v523
        %v4363 = vpop.f32.mrb[0].mxu0
        %v4364 = vadd.f32 %v4219, %v4363
        %v4365 = vpop.f32.mrb[0].mxu0
        %4366 = vmatprep.mubr.f32.mxu0 0.0
        %4367 = vmatmul.mubr.f32.gmra.mrb[0].mxu0 %v526
        %v4368 = vpop.f32.mrb[0].mxu0
        %v4369 = vadd.f32 %v4224, %v4368
        %v4370 = vpop.f32.mrb[0].mxu0
        %4371 = vmatprep.mubr.f32.mxu0 0.0
        %4372 = vmatmul.mubr.f32.gmra.mrb[0].mxu0 %v529
        %v4373 = vpop.f32.mrb[0].mxu0
        %v4374 = vadd.f32 %v4229, %v4373
        %v4375 = vpop.f32.mrb[0].mxu0
        %4376 = vmatprep.mubr.f32.mxu0 0.0
        %4377 = vmatmul.mubr.f32.gmra.mrb[0].mxu0 %v532
        %v4378 = vpop.f32.mrb[0].mxu0
        %v4379 = vadd.f32 %v4234, %v4378
        %v4380 = vpop.f32.mrb[0].mxu0
        %4381 = vmatprep.mubr.f32.mxu0 0.0
        %4382 = vmatmul.mubr.f32.gmra.mrb[0].mxu0 %v535
        %v4383 = vpop.f32.mrb[0].mxu0
        %v4384 = vadd.f32 %v4239, %v4383
        %v4385 = vpop.f32.mrb[0].mxu0
        %4386 = vmatprep.mubr.f32.mxu0 0.0
        %4387 = vmatmul.mubr.f32.gmra.mrb[0].mxu0 %v538
        %v4388 = vpop.f32.mrb[0].mxu0
        %v4389 = vadd.f32 %v4244, %v4388
        %v4390 = vpop.f32.mrb[0].mxu0
        %4391 = vmatprep.mubr.f32.mxu0 0.0
        %4392 = vmatmul.mubr.f32.gmra.mrb[0].mxu0 %v541
        %v4393 = vpop.f32.mrb[0].mxu0
        %v4394 = vadd.f32 %v4249, %v4393
        %v4395 = vpop.f32.mrb[0].mxu0
        %4396 = vmatprep.mubr.f32.mxu0 0.0
        %4397 = vmatmul.mubr.f32.gmra.mrb[0].mxu0 %v544
        %v4398 = vpop.f32.mrb[0].mxu0
        %v4399 = vadd.f32 %v4254, %v4398
        %v4400 = vpop.f32.mrb[0].mxu0
        %4401 = vmatprep.mubr.f32.mxu0 0.0
        %4402 = vmatmul.mubr.f32.gmra.mrb[0].mxu0 %v547
        %v4403 = vpop.f32.mrb[0].mxu0
        %v4404 = vadd.f32 %v4259, %v4403
        %v4405 = vpop.f32.mrb[0].mxu0
        %4406 = vdwg.mxu0
        %v4407 = vld [vmem:[%s710 + $0x10] sm:$0xff]
        %4408 = vmatprep.subr.mxu0 0.0
        %4409 = vmatpush1.msra.mxu0 %v4407
        %4410 = vmatprep.subr.mxu0 0.0
        %4411 = vmatpush1.msra.mxu0 0.0
        %4412 = vmatprep.subr.mxu0 0.0
        %4413 = vmatpush1.msra.mxu0 0.0
        %4414 = vmatprep.subr.mxu0 0.0
        %4415 = vmatpush1.msra.mxu0 0.0
        %4416 = vmatprep.subr.mxu0 0.0
        %4417 = vmatpush1.msra.mxu0 0.0
        %4418 = vmatprep.subr.mxu0 0.0
        %4419 = vmatpush1.msra.mxu0 0.0
        %4420 = vmatprep.subr.mxu0 0.0
        %4421 = vmatpush1.msra.mxu0 0.0
        %4422 = vmatprep.subr.mxu0 0.0
        %4423 = vmatpush1.msra.mxu0 0.0
        %4424 = vmatprep.subr.mxu0 0.0
        %4425 = vmatpush1.msra.mxu0 0.0
        %4426 = vmatprep.subr.mxu0 0.0
        %4427 = vmatpush1.msra.mxu0 0.0
        %4428 = vmatprep.subr.mxu0 0.0
        %4429 = vmatpush1.msra.mxu0 0.0
        %4430 = vmatprep.subr.mxu0 0.0
        %4431 = vmatpush1.msra.mxu0 0.0
        %4432 = vmatprep.subr.mxu0 0.0
        %4433 = vmatpush1.msra.mxu0 0.0
        %4434 = vmatprep.subr.mxu0 0.0
        %4435 = vmatpush1.msra.mxu0 0.0
        %4436 = vmatprep.subr.mxu0 0.0
        %4437 = vmatpush1.msra.mxu0 0.0
        %4438 = vmatprep.subr.mxu0 0.0
        %4439 = vmatpush1.msra.mxu0 0.0
        %4440 = vmatprep.subr.mxu0 0.0
        %4441 = vmatpush1.msra.mxu0 0.0
        %4442 = vmatprep.subr.mxu0 0.0
        %4443 = vmatpush1.msra.mxu0 0.0
        %4444 = vmatprep.subr.mxu0 0.0
        %4445 = vmatpush1.msra.mxu0 0.0
        %4446 = vmatprep.subr.mxu0 0.0
        %4447 = vmatpush1.msra.mxu0 0.0
        %4448 = vmatprep.subr.mxu0 0.0
        %4449 = vmatpush1.msra.mxu0 0.0
        %4450 = vmatprep.subr.mxu0 0.0
        %4451 = vmatpush1.msra.mxu0 0.0
        %4452 = vmatprep.subr.mxu0 0.0
        %4453 = vmatpush1.msra.mxu0 0.0
        %4454 = vmatprep.subr.mxu0 0.0
        %4455 = vmatpush1.msra.mxu0 0.0
        %4456 = vmatprep.subr.mxu0 0.0
        %4457 = vmatpush1.msra.mxu0 0.0
        %4458 = vmatprep.subr.mxu0 0.0
        %4459 = vmatpush1.msra.mxu0 0.0
        %4460 = vmatprep.subr.mxu0 0.0
        %4461 = vmatpush1.msra.mxu0 0.0
        %4462 = vmatprep.subr.mxu0 0.0
        %4463 = vmatpush1.msra.mxu0 0.0
        %4464 = vmatprep.subr.mxu0 0.0
        %4465 = vmatpush1.msra.mxu0 0.0
        %4466 = vmatprep.subr.mxu0 0.0
        %4467 = vmatpush1.msra.mxu0 0.0
        %4468 = vmatprep.subr.mxu0 0.0
        %4469 = vmatpush1.msra.mxu0 0.0
        %4470 = vmatprep.subr.mxu0 0.0
        %4471 = vmatpush1.msra.mxu0 0.0
        %4472 = vmatprep.mubr.f32.mxu0 0.0
        %4473 = vmatmul.mubr.f32.gmra.mrb[0].mxu0 %v713
        %v4474 = vpop.f32.mrb[0].mxu0
        %v4475 = vadd.f32 0.0, %v4474
        %v4476 = vpop.f32.mrb[0].mxu0
        %4477 = vmatprep.mubr.f32.mxu0 0.0
        %4478 = vmatmul.mubr.f32.gmra.mrb[0].mxu0 %v716
        %v4479 = vpop.f32.mrb[0].mxu0
        %v4480 = vadd.f32 0.0, %v4479
        %v4481 = vpop.f32.mrb[0].mxu0
        %4482 = vmatprep.mubr.f32.mxu0 0.0
        %4483 = vmatmul.mubr.f32.gmra.mrb[0].mxu0 %v719
        %v4484 = vpop.f32.mrb[0].mxu0
        %v4485 = vadd.f32 0.0, %v4484
        %v4486 = vpop.f32.mrb[0].mxu0
        %4487 = vmatprep.mubr.f32.mxu0 0.0
        %4488 = vmatmul.mubr.f32.gmra.mrb[0].mxu0 %v722
        %v4489 = vpop.f32.mrb[0].mxu0
        %v4490 = vadd.f32 0.0, %v4489
        %v4491 = vpop.f32.mrb[0].mxu0
        %4492 = vmatprep.mubr.f32.mxu0 0.0
        %4493 = vmatmul.mubr.f32.gmra.mrb[0].mxu0 %v725
        %v4494 = vpop.f32.mrb[0].mxu0
        %v4495 = vadd.f32 0.0, %v4494
        %v4496 = vpop.f32.mrb[0].mxu0
        %4497 = vmatprep.mubr.f32.mxu0 0.0
        %4498 = vmatmul.mubr.f32.gmra.mrb[0].mxu0 %v728
        %v4499 = vpop.f32.mrb[0].mxu0
        %v4500 = vadd.f32 0.0, %v4499
        %v4501 = vpop.f32.mrb[0].mxu0
        %4502 = vmatprep.mubr.f32.mxu0 0.0
        %4503 = vmatmul.mubr.f32.gmra.mrb[0].mxu0 %v731
        %v4504 = vpop.f32.mrb[0].mxu0
        %v4505 = vadd.f32 0.0, %v4504
        %v4506 = vpop.f32.mrb[0].mxu0
        %4507 = vmatprep.mubr.f32.mxu0 0.0
        %4508 = vmatmul.mubr.f32.gmra.mrb[0].mxu0 %v734
        %v4509 = vpop.f32.mrb[0].mxu0
        %v4510 = vadd.f32 0.0, %v4509
        %v4511 = vpop.f32.mrb[0].mxu0
        %4512 = vmatprep.mubr.f32.mxu0 0.0
        %4513 = vmatmul.mubr.f32.gmra.mrb[0].mxu0 %v737
        %v4514 = vpop.f32.mrb[0].mxu0
        %v4515 = vadd.f32 0.0, %v4514
        %v4516 = vpop.f32.mrb[0].mxu0
        %4517 = vmatprep.mubr.f32.mxu0 0.0
        %4518 = vmatmul.mubr.f32.gmra.mrb[0].mxu0 %v740
        %v4519 = vpop.f32.mrb[0].mxu0
        %v4520 = vadd.f32 0.0, %v4519
        %v4521 = vpop.f32.mrb[0].mxu0
        %4522 = vmatprep.mubr.f32.mxu0 0.0
        %4523 = vmatmul.mubr.f32.gmra.mrb[0].mxu0 %v743
        %v4524 = vpop.f32.mrb[0].mxu0
        %v4525 = vadd.f32 0.0, %v4524
        %v4526 = vpop.f32.mrb[0].mxu0
        %4527 = vmatprep.mubr.f32.mxu0 0.0
        %4528 = vmatmul.mubr.f32.gmra.mrb[0].mxu0 %v746
        %v4529 = vpop.f32.mrb[0].mxu0
        %v4530 = vadd.f32 0.0, %v4529
        %v4531 = vpop.f32.mrb[0].mxu0
        %4532 = vmatprep.mubr.f32.mxu0 0.0
        %4533 = vmatmul.mubr.f32.gmra.mrb[0].mxu0 %v749
        %v4534 = vpop.f32.mrb[0].mxu0
        %v4535 = vadd.f32 0.0, %v4534
        %v4536 = vpop.f32.mrb[0].mxu0
        %4537 = vmatprep.mubr.f32.mxu0 0.0
        %4538 = vmatmul.mubr.f32.gmra.mrb[0].mxu0 %v752
        %v4539 = vpop.f32.mrb[0].mxu0
        %v4540 = vadd.f32 0.0, %v4539
        %v4541 = vpop.f32.mrb[0].mxu0
        %4542 = vmatprep.mubr.f32.mxu0 0.0
        %4543 = vmatmul.mubr.f32.gmra.mrb[0].mxu0 %v755
        %v4544 = vpop.f32.mrb[0].mxu0
        %v4545 = vadd.f32 0.0, %v4544
        %v4546 = vpop.f32.mrb[0].mxu0
        %4547 = vmatprep.mubr.f32.mxu0 0.0
        %4548 = vmatmul.mubr.f32.gmra.mrb[0].mxu0 %v758
        %v4549 = vpop.f32.mrb[0].mxu0
        %v4550 = vadd.f32 0.0, %v4549
        %v4551 = vpop.f32.mrb[0].mxu0
        %4552 = vdwg.mxu0
        %v4553 = vadd.f32 %v4329, %v4475
        %v4554 = vadd.f32 %v4334, %v4480
        %v4555 = vadd.f32 %v4339, %v4485
        %v4556 = vadd.f32 %v4344, %v4490
        %v4557 = vadd.f32 %v4349, %v4495
        %v4558 = vadd.f32 %v4354, %v4500
        %v4559 = vadd.f32 %v4359, %v4505
        %v4560 = vadd.f32 %v4364, %v4510
        %v4561 = vadd.f32 %v4369, %v4515
        %v4562 = vadd.f32 %v4374, %v4520
        %v4563 = vadd.f32 %v4379, %v4525
        %v4564 = vadd.f32 %v4384, %v4530
        %v4565 = vadd.f32 %v4389, %v4535
        %v4566 = vadd.f32 %v4394, %v4540
        %v4567 = vadd.f32 %v4399, %v4545
        %v4568 = vadd.f32 %v4404, %v4550
        %v4569 = vld [vmem:[%s940 + $0x10] sm:$0xff]
        %4570 = vmatprep.subr.mxu0 0.0
        %4571 = vmatpush1.msra.mxu0 %v4569
        %4572 = vmatprep.subr.mxu0 0.0
        %4573 = vmatpush1.msra.mxu0 0.0
        %4574 = vmatprep.subr.mxu0 0.0
        %4575 = vmatpush1.msra.mxu0 0.0
        %4576 = vmatprep.subr.mxu0 0.0
        %4577 = vmatpush1.msra.mxu0 0.0
        %4578 = vmatprep.subr.mxu0 0.0
        %4579 = vmatpush1.msra.mxu0 0.0
        %4580 = vmatprep.subr.mxu0 0.0
        %4581 = vmatpush1.msra.mxu0 0.0
        %4582 = vmatprep.subr.mxu0 0.0
        %4583 = vmatpush1.msra.mxu0 0.0
        %4584 = vmatprep.subr.mxu0 0.0
        %4585 = vmatpush1.msra.mxu0 0.0
        %4586 = vmatprep.subr.mxu0 0.0
        %4587 = vmatpush1.msra.mxu0 0.0
        %4588 = vmatprep.subr.mxu0 0.0
        %4589 = vmatpush1.msra.mxu0 0.0
        %4590 = vmatprep.subr.mxu0 0.0
        %4591 = vmatpush1.msra.mxu0 0.0
        %4592 = vmatprep.subr.mxu0 0.0
        %4593 = vmatpush1.msra.mxu0 0.0
        %4594 = vmatprep.subr.mxu0 0.0
        %4595 = vmatpush1.msra.mxu0 0.0
        %4596 = vmatprep.subr.mxu0 0.0
        %4597 = vmatpush1.msra.mxu0 0.0
        %4598 = vmatprep.subr.mxu0 0.0
        %4599 = vmatpush1.msra.mxu0 0.0
        %4600 = vmatprep.subr.mxu0 0.0
        %4601 = vmatpush1.msra.mxu0 0.0
        %4602 = vmatprep.subr.mxu0 0.0
        %4603 = vmatpush1.msra.mxu0 0.0
        %4604 = vmatprep.subr.mxu0 0.0
        %4605 = vmatpush1.msra.mxu0 0.0
        %4606 = vmatprep.subr.mxu0 0.0
        %4607 = vmatpush1.msra.mxu0 0.0
        %4608 = vmatprep.subr.mxu0 0.0
        %4609 = vmatpush1.msra.mxu0 0.0
        %4610 = vmatprep.subr.mxu0 0.0
        %4611 = vmatpush1.msra.mxu0 0.0
        %4612 = vmatprep.subr.mxu0 0.0
        %4613 = vmatpush1.msra.mxu0 0.0
        %4614 = vmatprep.subr.mxu0 0.0
        %4615 = vmatpush1.msra.mxu0 0.0
        %4616 = vmatprep.subr.mxu0 0.0
        %4617 = vmatpush1.msra.mxu0 0.0
        %4618 = vmatprep.subr.mxu0 0.0
        %4619 = vmatpush1.msra.mxu0 0.0
        %4620 = vmatprep.subr.mxu0 0.0
        %4621 = vmatpush1.msra.mxu0 0.0
        %4622 = vmatprep.subr.mxu0 0.0
        %4623 = vmatpush1.msra.mxu0 0.0
        %4624 = vmatprep.subr.mxu0 0.0
        %4625 = vmatpush1.msra.mxu0 0.0
        %4626 = vmatprep.subr.mxu0 0.0
        %4627 = vmatpush1.msra.mxu0 0.0
        %4628 = vmatprep.subr.mxu0 0.0
        %4629 = vmatpush1.msra.mxu0 0.0
        %4630 = vmatprep.subr.mxu0 0.0
        %4631 = vmatpush1.msra.mxu0 0.0
        %4632 = vmatprep.subr.mxu0 0.0
        %4633 = vmatpush1.msra.mxu0 0.0
        %4634 = vmatprep.mubr.f32.mxu0 0.0
        %4635 = vmatmul.mubr.f32.gmra.mrb[0].mxu0 %v943
        %v4636 = vpop.f32.mrb[0].mxu0
        %v4637 = vadd.f32 0.0, %v4636
        %v4638 = vpop.f32.mrb[0].mxu0
        %4639 = vmatprep.mubr.f32.mxu0 0.0
        %4640 = vmatmul.mubr.f32.gmra.mrb[0].mxu0 %v946
        %v4641 = vpop.f32.mrb[0].mxu0
        %v4642 = vadd.f32 0.0, %v4641
        %v4643 = vpop.f32.mrb[0].mxu0
        %4644 = vmatprep.mubr.f32.mxu0 0.0
        %4645 = vmatmul.mubr.f32.gmra.mrb[0].mxu0 %v949
        %v4646 = vpop.f32.mrb[0].mxu0
        %v4647 = vadd.f32 0.0, %v4646
        %v4648 = vpop.f32.mrb[0].mxu0
        %4649 = vmatprep.mubr.f32.mxu0 0.0
        %4650 = vmatmul.mubr.f32.gmra.mrb[0].mxu0 %v952
        %v4651 = vpop.f32.mrb[0].mxu0
        %v4652 = vadd.f32 0.0, %v4651
        %v4653 = vpop.f32.mrb[0].mxu0
        %4654 = vmatprep.mubr.f32.mxu0 0.0
        %4655 = vmatmul.mubr.f32.gmra.mrb[0].mxu0 %v955
        %v4656 = vpop.f32.mrb[0].mxu0
        %v4657 = vadd.f32 0.0, %v4656
        %v4658 = vpop.f32.mrb[0].mxu0
        %4659 = vmatprep.mubr.f32.mxu0 0.0
        %4660 = vmatmul.mubr.f32.gmra.mrb[0].mxu0 %v958
        %v4661 = vpop.f32.mrb[0].mxu0
        %v4662 = vadd.f32 0.0, %v4661
        %v4663 = vpop.f32.mrb[0].mxu0
        %4664 = vmatprep.mubr.f32.mxu0 0.0
        %4665 = vmatmul.mubr.f32.gmra.mrb[0].mxu0 %v961
        %v4666 = vpop.f32.mrb[0].mxu0
        %v4667 = vadd.f32 0.0, %v4666
        %v4668 = vpop.f32.mrb[0].mxu0
        %4669 = vmatprep.mubr.f32.mxu0 0.0
        %4670 = vmatmul.mubr.f32.gmra.mrb[0].mxu0 %v964
        %v4671 = vpop.f32.mrb[0].mxu0
        %v4672 = vadd.f32 0.0, %v4671
        %v4673 = vpop.f32.mrb[0].mxu0
        %4674 = vmatprep.mubr.f32.mxu0 0.0
        %4675 = vmatmul.mubr.f32.gmra.mrb[0].mxu0 %v967
        %v4676 = vpop.f32.mrb[0].mxu0
        %v4677 = vadd.f32 0.0, %v4676
        %v4678 = vpop.f32.mrb[0].mxu0
        %4679 = vmatprep.mubr.f32.mxu0 0.0
        %4680 = vmatmul.mubr.f32.gmra.mrb[0].mxu0 %v970
        %v4681 = vpop.f32.mrb[0].mxu0
        %v4682 = vadd.f32 0.0, %v4681
        %v4683 = vpop.f32.mrb[0].mxu0
        %4684 = vmatprep.mubr.f32.mxu0 0.0
        %4685 = vmatmul.mubr.f32.gmra.mrb[0].mxu0 %v973
        %v4686 = vpop.f32.mrb[0].mxu0
        %v4687 = vadd.f32 0.0, %v4686
        %v4688 = vpop.f32.mrb[0].mxu0
        %4689 = vmatprep.mubr.f32.mxu0 0.0
        %4690 = vmatmul.mubr.f32.gmra.mrb[0].mxu0 %v976
        %v4691 = vpop.f32.mrb[0].mxu0
        %v4692 = vadd.f32 0.0, %v4691
        %v4693 = vpop.f32.mrb[0].mxu0
        %4694 = vmatprep.mubr.f32.mxu0 0.0
        %4695 = vmatmul.mubr.f32.gmra.mrb[0].mxu0 %v979
        %v4696 = vpop.f32.mrb[0].mxu0
        %v4697 = vadd.f32 0.0, %v4696
        %v4698 = vpop.f32.mrb[0].mxu0
        %4699 = vmatprep.mubr.f32.mxu0 0.0
        %4700 = vmatmul.mubr.f32.gmra.mrb[0].mxu0 %v982
        %v4701 = vpop.f32.mrb[0].mxu0
        %v4702 = vadd.f32 0.0, %v4701
        %v4703 = vpop.f32.mrb[0].mxu0
        %4704 = vmatprep.mubr.f32.mxu0 0.0
        %4705 = vmatmul.mubr.f32.gmra.mrb[0].mxu0 %v985
        %v4706 = vpop.f32.mrb[0].mxu0
        %v4707 = vadd.f32 0.0, %v4706
        %v4708 = vpop.f32.mrb[0].mxu0
        %4709 = vmatprep.mubr.f32.mxu0 0.0
        %4710 = vmatmul.mubr.f32.gmra.mrb[0].mxu0 %v988
        %v4711 = vpop.f32.mrb[0].mxu0
        %v4712 = vadd.f32 0.0, %v4711
        %v4713 = vpop.f32.mrb[0].mxu0
        %4714 = vdwg.mxu0
        %v4715 = vadd.f32 %v4553, %v4637
        %v4716 = vadd.f32 %v4554, %v4642
        %v4717 = vadd.f32 %v4555, %v4647
        %v4718 = vadd.f32 %v4556, %v4652
        %v4719 = vadd.f32 %v4557, %v4657
        %v4720 = vadd.f32 %v4558, %v4662
        %v4721 = vadd.f32 %v4559, %v4667
        %v4722 = vadd.f32 %v4560, %v4672
        %v4723 = vadd.f32 %v4561, %v4677
        %v4724 = vadd.f32 %v4562, %v4682
        %v4725 = vadd.f32 %v4563, %v4687
        %v4726 = vadd.f32 %v4564, %v4692
        %v4727 = vadd.f32 %v4565, %v4697
        %v4728 = vadd.f32 %v4566, %v4702
        %v4729 = vadd.f32 %v4567, %v4707
        %v4730 = vadd.f32 %v4568, %v4712
        %v4731 = vld [vmem:[%s1167 + $0x10] sm:$0xff]
        %4732 = vmatprep.subr.mxu0 0.0
        %4733 = vmatpush1.msra.mxu0 %v4731
        %4734 = vmatprep.subr.mxu0 0.0
        %4735 = vmatpush1.msra.mxu0 0.0
        %4736 = vmatprep.subr.mxu0 0.0
        %4737 = vmatpush1.msra.mxu0 0.0
        %4738 = vmatprep.subr.mxu0 0.0
        %4739 = vmatpush1.msra.mxu0 0.0
        %4740 = vmatprep.subr.mxu0 0.0
        %4741 = vmatpush1.msra.mxu0 0.0
        %4742 = vmatprep.subr.mxu0 0.0
        %4743 = vmatpush1.msra.mxu0 0.0
        %4744 = vmatprep.subr.mxu0 0.0
        %4745 = vmatpush1.msra.mxu0 0.0
        %4746 = vmatprep.subr.mxu0 0.0
        %4747 = vmatpush1.msra.mxu0 0.0
        %4748 = vmatprep.subr.mxu0 0.0
        %4749 = vmatpush1.msra.mxu0 0.0
        %4750 = vmatprep.subr.mxu0 0.0
        %4751 = vmatpush1.msra.mxu0 0.0
        %4752 = vmatprep.subr.mxu0 0.0
        %4753 = vmatpush1.msra.mxu0 0.0
        %4754 = vmatprep.subr.mxu0 0.0
        %4755 = vmatpush1.msra.mxu0 0.0
        %4756 = vmatprep.subr.mxu0 0.0
        %4757 = vmatpush1.msra.mxu0 0.0
        %4758 = vmatprep.subr.mxu0 0.0
        %4759 = vmatpush1.msra.mxu0 0.0
        %4760 = vmatprep.subr.mxu0 0.0
        %4761 = vmatpush1.msra.mxu0 0.0
        %4762 = vmatprep.subr.mxu0 0.0
        %4763 = vmatpush1.msra.mxu0 0.0
        %4764 = vmatprep.subr.mxu0 0.0
        %4765 = vmatpush1.msra.mxu0 0.0
        %4766 = vmatprep.subr.mxu0 0.0
        %4767 = vmatpush1.msra.mxu0 0.0
        %4768 = vmatprep.subr.mxu0 0.0
        %4769 = vmatpush1.msra.mxu0 0.0
        %4770 = vmatprep.subr.mxu0 0.0
        %4771 = vmatpush1.msra.mxu0 0.0
        %4772 = vmatprep.subr.mxu0 0.0
        %4773 = vmatpush1.msra.mxu0 0.0
        %4774 = vmatprep.subr.mxu0 0.0
        %4775 = vmatpush1.msra.mxu0 0.0
        %4776 = vmatprep.subr.mxu0 0.0
        %4777 = vmatpush1.msra.mxu0 0.0
        %4778 = vmatprep.subr.mxu0 0.0
        %4779 = vmatpush1.msra.mxu0 0.0
        %4780 = vmatprep.subr.mxu0 0.0
        %4781 = vmatpush1.msra.mxu0 0.0
        %4782 = vmatprep.subr.mxu0 0.0
        %4783 = vmatpush1.msra.mxu0 0.0
        %4784 = vmatprep.subr.mxu0 0.0
        %4785 = vmatpush1.msra.mxu0 0.0
        %4786 = vmatprep.subr.mxu0 0.0
        %4787 = vmatpush1.msra.mxu0 0.0
        %4788 = vmatprep.subr.mxu0 0.0
        %4789 = vmatpush1.msra.mxu0 0.0
        %4790 = vmatprep.subr.mxu0 0.0
        %4791 = vmatpush1.msra.mxu0 0.0
        %4792 = vmatprep.subr.mxu0 0.0
        %4793 = vmatpush1.msra.mxu0 0.0
        %4794 = vmatprep.subr.mxu0 0.0
        %4795 = vmatpush1.msra.mxu0 0.0
        %4796 = vmatprep.mubr.f32.mxu0 0.0
        %4797 = vmatmul.mubr.f32.gmra.mrb[0].mxu0 %v1170
        %v4798 = vpop.f32.mrb[0].mxu0
        %v4799 = vadd.f32 0.0, %v4798
        %v4800 = vpop.f32.mrb[0].mxu0
        %4801 = vmatprep.mubr.f32.mxu0 0.0
        %4802 = vmatmul.mubr.f32.gmra.mrb[0].mxu0 %v1173
        %v4803 = vpop.f32.mrb[0].mxu0
        %v4804 = vadd.f32 0.0, %v4803
        %v4805 = vpop.f32.mrb[0].mxu0
        %4806 = vmatprep.mubr.f32.mxu0 0.0
        %4807 = vmatmul.mubr.f32.gmra.mrb[0].mxu0 %v1176
        %v4808 = vpop.f32.mrb[0].mxu0
        %v4809 = vadd.f32 0.0, %v4808
        %v4810 = vpop.f32.mrb[0].mxu0
        %4811 = vmatprep.mubr.f32.mxu0 0.0
        %4812 = vmatmul.mubr.f32.gmra.mrb[0].mxu0 %v1179
        %v4813 = vpop.f32.mrb[0].mxu0
        %v4814 = vadd.f32 0.0, %v4813
        %v4815 = vpop.f32.mrb[0].mxu0
        %4816 = vmatprep.mubr.f32.mxu0 0.0
        %4817 = vmatmul.mubr.f32.gmra.mrb[0].mxu0 %v1182
        %v4818 = vpop.f32.mrb[0].mxu0
        %v4819 = vadd.f32 0.0, %v4818
        %v4820 = vpop.f32.mrb[0].mxu0
        %4821 = vmatprep.mubr.f32.mxu0 0.0
        %4822 = vmatmul.mubr.f32.gmra.mrb[0].mxu0 %v1185
        %v4823 = vpop.f32.mrb[0].mxu0
        %v4824 = vadd.f32 0.0, %v4823
        %v4825 = vpop.f32.mrb[0].mxu0
        %4826 = vmatprep.mubr.f32.mxu0 0.0
        %4827 = vmatmul.mubr.f32.gmra.mrb[0].mxu0 %v1188
        %v4828 = vpop.f32.mrb[0].mxu0
        %v4829 = vadd.f32 0.0, %v4828
        %v4830 = vpop.f32.mrb[0].mxu0
        %4831 = vmatprep.mubr.f32.mxu0 0.0
        %4832 = vmatmul.mubr.f32.gmra.mrb[0].mxu0 %v1191
        %v4833 = vpop.f32.mrb[0].mxu0
        %v4834 = vadd.f32 0.0, %v4833
        %v4835 = vpop.f32.mrb[0].mxu0
        %4836 = vmatprep.mubr.f32.mxu0 0.0
        %4837 = vmatmul.mubr.f32.gmra.mrb[0].mxu0 %v1194
        %v4838 = vpop.f32.mrb[0].mxu0
        %v4839 = vadd.f32 0.0, %v4838
        %v4840 = vpop.f32.mrb[0].mxu0
        %4841 = vmatprep.mubr.f32.mxu0 0.0
        %4842 = vmatmul.mubr.f32.gmra.mrb[0].mxu0 %v1197
        %v4843 = vpop.f32.mrb[0].mxu0
        %v4844 = vadd.f32 0.0, %v4843
        %v4845 = vpop.f32.mrb[0].mxu0
        %4846 = vmatprep.mubr.f32.mxu0 0.0
        %4847 = vmatmul.mubr.f32.gmra.mrb[0].mxu0 %v1200
        %v4848 = vpop.f32.mrb[0].mxu0
        %v4849 = vadd.f32 0.0, %v4848
        %v4850 = vpop.f32.mrb[0].mxu0
        %4851 = vmatprep.mubr.f32.mxu0 0.0
        %4852 = vmatmul.mubr.f32.gmra.mrb[0].mxu0 %v1203
        %v4853 = vpop.f32.mrb[0].mxu0
        %v4854 = vadd.f32 0.0, %v4853
        %v4855 = vpop.f32.mrb[0].mxu0
        %4856 = vmatprep.mubr.f32.mxu0 0.0
        %4857 = vmatmul.mubr.f32.gmra.mrb[0].mxu0 %v1206
        %v4858 = vpop.f32.mrb[0].mxu0
        %v4859 = vadd.f32 0.0, %v4858
        %v4860 = vpop.f32.mrb[0].mxu0
        %4861 = vmatprep.mubr.f32.mxu0 0.0
        %4862 = vmatmul.mubr.f32.gmra.mrb[0].mxu0 %v1209
        %v4863 = vpop.f32.mrb[0].mxu0
        %v4864 = vadd.f32 0.0, %v4863
        %v4865 = vpop.f32.mrb[0].mxu0
        %4866 = vmatprep.mubr.f32.mxu0 0.0
        %4867 = vmatmul.mubr.f32.gmra.mrb[0].mxu0 %v1212
        %v4868 = vpop.f32.mrb[0].mxu0
        %v4869 = vadd.f32 0.0, %v4868
        %v4870 = vpop.f32.mrb[0].mxu0
        %4871 = vmatprep.mubr.f32.mxu0 0.0
        %4872 = vmatmul.mubr.f32.gmra.mrb[0].mxu0 %v1215
        %v4873 = vpop.f32.mrb[0].mxu0
        %v4874 = vadd.f32 0.0, %v4873
        %v4875 = vpop.f32.mrb[0].mxu0
        %4876 = vdwg.mxu0
        %v4877 = vadd.f32 %v4715, %v4799
        %v4878 = vadd.f32 %v4716, %v4804
        %v4879 = vadd.f32 %v4717, %v4809
        %v4880 = vadd.f32 %v4718, %v4814
        %v4881 = vadd.f32 %v4719, %v4819
        %v4882 = vadd.f32 %v4720, %v4824
        %v4883 = vadd.f32 %v4721, %v4829
        %v4884 = vadd.f32 %v4722, %v4834
        %v4885 = vadd.f32 %v4723, %v4839
        %v4886 = vadd.f32 %v4724, %v4844
        %v4887 = vadd.f32 %v4725, %v4849
        %v4888 = vadd.f32 %v4726, %v4854
        %v4889 = vadd.f32 %v4727, %v4859
        %v4890 = vadd.f32 %v4728, %v4864
        %v4891 = vadd.f32 %v4729, %v4869
        %v4892 = vadd.f32 %v4730, %v4874
        %v4893 = vld [vmem:[%s1394 + $0x10] sm:$0xff]
        %4894 = vmatprep.subr.mxu0 0.0
        %4895 = vmatpush1.msra.mxu0 %v4893
        %4896 = vmatprep.subr.mxu0 0.0
        %4897 = vmatpush1.msra.mxu0 0.0
        %4898 = vmatprep.subr.mxu0 0.0
        %4899 = vmatpush1.msra.mxu0 0.0
        %4900 = vmatprep.subr.mxu0 0.0
        %4901 = vmatpush1.msra.mxu0 0.0
        %4902 = vmatprep.subr.mxu0 0.0
        %4903 = vmatpush1.msra.mxu0 0.0
        %4904 = vmatprep.subr.mxu0 0.0
        %4905 = vmatpush1.msra.mxu0 0.0
        %4906 = vmatprep.subr.mxu0 0.0
        %4907 = vmatpush1.msra.mxu0 0.0
        %4908 = vmatprep.subr.mxu0 0.0
        %4909 = vmatpush1.msra.mxu0 0.0
        %4910 = vmatprep.subr.mxu0 0.0
        %4911 = vmatpush1.msra.mxu0 0.0
        %4912 = vmatprep.subr.mxu0 0.0
        %4913 = vmatpush1.msra.mxu0 0.0
        %4914 = vmatprep.subr.mxu0 0.0
        %4915 = vmatpush1.msra.mxu0 0.0
        %4916 = vmatprep.subr.mxu0 0.0
        %4917 = vmatpush1.msra.mxu0 0.0
        %4918 = vmatprep.subr.mxu0 0.0
        %4919 = vmatpush1.msra.mxu0 0.0
        %4920 = vmatprep.subr.mxu0 0.0
        %4921 = vmatpush1.msra.mxu0 0.0
        %4922 = vmatprep.subr.mxu0 0.0
        %4923 = vmatpush1.msra.mxu0 0.0
        %4924 = vmatprep.subr.mxu0 0.0
        %4925 = vmatpush1.msra.mxu0 0.0
        %4926 = vmatprep.subr.mxu0 0.0
        %4927 = vmatpush1.msra.mxu0 0.0
        %4928 = vmatprep.subr.mxu0 0.0
        %4929 = vmatpush1.msra.mxu0 0.0
        %4930 = vmatprep.subr.mxu0 0.0
        %4931 = vmatpush1.msra.mxu0 0.0
        %4932 = vmatprep.subr.mxu0 0.0
        %4933 = vmatpush1.msra.mxu0 0.0
        %4934 = vmatprep.subr.mxu0 0.0
        %4935 = vmatpush1.msra.mxu0 0.0
        %4936 = vmatprep.subr.mxu0 0.0
        %4937 = vmatpush1.msra.mxu0 0.0
        %4938 = vmatprep.subr.mxu0 0.0
        %4939 = vmatpush1.msra.mxu0 0.0
        %4940 = vmatprep.subr.mxu0 0.0
        %4941 = vmatpush1.msra.mxu0 0.0
        %4942 = vmatprep.subr.mxu0 0.0
        %4943 = vmatpush1.msra.mxu0 0.0
        %4944 = vmatprep.subr.mxu0 0.0
        %4945 = vmatpush1.msra.mxu0 0.0
        %4946 = vmatprep.subr.mxu0 0.0
        %4947 = vmatpush1.msra.mxu0 0.0
        %4948 = vmatprep.subr.mxu0 0.0
        %4949 = vmatpush1.msra.mxu0 0.0
        %4950 = vmatprep.subr.mxu0 0.0
        %4951 = vmatpush1.msra.mxu0 0.0
        %4952 = vmatprep.subr.mxu0 0.0
        %4953 = vmatpush1.msra.mxu0 0.0
        %4954 = vmatprep.subr.mxu0 0.0
        %4955 = vmatpush1.msra.mxu0 0.0
        %4956 = vmatprep.subr.mxu0 0.0
        %4957 = vmatpush1.msra.mxu0 0.0
        %4958 = vmatprep.mubr.f32.mxu0 0.0
        %4959 = vmatmul.mubr.f32.gmra.mrb[0].mxu0 %v1397
        %v4960 = vpop.f32.mrb[0].mxu0
        %v4961 = vadd.f32 0.0, %v4960
        %v4962 = vpop.f32.mrb[0].mxu0
        %4963 = vmatprep.mubr.f32.mxu0 0.0
        %4964 = vmatmul.mubr.f32.gmra.mrb[0].mxu0 %v1400
        %v4965 = vpop.f32.mrb[0].mxu0
        %v4966 = vadd.f32 0.0, %v4965
        %v4967 = vpop.f32.mrb[0].mxu0
        %4968 = vmatprep.mubr.f32.mxu0 0.0
        %4969 = vmatmul.mubr.f32.gmra.mrb[0].mxu0 %v1403
        %v4970 = vpop.f32.mrb[0].mxu0
        %v4971 = vadd.f32 0.0, %v4970
        %v4972 = vpop.f32.mrb[0].mxu0
        %4973 = vmatprep.mubr.f32.mxu0 0.0
        %4974 = vmatmul.mubr.f32.gmra.mrb[0].mxu0 %v1406
        %v4975 = vpop.f32.mrb[0].mxu0
        %v4976 = vadd.f32 0.0, %v4975
        %v4977 = vpop.f32.mrb[0].mxu0
        %4978 = vmatprep.mubr.f32.mxu0 0.0
        %4979 = vmatmul.mubr.f32.gmra.mrb[0].mxu0 %v1409
        %v4980 = vpop.f32.mrb[0].mxu0
        %v4981 = vadd.f32 0.0, %v4980
        %v4982 = vpop.f32.mrb[0].mxu0
        %4983 = vmatprep.mubr.f32.mxu0 0.0
        %4984 = vmatmul.mubr.f32.gmra.mrb[0].mxu0 %v1412
        %v4985 = vpop.f32.mrb[0].mxu0
        %v4986 = vadd.f32 0.0, %v4985
        %v4987 = vpop.f32.mrb[0].mxu0
        %4988 = vmatprep.mubr.f32.mxu0 0.0
        %4989 = vmatmul.mubr.f32.gmra.mrb[0].mxu0 %v1415
        %v4990 = vpop.f32.mrb[0].mxu0
        %v4991 = vadd.f32 0.0, %v4990
        %v4992 = vpop.f32.mrb[0].mxu0
        %4993 = vmatprep.mubr.f32.mxu0 0.0
        %4994 = vmatmul.mubr.f32.gmra.mrb[0].mxu0 %v1418
        %v4995 = vpop.f32.mrb[0].mxu0
        %v4996 = vadd.f32 0.0, %v4995
        %v4997 = vpop.f32.mrb[0].mxu0
        %4998 = vmatprep.mubr.f32.mxu0 0.0
        %4999 = vmatmul.mubr.f32.gmra.mrb[0].mxu0 %v1421
        %v5000 = vpop.f32.mrb[0].mxu0
        %v5001 = vadd.f32 0.0, %v5000
        %v5002 = vpop.f32.mrb[0].mxu0
        %5003 = vmatprep.mubr.f32.mxu0 0.0
        %5004 = vmatmul.mubr.f32.gmra.mrb[0].mxu0 %v1424
        %v5005 = vpop.f32.mrb[0].mxu0
        %v5006 = vadd.f32 0.0, %v5005
        %v5007 = vpop.f32.mrb[0].mxu0
        %5008 = vmatprep.mubr.f32.mxu0 0.0
        %5009 = vmatmul.mubr.f32.gmra.mrb[0].mxu0 %v1427
        %v5010 = vpop.f32.mrb[0].mxu0
        %v5011 = vadd.f32 0.0, %v5010
        %v5012 = vpop.f32.mrb[0].mxu0
        %5013 = vmatprep.mubr.f32.mxu0 0.0
        %5014 = vmatmul.mubr.f32.gmra.mrb[0].mxu0 %v1430
        %v5015 = vpop.f32.mrb[0].mxu0
        %v5016 = vadd.f32 0.0, %v5015
        %v5017 = vpop.f32.mrb[0].mxu0
        %5018 = vmatprep.mubr.f32.mxu0 0.0
        %5019 = vmatmul.mubr.f32.gmra.mrb[0].mxu0 %v1433
        %v5020 = vpop.f32.mrb[0].mxu0
        %v5021 = vadd.f32 0.0, %v5020
        %v5022 = vpop.f32.mrb[0].mxu0
        %5023 = vmatprep.mubr.f32.mxu0 0.0
        %5024 = vmatmul.mubr.f32.gmra.mrb[0].mxu0 %v1436
        %v5025 = vpop.f32.mrb[0].mxu0
        %v5026 = vadd.f32 0.0, %v5025
        %v5027 = vpop.f32.mrb[0].mxu0
        %5028 = vmatprep.mubr.f32.mxu0 0.0
        %5029 = vmatmul.mubr.f32.gmra.mrb[0].mxu0 %v1439
        %v5030 = vpop.f32.mrb[0].mxu0
        %v5031 = vadd.f32 0.0, %v5030
        %v5032 = vpop.f32.mrb[0].mxu0
        %5033 = vmatprep.mubr.f32.mxu0 0.0
        %5034 = vmatmul.mubr.f32.gmra.mrb[0].mxu0 %v1442
        %v5035 = vpop.f32.mrb[0].mxu0
        %v5036 = vadd.f32 0.0, %v5035
        %v5037 = vpop.f32.mrb[0].mxu0
        %5038 = vdwg.mxu0
        %v5039 = vadd.f32 %v4877, %v4961
        %v5040 = vadd.f32 %v4878, %v4966
        %v5041 = vadd.f32 %v4879, %v4971
        %v5042 = vadd.f32 %v4880, %v4976
        %v5043 = vadd.f32 %v4881, %v4981
        %v5044 = vadd.f32 %v4882, %v4986
        %v5045 = vadd.f32 %v4883, %v4991
        %v5046 = vadd.f32 %v4884, %v4996
        %v5047 = vadd.f32 %v4885, %v5001
        %v5048 = vadd.f32 %v4886, %v5006
        %v5049 = vadd.f32 %v4887, %v5011
        %v5050 = vadd.f32 %v4888, %v5016
        %v5051 = vadd.f32 %v4889, %v5021
        %v5052 = vadd.f32 %v4890, %v5026
        %v5053 = vadd.f32 %v4891, %v5031
        %v5054 = vadd.f32 %v4892, %v5036
        %v5055 = vld [vmem:[%s1624 + $0x10] sm:$0xff]
        %5056 = vmatprep.subr.mxu0 0.0
        %5057 = vmatpush1.msra.mxu0 %v5055
        %5058 = vmatprep.subr.mxu0 0.0
        %5059 = vmatpush1.msra.mxu0 0.0
        %5060 = vmatprep.subr.mxu0 0.0
        %5061 = vmatpush1.msra.mxu0 0.0
        %5062 = vmatprep.subr.mxu0 0.0
        %5063 = vmatpush1.msra.mxu0 0.0
        %5064 = vmatprep.subr.mxu0 0.0
        %5065 = vmatpush1.msra.mxu0 0.0
        %5066 = vmatprep.subr.mxu0 0.0
        %5067 = vmatpush1.msra.mxu0 0.0
        %5068 = vmatprep.subr.mxu0 0.0
        %5069 = vmatpush1.msra.mxu0 0.0
        %5070 = vmatprep.subr.mxu0 0.0
        %5071 = vmatpush1.msra.mxu0 0.0
        %5072 = vmatprep.subr.mxu0 0.0
        %5073 = vmatpush1.msra.mxu0 0.0
        %5074 = vmatprep.subr.mxu0 0.0
        %5075 = vmatpush1.msra.mxu0 0.0
        %5076 = vmatprep.subr.mxu0 0.0
        %5077 = vmatpush1.msra.mxu0 0.0
        %5078 = vmatprep.subr.mxu0 0.0
        %5079 = vmatpush1.msra.mxu0 0.0
        %5080 = vmatprep.subr.mxu0 0.0
        %5081 = vmatpush1.msra.mxu0 0.0
        %5082 = vmatprep.subr.mxu0 0.0
        %5083 = vmatpush1.msra.mxu0 0.0
        %5084 = vmatprep.subr.mxu0 0.0
        %5085 = vmatpush1.msra.mxu0 0.0
        %5086 = vmatprep.subr.mxu0 0.0
        %5087 = vmatpush1.msra.mxu0 0.0
        %5088 = vmatprep.subr.mxu0 0.0
        %5089 = vmatpush1.msra.mxu0 0.0
        %5090 = vmatprep.subr.mxu0 0.0
        %5091 = vmatpush1.msra.mxu0 0.0
        %5092 = vmatprep.subr.mxu0 0.0
        %5093 = vmatpush1.msra.mxu0 0.0
        %5094 = vmatprep.subr.mxu0 0.0
        %5095 = vmatpush1.msra.mxu0 0.0
        %5096 = vmatprep.subr.mxu0 0.0
        %5097 = vmatpush1.msra.mxu0 0.0
        %5098 = vmatprep.subr.mxu0 0.0
        %5099 = vmatpush1.msra.mxu0 0.0
        %5100 = vmatprep.subr.mxu0 0.0
        %5101 = vmatpush1.msra.mxu0 0.0
        %5102 = vmatprep.subr.mxu0 0.0
        %5103 = vmatpush1.msra.mxu0 0.0
        %5104 = vmatprep.subr.mxu0 0.0
        %5105 = vmatpush1.msra.mxu0 0.0
        %5106 = vmatprep.subr.mxu0 0.0
        %5107 = vmatpush1.msra.mxu0 0.0
        %5108 = vmatprep.subr.mxu0 0.0
        %5109 = vmatpush1.msra.mxu0 0.0
        %5110 = vmatprep.subr.mxu0 0.0
        %5111 = vmatpush1.msra.mxu0 0.0
        %5112 = vmatprep.subr.mxu0 0.0
        %5113 = vmatpush1.msra.mxu0 0.0
        %5114 = vmatprep.subr.mxu0 0.0
        %5115 = vmatpush1.msra.mxu0 0.0
        %5116 = vmatprep.subr.mxu0 0.0
        %5117 = vmatpush1.msra.mxu0 0.0
        %5118 = vmatprep.subr.mxu0 0.0
        %5119 = vmatpush1.msra.mxu0 0.0
        %5120 = vmatprep.mubr.f32.mxu0 0.0
        %5121 = vmatmul.mubr.f32.gmra.mrb[0].mxu0 %v1627
        %v5122 = vpop.f32.mrb[0].mxu0
        %v5123 = vadd.f32 0.0, %v5122
        %v5124 = vpop.f32.mrb[0].mxu0
        %5125 = vmatprep.mubr.f32.mxu0 0.0
        %5126 = vmatmul.mubr.f32.gmra.mrb[0].mxu0 %v1630
        %v5127 = vpop.f32.mrb[0].mxu0
        %v5128 = vadd.f32 0.0, %v5127
        %v5129 = vpop.f32.mrb[0].mxu0
        %5130 = vmatprep.mubr.f32.mxu0 0.0
        %5131 = vmatmul.mubr.f32.gmra.mrb[0].mxu0 %v1633
        %v5132 = vpop.f32.mrb[0].mxu0
        %v5133 = vadd.f32 0.0, %v5132
        %v5134 = vpop.f32.mrb[0].mxu0
        %5135 = vmatprep.mubr.f32.mxu0 0.0
        %5136 = vmatmul.mubr.f32.gmra.mrb[0].mxu0 %v1636
        %v5137 = vpop.f32.mrb[0].mxu0
        %v5138 = vadd.f32 0.0, %v5137
        %v5139 = vpop.f32.mrb[0].mxu0
        %5140 = vmatprep.mubr.f32.mxu0 0.0
        %5141 = vmatmul.mubr.f32.gmra.mrb[0].mxu0 %v1639
        %v5142 = vpop.f32.mrb[0].mxu0
        %v5143 = vadd.f32 0.0, %v5142
        %v5144 = vpop.f32.mrb[0].mxu0
        %5145 = vmatprep.mubr.f32.mxu0 0.0
        %5146 = vmatmul.mubr.f32.gmra.mrb[0].mxu0 %v1642
        %v5147 = vpop.f32.mrb[0].mxu0
        %v5148 = vadd.f32 0.0, %v5147
        %v5149 = vpop.f32.mrb[0].mxu0
        %5150 = vmatprep.mubr.f32.mxu0 0.0
        %5151 = vmatmul.mubr.f32.gmra.mrb[0].mxu0 %v1645
        %v5152 = vpop.f32.mrb[0].mxu0
        %v5153 = vadd.f32 0.0, %v5152
        %v5154 = vpop.f32.mrb[0].mxu0
        %5155 = vmatprep.mubr.f32.mxu0 0.0
        %5156 = vmatmul.mubr.f32.gmra.mrb[0].mxu0 %v1648
        %v5157 = vpop.f32.mrb[0].mxu0
        %v5158 = vadd.f32 0.0, %v5157
        %v5159 = vpop.f32.mrb[0].mxu0
        %5160 = vmatprep.mubr.f32.mxu0 0.0
        %5161 = vmatmul.mubr.f32.gmra.mrb[0].mxu0 %v1651
        %v5162 = vpop.f32.mrb[0].mxu0
        %v5163 = vadd.f32 0.0, %v5162
        %v5164 = vpop.f32.mrb[0].mxu0
        %5165 = vmatprep.mubr.f32.mxu0 0.0
        %5166 = vmatmul.mubr.f32.gmra.mrb[0].mxu0 %v1654
        %v5167 = vpop.f32.mrb[0].mxu0
        %v5168 = vadd.f32 0.0, %v5167
        %v5169 = vpop.f32.mrb[0].mxu0
        %5170 = vmatprep.mubr.f32.mxu0 0.0
        %5171 = vmatmul.mubr.f32.gmra.mrb[0].mxu0 %v1657
        %v5172 = vpop.f32.mrb[0].mxu0
        %v5173 = vadd.f32 0.0, %v5172
        %v5174 = vpop.f32.mrb[0].mxu0
        %5175 = vmatprep.mubr.f32.mxu0 0.0
        %5176 = vmatmul.mubr.f32.gmra.mrb[0].mxu0 %v1660
        %v5177 = vpop.f32.mrb[0].mxu0
        %v5178 = vadd.f32 0.0, %v5177
        %v5179 = vpop.f32.mrb[0].mxu0
        %5180 = vmatprep.mubr.f32.mxu0 0.0
        %5181 = vmatmul.mubr.f32.gmra.mrb[0].mxu0 %v1663
        %v5182 = vpop.f32.mrb[0].mxu0
        %v5183 = vadd.f32 0.0, %v5182
        %v5184 = vpop.f32.mrb[0].mxu0
        %5185 = vmatprep.mubr.f32.mxu0 0.0
        %5186 = vmatmul.mubr.f32.gmra.mrb[0].mxu0 %v1666
        %v5187 = vpop.f32.mrb[0].mxu0
        %v5188 = vadd.f32 0.0, %v5187
        %v5189 = vpop.f32.mrb[0].mxu0
        %5190 = vmatprep.mubr.f32.mxu0 0.0
        %5191 = vmatmul.mubr.f32.gmra.mrb[0].mxu0 %v1669
        %v5192 = vpop.f32.mrb[0].mxu0
        %v5193 = vadd.f32 0.0, %v5192
        %v5194 = vpop.f32.mrb[0].mxu0
        %5195 = vmatprep.mubr.f32.mxu0 0.0
        %5196 = vmatmul.mubr.f32.gmra.mrb[0].mxu0 %v1672
        %v5197 = vpop.f32.mrb[0].mxu0
        %v5198 = vadd.f32 0.0, %v5197
        %v5199 = vpop.f32.mrb[0].mxu0
        %5200 = vdwg.mxu0
        %v5201 = vadd.f32 %v5039, %v5123
        %v5202 = vadd.f32 %v5040, %v5128
        %v5203 = vadd.f32 %v5041, %v5133
        %v5204 = vadd.f32 %v5042, %v5138
        %v5205 = vadd.f32 %v5043, %v5143
        %v5206 = vadd.f32 %v5044, %v5148
        %v5207 = vadd.f32 %v5045, %v5153
        %v5208 = vadd.f32 %v5046, %v5158
        %v5209 = vadd.f32 %v5047, %v5163
        %v5210 = vadd.f32 %v5048, %v5168
        %v5211 = vadd.f32 %v5049, %v5173
        %v5212 = vadd.f32 %v5050, %v5178
        %v5213 = vadd.f32 %v5051, %v5183
        %v5214 = vadd.f32 %v5052, %v5188
        %v5215 = vadd.f32 %v5053, %v5193
        %v5216 = vadd.f32 %v5054, %v5198
        %v5217 = vld [vmem:[%s1851 + $0x10] sm:$0xff]
        %5218 = vmatprep.subr.mxu0 0.0
        %5219 = vmatpush1.msra.mxu0 %v5217
        %5220 = vmatprep.subr.mxu0 0.0
        %5221 = vmatpush1.msra.mxu0 0.0
        %5222 = vmatprep.subr.mxu0 0.0
        %5223 = vmatpush1.msra.mxu0 0.0
        %5224 = vmatprep.subr.mxu0 0.0
        %5225 = vmatpush1.msra.mxu0 0.0
        %5226 = vmatprep.subr.mxu0 0.0
        %5227 = vmatpush1.msra.mxu0 0.0
        %5228 = vmatprep.subr.mxu0 0.0
        %5229 = vmatpush1.msra.mxu0 0.0
        %5230 = vmatprep.subr.mxu0 0.0
        %5231 = vmatpush1.msra.mxu0 0.0
        %5232 = vmatprep.subr.mxu0 0.0
        %5233 = vmatpush1.msra.mxu0 0.0
        %5234 = vmatprep.subr.mxu0 0.0
        %5235 = vmatpush1.msra.mxu0 0.0
        %5236 = vmatprep.subr.mxu0 0.0
        %5237 = vmatpush1.msra.mxu0 0.0
        %5238 = vmatprep.subr.mxu0 0.0
        %5239 = vmatpush1.msra.mxu0 0.0
        %5240 = vmatprep.subr.mxu0 0.0
        %5241 = vmatpush1.msra.mxu0 0.0
        %5242 = vmatprep.subr.mxu0 0.0
        %5243 = vmatpush1.msra.mxu0 0.0
        %5244 = vmatprep.subr.mxu0 0.0
        %5245 = vmatpush1.msra.mxu0 0.0
        %5246 = vmatprep.subr.mxu0 0.0
        %5247 = vmatpush1.msra.mxu0 0.0
        %5248 = vmatprep.subr.mxu0 0.0
        %5249 = vmatpush1.msra.mxu0 0.0
        %5250 = vmatprep.subr.mxu0 0.0
        %5251 = vmatpush1.msra.mxu0 0.0
        %5252 = vmatprep.subr.mxu0 0.0
        %5253 = vmatpush1.msra.mxu0 0.0
        %5254 = vmatprep.subr.mxu0 0.0
        %5255 = vmatpush1.msra.mxu0 0.0
        %5256 = vmatprep.subr.mxu0 0.0
        %5257 = vmatpush1.msra.mxu0 0.0
        %5258 = vmatprep.subr.mxu0 0.0
        %5259 = vmatpush1.msra.mxu0 0.0
        %5260 = vmatprep.subr.mxu0 0.0
        %5261 = vmatpush1.msra.mxu0 0.0
        %5262 = vmatprep.subr.mxu0 0.0
        %5263 = vmatpush1.msra.mxu0 0.0
        %5264 = vmatprep.subr.mxu0 0.0
        %5265 = vmatpush1.msra.mxu0 0.0
        %5266 = vmatprep.subr.mxu0 0.0
        %5267 = vmatpush1.msra.mxu0 0.0
        %5268 = vmatprep.subr.mxu0 0.0
        %5269 = vmatpush1.msra.mxu0 0.0
        %5270 = vmatprep.subr.mxu0 0.0
        %5271 = vmatpush1.msra.mxu0 0.0
        %5272 = vmatprep.subr.mxu0 0.0
        %5273 = vmatpush1.msra.mxu0 0.0
        %5274 = vmatprep.subr.mxu0 0.0
        %5275 = vmatpush1.msra.mxu0 0.0
        %5276 = vmatprep.subr.mxu0 0.0
        %5277 = vmatpush1.msra.mxu0 0.0
        %5278 = vmatprep.subr.mxu0 0.0
        %5279 = vmatpush1.msra.mxu0 0.0
        %5280 = vmatprep.subr.mxu0 0.0
        %5281 = vmatpush1.msra.mxu0 0.0
        %5282 = vmatprep.mubr.f32.mxu0 0.0
        %5283 = vmatmul.mubr.f32.gmra.mrb[0].mxu0 %v1854
        %v5284 = vpop.f32.mrb[0].mxu0
        %v5285 = vadd.f32 0.0, %v5284
        %v5286 = vpop.f32.mrb[0].mxu0
        %5287 = vmatprep.mubr.f32.mxu0 0.0
        %5288 = vmatmul.mubr.f32.gmra.mrb[0].mxu0 %v1857
        %v5289 = vpop.f32.mrb[0].mxu0
        %v5290 = vadd.f32 0.0, %v5289
        %v5291 = vpop.f32.mrb[0].mxu0
        %5292 = vmatprep.mubr.f32.mxu0 0.0
        %5293 = vmatmul.mubr.f32.gmra.mrb[0].mxu0 %v1860
        %v5294 = vpop.f32.mrb[0].mxu0
        %v5295 = vadd.f32 0.0, %v5294
        %v5296 = vpop.f32.mrb[0].mxu0
        %5297 = vmatprep.mubr.f32.mxu0 0.0
        %5298 = vmatmul.mubr.f32.gmra.mrb[0].mxu0 %v1863
        %v5299 = vpop.f32.mrb[0].mxu0
        %v5300 = vadd.f32 0.0, %v5299
        %v5301 = vpop.f32.mrb[0].mxu0
        %5302 = vmatprep.mubr.f32.mxu0 0.0
        %5303 = vmatmul.mubr.f32.gmra.mrb[0].mxu0 %v1866
        %v5304 = vpop.f32.mrb[0].mxu0
        %v5305 = vadd.f32 0.0, %v5304
        %v5306 = vpop.f32.mrb[0].mxu0
        %5307 = vmatprep.mubr.f32.mxu0 0.0
        %5308 = vmatmul.mubr.f32.gmra.mrb[0].mxu0 %v1869
        %v5309 = vpop.f32.mrb[0].mxu0
        %v5310 = vadd.f32 0.0, %v5309
        %v5311 = vpop.f32.mrb[0].mxu0
        %5312 = vmatprep.mubr.f32.mxu0 0.0
        %5313 = vmatmul.mubr.f32.gmra.mrb[0].mxu0 %v1872
        %v5314 = vpop.f32.mrb[0].mxu0
        %v5315 = vadd.f32 0.0, %v5314
        %v5316 = vpop.f32.mrb[0].mxu0
        %5317 = vmatprep.mubr.f32.mxu0 0.0
        %5318 = vmatmul.mubr.f32.gmra.mrb[0].mxu0 %v1875
        %v5319 = vpop.f32.mrb[0].mxu0
        %v5320 = vadd.f32 0.0, %v5319
        %v5321 = vpop.f32.mrb[0].mxu0
        %5322 = vmatprep.mubr.f32.mxu0 0.0
        %5323 = vmatmul.mubr.f32.gmra.mrb[0].mxu0 %v1878
        %v5324 = vpop.f32.mrb[0].mxu0
        %v5325 = vadd.f32 0.0, %v5324
        %v5326 = vpop.f32.mrb[0].mxu0
        %5327 = vmatprep.mubr.f32.mxu0 0.0
        %5328 = vmatmul.mubr.f32.gmra.mrb[0].mxu0 %v1881
        %v5329 = vpop.f32.mrb[0].mxu0
        %v5330 = vadd.f32 0.0, %v5329
        %v5331 = vpop.f32.mrb[0].mxu0
        %5332 = vmatprep.mubr.f32.mxu0 0.0
        %5333 = vmatmul.mubr.f32.gmra.mrb[0].mxu0 %v1884
        %v5334 = vpop.f32.mrb[0].mxu0
        %v5335 = vadd.f32 0.0, %v5334
        %v5336 = vpop.f32.mrb[0].mxu0
        %5337 = vmatprep.mubr.f32.mxu0 0.0
        %5338 = vmatmul.mubr.f32.gmra.mrb[0].mxu0 %v1887
        %v5339 = vpop.f32.mrb[0].mxu0
        %v5340 = vadd.f32 0.0, %v5339
        %v5341 = vpop.f32.mrb[0].mxu0
        %5342 = vmatprep.mubr.f32.mxu0 0.0
        %5343 = vmatmul.mubr.f32.gmra.mrb[0].mxu0 %v1890
        %v5344 = vpop.f32.mrb[0].mxu0
        %v5345 = vadd.f32 0.0, %v5344
        %v5346 = vpop.f32.mrb[0].mxu0
        %5347 = vmatprep.mubr.f32.mxu0 0.0
        %5348 = vmatmul.mubr.f32.gmra.mrb[0].mxu0 %v1893
        %v5349 = vpop.f32.mrb[0].mxu0
        %v5350 = vadd.f32 0.0, %v5349
        %v5351 = vpop.f32.mrb[0].mxu0
        %5352 = vmatprep.mubr.f32.mxu0 0.0
        %5353 = vmatmul.mubr.f32.gmra.mrb[0].mxu0 %v1896
        %v5354 = vpop.f32.mrb[0].mxu0
        %v5355 = vadd.f32 0.0, %v5354
        %v5356 = vpop.f32.mrb[0].mxu0
        %5357 = vmatprep.mubr.f32.mxu0 0.0
        %5358 = vmatmul.mubr.f32.gmra.mrb[0].mxu0 %v1899
        %v5359 = vpop.f32.mrb[0].mxu0
        %v5360 = vadd.f32 0.0, %v5359
        %v5361 = vpop.f32.mrb[0].mxu0
        %5362 = vdwg.mxu0
        %v5363 = vadd.f32 %v5201, %v5285
        %v5364 = vadd.f32 %v5202, %v5290
        %v5365 = vadd.f32 %v5203, %v5295
        %v5366 = vadd.f32 %v5204, %v5300
        %v5367 = vadd.f32 %v5205, %v5305
        %v5368 = vadd.f32 %v5206, %v5310
        %v5369 = vadd.f32 %v5207, %v5315
        %v5370 = vadd.f32 %v5208, %v5320
        %v5371 = vadd.f32 %v5209, %v5325
        %v5372 = vadd.f32 %v5210, %v5330
        %v5373 = vadd.f32 %v5211, %v5335
        %v5374 = vadd.f32 %v5212, %v5340
        %v5375 = vadd.f32 %v5213, %v5345
        %v5376 = vadd.f32 %v5214, %v5350
        %v5377 = vadd.f32 %v5215, %v5355
        %v5378 = vadd.f32 %v5216, %v5360
        %v5379 = vld [vmem:[%s2078 + $0x10] sm:$0xff]
        %5380 = vmatprep.subr.mxu0 0.0
        %5381 = vmatpush1.msra.mxu0 %v5379
        %5382 = vmatprep.subr.mxu0 0.0
        %5383 = vmatpush1.msra.mxu0 0.0
        %5384 = vmatprep.subr.mxu0 0.0
        %5385 = vmatpush1.msra.mxu0 0.0
        %5386 = vmatprep.subr.mxu0 0.0
        %5387 = vmatpush1.msra.mxu0 0.0
        %5388 = vmatprep.subr.mxu0 0.0
        %5389 = vmatpush1.msra.mxu0 0.0
        %5390 = vmatprep.subr.mxu0 0.0
        %5391 = vmatpush1.msra.mxu0 0.0
        %5392 = vmatprep.subr.mxu0 0.0
        %5393 = vmatpush1.msra.mxu0 0.0
        %5394 = vmatprep.subr.mxu0 0.0
        %5395 = vmatpush1.msra.mxu0 0.0
        %5396 = vmatprep.subr.mxu0 0.0
        %5397 = vmatpush1.msra.mxu0 0.0
        %5398 = vmatprep.subr.mxu0 0.0
        %5399 = vmatpush1.msra.mxu0 0.0
        %5400 = vmatprep.subr.mxu0 0.0
        %5401 = vmatpush1.msra.mxu0 0.0
        %5402 = vmatprep.subr.mxu0 0.0
        %5403 = vmatpush1.msra.mxu0 0.0
        %5404 = vmatprep.subr.mxu0 0.0
        %5405 = vmatpush1.msra.mxu0 0.0
        %5406 = vmatprep.subr.mxu0 0.0
        %5407 = vmatpush1.msra.mxu0 0.0
        %5408 = vmatprep.subr.mxu0 0.0
        %5409 = vmatpush1.msra.mxu0 0.0
        %5410 = vmatprep.subr.mxu0 0.0
        %5411 = vmatpush1.msra.mxu0 0.0
        %5412 = vmatprep.subr.mxu0 0.0
        %5413 = vmatpush1.msra.mxu0 0.0
        %5414 = vmatprep.subr.mxu0 0.0
        %5415 = vmatpush1.msra.mxu0 0.0
        %5416 = vmatprep.subr.mxu0 0.0
        %5417 = vmatpush1.msra.mxu0 0.0
        %5418 = vmatprep.subr.mxu0 0.0
        %5419 = vmatpush1.msra.mxu0 0.0
        %5420 = vmatprep.subr.mxu0 0.0
        %5421 = vmatpush1.msra.mxu0 0.0
        %5422 = vmatprep.subr.mxu0 0.0
        %5423 = vmatpush1.msra.mxu0 0.0
        %5424 = vmatprep.subr.mxu0 0.0
        %5425 = vmatpush1.msra.mxu0 0.0
        %5426 = vmatprep.subr.mxu0 0.0
        %5427 = vmatpush1.msra.mxu0 0.0
        %5428 = vmatprep.subr.mxu0 0.0
        %5429 = vmatpush1.msra.mxu0 0.0
        %5430 = vmatprep.subr.mxu0 0.0
        %5431 = vmatpush1.msra.mxu0 0.0
        %5432 = vmatprep.subr.mxu0 0.0
        %5433 = vmatpush1.msra.mxu0 0.0
        %5434 = vmatprep.subr.mxu0 0.0
        %5435 = vmatpush1.msra.mxu0 0.0
        %5436 = vmatprep.subr.mxu0 0.0
        %5437 = vmatpush1.msra.mxu0 0.0
        %5438 = vmatprep.subr.mxu0 0.0
        %5439 = vmatpush1.msra.mxu0 0.0
        %5440 = vmatprep.subr.mxu0 0.0
        %5441 = vmatpush1.msra.mxu0 0.0
        %5442 = vmatprep.subr.mxu0 0.0
        %5443 = vmatpush1.msra.mxu0 0.0
        %5444 = vmatprep.mubr.f32.mxu0 0.0
        %5445 = vmatmul.mubr.f32.gmra.mrb[0].mxu0 %v2081
        %v5446 = vpop.f32.mrb[0].mxu0
        %v5447 = vadd.f32 0.0, %v5446
        %v5448 = vpop.f32.mrb[0].mxu0
        %5449 = vmatprep.mubr.f32.mxu0 0.0
        %5450 = vmatmul.mubr.f32.gmra.mrb[0].mxu0 %v2084
        %v5451 = vpop.f32.mrb[0].mxu0
        %v5452 = vadd.f32 0.0, %v5451
        %v5453 = vpop.f32.mrb[0].mxu0
        %5454 = vmatprep.mubr.f32.mxu0 0.0
        %5455 = vmatmul.mubr.f32.gmra.mrb[0].mxu0 %v2087
        %v5456 = vpop.f32.mrb[0].mxu0
        %v5457 = vadd.f32 0.0, %v5456
        %v5458 = vpop.f32.mrb[0].mxu0
        %5459 = vmatprep.mubr.f32.mxu0 0.0
        %5460 = vmatmul.mubr.f32.gmra.mrb[0].mxu0 %v2090
        %v5461 = vpop.f32.mrb[0].mxu0
        %v5462 = vadd.f32 0.0, %v5461
        %v5463 = vpop.f32.mrb[0].mxu0
        %5464 = vmatprep.mubr.f32.mxu0 0.0
        %5465 = vmatmul.mubr.f32.gmra.mrb[0].mxu0 %v2093
        %v5466 = vpop.f32.mrb[0].mxu0
        %v5467 = vadd.f32 0.0, %v5466
        %v5468 = vpop.f32.mrb[0].mxu0
        %5469 = vmatprep.mubr.f32.mxu0 0.0
        %5470 = vmatmul.mubr.f32.gmra.mrb[0].mxu0 %v2096
        %v5471 = vpop.f32.mrb[0].mxu0
        %v5472 = vadd.f32 0.0, %v5471
        %v5473 = vpop.f32.mrb[0].mxu0
        %5474 = vmatprep.mubr.f32.mxu0 0.0
        %5475 = vmatmul.mubr.f32.gmra.mrb[0].mxu0 %v2099
        %v5476 = vpop.f32.mrb[0].mxu0
        %v5477 = vadd.f32 0.0, %v5476
        %v5478 = vpop.f32.mrb[0].mxu0
        %5479 = vmatprep.mubr.f32.mxu0 0.0
        %5480 = vmatmul.mubr.f32.gmra.mrb[0].mxu0 %v2102
        %v5481 = vpop.f32.mrb[0].mxu0
        %v5482 = vadd.f32 0.0, %v5481
        %v5483 = vpop.f32.mrb[0].mxu0
        %5484 = vmatprep.mubr.f32.mxu0 0.0
        %5485 = vmatmul.mubr.f32.gmra.mrb[0].mxu0 %v2105
        %v5486 = vpop.f32.mrb[0].mxu0
        %v5487 = vadd.f32 0.0, %v5486
        %v5488 = vpop.f32.mrb[0].mxu0
        %5489 = vmatprep.mubr.f32.mxu0 0.0
        %5490 = vmatmul.mubr.f32.gmra.mrb[0].mxu0 %v2108
        %v5491 = vpop.f32.mrb[0].mxu0
        %v5492 = vadd.f32 0.0, %v5491
        %v5493 = vpop.f32.mrb[0].mxu0
        %5494 = vmatprep.mubr.f32.mxu0 0.0
        %5495 = vmatmul.mubr.f32.gmra.mrb[0].mxu0 %v2111
        %v5496 = vpop.f32.mrb[0].mxu0
        %v5497 = vadd.f32 0.0, %v5496
        %v5498 = vpop.f32.mrb[0].mxu0
        %5499 = vmatprep.mubr.f32.mxu0 0.0
        %5500 = vmatmul.mubr.f32.gmra.mrb[0].mxu0 %v2114
        %v5501 = vpop.f32.mrb[0].mxu0
        %v5502 = vadd.f32 0.0, %v5501
        %v5503 = vpop.f32.mrb[0].mxu0
        %5504 = vmatprep.mubr.f32.mxu0 0.0
        %5505 = vmatmul.mubr.f32.gmra.mrb[0].mxu0 %v2117
        %v5506 = vpop.f32.mrb[0].mxu0
        %v5507 = vadd.f32 0.0, %v5506
        %v5508 = vpop.f32.mrb[0].mxu0
        %5509 = vmatprep.mubr.f32.mxu0 0.0
        %5510 = vmatmul.mubr.f32.gmra.mrb[0].mxu0 %v2120
        %v5511 = vpop.f32.mrb[0].mxu0
        %v5512 = vadd.f32 0.0, %v5511
        %v5513 = vpop.f32.mrb[0].mxu0
        %5514 = vmatprep.mubr.f32.mxu0 0.0
        %5515 = vmatmul.mubr.f32.gmra.mrb[0].mxu0 %v2123
        %v5516 = vpop.f32.mrb[0].mxu0
        %v5517 = vadd.f32 0.0, %v5516
        %v5518 = vpop.f32.mrb[0].mxu0
        %5519 = vmatprep.mubr.f32.mxu0 0.0
        %5520 = vmatmul.mubr.f32.gmra.mrb[0].mxu0 %v2126
        %v5521 = vpop.f32.mrb[0].mxu0
        %v5522 = vadd.f32 0.0, %v5521
        %v5523 = vpop.f32.mrb[0].mxu0
        %5524 = vdwg.mxu0
        %v5525 = vadd.f32 %v5363, %v5447
        %v5526 = vadd.f32 %v5364, %v5452
        %v5527 = vadd.f32 %v5365, %v5457
        %v5528 = vadd.f32 %v5366, %v5462
        %v5529 = vadd.f32 %v5367, %v5467
        %v5530 = vadd.f32 %v5368, %v5472
        %v5531 = vadd.f32 %v5369, %v5477
        %v5532 = vadd.f32 %v5370, %v5482
        %v5533 = vadd.f32 %v5371, %v5487
        %v5534 = vadd.f32 %v5372, %v5492
        %v5535 = vadd.f32 %v5373, %v5497
        %v5536 = vadd.f32 %v5374, %v5502
        %v5537 = vadd.f32 %v5375, %v5507
        %v5538 = vadd.f32 %v5376, %v5512
        %v5539 = vadd.f32 %v5377, %v5517
        %v5540 = vadd.f32 %v5378, %v5522
        %v5541 = vld [vmem:[%s2 + $0x2] sm:$0x1]
        %v5543 = vlaneseq
        %v5544 = vshrl.u32 %v5543, 7
        %v5545 = vsub.s32 0, %v5544
        %v5546 = vrot.slane %v5541, %v5545
        %v5548 = vadd.f32 %v5525, %v5546
        %v5549 = vadd.f32 %v5526, %v5546
        %v5550 = vadd.f32 %v5527, %v5546
        %v5551 = vadd.f32 %v5528, %v5546
        %v5552 = vadd.f32 %v5529, %v5546
        %v5553 = vadd.f32 %v5530, %v5546
        %v5554 = vadd.f32 %v5531, %v5546
        %v5555 = vadd.f32 %v5532, %v5546
        %v5556 = vadd.f32 %v5533, %v5546
        %v5557 = vadd.f32 %v5534, %v5546
        %v5558 = vadd.f32 %v5535, %v5546
        %v5559 = vadd.f32 %v5536, %v5546
        %v5560 = vadd.f32 %v5537, %v5546
        %v5561 = vadd.f32 %v5538, %v5546
        %v5562 = vadd.f32 %v5539, %v5546
        %v5563 = vadd.f32 %v5540, %v5546
        %v5564 = vmax.f32 %v5548, 0.0
        %v5565 = vmax.f32 %v5549, 0.0
        %v5566 = vmax.f32 %v5550, 0.0
        %v5567 = vmax.f32 %v5551, 0.0
        %v5568 = vmax.f32 %v5552, 0.0
        %v5569 = vmax.f32 %v5553, 0.0
        %v5570 = vmax.f32 %v5554, 0.0
        %v5571 = vmax.f32 %v5555, 0.0
        %v5572 = vmax.f32 %v5556, 0.0
        %v5573 = vmax.f32 %v5557, 0.0
        %v5574 = vmax.f32 %v5558, 0.0
        %v5575 = vmax.f32 %v5559, 0.0
        %v5576 = vmax.f32 %v5560, 0.0
        %v5577 = vmax.f32 %v5561, 0.0
        %v5578 = vmax.f32 %v5562, 0.0
        %v5579 = vmax.f32 %v5563, 0.0
        %v5580 = vld [vmem:[%s3 + $0x100] sm:$0xff]
        %v5581 = vld [vmem:[%s3 + $0x108] sm:$0xff]
        %v5582 = vld [vmem:[%s3 + $0x110] sm:$0xff]
        %v5583 = vld [vmem:[%s3 + $0x118] sm:$0xff]
        %v5584 = vld [vmem:[%s3 + $0x120] sm:$0xff]
        %v5585 = vld [vmem:[%s3 + $0x128] sm:$0xff]
        %v5586 = vld [vmem:[%s3 + $0x130] sm:$0xff]
        %v5587 = vld [vmem:[%s3 + $0x138] sm:$0xff]
        %v5588 = vld [vmem:[%s3 + $0x140] sm:$0xff]
        %v5589 = vld [vmem:[%s3 + $0x148] sm:$0xff]
        %v5590 = vld [vmem:[%s3 + $0x150] sm:$0xff]
        %v5591 = vld [vmem:[%s3 + $0x158] sm:$0xff]
        %v5592 = vld [vmem:[%s3 + $0x160] sm:$0xff]
        %v5593 = vld [vmem:[%s3 + $0x168] sm:$0xff]
        %v5594 = vld [vmem:[%s3 + $0x170] sm:$0xff]
        %v5595 = vld [vmem:[%s3 + $0x178] sm:$0xff]
        %5596 = vmatprep.subr.mxu0 0.0
        %5597 = vmatpush1.msra.mxu0 %v5580
        %5598 = vmatprep.subr.mxu0 0.0
        %5599 = vmatpush1.msra.mxu0 %v5581
        %5600 = vmatprep.subr.mxu0 0.0
        %5601 = vmatpush1.msra.mxu0 %v5582
        %5602 = vmatprep.subr.mxu0 0.0
        %5603 = vmatpush1.msra.mxu0 %v5583
        %5604 = vmatprep.subr.mxu0 0.0
        %5605 = vmatpush1.msra.mxu0 %v5584
        %5606 = vmatprep.subr.mxu0 0.0
        %5607 = vmatpush1.msra.mxu0 %v5585
        %5608 = vmatprep.subr.mxu0 0.0
        %5609 = vmatpush1.msra.mxu0 %v5586
        %5610 = vmatprep.subr.mxu0 0.0
        %5611 = vmatpush1.msra.mxu0 %v5587
        %5612 = vmatprep.subr.mxu0 0.0
        %5613 = vmatpush1.msra.mxu0 %v5588
        %5614 = vmatprep.subr.mxu0 0.0
        %5615 = vmatpush1.msra.mxu0 %v5589
        %5616 = vmatprep.subr.mxu0 0.0
        %5617 = vmatpush1.msra.mxu0 %v5590
        %5618 = vmatprep.subr.mxu0 0.0
        %5619 = vmatpush1.msra.mxu0 %v5591
        %5620 = vmatprep.subr.mxu0 0.0
        %5621 = vmatpush1.msra.mxu0 %v5592
        %5622 = vmatprep.subr.mxu0 0.0
        %5623 = vmatpush1.msra.mxu0 %v5593
        %5624 = vmatprep.subr.mxu0 0.0
        %5625 = vmatpush1.msra.mxu0 %v5594
        %5626 = vmatprep.subr.mxu0 0.0
        %5627 = vmatpush1.msra.mxu0 %v5595
        %5628 = vmatprep.subr.mxu0 0.0
        %5629 = vmatpush1.msra.mxu0 0.0
        %5630 = vmatprep.subr.mxu0 0.0
        %5631 = vmatpush1.msra.mxu0 0.0
        %5632 = vmatprep.subr.mxu0 0.0
        %5633 = vmatpush1.msra.mxu0 0.0
        %5634 = vmatprep.subr.mxu0 0.0
        %5635 = vmatpush1.msra.mxu0 0.0
        %5636 = vmatprep.subr.mxu0 0.0
        %5637 = vmatpush1.msra.mxu0 0.0
        %5638 = vmatprep.subr.mxu0 0.0
        %5639 = vmatpush1.msra.mxu0 0.0
        %5640 = vmatprep.subr.mxu0 0.0
        %5641 = vmatpush1.msra.mxu0 0.0
        %5642 = vmatprep.subr.mxu0 0.0
        %5643 = vmatpush1.msra.mxu0 0.0
        %5644 = vmatprep.subr.mxu0 0.0
        %5645 = vmatpush1.msra.mxu0 0.0
        %5646 = vmatprep.subr.mxu0 0.0
        %5647 = vmatpush1.msra.mxu0 0.0
        %5648 = vmatprep.subr.mxu0 0.0
        %5649 = vmatpush1.msra.mxu0 0.0
        %5650 = vmatprep.subr.mxu0 0.0
        %5651 = vmatpush1.msra.mxu0 0.0
        %5652 = vmatprep.subr.mxu0 0.0
        %5653 = vmatpush1.msra.mxu0 0.0
        %5654 = vmatprep.subr.mxu0 0.0
        %5655 = vmatpush1.msra.mxu0 0.0
        %5656 = vmatprep.subr.mxu0 0.0
        %5657 = vmatpush1.msra.mxu0 0.0
        %5658 = vmatprep.subr.mxu0 0.0
        %5659 = vmatpush1.msra.mxu0 0.0
        %5660 = vmatprep.mubr.f32.mxu0 0.0
        %5661 = vmatmul.mubr.f32.gmra.mrb[0].mxu0 %v5564
        %v5662 = vpop.f32.mrb[0].mxu0
        %v5663 = vadd.f32 0.0, %v5662
        %v5664 = vpop.f32.mrb[0].mxu0
        %5665 = vmatprep.mubr.f32.mxu0 0.0
        %5666 = vmatmul.mubr.f32.gmra.mrb[0].mxu0 %v5565
        %v5667 = vpop.f32.mrb[0].mxu0
        %v5668 = vadd.f32 0.0, %v5667
        %v5669 = vpop.f32.mrb[0].mxu0
        %5670 = vmatprep.mubr.f32.mxu0 0.0
        %5671 = vmatmul.mubr.f32.gmra.mrb[0].mxu0 %v5566
        %v5672 = vpop.f32.mrb[0].mxu0
        %v5673 = vadd.f32 0.0, %v5672
        %v5674 = vpop.f32.mrb[0].mxu0
        %5675 = vmatprep.mubr.f32.mxu0 0.0
        %5676 = vmatmul.mubr.f32.gmra.mrb[0].mxu0 %v5567
        %v5677 = vpop.f32.mrb[0].mxu0
        %v5678 = vadd.f32 0.0, %v5677
        %v5679 = vpop.f32.mrb[0].mxu0
        %5680 = vmatprep.mubr.f32.mxu0 0.0
        %5681 = vmatmul.mubr.f32.gmra.mrb[0].mxu0 %v5568
        %v5682 = vpop.f32.mrb[0].mxu0
        %v5683 = vadd.f32 0.0, %v5682
        %v5684 = vpop.f32.mrb[0].mxu0
        %5685 = vmatprep.mubr.f32.mxu0 0.0
        %5686 = vmatmul.mubr.f32.gmra.mrb[0].mxu0 %v5569
        %v5687 = vpop.f32.mrb[0].mxu0
        %v5688 = vadd.f32 0.0, %v5687
        %v5689 = vpop.f32.mrb[0].mxu0
        %5690 = vmatprep.mubr.f32.mxu0 0.0
        %5691 = vmatmul.mubr.f32.gmra.mrb[0].mxu0 %v5570
        %v5692 = vpop.f32.mrb[0].mxu0
        %v5693 = vadd.f32 0.0, %v5692
        %v5694 = vpop.f32.mrb[0].mxu0
        %5695 = vmatprep.mubr.f32.mxu0 0.0
        %5696 = vmatmul.mubr.f32.gmra.mrb[0].mxu0 %v5571
        %v5697 = vpop.f32.mrb[0].mxu0
        %v5698 = vadd.f32 0.0, %v5697
        %v5699 = vpop.f32.mrb[0].mxu0
        %5700 = vmatprep.mubr.f32.mxu0 0.0
        %5701 = vmatmul.mubr.f32.gmra.mrb[0].mxu0 %v5572
        %v5702 = vpop.f32.mrb[0].mxu0
        %v5703 = vadd.f32 0.0, %v5702
        %v5704 = vpop.f32.mrb[0].mxu0
        %5705 = vmatprep.mubr.f32.mxu0 0.0
        %5706 = vmatmul.mubr.f32.gmra.mrb[0].mxu0 %v5573
        %v5707 = vpop.f32.mrb[0].mxu0
        %v5708 = vadd.f32 0.0, %v5707
        %v5709 = vpop.f32.mrb[0].mxu0
        %5710 = vmatprep.mubr.f32.mxu0 0.0
        %5711 = vmatmul.mubr.f32.gmra.mrb[0].mxu0 %v5574
        %v5712 = vpop.f32.mrb[0].mxu0
        %v5713 = vadd.f32 0.0, %v5712
        %v5714 = vpop.f32.mrb[0].mxu0
        %5715 = vmatprep.mubr.f32.mxu0 0.0
        %5716 = vmatmul.mubr.f32.gmra.mrb[0].mxu0 %v5575
        %v5717 = vpop.f32.mrb[0].mxu0
        %v5718 = vadd.f32 0.0, %v5717
        %v5719 = vpop.f32.mrb[0].mxu0
        %5720 = vmatprep.mubr.f32.mxu0 0.0
        %5721 = vmatmul.mubr.f32.gmra.mrb[0].mxu0 %v5576
        %v5722 = vpop.f32.mrb[0].mxu0
        %v5723 = vadd.f32 0.0, %v5722
        %v5724 = vpop.f32.mrb[0].mxu0
        %5725 = vmatprep.mubr.f32.mxu0 0.0
        %5726 = vmatmul.mubr.f32.gmra.mrb[0].mxu0 %v5577
        %v5727 = vpop.f32.mrb[0].mxu0
        %v5728 = vadd.f32 0.0, %v5727
        %v5729 = vpop.f32.mrb[0].mxu0
        %5730 = vmatprep.mubr.f32.mxu0 0.0
        %5731 = vmatmul.mubr.f32.gmra.mrb[0].mxu0 %v5578
        %v5732 = vpop.f32.mrb[0].mxu0
        %v5733 = vadd.f32 0.0, %v5732
        %v5734 = vpop.f32.mrb[0].mxu0
        %5735 = vmatprep.mubr.f32.mxu0 0.0
        %5736 = vmatmul.mubr.f32.gmra.mrb[0].mxu0 %v5579
        %v5737 = vpop.f32.mrb[0].mxu0
        %v5738 = vadd.f32 0.0, %v5737
        %v5739 = vpop.f32.mrb[0].mxu0
        %5740 = vdwg.mxu0
        %v5741 = vadd.f32 %v4037, %v5663
        %v5742 = vadd.f32 %v4042, %v5668
        %v5743 = vadd.f32 %v4047, %v5673
        %v5744 = vadd.f32 %v4052, %v5678
        %v5745 = vadd.f32 %v4057, %v5683
        %v5746 = vadd.f32 %v4062, %v5688
        %v5747 = vadd.f32 %v4067, %v5693
        %v5748 = vadd.f32 %v4072, %v5698
        %v5749 = vadd.f32 %v4077, %v5703
        %v5750 = vadd.f32 %v4082, %v5708
        %v5751 = vadd.f32 %v4087, %v5713
        %v5752 = vadd.f32 %v4092, %v5718
        %v5753 = vadd.f32 %v4097, %v5723
        %v5754 = vadd.f32 %v4102, %v5728
        %v5755 = vadd.f32 %v4107, %v5733
        %v5756 = vadd.f32 %v4112, %v5738
        %v5757 = vld [vmem:[%s1 + $0x18] sm:$0xff]
        %v5758 = vld [vmem:[%s305 + $0x18] sm:$0xff]
        %5759 = vmatprep.subr.mxu0 0.0
        %5760 = vmatpush1.msra.mxu0 %v5758
        %5761 = vmatprep.subr.mxu0 0.0
        %5762 = vmatpush1.msra.mxu0 0.0
        %5763 = vmatprep.subr.mxu0 0.0
        %5764 = vmatpush1.msra.mxu0 0.0
        %5765 = vmatprep.subr.mxu0 0.0
        %5766 = vmatpush1.msra.mxu0 0.0
        %5767 = vmatprep.subr.mxu0 0.0
        %5768 = vmatpush1.msra.mxu0 0.0
        %5769 = vmatprep.subr.mxu0 0.0
        %5770 = vmatpush1.msra.mxu0 0.0
        %5771 = vmatprep.subr.mxu0 0.0
        %5772 = vmatpush1.msra.mxu0 0.0
        %5773 = vmatprep.subr.mxu0 0.0
        %5774 = vmatpush1.msra.mxu0 0.0
        %5775 = vmatprep.subr.mxu0 0.0
        %5776 = vmatpush1.msra.mxu0 0.0
        %5777 = vmatprep.subr.mxu0 0.0
        %5778 = vmatpush1.msra.mxu0 0.0
        %5779 = vmatprep.subr.mxu0 0.0
        %5780 = vmatpush1.msra.mxu0 0.0
        %5781 = vmatprep.subr.mxu0 0.0
        %5782 = vmatpush1.msra.mxu0 0.0
        %5783 = vmatprep.subr.mxu0 0.0
        %5784 = vmatpush1.msra.mxu0 0.0
        %5785 = vmatprep.subr.mxu0 0.0
        %5786 = vmatpush1.msra.mxu0 0.0
        %5787 = vmatprep.subr.mxu0 0.0
        %5788 = vmatpush1.msra.mxu0 0.0
        %5789 = vmatprep.subr.mxu0 0.0
        %5790 = vmatpush1.msra.mxu0 0.0
        %5791 = vmatprep.subr.mxu0 0.0
        %5792 = vmatpush1.msra.mxu0 0.0
        %5793 = vmatprep.subr.mxu0 0.0
        %5794 = vmatpush1.msra.mxu0 0.0
        %5795 = vmatprep.subr.mxu0 0.0
        %5796 = vmatpush1.msra.mxu0 0.0
        %5797 = vmatprep.subr.mxu0 0.0
        %5798 = vmatpush1.msra.mxu0 0.0
        %5799 = vmatprep.subr.mxu0 0.0
        %5800 = vmatpush1.msra.mxu0 0.0
        %5801 = vmatprep.subr.mxu0 0.0
        %5802 = vmatpush1.msra.mxu0 0.0
        %5803 = vmatprep.subr.mxu0 0.0
        %5804 = vmatpush1.msra.mxu0 0.0
        %5805 = vmatprep.subr.mxu0 0.0
        %5806 = vmatpush1.msra.mxu0 0.0
        %5807 = vmatprep.subr.mxu0 0.0
        %5808 = vmatpush1.msra.mxu0 0.0
        %5809 = vmatprep.subr.mxu0 0.0
        %5810 = vmatpush1.msra.mxu0 0.0
        %5811 = vmatprep.subr.mxu0 0.0
        %5812 = vmatpush1.msra.mxu0 0.0
        %5813 = vmatprep.subr.mxu0 0.0
        %5814 = vmatpush1.msra.mxu0 0.0
        %5815 = vmatprep.subr.mxu0 0.0
        %5816 = vmatpush1.msra.mxu0 0.0
        %5817 = vmatprep.subr.mxu0 0.0
        %5818 = vmatpush1.msra.mxu0 0.0
        %5819 = vmatprep.subr.mxu0 0.0
        %5820 = vmatpush1.msra.mxu0 0.0
        %5821 = vmatprep.subr.mxu0 0.0
        %5822 = vmatpush1.msra.mxu0 0.0
        %5823 = vmatprep.mubr.f32.mxu0 0.0
        %5824 = vmatmul.mubr.f32.gmra.mrb[0].mxu0 %v309
        %v5825 = vpop.f32.mrb[0].mxu0
        %v5826 = vadd.f32 0.0, %v5825
        %v5827 = vpop.f32.mrb[0].mxu0
        %5828 = vmatprep.mubr.f32.mxu0 0.0
        %5829 = vmatmul.mubr.f32.gmra.mrb[0].mxu0 %v312
        %v5830 = vpop.f32.mrb[0].mxu0
        %v5831 = vadd.f32 0.0, %v5830
        %v5832 = vpop.f32.mrb[0].mxu0
        %5833 = vmatprep.mubr.f32.mxu0 0.0
        %5834 = vmatmul.mubr.f32.gmra.mrb[0].mxu0 %v315
        %v5835 = vpop.f32.mrb[0].mxu0
        %v5836 = vadd.f32 0.0, %v5835
        %v5837 = vpop.f32.mrb[0].mxu0
        %5838 = vmatprep.mubr.f32.mxu0 0.0
        %5839 = vmatmul.mubr.f32.gmra.mrb[0].mxu0 %v318
        %v5840 = vpop.f32.mrb[0].mxu0
        %v5841 = vadd.f32 0.0, %v5840
        %v5842 = vpop.f32.mrb[0].mxu0
        %5843 = vmatprep.mubr.f32.mxu0 0.0
        %5844 = vmatmul.mubr.f32.gmra.mrb[0].mxu0 %v321
        %v5845 = vpop.f32.mrb[0].mxu0
        %v5846 = vadd.f32 0.0, %v5845
        %v5847 = vpop.f32.mrb[0].mxu0
        %5848 = vmatprep.mubr.f32.mxu0 0.0
        %5849 = vmatmul.mubr.f32.gmra.mrb[0].mxu0 %v324
        %v5850 = vpop.f32.mrb[0].mxu0
        %v5851 = vadd.f32 0.0, %v5850
        %v5852 = vpop.f32.mrb[0].mxu0
        %5853 = vmatprep.mubr.f32.mxu0 0.0
        %5854 = vmatmul.mubr.f32.gmra.mrb[0].mxu0 %v327
        %v5855 = vpop.f32.mrb[0].mxu0
        %v5856 = vadd.f32 0.0, %v5855
        %v5857 = vpop.f32.mrb[0].mxu0
        %5858 = vmatprep.mubr.f32.mxu0 0.0
        %5859 = vmatmul.mubr.f32.gmra.mrb[0].mxu0 %v330
        %v5860 = vpop.f32.mrb[0].mxu0
        %v5861 = vadd.f32 0.0, %v5860
        %v5862 = vpop.f32.mrb[0].mxu0
        %5863 = vmatprep.mubr.f32.mxu0 0.0
        %5864 = vmatmul.mubr.f32.gmra.mrb[0].mxu0 %v333
        %v5865 = vpop.f32.mrb[0].mxu0
        %v5866 = vadd.f32 0.0, %v5865
        %v5867 = vpop.f32.mrb[0].mxu0
        %5868 = vmatprep.mubr.f32.mxu0 0.0
        %5869 = vmatmul.mubr.f32.gmra.mrb[0].mxu0 %v336
        %v5870 = vpop.f32.mrb[0].mxu0
        %v5871 = vadd.f32 0.0, %v5870
        %v5872 = vpop.f32.mrb[0].mxu0
        %5873 = vmatprep.mubr.f32.mxu0 0.0
        %5874 = vmatmul.mubr.f32.gmra.mrb[0].mxu0 %v339
        %v5875 = vpop.f32.mrb[0].mxu0
        %v5876 = vadd.f32 0.0, %v5875
        %v5877 = vpop.f32.mrb[0].mxu0
        %5878 = vmatprep.mubr.f32.mxu0 0.0
        %5879 = vmatmul.mubr.f32.gmra.mrb[0].mxu0 %v342
        %v5880 = vpop.f32.mrb[0].mxu0
        %v5881 = vadd.f32 0.0, %v5880
        %v5882 = vpop.f32.mrb[0].mxu0
        %5883 = vmatprep.mubr.f32.mxu0 0.0
        %5884 = vmatmul.mubr.f32.gmra.mrb[0].mxu0 %v345
        %v5885 = vpop.f32.mrb[0].mxu0
        %v5886 = vadd.f32 0.0, %v5885
        %v5887 = vpop.f32.mrb[0].mxu0
        %5888 = vmatprep.mubr.f32.mxu0 0.0
        %5889 = vmatmul.mubr.f32.gmra.mrb[0].mxu0 %v348
        %v5890 = vpop.f32.mrb[0].mxu0
        %v5891 = vadd.f32 0.0, %v5890
        %v5892 = vpop.f32.mrb[0].mxu0
        %5893 = vmatprep.mubr.f32.mxu0 0.0
        %5894 = vmatmul.mubr.f32.gmra.mrb[0].mxu0 %v351
        %v5895 = vpop.f32.mrb[0].mxu0
        %v5896 = vadd.f32 0.0, %v5895
        %v5897 = vpop.f32.mrb[0].mxu0
        %5898 = vmatprep.mubr.f32.mxu0 0.0
        %5899 = vmatmul.mubr.f32.gmra.mrb[0].mxu0 %v354
        %v5900 = vpop.f32.mrb[0].mxu0
        %v5901 = vadd.f32 0.0, %v5900
        %v5902 = vpop.f32.mrb[0].mxu0
        %5903 = vdwg.mxu0
        %5904 = vmatprep.subr.mxu0 0.0
        %5905 = vmatpush1.msra.mxu0 %v5757
        %5906 = vmatprep.subr.mxu0 0.0
        %5907 = vmatpush1.msra.mxu0 0.0
        %5908 = vmatprep.subr.mxu0 0.0
        %5909 = vmatpush1.msra.mxu0 0.0
        %5910 = vmatprep.subr.mxu0 0.0
        %5911 = vmatpush1.msra.mxu0 0.0
        %5912 = vmatprep.subr.mxu0 0.0
        %5913 = vmatpush1.msra.mxu0 0.0
        %5914 = vmatprep.subr.mxu0 0.0
        %5915 = vmatpush1.msra.mxu0 0.0
        %5916 = vmatprep.subr.mxu0 0.0
        %5917 = vmatpush1.msra.mxu0 0.0
        %5918 = vmatprep.subr.mxu0 0.0
        %5919 = vmatpush1.msra.mxu0 0.0
        %5920 = vmatprep.subr.mxu0 0.0
        %5921 = vmatpush1.msra.mxu0 0.0
        %5922 = vmatprep.subr.mxu0 0.0
        %5923 = vmatpush1.msra.mxu0 0.0
        %5924 = vmatprep.subr.mxu0 0.0
        %5925 = vmatpush1.msra.mxu0 0.0
        %5926 = vmatprep.subr.mxu0 0.0
        %5927 = vmatpush1.msra.mxu0 0.0
        %5928 = vmatprep.subr.mxu0 0.0
        %5929 = vmatpush1.msra.mxu0 0.0
        %5930 = vmatprep.subr.mxu0 0.0
        %5931 = vmatpush1.msra.mxu0 0.0
        %5932 = vmatprep.subr.mxu0 0.0
        %5933 = vmatpush1.msra.mxu0 0.0
        %5934 = vmatprep.subr.mxu0 0.0
        %5935 = vmatpush1.msra.mxu0 0.0
        %5936 = vmatprep.subr.mxu0 0.0
        %5937 = vmatpush1.msra.mxu0 0.0
        %5938 = vmatprep.subr.mxu0 0.0
        %5939 = vmatpush1.msra.mxu0 0.0
        %5940 = vmatprep.subr.mxu0 0.0
        %5941 = vmatpush1.msra.mxu0 0.0
        %5942 = vmatprep.subr.mxu0 0.0
        %5943 = vmatpush1.msra.mxu0 0.0
        %5944 = vmatprep.subr.mxu0 0.0
        %5945 = vmatpush1.msra.mxu0 0.0
        %5946 = vmatprep.subr.mxu0 0.0
        %5947 = vmatpush1.msra.mxu0 0.0
        %5948 = vmatprep.subr.mxu0 0.0
        %5949 = vmatpush1.msra.mxu0 0.0
        %5950 = vmatprep.subr.mxu0 0.0
        %5951 = vmatpush1.msra.mxu0 0.0
        %5952 = vmatprep.subr.mxu0 0.0
        %5953 = vmatpush1.msra.mxu0 0.0
        %5954 = vmatprep.subr.mxu0 0.0
        %5955 = vmatpush1.msra.mxu0 0.0
        %5956 = vmatprep.subr.mxu0 0.0
        %5957 = vmatpush1.msra.mxu0 0.0
        %5958 = vmatprep.subr.mxu0 0.0
        %5959 = vmatpush1.msra.mxu0 0.0
        %5960 = vmatprep.subr.mxu0 0.0
        %5961 = vmatpush1.msra.mxu0 0.0
        %5962 = vmatprep.subr.mxu0 0.0
        %5963 = vmatpush1.msra.mxu0 0.0
        %5964 = vmatprep.subr.mxu0 0.0
        %5965 = vmatpush1.msra.mxu0 0.0
        %5966 = vmatprep.subr.mxu0 0.0
        %5967 = vmatpush1.msra.mxu0 0.0
        %5968 = vmatprep.mubr.f32.mxu0 0.0
        %5969 = vmatmul.mubr.f32.gmra.mrb[0].mxu0 %v502
        %v5970 = vpop.f32.mrb[0].mxu0
        %v5971 = vadd.f32 %v5826, %v5970
        %v5972 = vpop.f32.mrb[0].mxu0
        %5973 = vmatprep.mubr.f32.mxu0 0.0
        %5974 = vmatmul.mubr.f32.gmra.mrb[0].mxu0 %v505
        %v5975 = vpop.f32.mrb[0].mxu0
        %v5976 = vadd.f32 %v5831, %v5975
        %v5977 = vpop.f32.mrb[0].mxu0
        %5978 = vmatprep.mubr.f32.mxu0 0.0
        %5979 = vmatmul.mubr.f32.gmra.mrb[0].mxu0 %v508
        %v5980 = vpop.f32.mrb[0].mxu0
        %v5981 = vadd.f32 %v5836, %v5980
        %v5982 = vpop.f32.mrb[0].mxu0
        %5983 = vmatprep.mubr.f32.mxu0 0.0
        %5984 = vmatmul.mubr.f32.gmra.mrb[0].mxu0 %v511
        %v5985 = vpop.f32.mrb[0].mxu0
        %v5986 = vadd.f32 %v5841, %v5985
        %v5987 = vpop.f32.mrb[0].mxu0
        %5988 = vmatprep.mubr.f32.mxu0 0.0
        %5989 = vmatmul.mubr.f32.gmra.mrb[0].mxu0 %v514
        %v5990 = vpop.f32.mrb[0].mxu0
        %v5991 = vadd.f32 %v5846, %v5990
        %v5992 = vpop.f32.mrb[0].mxu0
        %5993 = vmatprep.mubr.f32.mxu0 0.0
        %5994 = vmatmul.mubr.f32.gmra.mrb[0].mxu0 %v517
        %v5995 = vpop.f32.mrb[0].mxu0
        %v5996 = vadd.f32 %v5851, %v5995
        %v5997 = vpop.f32.mrb[0].mxu0
        %5998 = vmatprep.mubr.f32.mxu0 0.0
        %5999 = vmatmul.mubr.f32.gmra.mrb[0].mxu0 %v520
        %v6000 = vpop.f32.mrb[0].mxu0
        %v6001 = vadd.f32 %v5856, %v6000
        %v6002 = vpop.f32.mrb[0].mxu0
        %6003 = vmatprep.mubr.f32.mxu0 0.0
        %6004 = vmatmul.mubr.f32.gmra.mrb[0].mxu0 %v523
        %v6005 = vpop.f32.mrb[0].mxu0
        %v6006 = vadd.f32 %v5861, %v6005
        %v6007 = vpop.f32.mrb[0].mxu0
        %6008 = vmatprep.mubr.f32.mxu0 0.0
        %6009 = vmatmul.mubr.f32.gmra.mrb[0].mxu0 %v526
        %v6010 = vpop.f32.mrb[0].mxu0
        %v6011 = vadd.f32 %v5866, %v6010
        %v6012 = vpop.f32.mrb[0].mxu0
        %6013 = vmatprep.mubr.f32.mxu0 0.0
        %6014 = vmatmul.mubr.f32.gmra.mrb[0].mxu0 %v529
        %v6015 = vpop.f32.mrb[0].mxu0
        %v6016 = vadd.f32 %v5871, %v6015
        %v6017 = vpop.f32.mrb[0].mxu0
        %6018 = vmatprep.mubr.f32.mxu0 0.0
        %6019 = vmatmul.mubr.f32.gmra.mrb[0].mxu0 %v532
        %v6020 = vpop.f32.mrb[0].mxu0
        %v6021 = vadd.f32 %v5876, %v6020
        %v6022 = vpop.f32.mrb[0].mxu0
        %6023 = vmatprep.mubr.f32.mxu0 0.0
        %6024 = vmatmul.mubr.f32.gmra.mrb[0].mxu0 %v535
        %v6025 = vpop.f32.mrb[0].mxu0
        %v6026 = vadd.f32 %v5881, %v6025
        %v6027 = vpop.f32.mrb[0].mxu0
        %6028 = vmatprep.mubr.f32.mxu0 0.0
        %6029 = vmatmul.mubr.f32.gmra.mrb[0].mxu0 %v538
        %v6030 = vpop.f32.mrb[0].mxu0
        %v6031 = vadd.f32 %v5886, %v6030
        %v6032 = vpop.f32.mrb[0].mxu0
        %6033 = vmatprep.mubr.f32.mxu0 0.0
        %6034 = vmatmul.mubr.f32.gmra.mrb[0].mxu0 %v541
        %v6035 = vpop.f32.mrb[0].mxu0
        %v6036 = vadd.f32 %v5891, %v6035
        %v6037 = vpop.f32.mrb[0].mxu0
        %6038 = vmatprep.mubr.f32.mxu0 0.0
        %6039 = vmatmul.mubr.f32.gmra.mrb[0].mxu0 %v544
        %v6040 = vpop.f32.mrb[0].mxu0
        %v6041 = vadd.f32 %v5896, %v6040
        %v6042 = vpop.f32.mrb[0].mxu0
        %6043 = vmatprep.mubr.f32.mxu0 0.0
        %6044 = vmatmul.mubr.f32.gmra.mrb[0].mxu0 %v547
        %v6045 = vpop.f32.mrb[0].mxu0
        %v6046 = vadd.f32 %v5901, %v6045
        %v6047 = vpop.f32.mrb[0].mxu0
        %6048 = vdwg.mxu0
        %v6049 = vld [vmem:[%s710 + $0x18] sm:$0xff]
        %6050 = vmatprep.subr.mxu0 0.0
        %6051 = vmatpush1.msra.mxu0 %v6049
        %6052 = vmatprep.subr.mxu0 0.0
        %6053 = vmatpush1.msra.mxu0 0.0
        %6054 = vmatprep.subr.mxu0 0.0
        %6055 = vmatpush1.msra.mxu0 0.0
        %6056 = vmatprep.subr.mxu0 0.0
        %6057 = vmatpush1.msra.mxu0 0.0
        %6058 = vmatprep.subr.mxu0 0.0
        %6059 = vmatpush1.msra.mxu0 0.0
        %6060 = vmatprep.subr.mxu0 0.0
        %6061 = vmatpush1.msra.mxu0 0.0
        %6062 = vmatprep.subr.mxu0 0.0
        %6063 = vmatpush1.msra.mxu0 0.0
        %6064 = vmatprep.subr.mxu0 0.0
        %6065 = vmatpush1.msra.mxu0 0.0
        %6066 = vmatprep.subr.mxu0 0.0
        %6067 = vmatpush1.msra.mxu0 0.0
        %6068 = vmatprep.subr.mxu0 0.0
        %6069 = vmatpush1.msra.mxu0 0.0
        %6070 = vmatprep.subr.mxu0 0.0
        %6071 = vmatpush1.msra.mxu0 0.0
        %6072 = vmatprep.subr.mxu0 0.0
        %6073 = vmatpush1.msra.mxu0 0.0
        %6074 = vmatprep.subr.mxu0 0.0
        %6075 = vmatpush1.msra.mxu0 0.0
        %6076 = vmatprep.subr.mxu0 0.0
        %6077 = vmatpush1.msra.mxu0 0.0
        %6078 = vmatprep.subr.mxu0 0.0
        %6079 = vmatpush1.msra.mxu0 0.0
        %6080 = vmatprep.subr.mxu0 0.0
        %6081 = vmatpush1.msra.mxu0 0.0
        %6082 = vmatprep.subr.mxu0 0.0
        %6083 = vmatpush1.msra.mxu0 0.0
        %6084 = vmatprep.subr.mxu0 0.0
        %6085 = vmatpush1.msra.mxu0 0.0
        %6086 = vmatprep.subr.mxu0 0.0
        %6087 = vmatpush1.msra.mxu0 0.0
        %6088 = vmatprep.subr.mxu0 0.0
        %6089 = vmatpush1.msra.mxu0 0.0
        %6090 = vmatprep.subr.mxu0 0.0
        %6091 = vmatpush1.msra.mxu0 0.0
        %6092 = vmatprep.subr.mxu0 0.0
        %6093 = vmatpush1.msra.mxu0 0.0
        %6094 = vmatprep.subr.mxu0 0.0
        %6095 = vmatpush1.msra.mxu0 0.0
        %6096 = vmatprep.subr.mxu0 0.0
        %6097 = vmatpush1.msra.mxu0 0.0
        %6098 = vmatprep.subr.mxu0 0.0
        %6099 = vmatpush1.msra.mxu0 0.0
        %6100 = vmatprep.subr.mxu0 0.0
        %6101 = vmatpush1.msra.mxu0 0.0
        %6102 = vmatprep.subr.mxu0 0.0
        %6103 = vmatpush1.msra.mxu0 0.0
        %6104 = vmatprep.subr.mxu0 0.0
        %6105 = vmatpush1.msra.mxu0 0.0
        %6106 = vmatprep.subr.mxu0 0.0
        %6107 = vmatpush1.msra.mxu0 0.0
        %6108 = vmatprep.subr.mxu0 0.0
        %6109 = vmatpush1.msra.mxu0 0.0
        %6110 = vmatprep.subr.mxu0 0.0
        %6111 = vmatpush1.msra.mxu0 0.0
        %6112 = vmatprep.subr.mxu0 0.0
        %6113 = vmatpush1.msra.mxu0 0.0
        %6114 = vmatprep.mubr.f32.mxu0 0.0
        %6115 = vmatmul.mubr.f32.gmra.mrb[0].mxu0 %v713
        %v6116 = vpop.f32.mrb[0].mxu0
        %v6117 = vadd.f32 0.0, %v6116
        %v6118 = vpop.f32.mrb[0].mxu0
        %6119 = vmatprep.mubr.f32.mxu0 0.0
        %6120 = vmatmul.mubr.f32.gmra.mrb[0].mxu0 %v716
        %v6121 = vpop.f32.mrb[0].mxu0
        %v6122 = vadd.f32 0.0, %v6121
        %v6123 = vpop.f32.mrb[0].mxu0
        %6124 = vmatprep.mubr.f32.mxu0 0.0
        %6125 = vmatmul.mubr.f32.gmra.mrb[0].mxu0 %v719
        %v6126 = vpop.f32.mrb[0].mxu0
        %v6127 = vadd.f32 0.0, %v6126
        %v6128 = vpop.f32.mrb[0].mxu0
        %6129 = vmatprep.mubr.f32.mxu0 0.0
        %6130 = vmatmul.mubr.f32.gmra.mrb[0].mxu0 %v722
        %v6131 = vpop.f32.mrb[0].mxu0
        %v6132 = vadd.f32 0.0, %v6131
        %v6133 = vpop.f32.mrb[0].mxu0
        %6134 = vmatprep.mubr.f32.mxu0 0.0
        %6135 = vmatmul.mubr.f32.gmra.mrb[0].mxu0 %v725
        %v6136 = vpop.f32.mrb[0].mxu0
        %v6137 = vadd.f32 0.0, %v6136
        %v6138 = vpop.f32.mrb[0].mxu0
        %6139 = vmatprep.mubr.f32.mxu0 0.0
        %6140 = vmatmul.mubr.f32.gmra.mrb[0].mxu0 %v728
        %v6141 = vpop.f32.mrb[0].mxu0
        %v6142 = vadd.f32 0.0, %v6141
        %v6143 = vpop.f32.mrb[0].mxu0
        %6144 = vmatprep.mubr.f32.mxu0 0.0
        %6145 = vmatmul.mubr.f32.gmra.mrb[0].mxu0 %v731
        %v6146 = vpop.f32.mrb[0].mxu0
        %v6147 = vadd.f32 0.0, %v6146
        %v6148 = vpop.f32.mrb[0].mxu0
        %6149 = vmatprep.mubr.f32.mxu0 0.0
        %6150 = vmatmul.mubr.f32.gmra.mrb[0].mxu0 %v734
        %v6151 = vpop.f32.mrb[0].mxu0
        %v6152 = vadd.f32 0.0, %v6151
        %v6153 = vpop.f32.mrb[0].mxu0
        %6154 = vmatprep.mubr.f32.mxu0 0.0
        %6155 = vmatmul.mubr.f32.gmra.mrb[0].mxu0 %v737
        %v6156 = vpop.f32.mrb[0].mxu0
        %v6157 = vadd.f32 0.0, %v6156
        %v6158 = vpop.f32.mrb[0].mxu0
        %6159 = vmatprep.mubr.f32.mxu0 0.0
        %6160 = vmatmul.mubr.f32.gmra.mrb[0].mxu0 %v740
        %v6161 = vpop.f32.mrb[0].mxu0
        %v6162 = vadd.f32 0.0, %v6161
        %v6163 = vpop.f32.mrb[0].mxu0
        %6164 = vmatprep.mubr.f32.mxu0 0.0
        %6165 = vmatmul.mubr.f32.gmra.mrb[0].mxu0 %v743
        %v6166 = vpop.f32.mrb[0].mxu0
        %v6167 = vadd.f32 0.0, %v6166
        %v6168 = vpop.f32.mrb[0].mxu0
        %6169 = vmatprep.mubr.f32.mxu0 0.0
        %6170 = vmatmul.mubr.f32.gmra.mrb[0].mxu0 %v746
        %v6171 = vpop.f32.mrb[0].mxu0
        %v6172 = vadd.f32 0.0, %v6171
        %v6173 = vpop.f32.mrb[0].mxu0
        %6174 = vmatprep.mubr.f32.mxu0 0.0
        %6175 = vmatmul.mubr.f32.gmra.mrb[0].mxu0 %v749
        %v6176 = vpop.f32.mrb[0].mxu0
        %v6177 = vadd.f32 0.0, %v6176
        %v6178 = vpop.f32.mrb[0].mxu0
        %6179 = vmatprep.mubr.f32.mxu0 0.0
        %6180 = vmatmul.mubr.f32.gmra.mrb[0].mxu0 %v752
        %v6181 = vpop.f32.mrb[0].mxu0
        %v6182 = vadd.f32 0.0, %v6181
        %v6183 = vpop.f32.mrb[0].mxu0
        %6184 = vmatprep.mubr.f32.mxu0 0.0
        %6185 = vmatmul.mubr.f32.gmra.mrb[0].mxu0 %v755
        %v6186 = vpop.f32.mrb[0].mxu0
        %v6187 = vadd.f32 0.0, %v6186
        %v6188 = vpop.f32.mrb[0].mxu0
        %6189 = vmatprep.mubr.f32.mxu0 0.0
        %6190 = vmatmul.mubr.f32.gmra.mrb[0].mxu0 %v758
        %v6191 = vpop.f32.mrb[0].mxu0
        %v6192 = vadd.f32 0.0, %v6191
        %v6193 = vpop.f32.mrb[0].mxu0
        %6194 = vdwg.mxu0
        %v6195 = vadd.f32 %v5971, %v6117
        %v6196 = vadd.f32 %v5976, %v6122
        %v6197 = vadd.f32 %v5981, %v6127
        %v6198 = vadd.f32 %v5986, %v6132
        %v6199 = vadd.f32 %v5991, %v6137
        %v6200 = vadd.f32 %v5996, %v6142
        %v6201 = vadd.f32 %v6001, %v6147
        %v6202 = vadd.f32 %v6006, %v6152
        %v6203 = vadd.f32 %v6011, %v6157
        %v6204 = vadd.f32 %v6016, %v6162
        %v6205 = vadd.f32 %v6021, %v6167
        %v6206 = vadd.f32 %v6026, %v6172
        %v6207 = vadd.f32 %v6031, %v6177
        %v6208 = vadd.f32 %v6036, %v6182
        %v6209 = vadd.f32 %v6041, %v6187
        %v6210 = vadd.f32 %v6046, %v6192
        %v6211 = vld [vmem:[%s940 + $0x18] sm:$0xff]
        %6212 = vmatprep.subr.mxu0 0.0
        %6213 = vmatpush1.msra.mxu0 %v6211
        %6214 = vmatprep.subr.mxu0 0.0
        %6215 = vmatpush1.msra.mxu0 0.0
        %6216 = vmatprep.subr.mxu0 0.0
        %6217 = vmatpush1.msra.mxu0 0.0
        %6218 = vmatprep.subr.mxu0 0.0
        %6219 = vmatpush1.msra.mxu0 0.0
        %6220 = vmatprep.subr.mxu0 0.0
        %6221 = vmatpush1.msra.mxu0 0.0
        %6222 = vmatprep.subr.mxu0 0.0
        %6223 = vmatpush1.msra.mxu0 0.0
        %6224 = vmatprep.subr.mxu0 0.0
        %6225 = vmatpush1.msra.mxu0 0.0
        %6226 = vmatprep.subr.mxu0 0.0
        %6227 = vmatpush1.msra.mxu0 0.0
        %6228 = vmatprep.subr.mxu0 0.0
        %6229 = vmatpush1.msra.mxu0 0.0
        %6230 = vmatprep.subr.mxu0 0.0
        %6231 = vmatpush1.msra.mxu0 0.0
        %6232 = vmatprep.subr.mxu0 0.0
        %6233 = vmatpush1.msra.mxu0 0.0
        %6234 = vmatprep.subr.mxu0 0.0
        %6235 = vmatpush1.msra.mxu0 0.0
        %6236 = vmatprep.subr.mxu0 0.0
        %6237 = vmatpush1.msra.mxu0 0.0
        %6238 = vmatprep.subr.mxu0 0.0
        %6239 = vmatpush1.msra.mxu0 0.0
        %6240 = vmatprep.subr.mxu0 0.0
        %6241 = vmatpush1.msra.mxu0 0.0
        %6242 = vmatprep.subr.mxu0 0.0
        %6243 = vmatpush1.msra.mxu0 0.0
        %6244 = vmatprep.subr.mxu0 0.0
        %6245 = vmatpush1.msra.mxu0 0.0
        %6246 = vmatprep.subr.mxu0 0.0
        %6247 = vmatpush1.msra.mxu0 0.0
        %6248 = vmatprep.subr.mxu0 0.0
        %6249 = vmatpush1.msra.mxu0 0.0
        %6250 = vmatprep.subr.mxu0 0.0
        %6251 = vmatpush1.msra.mxu0 0.0
        %6252 = vmatprep.subr.mxu0 0.0
        %6253 = vmatpush1.msra.mxu0 0.0
        %6254 = vmatprep.subr.mxu0 0.0
        %6255 = vmatpush1.msra.mxu0 0.0
        %6256 = vmatprep.subr.mxu0 0.0
        %6257 = vmatpush1.msra.mxu0 0.0
        %6258 = vmatprep.subr.mxu0 0.0
        %6259 = vmatpush1.msra.mxu0 0.0
        %6260 = vmatprep.subr.mxu0 0.0
        %6261 = vmatpush1.msra.mxu0 0.0
        %6262 = vmatprep.subr.mxu0 0.0
        %6263 = vmatpush1.msra.mxu0 0.0
        %6264 = vmatprep.subr.mxu0 0.0
        %6265 = vmatpush1.msra.mxu0 0.0
        %6266 = vmatprep.subr.mxu0 0.0
        %6267 = vmatpush1.msra.mxu0 0.0
        %6268 = vmatprep.subr.mxu0 0.0
        %6269 = vmatpush1.msra.mxu0 0.0
        %6270 = vmatprep.subr.mxu0 0.0
        %6271 = vmatpush1.msra.mxu0 0.0
        %6272 = vmatprep.subr.mxu0 0.0
        %6273 = vmatpush1.msra.mxu0 0.0
        %6274 = vmatprep.subr.mxu0 0.0
        %6275 = vmatpush1.msra.mxu0 0.0
        %6276 = vmatprep.mubr.f32.mxu0 0.0
        %6277 = vmatmul.mubr.f32.gmra.mrb[0].mxu0 %v943
        %v6278 = vpop.f32.mrb[0].mxu0
        %v6279 = vadd.f32 0.0, %v6278
        %v6280 = vpop.f32.mrb[0].mxu0
        %6281 = vmatprep.mubr.f32.mxu0 0.0
        %6282 = vmatmul.mubr.f32.gmra.mrb[0].mxu0 %v946
        %v6283 = vpop.f32.mrb[0].mxu0
        %v6284 = vadd.f32 0.0, %v6283
        %v6285 = vpop.f32.mrb[0].mxu0
        %6286 = vmatprep.mubr.f32.mxu0 0.0
        %6287 = vmatmul.mubr.f32.gmra.mrb[0].mxu0 %v949
        %v6288 = vpop.f32.mrb[0].mxu0
        %v6289 = vadd.f32 0.0, %v6288
        %v6290 = vpop.f32.mrb[0].mxu0
        %6291 = vmatprep.mubr.f32.mxu0 0.0
        %6292 = vmatmul.mubr.f32.gmra.mrb[0].mxu0 %v952
        %v6293 = vpop.f32.mrb[0].mxu0
        %v6294 = vadd.f32 0.0, %v6293
        %v6295 = vpop.f32.mrb[0].mxu0
        %6296 = vmatprep.mubr.f32.mxu0 0.0
        %6297 = vmatmul.mubr.f32.gmra.mrb[0].mxu0 %v955
        %v6298 = vpop.f32.mrb[0].mxu0
        %v6299 = vadd.f32 0.0, %v6298
        %v6300 = vpop.f32.mrb[0].mxu0
        %6301 = vmatprep.mubr.f32.mxu0 0.0
        %6302 = vmatmul.mubr.f32.gmra.mrb[0].mxu0 %v958
        %v6303 = vpop.f32.mrb[0].mxu0
        %v6304 = vadd.f32 0.0, %v6303
        %v6305 = vpop.f32.mrb[0].mxu0
        %6306 = vmatprep.mubr.f32.mxu0 0.0
        %6307 = vmatmul.mubr.f32.gmra.mrb[0].mxu0 %v961
        %v6308 = vpop.f32.mrb[0].mxu0
        %v6309 = vadd.f32 0.0, %v6308
        %v6310 = vpop.f32.mrb[0].mxu0
        %6311 = vmatprep.mubr.f32.mxu0 0.0
        %6312 = vmatmul.mubr.f32.gmra.mrb[0].mxu0 %v964
        %v6313 = vpop.f32.mrb[0].mxu0
        %v6314 = vadd.f32 0.0, %v6313
        %v6315 = vpop.f32.mrb[0].mxu0
        %6316 = vmatprep.mubr.f32.mxu0 0.0
        %6317 = vmatmul.mubr.f32.gmra.mrb[0].mxu0 %v967
        %v6318 = vpop.f32.mrb[0].mxu0
        %v6319 = vadd.f32 0.0, %v6318
        %v6320 = vpop.f32.mrb[0].mxu0
        %6321 = vmatprep.mubr.f32.mxu0 0.0
        %6322 = vmatmul.mubr.f32.gmra.mrb[0].mxu0 %v970
        %v6323 = vpop.f32.mrb[0].mxu0
        %v6324 = vadd.f32 0.0, %v6323
        %v6325 = vpop.f32.mrb[0].mxu0
        %6326 = vmatprep.mubr.f32.mxu0 0.0
        %6327 = vmatmul.mubr.f32.gmra.mrb[0].mxu0 %v973
        %v6328 = vpop.f32.mrb[0].mxu0
        %v6329 = vadd.f32 0.0, %v6328
        %v6330 = vpop.f32.mrb[0].mxu0
        %6331 = vmatprep.mubr.f32.mxu0 0.0
        %6332 = vmatmul.mubr.f32.gmra.mrb[0].mxu0 %v976
        %v6333 = vpop.f32.mrb[0].mxu0
        %v6334 = vadd.f32 0.0, %v6333
        %v6335 = vpop.f32.mrb[0].mxu0
        %6336 = vmatprep.mubr.f32.mxu0 0.0
        %6337 = vmatmul.mubr.f32.gmra.mrb[0].mxu0 %v979
        %v6338 = vpop.f32.mrb[0].mxu0
        %v6339 = vadd.f32 0.0, %v6338
        %v6340 = vpop.f32.mrb[0].mxu0
        %6341 = vmatprep.mubr.f32.mxu0 0.0
        %6342 = vmatmul.mubr.f32.gmra.mrb[0].mxu0 %v982
        %v6343 = vpop.f32.mrb[0].mxu0
        %v6344 = vadd.f32 0.0, %v6343
        %v6345 = vpop.f32.mrb[0].mxu0
        %6346 = vmatprep.mubr.f32.mxu0 0.0
        %6347 = vmatmul.mubr.f32.gmra.mrb[0].mxu0 %v985
        %v6348 = vpop.f32.mrb[0].mxu0
        %v6349 = vadd.f32 0.0, %v6348
        %v6350 = vpop.f32.mrb[0].mxu0
        %6351 = vmatprep.mubr.f32.mxu0 0.0
        %6352 = vmatmul.mubr.f32.gmra.mrb[0].mxu0 %v988
        %v6353 = vpop.f32.mrb[0].mxu0
        %v6354 = vadd.f32 0.0, %v6353
        %v6355 = vpop.f32.mrb[0].mxu0
        %6356 = vdwg.mxu0
        %v6357 = vadd.f32 %v6195, %v6279
        %v6358 = vadd.f32 %v6196, %v6284
        %v6359 = vadd.f32 %v6197, %v6289
        %v6360 = vadd.f32 %v6198, %v6294
        %v6361 = vadd.f32 %v6199, %v6299
        %v6362 = vadd.f32 %v6200, %v6304
        %v6363 = vadd.f32 %v6201, %v6309
        %v6364 = vadd.f32 %v6202, %v6314
        %v6365 = vadd.f32 %v6203, %v6319
        %v6366 = vadd.f32 %v6204, %v6324
        %v6367 = vadd.f32 %v6205, %v6329
        %v6368 = vadd.f32 %v6206, %v6334
        %v6369 = vadd.f32 %v6207, %v6339
        %v6370 = vadd.f32 %v6208, %v6344
        %v6371 = vadd.f32 %v6209, %v6349
        %v6372 = vadd.f32 %v6210, %v6354
        %v6373 = vld [vmem:[%s1167 + $0x18] sm:$0xff]
        %6374 = vmatprep.subr.mxu0 0.0
        %6375 = vmatpush1.msra.mxu0 %v6373
        %6376 = vmatprep.subr.mxu0 0.0
        %6377 = vmatpush1.msra.mxu0 0.0
        %6378 = vmatprep.subr.mxu0 0.0
        %6379 = vmatpush1.msra.mxu0 0.0
        %6380 = vmatprep.subr.mxu0 0.0
        %6381 = vmatpush1.msra.mxu0 0.0
        %6382 = vmatprep.subr.mxu0 0.0
        %6383 = vmatpush1.msra.mxu0 0.0
        %6384 = vmatprep.subr.mxu0 0.0
        %6385 = vmatpush1.msra.mxu0 0.0
        %6386 = vmatprep.subr.mxu0 0.0
        %6387 = vmatpush1.msra.mxu0 0.0
        %6388 = vmatprep.subr.mxu0 0.0
        %6389 = vmatpush1.msra.mxu0 0.0
        %6390 = vmatprep.subr.mxu0 0.0
        %6391 = vmatpush1.msra.mxu0 0.0
        %6392 = vmatprep.subr.mxu0 0.0
        %6393 = vmatpush1.msra.mxu0 0.0
        %6394 = vmatprep.subr.mxu0 0.0
        %6395 = vmatpush1.msra.mxu0 0.0
        %6396 = vmatprep.subr.mxu0 0.0
        %6397 = vmatpush1.msra.mxu0 0.0
        %6398 = vmatprep.subr.mxu0 0.0
        %6399 = vmatpush1.msra.mxu0 0.0
        %6400 = vmatprep.subr.mxu0 0.0
        %6401 = vmatpush1.msra.mxu0 0.0
        %6402 = vmatprep.subr.mxu0 0.0
        %6403 = vmatpush1.msra.mxu0 0.0
        %6404 = vmatprep.subr.mxu0 0.0
        %6405 = vmatpush1.msra.mxu0 0.0
        %6406 = vmatprep.subr.mxu0 0.0
        %6407 = vmatpush1.msra.mxu0 0.0
        %6408 = vmatprep.subr.mxu0 0.0
        %6409 = vmatpush1.msra.mxu0 0.0
        %6410 = vmatprep.subr.mxu0 0.0
        %6411 = vmatpush1.msra.mxu0 0.0
        %6412 = vmatprep.subr.mxu0 0.0
        %6413 = vmatpush1.msra.mxu0 0.0
        %6414 = vmatprep.subr.mxu0 0.0
        %6415 = vmatpush1.msra.mxu0 0.0
        %6416 = vmatprep.subr.mxu0 0.0
        %6417 = vmatpush1.msra.mxu0 0.0
        %6418 = vmatprep.subr.mxu0 0.0
        %6419 = vmatpush1.msra.mxu0 0.0
        %6420 = vmatprep.subr.mxu0 0.0
        %6421 = vmatpush1.msra.mxu0 0.0
        %6422 = vmatprep.subr.mxu0 0.0
        %6423 = vmatpush1.msra.mxu0 0.0
        %6424 = vmatprep.subr.mxu0 0.0
        %6425 = vmatpush1.msra.mxu0 0.0
        %6426 = vmatprep.subr.mxu0 0.0
        %6427 = vmatpush1.msra.mxu0 0.0
        %6428 = vmatprep.subr.mxu0 0.0
        %6429 = vmatpush1.msra.mxu0 0.0
        %6430 = vmatprep.subr.mxu0 0.0
        %6431 = vmatpush1.msra.mxu0 0.0
        %6432 = vmatprep.subr.mxu0 0.0
        %6433 = vmatpush1.msra.mxu0 0.0
        %6434 = vmatprep.subr.mxu0 0.0
        %6435 = vmatpush1.msra.mxu0 0.0
        %6436 = vmatprep.subr.mxu0 0.0
        %6437 = vmatpush1.msra.mxu0 0.0
        %6438 = vmatprep.mubr.f32.mxu0 0.0
        %6439 = vmatmul.mubr.f32.gmra.mrb[0].mxu0 %v1170
        %v6440 = vpop.f32.mrb[0].mxu0
        %v6441 = vadd.f32 0.0, %v6440
        %v6442 = vpop.f32.mrb[0].mxu0
        %6443 = vmatprep.mubr.f32.mxu0 0.0
        %6444 = vmatmul.mubr.f32.gmra.mrb[0].mxu0 %v1173
        %v6445 = vpop.f32.mrb[0].mxu0
        %v6446 = vadd.f32 0.0, %v6445
        %v6447 = vpop.f32.mrb[0].mxu0
        %6448 = vmatprep.mubr.f32.mxu0 0.0
        %6449 = vmatmul.mubr.f32.gmra.mrb[0].mxu0 %v1176
        %v6450 = vpop.f32.mrb[0].mxu0
        %v6451 = vadd.f32 0.0, %v6450
        %v6452 = vpop.f32.mrb[0].mxu0
        %6453 = vmatprep.mubr.f32.mxu0 0.0
        %6454 = vmatmul.mubr.f32.gmra.mrb[0].mxu0 %v1179
        %v6455 = vpop.f32.mrb[0].mxu0
        %v6456 = vadd.f32 0.0, %v6455
        %v6457 = vpop.f32.mrb[0].mxu0
        %6458 = vmatprep.mubr.f32.mxu0 0.0
        %6459 = vmatmul.mubr.f32.gmra.mrb[0].mxu0 %v1182
        %v6460 = vpop.f32.mrb[0].mxu0
        %v6461 = vadd.f32 0.0, %v6460
        %v6462 = vpop.f32.mrb[0].mxu0
        %6463 = vmatprep.mubr.f32.mxu0 0.0
        %6464 = vmatmul.mubr.f32.gmra.mrb[0].mxu0 %v1185
        %v6465 = vpop.f32.mrb[0].mxu0
        %v6466 = vadd.f32 0.0, %v6465
        %v6467 = vpop.f32.mrb[0].mxu0
        %6468 = vmatprep.mubr.f32.mxu0 0.0
        %6469 = vmatmul.mubr.f32.gmra.mrb[0].mxu0 %v1188
        %v6470 = vpop.f32.mrb[0].mxu0
        %v6471 = vadd.f32 0.0, %v6470
        %v6472 = vpop.f32.mrb[0].mxu0
        %6473 = vmatprep.mubr.f32.mxu0 0.0
        %6474 = vmatmul.mubr.f32.gmra.mrb[0].mxu0 %v1191
        %v6475 = vpop.f32.mrb[0].mxu0
        %v6476 = vadd.f32 0.0, %v6475
        %v6477 = vpop.f32.mrb[0].mxu0
        %6478 = vmatprep.mubr.f32.mxu0 0.0
        %6479 = vmatmul.mubr.f32.gmra.mrb[0].mxu0 %v1194
        %v6480 = vpop.f32.mrb[0].mxu0
        %v6481 = vadd.f32 0.0, %v6480
        %v6482 = vpop.f32.mrb[0].mxu0
        %6483 = vmatprep.mubr.f32.mxu0 0.0
        %6484 = vmatmul.mubr.f32.gmra.mrb[0].mxu0 %v1197
        %v6485 = vpop.f32.mrb[0].mxu0
        %v6486 = vadd.f32 0.0, %v6485
        %v6487 = vpop.f32.mrb[0].mxu0
        %6488 = vmatprep.mubr.f32.mxu0 0.0
        %6489 = vmatmul.mubr.f32.gmra.mrb[0].mxu0 %v1200
        %v6490 = vpop.f32.mrb[0].mxu0
        %v6491 = vadd.f32 0.0, %v6490
        %v6492 = vpop.f32.mrb[0].mxu0
        %6493 = vmatprep.mubr.f32.mxu0 0.0
        %6494 = vmatmul.mubr.f32.gmra.mrb[0].mxu0 %v1203
        %v6495 = vpop.f32.mrb[0].mxu0
        %v6496 = vadd.f32 0.0, %v6495
        %v6497 = vpop.f32.mrb[0].mxu0
        %6498 = vmatprep.mubr.f32.mxu0 0.0
        %6499 = vmatmul.mubr.f32.gmra.mrb[0].mxu0 %v1206
        %v6500 = vpop.f32.mrb[0].mxu0
        %v6501 = vadd.f32 0.0, %v6500
        %v6502 = vpop.f32.mrb[0].mxu0
        %6503 = vmatprep.mubr.f32.mxu0 0.0
        %6504 = vmatmul.mubr.f32.gmra.mrb[0].mxu0 %v1209
        %v6505 = vpop.f32.mrb[0].mxu0
        %v6506 = vadd.f32 0.0, %v6505
        %v6507 = vpop.f32.mrb[0].mxu0
        %6508 = vmatprep.mubr.f32.mxu0 0.0
        %6509 = vmatmul.mubr.f32.gmra.mrb[0].mxu0 %v1212
        %v6510 = vpop.f32.mrb[0].mxu0
        %v6511 = vadd.f32 0.0, %v6510
        %v6512 = vpop.f32.mrb[0].mxu0
        %6513 = vmatprep.mubr.f32.mxu0 0.0
        %6514 = vmatmul.mubr.f32.gmra.mrb[0].mxu0 %v1215
        %v6515 = vpop.f32.mrb[0].mxu0
        %v6516 = vadd.f32 0.0, %v6515
        %v6517 = vpop.f32.mrb[0].mxu0
        %6518 = vdwg.mxu0
        %v6519 = vadd.f32 %v6357, %v6441
        %v6520 = vadd.f32 %v6358, %v6446
        %v6521 = vadd.f32 %v6359, %v6451
        %v6522 = vadd.f32 %v6360, %v6456
        %v6523 = vadd.f32 %v6361, %v6461
        %v6524 = vadd.f32 %v6362, %v6466
        %v6525 = vadd.f32 %v6363, %v6471
        %v6526 = vadd.f32 %v6364, %v6476
        %v6527 = vadd.f32 %v6365, %v6481
        %v6528 = vadd.f32 %v6366, %v6486
        %v6529 = vadd.f32 %v6367, %v6491
        %v6530 = vadd.f32 %v6368, %v6496
        %v6531 = vadd.f32 %v6369, %v6501
        %v6532 = vadd.f32 %v6370, %v6506
        %v6533 = vadd.f32 %v6371, %v6511
        %v6534 = vadd.f32 %v6372, %v6516
        %v6535 = vld [vmem:[%s1394 + $0x18] sm:$0xff]
        %6536 = vmatprep.subr.mxu0 0.0
        %6537 = vmatpush1.msra.mxu0 %v6535
        %6538 = vmatprep.subr.mxu0 0.0
        %6539 = vmatpush1.msra.mxu0 0.0
        %6540 = vmatprep.subr.mxu0 0.0
        %6541 = vmatpush1.msra.mxu0 0.0
        %6542 = vmatprep.subr.mxu0 0.0
        %6543 = vmatpush1.msra.mxu0 0.0
        %6544 = vmatprep.subr.mxu0 0.0
        %6545 = vmatpush1.msra.mxu0 0.0
        %6546 = vmatprep.subr.mxu0 0.0
        %6547 = vmatpush1.msra.mxu0 0.0
        %6548 = vmatprep.subr.mxu0 0.0
        %6549 = vmatpush1.msra.mxu0 0.0
        %6550 = vmatprep.subr.mxu0 0.0
        %6551 = vmatpush1.msra.mxu0 0.0
        %6552 = vmatprep.subr.mxu0 0.0
        %6553 = vmatpush1.msra.mxu0 0.0
        %6554 = vmatprep.subr.mxu0 0.0
        %6555 = vmatpush1.msra.mxu0 0.0
        %6556 = vmatprep.subr.mxu0 0.0
        %6557 = vmatpush1.msra.mxu0 0.0
        %6558 = vmatprep.subr.mxu0 0.0
        %6559 = vmatpush1.msra.mxu0 0.0
        %6560 = vmatprep.subr.mxu0 0.0
        %6561 = vmatpush1.msra.mxu0 0.0
        %6562 = vmatprep.subr.mxu0 0.0
        %6563 = vmatpush1.msra.mxu0 0.0
        %6564 = vmatprep.subr.mxu0 0.0
        %6565 = vmatpush1.msra.mxu0 0.0
        %6566 = vmatprep.subr.mxu0 0.0
        %6567 = vmatpush1.msra.mxu0 0.0
        %6568 = vmatprep.subr.mxu0 0.0
        %6569 = vmatpush1.msra.mxu0 0.0
        %6570 = vmatprep.subr.mxu0 0.0
        %6571 = vmatpush1.msra.mxu0 0.0
        %6572 = vmatprep.subr.mxu0 0.0
        %6573 = vmatpush1.msra.mxu0 0.0
        %6574 = vmatprep.subr.mxu0 0.0
        %6575 = vmatpush1.msra.mxu0 0.0
        %6576 = vmatprep.subr.mxu0 0.0
        %6577 = vmatpush1.msra.mxu0 0.0
        %6578 = vmatprep.subr.mxu0 0.0
        %6579 = vmatpush1.msra.mxu0 0.0
        %6580 = vmatprep.subr.mxu0 0.0
        %6581 = vmatpush1.msra.mxu0 0.0
        %6582 = vmatprep.subr.mxu0 0.0
        %6583 = vmatpush1.msra.mxu0 0.0
        %6584 = vmatprep.subr.mxu0 0.0
        %6585 = vmatpush1.msra.mxu0 0.0
        %6586 = vmatprep.subr.mxu0 0.0
        %6587 = vmatpush1.msra.mxu0 0.0
        %6588 = vmatprep.subr.mxu0 0.0
        %6589 = vmatpush1.msra.mxu0 0.0
        %6590 = vmatprep.subr.mxu0 0.0
        %6591 = vmatpush1.msra.mxu0 0.0
        %6592 = vmatprep.subr.mxu0 0.0
        %6593 = vmatpush1.msra.mxu0 0.0
        %6594 = vmatprep.subr.mxu0 0.0
        %6595 = vmatpush1.msra.mxu0 0.0
        %6596 = vmatprep.subr.mxu0 0.0
        %6597 = vmatpush1.msra.mxu0 0.0
        %6598 = vmatprep.subr.mxu0 0.0
        %6599 = vmatpush1.msra.mxu0 0.0
        %6600 = vmatprep.mubr.f32.mxu0 0.0
        %6601 = vmatmul.mubr.f32.gmra.mrb[0].mxu0 %v1397
        %v6602 = vpop.f32.mrb[0].mxu0
        %v6603 = vadd.f32 0.0, %v6602
        %v6604 = vpop.f32.mrb[0].mxu0
        %6605 = vmatprep.mubr.f32.mxu0 0.0
        %6606 = vmatmul.mubr.f32.gmra.mrb[0].mxu0 %v1400
        %v6607 = vpop.f32.mrb[0].mxu0
        %v6608 = vadd.f32 0.0, %v6607
        %v6609 = vpop.f32.mrb[0].mxu0
        %6610 = vmatprep.mubr.f32.mxu0 0.0
        %6611 = vmatmul.mubr.f32.gmra.mrb[0].mxu0 %v1403
        %v6612 = vpop.f32.mrb[0].mxu0
        %v6613 = vadd.f32 0.0, %v6612
        %v6614 = vpop.f32.mrb[0].mxu0
        %6615 = vmatprep.mubr.f32.mxu0 0.0
        %6616 = vmatmul.mubr.f32.gmra.mrb[0].mxu0 %v1406
        %v6617 = vpop.f32.mrb[0].mxu0
        %v6618 = vadd.f32 0.0, %v6617
        %v6619 = vpop.f32.mrb[0].mxu0
        %6620 = vmatprep.mubr.f32.mxu0 0.0
        %6621 = vmatmul.mubr.f32.gmra.mrb[0].mxu0 %v1409
        %v6622 = vpop.f32.mrb[0].mxu0
        %v6623 = vadd.f32 0.0, %v6622
        %v6624 = vpop.f32.mrb[0].mxu0
        %6625 = vmatprep.mubr.f32.mxu0 0.0
        %6626 = vmatmul.mubr.f32.gmra.mrb[0].mxu0 %v1412
        %v6627 = vpop.f32.mrb[0].mxu0
        %v6628 = vadd.f32 0.0, %v6627
        %v6629 = vpop.f32.mrb[0].mxu0
        %6630 = vmatprep.mubr.f32.mxu0 0.0
        %6631 = vmatmul.mubr.f32.gmra.mrb[0].mxu0 %v1415
        %v6632 = vpop.f32.mrb[0].mxu0
        %v6633 = vadd.f32 0.0, %v6632
        %v6634 = vpop.f32.mrb[0].mxu0
        %6635 = vmatprep.mubr.f32.mxu0 0.0
        %6636 = vmatmul.mubr.f32.gmra.mrb[0].mxu0 %v1418
        %v6637 = vpop.f32.mrb[0].mxu0
        %v6638 = vadd.f32 0.0, %v6637
        %v6639 = vpop.f32.mrb[0].mxu0
        %6640 = vmatprep.mubr.f32.mxu0 0.0
        %6641 = vmatmul.mubr.f32.gmra.mrb[0].mxu0 %v1421
        %v6642 = vpop.f32.mrb[0].mxu0
        %v6643 = vadd.f32 0.0, %v6642
        %v6644 = vpop.f32.mrb[0].mxu0
        %6645 = vmatprep.mubr.f32.mxu0 0.0
        %6646 = vmatmul.mubr.f32.gmra.mrb[0].mxu0 %v1424
        %v6647 = vpop.f32.mrb[0].mxu0
        %v6648 = vadd.f32 0.0, %v6647
        %v6649 = vpop.f32.mrb[0].mxu0
        %6650 = vmatprep.mubr.f32.mxu0 0.0
        %6651 = vmatmul.mubr.f32.gmra.mrb[0].mxu0 %v1427
        %v6652 = vpop.f32.mrb[0].mxu0
        %v6653 = vadd.f32 0.0, %v6652
        %v6654 = vpop.f32.mrb[0].mxu0
        %6655 = vmatprep.mubr.f32.mxu0 0.0
        %6656 = vmatmul.mubr.f32.gmra.mrb[0].mxu0 %v1430
        %v6657 = vpop.f32.mrb[0].mxu0
        %v6658 = vadd.f32 0.0, %v6657
        %v6659 = vpop.f32.mrb[0].mxu0
        %6660 = vmatprep.mubr.f32.mxu0 0.0
        %6661 = vmatmul.mubr.f32.gmra.mrb[0].mxu0 %v1433
        %v6662 = vpop.f32.mrb[0].mxu0
        %v6663 = vadd.f32 0.0, %v6662
        %v6664 = vpop.f32.mrb[0].mxu0
        %6665 = vmatprep.mubr.f32.mxu0 0.0
        %6666 = vmatmul.mubr.f32.gmra.mrb[0].mxu0 %v1436
        %v6667 = vpop.f32.mrb[0].mxu0
        %v6668 = vadd.f32 0.0, %v6667
        %v6669 = vpop.f32.mrb[0].mxu0
        %6670 = vmatprep.mubr.f32.mxu0 0.0
        %6671 = vmatmul.mubr.f32.gmra.mrb[0].mxu0 %v1439
        %v6672 = vpop.f32.mrb[0].mxu0
        %v6673 = vadd.f32 0.0, %v6672
        %v6674 = vpop.f32.mrb[0].mxu0
        %6675 = vmatprep.mubr.f32.mxu0 0.0
        %6676 = vmatmul.mubr.f32.gmra.mrb[0].mxu0 %v1442
        %v6677 = vpop.f32.mrb[0].mxu0
        %v6678 = vadd.f32 0.0, %v6677
        %v6679 = vpop.f32.mrb[0].mxu0
        %6680 = vdwg.mxu0
        %v6681 = vadd.f32 %v6519, %v6603
        %v6682 = vadd.f32 %v6520, %v6608
        %v6683 = vadd.f32 %v6521, %v6613
        %v6684 = vadd.f32 %v6522, %v6618
        %v6685 = vadd.f32 %v6523, %v6623
        %v6686 = vadd.f32 %v6524, %v6628
        %v6687 = vadd.f32 %v6525, %v6633
        %v6688 = vadd.f32 %v6526, %v6638
        %v6689 = vadd.f32 %v6527, %v6643
        %v6690 = vadd.f32 %v6528, %v6648
        %v6691 = vadd.f32 %v6529, %v6653
        %v6692 = vadd.f32 %v6530, %v6658
        %v6693 = vadd.f32 %v6531, %v6663
        %v6694 = vadd.f32 %v6532, %v6668
        %v6695 = vadd.f32 %v6533, %v6673
        %v6696 = vadd.f32 %v6534, %v6678
        %v6697 = vld [vmem:[%s1624 + $0x18] sm:$0xff]
        %6698 = vmatprep.subr.mxu0 0.0
        %6699 = vmatpush1.msra.mxu0 %v6697
        %6700 = vmatprep.subr.mxu0 0.0
        %6701 = vmatpush1.msra.mxu0 0.0
        %6702 = vmatprep.subr.mxu0 0.0
        %6703 = vmatpush1.msra.mxu0 0.0
        %6704 = vmatprep.subr.mxu0 0.0
        %6705 = vmatpush1.msra.mxu0 0.0
        %6706 = vmatprep.subr.mxu0 0.0
        %6707 = vmatpush1.msra.mxu0 0.0
        %6708 = vmatprep.subr.mxu0 0.0
        %6709 = vmatpush1.msra.mxu0 0.0
        %6710 = vmatprep.subr.mxu0 0.0
        %6711 = vmatpush1.msra.mxu0 0.0
        %6712 = vmatprep.subr.mxu0 0.0
        %6713 = vmatpush1.msra.mxu0 0.0
        %6714 = vmatprep.subr.mxu0 0.0
        %6715 = vmatpush1.msra.mxu0 0.0
        %6716 = vmatprep.subr.mxu0 0.0
        %6717 = vmatpush1.msra.mxu0 0.0
        %6718 = vmatprep.subr.mxu0 0.0
        %6719 = vmatpush1.msra.mxu0 0.0
        %6720 = vmatprep.subr.mxu0 0.0
        %6721 = vmatpush1.msra.mxu0 0.0
        %6722 = vmatprep.subr.mxu0 0.0
        %6723 = vmatpush1.msra.mxu0 0.0
        %6724 = vmatprep.subr.mxu0 0.0
        %6725 = vmatpush1.msra.mxu0 0.0
        %6726 = vmatprep.subr.mxu0 0.0
        %6727 = vmatpush1.msra.mxu0 0.0
        %6728 = vmatprep.subr.mxu0 0.0
        %6729 = vmatpush1.msra.mxu0 0.0
        %6730 = vmatprep.subr.mxu0 0.0
        %6731 = vmatpush1.msra.mxu0 0.0
        %6732 = vmatprep.subr.mxu0 0.0
        %6733 = vmatpush1.msra.mxu0 0.0
        %6734 = vmatprep.subr.mxu0 0.0
        %6735 = vmatpush1.msra.mxu0 0.0
        %6736 = vmatprep.subr.mxu0 0.0
        %6737 = vmatpush1.msra.mxu0 0.0
        %6738 = vmatprep.subr.mxu0 0.0
        %6739 = vmatpush1.msra.mxu0 0.0
        %6740 = vmatprep.subr.mxu0 0.0
        %6741 = vmatpush1.msra.mxu0 0.0
        %6742 = vmatprep.subr.mxu0 0.0
        %6743 = vmatpush1.msra.mxu0 0.0
        %6744 = vmatprep.subr.mxu0 0.0
        %6745 = vmatpush1.msra.mxu0 0.0
        %6746 = vmatprep.subr.mxu0 0.0
        %6747 = vmatpush1.msra.mxu0 0.0
        %6748 = vmatprep.subr.mxu0 0.0
        %6749 = vmatpush1.msra.mxu0 0.0
        %6750 = vmatprep.subr.mxu0 0.0
        %6751 = vmatpush1.msra.mxu0 0.0
        %6752 = vmatprep.subr.mxu0 0.0
        %6753 = vmatpush1.msra.mxu0 0.0
        %6754 = vmatprep.subr.mxu0 0.0
        %6755 = vmatpush1.msra.mxu0 0.0
        %6756 = vmatprep.subr.mxu0 0.0
        %6757 = vmatpush1.msra.mxu0 0.0
        %6758 = vmatprep.subr.mxu0 0.0
        %6759 = vmatpush1.msra.mxu0 0.0
        %6760 = vmatprep.subr.mxu0 0.0
        %6761 = vmatpush1.msra.mxu0 0.0
        %6762 = vmatprep.mubr.f32.mxu0 0.0
        %6763 = vmatmul.mubr.f32.gmra.mrb[0].mxu0 %v1627
        %v6764 = vpop.f32.mrb[0].mxu0
        %v6765 = vadd.f32 0.0, %v6764
        %v6766 = vpop.f32.mrb[0].mxu0
        %6767 = vmatprep.mubr.f32.mxu0 0.0
        %6768 = vmatmul.mubr.f32.gmra.mrb[0].mxu0 %v1630
        %v6769 = vpop.f32.mrb[0].mxu0
        %v6770 = vadd.f32 0.0, %v6769
        %v6771 = vpop.f32.mrb[0].mxu0
        %6772 = vmatprep.mubr.f32.mxu0 0.0
        %6773 = vmatmul.mubr.f32.gmra.mrb[0].mxu0 %v1633
        %v6774 = vpop.f32.mrb[0].mxu0
        %v6775 = vadd.f32 0.0, %v6774
        %v6776 = vpop.f32.mrb[0].mxu0
        %6777 = vmatprep.mubr.f32.mxu0 0.0
        %6778 = vmatmul.mubr.f32.gmra.mrb[0].mxu0 %v1636
        %v6779 = vpop.f32.mrb[0].mxu0
        %v6780 = vadd.f32 0.0, %v6779
        %v6781 = vpop.f32.mrb[0].mxu0
        %6782 = vmatprep.mubr.f32.mxu0 0.0
        %6783 = vmatmul.mubr.f32.gmra.mrb[0].mxu0 %v1639
        %v6784 = vpop.f32.mrb[0].mxu0
        %v6785 = vadd.f32 0.0, %v6784
        %v6786 = vpop.f32.mrb[0].mxu0
        %6787 = vmatprep.mubr.f32.mxu0 0.0
        %6788 = vmatmul.mubr.f32.gmra.mrb[0].mxu0 %v1642
        %v6789 = vpop.f32.mrb[0].mxu0
        %v6790 = vadd.f32 0.0, %v6789
        %v6791 = vpop.f32.mrb[0].mxu0
        %6792 = vmatprep.mubr.f32.mxu0 0.0
        %6793 = vmatmul.mubr.f32.gmra.mrb[0].mxu0 %v1645
        %v6794 = vpop.f32.mrb[0].mxu0
        %v6795 = vadd.f32 0.0, %v6794
        %v6796 = vpop.f32.mrb[0].mxu0
        %6797 = vmatprep.mubr.f32.mxu0 0.0
        %6798 = vmatmul.mubr.f32.gmra.mrb[0].mxu0 %v1648
        %v6799 = vpop.f32.mrb[0].mxu0
        %v6800 = vadd.f32 0.0, %v6799
        %v6801 = vpop.f32.mrb[0].mxu0
        %6802 = vmatprep.mubr.f32.mxu0 0.0
        %6803 = vmatmul.mubr.f32.gmra.mrb[0].mxu0 %v1651
        %v6804 = vpop.f32.mrb[0].mxu0
        %v6805 = vadd.f32 0.0, %v6804
        %v6806 = vpop.f32.mrb[0].mxu0
        %6807 = vmatprep.mubr.f32.mxu0 0.0
        %6808 = vmatmul.mubr.f32.gmra.mrb[0].mxu0 %v1654
        %v6809 = vpop.f32.mrb[0].mxu0
        %v6810 = vadd.f32 0.0, %v6809
        %v6811 = vpop.f32.mrb[0].mxu0
        %6812 = vmatprep.mubr.f32.mxu0 0.0
        %6813 = vmatmul.mubr.f32.gmra.mrb[0].mxu0 %v1657
        %v6814 = vpop.f32.mrb[0].mxu0
        %v6815 = vadd.f32 0.0, %v6814
        %v6816 = vpop.f32.mrb[0].mxu0
        %6817 = vmatprep.mubr.f32.mxu0 0.0
        %6818 = vmatmul.mubr.f32.gmra.mrb[0].mxu0 %v1660
        %v6819 = vpop.f32.mrb[0].mxu0
        %v6820 = vadd.f32 0.0, %v6819
        %v6821 = vpop.f32.mrb[0].mxu0
        %6822 = vmatprep.mubr.f32.mxu0 0.0
        %6823 = vmatmul.mubr.f32.gmra.mrb[0].mxu0 %v1663
        %v6824 = vpop.f32.mrb[0].mxu0
        %v6825 = vadd.f32 0.0, %v6824
        %v6826 = vpop.f32.mrb[0].mxu0
        %6827 = vmatprep.mubr.f32.mxu0 0.0
        %6828 = vmatmul.mubr.f32.gmra.mrb[0].mxu0 %v1666
        %v6829 = vpop.f32.mrb[0].mxu0
        %v6830 = vadd.f32 0.0, %v6829
        %v6831 = vpop.f32.mrb[0].mxu0
        %6832 = vmatprep.mubr.f32.mxu0 0.0
        %6833 = vmatmul.mubr.f32.gmra.mrb[0].mxu0 %v1669
        %v6834 = vpop.f32.mrb[0].mxu0
        %v6835 = vadd.f32 0.0, %v6834
        %v6836 = vpop.f32.mrb[0].mxu0
        %6837 = vmatprep.mubr.f32.mxu0 0.0
        %6838 = vmatmul.mubr.f32.gmra.mrb[0].mxu0 %v1672
        %v6839 = vpop.f32.mrb[0].mxu0
        %v6840 = vadd.f32 0.0, %v6839
        %v6841 = vpop.f32.mrb[0].mxu0
        %6842 = vdwg.mxu0
        %v6843 = vadd.f32 %v6681, %v6765
        %v6844 = vadd.f32 %v6682, %v6770
        %v6845 = vadd.f32 %v6683, %v6775
        %v6846 = vadd.f32 %v6684, %v6780
        %v6847 = vadd.f32 %v6685, %v6785
        %v6848 = vadd.f32 %v6686, %v6790
        %v6849 = vadd.f32 %v6687, %v6795
        %v6850 = vadd.f32 %v6688, %v6800
        %v6851 = vadd.f32 %v6689, %v6805
        %v6852 = vadd.f32 %v6690, %v6810
        %v6853 = vadd.f32 %v6691, %v6815
        %v6854 = vadd.f32 %v6692, %v6820
        %v6855 = vadd.f32 %v6693, %v6825
        %v6856 = vadd.f32 %v6694, %v6830
        %v6857 = vadd.f32 %v6695, %v6835
        %v6858 = vadd.f32 %v6696, %v6840
        %v6859 = vld [vmem:[%s1851 + $0x18] sm:$0xff]
        %6860 = vmatprep.subr.mxu0 0.0
        %6861 = vmatpush1.msra.mxu0 %v6859
        %6862 = vmatprep.subr.mxu0 0.0
        %6863 = vmatpush1.msra.mxu0 0.0
        %6864 = vmatprep.subr.mxu0 0.0
        %6865 = vmatpush1.msra.mxu0 0.0
        %6866 = vmatprep.subr.mxu0 0.0
        %6867 = vmatpush1.msra.mxu0 0.0
        %6868 = vmatprep.subr.mxu0 0.0
        %6869 = vmatpush1.msra.mxu0 0.0
        %6870 = vmatprep.subr.mxu0 0.0
        %6871 = vmatpush1.msra.mxu0 0.0
        %6872 = vmatprep.subr.mxu0 0.0
        %6873 = vmatpush1.msra.mxu0 0.0
        %6874 = vmatprep.subr.mxu0 0.0
        %6875 = vmatpush1.msra.mxu0 0.0
        %6876 = vmatprep.subr.mxu0 0.0
        %6877 = vmatpush1.msra.mxu0 0.0
        %6878 = vmatprep.subr.mxu0 0.0
        %6879 = vmatpush1.msra.mxu0 0.0
        %6880 = vmatprep.subr.mxu0 0.0
        %6881 = vmatpush1.msra.mxu0 0.0
        %6882 = vmatprep.subr.mxu0 0.0
        %6883 = vmatpush1.msra.mxu0 0.0
        %6884 = vmatprep.subr.mxu0 0.0
        %6885 = vmatpush1.msra.mxu0 0.0
        %6886 = vmatprep.subr.mxu0 0.0
        %6887 = vmatpush1.msra.mxu0 0.0
        %6888 = vmatprep.subr.mxu0 0.0
        %6889 = vmatpush1.msra.mxu0 0.0
        %6890 = vmatprep.subr.mxu0 0.0
        %6891 = vmatpush1.msra.mxu0 0.0
        %6892 = vmatprep.subr.mxu0 0.0
        %6893 = vmatpush1.msra.mxu0 0.0
        %6894 = vmatprep.subr.mxu0 0.0
        %6895 = vmatpush1.msra.mxu0 0.0
        %6896 = vmatprep.subr.mxu0 0.0
        %6897 = vmatpush1.msra.mxu0 0.0
        %6898 = vmatprep.subr.mxu0 0.0
        %6899 = vmatpush1.msra.mxu0 0.0
        %6900 = vmatprep.subr.mxu0 0.0
        %6901 = vmatpush1.msra.mxu0 0.0
        %6902 = vmatprep.subr.mxu0 0.0
        %6903 = vmatpush1.msra.mxu0 0.0
        %6904 = vmatprep.subr.mxu0 0.0
        %6905 = vmatpush1.msra.mxu0 0.0
        %6906 = vmatprep.subr.mxu0 0.0
        %6907 = vmatpush1.msra.mxu0 0.0
        %6908 = vmatprep.subr.mxu0 0.0
        %6909 = vmatpush1.msra.mxu0 0.0
        %6910 = vmatprep.subr.mxu0 0.0
        %6911 = vmatpush1.msra.mxu0 0.0
        %6912 = vmatprep.subr.mxu0 0.0
        %6913 = vmatpush1.msra.mxu0 0.0
        %6914 = vmatprep.subr.mxu0 0.0
        %6915 = vmatpush1.msra.mxu0 0.0
        %6916 = vmatprep.subr.mxu0 0.0
        %6917 = vmatpush1.msra.mxu0 0.0
        %6918 = vmatprep.subr.mxu0 0.0
        %6919 = vmatpush1.msra.mxu0 0.0
        %6920 = vmatprep.subr.mxu0 0.0
        %6921 = vmatpush1.msra.mxu0 0.0
        %6922 = vmatprep.subr.mxu0 0.0
        %6923 = vmatpush1.msra.mxu0 0.0
        %6924 = vmatprep.mubr.f32.mxu0 0.0
        %6925 = vmatmul.mubr.f32.gmra.mrb[0].mxu0 %v1854
        %v6926 = vpop.f32.mrb[0].mxu0
        %v6927 = vadd.f32 0.0, %v6926
        %v6928 = vpop.f32.mrb[0].mxu0
        %6929 = vmatprep.mubr.f32.mxu0 0.0
        %6930 = vmatmul.mubr.f32.gmra.mrb[0].mxu0 %v1857
        %v6931 = vpop.f32.mrb[0].mxu0
        %v6932 = vadd.f32 0.0, %v6931
        %v6933 = vpop.f32.mrb[0].mxu0
        %6934 = vmatprep.mubr.f32.mxu0 0.0
        %6935 = vmatmul.mubr.f32.gmra.mrb[0].mxu0 %v1860
        %v6936 = vpop.f32.mrb[0].mxu0
        %v6937 = vadd.f32 0.0, %v6936
        %v6938 = vpop.f32.mrb[0].mxu0
        %6939 = vmatprep.mubr.f32.mxu0 0.0
        %6940 = vmatmul.mubr.f32.gmra.mrb[0].mxu0 %v1863
        %v6941 = vpop.f32.mrb[0].mxu0
        %v6942 = vadd.f32 0.0, %v6941
        %v6943 = vpop.f32.mrb[0].mxu0
        %6944 = vmatprep.mubr.f32.mxu0 0.0
        %6945 = vmatmul.mubr.f32.gmra.mrb[0].mxu0 %v1866
        %v6946 = vpop.f32.mrb[0].mxu0
        %v6947 = vadd.f32 0.0, %v6946
        %v6948 = vpop.f32.mrb[0].mxu0
        %6949 = vmatprep.mubr.f32.mxu0 0.0
        %6950 = vmatmul.mubr.f32.gmra.mrb[0].mxu0 %v1869
        %v6951 = vpop.f32.mrb[0].mxu0
        %v6952 = vadd.f32 0.0, %v6951
        %v6953 = vpop.f32.mrb[0].mxu0
        %6954 = vmatprep.mubr.f32.mxu0 0.0
        %6955 = vmatmul.mubr.f32.gmra.mrb[0].mxu0 %v1872
        %v6956 = vpop.f32.mrb[0].mxu0
        %v6957 = vadd.f32 0.0, %v6956
        %v6958 = vpop.f32.mrb[0].mxu0
        %6959 = vmatprep.mubr.f32.mxu0 0.0
        %6960 = vmatmul.mubr.f32.gmra.mrb[0].mxu0 %v1875
        %v6961 = vpop.f32.mrb[0].mxu0
        %v6962 = vadd.f32 0.0, %v6961
        %v6963 = vpop.f32.mrb[0].mxu0
        %6964 = vmatprep.mubr.f32.mxu0 0.0
        %6965 = vmatmul.mubr.f32.gmra.mrb[0].mxu0 %v1878
        %v6966 = vpop.f32.mrb[0].mxu0
        %v6967 = vadd.f32 0.0, %v6966
        %v6968 = vpop.f32.mrb[0].mxu0
        %6969 = vmatprep.mubr.f32.mxu0 0.0
        %6970 = vmatmul.mubr.f32.gmra.mrb[0].mxu0 %v1881
        %v6971 = vpop.f32.mrb[0].mxu0
        %v6972 = vadd.f32 0.0, %v6971
        %v6973 = vpop.f32.mrb[0].mxu0
        %6974 = vmatprep.mubr.f32.mxu0 0.0
        %6975 = vmatmul.mubr.f32.gmra.mrb[0].mxu0 %v1884
        %v6976 = vpop.f32.mrb[0].mxu0
        %v6977 = vadd.f32 0.0, %v6976
        %v6978 = vpop.f32.mrb[0].mxu0
        %6979 = vmatprep.mubr.f32.mxu0 0.0
        %6980 = vmatmul.mubr.f32.gmra.mrb[0].mxu0 %v1887
        %v6981 = vpop.f32.mrb[0].mxu0
        %v6982 = vadd.f32 0.0, %v6981
        %v6983 = vpop.f32.mrb[0].mxu0
        %6984 = vmatprep.mubr.f32.mxu0 0.0
        %6985 = vmatmul.mubr.f32.gmra.mrb[0].mxu0 %v1890
        %v6986 = vpop.f32.mrb[0].mxu0
        %v6987 = vadd.f32 0.0, %v6986
        %v6988 = vpop.f32.mrb[0].mxu0
        %6989 = vmatprep.mubr.f32.mxu0 0.0
        %6990 = vmatmul.mubr.f32.gmra.mrb[0].mxu0 %v1893
        %v6991 = vpop.f32.mrb[0].mxu0
        %v6992 = vadd.f32 0.0, %v6991
        %v6993 = vpop.f32.mrb[0].mxu0
        %6994 = vmatprep.mubr.f32.mxu0 0.0
        %6995 = vmatmul.mubr.f32.gmra.mrb[0].mxu0 %v1896
        %v6996 = vpop.f32.mrb[0].mxu0
        %v6997 = vadd.f32 0.0, %v6996
        %v6998 = vpop.f32.mrb[0].mxu0
        %6999 = vmatprep.mubr.f32.mxu0 0.0
        %7000 = vmatmul.mubr.f32.gmra.mrb[0].mxu0 %v1899
        %v7001 = vpop.f32.mrb[0].mxu0
        %v7002 = vadd.f32 0.0, %v7001
        %v7003 = vpop.f32.mrb[0].mxu0
        %7004 = vdwg.mxu0
        %v7005 = vadd.f32 %v6843, %v6927
        %v7006 = vadd.f32 %v6844, %v6932
        %v7007 = vadd.f32 %v6845, %v6937
        %v7008 = vadd.f32 %v6846, %v6942
        %v7009 = vadd.f32 %v6847, %v6947
        %v7010 = vadd.f32 %v6848, %v6952
        %v7011 = vadd.f32 %v6849, %v6957
        %v7012 = vadd.f32 %v6850, %v6962
        %v7013 = vadd.f32 %v6851, %v6967
        %v7014 = vadd.f32 %v6852, %v6972
        %v7015 = vadd.f32 %v6853, %v6977
        %v7016 = vadd.f32 %v6854, %v6982
        %v7017 = vadd.f32 %v6855, %v6987
        %v7018 = vadd.f32 %v6856, %v6992
        %v7019 = vadd.f32 %v6857, %v6997
        %v7020 = vadd.f32 %v6858, %v7002
        %v7021 = vld [vmem:[%s2078 + $0x18] sm:$0xff]
        %7022 = vmatprep.subr.mxu0 0.0
        %7023 = vmatpush1.msra.mxu0 %v7021
        %7024 = vmatprep.subr.mxu0 0.0
        %7025 = vmatpush1.msra.mxu0 0.0
        %7026 = vmatprep.subr.mxu0 0.0
        %7027 = vmatpush1.msra.mxu0 0.0
        %7028 = vmatprep.subr.mxu0 0.0
        %7029 = vmatpush1.msra.mxu0 0.0
        %7030 = vmatprep.subr.mxu0 0.0
        %7031 = vmatpush1.msra.mxu0 0.0
        %7032 = vmatprep.subr.mxu0 0.0
        %7033 = vmatpush1.msra.mxu0 0.0
        %7034 = vmatprep.subr.mxu0 0.0
        %7035 = vmatpush1.msra.mxu0 0.0
        %7036 = vmatprep.subr.mxu0 0.0
        %7037 = vmatpush1.msra.mxu0 0.0
        %7038 = vmatprep.subr.mxu0 0.0
        %7039 = vmatpush1.msra.mxu0 0.0
        %7040 = vmatprep.subr.mxu0 0.0
        %7041 = vmatpush1.msra.mxu0 0.0
        %7042 = vmatprep.subr.mxu0 0.0
        %7043 = vmatpush1.msra.mxu0 0.0
        %7044 = vmatprep.subr.mxu0 0.0
        %7045 = vmatpush1.msra.mxu0 0.0
        %7046 = vmatprep.subr.mxu0 0.0
        %7047 = vmatpush1.msra.mxu0 0.0
        %7048 = vmatprep.subr.mxu0 0.0
        %7049 = vmatpush1.msra.mxu0 0.0
        %7050 = vmatprep.subr.mxu0 0.0
        %7051 = vmatpush1.msra.mxu0 0.0
        %7052 = vmatprep.subr.mxu0 0.0
        %7053 = vmatpush1.msra.mxu0 0.0
        %7054 = vmatprep.subr.mxu0 0.0
        %7055 = vmatpush1.msra.mxu0 0.0
        %7056 = vmatprep.subr.mxu0 0.0
        %7057 = vmatpush1.msra.mxu0 0.0
        %7058 = vmatprep.subr.mxu0 0.0
        %7059 = vmatpush1.msra.mxu0 0.0
        %7060 = vmatprep.subr.mxu0 0.0
        %7061 = vmatpush1.msra.mxu0 0.0
        %7062 = vmatprep.subr.mxu0 0.0
        %7063 = vmatpush1.msra.mxu0 0.0
        %7064 = vmatprep.subr.mxu0 0.0
        %7065 = vmatpush1.msra.mxu0 0.0
        %7066 = vmatprep.subr.mxu0 0.0
        %7067 = vmatpush1.msra.mxu0 0.0
        %7068 = vmatprep.subr.mxu0 0.0
        %7069 = vmatpush1.msra.mxu0 0.0
        %7070 = vmatprep.subr.mxu0 0.0
        %7071 = vmatpush1.msra.mxu0 0.0
        %7072 = vmatprep.subr.mxu0 0.0
        %7073 = vmatpush1.msra.mxu0 0.0
        %7074 = vmatprep.subr.mxu0 0.0
        %7075 = vmatpush1.msra.mxu0 0.0
        %7076 = vmatprep.subr.mxu0 0.0
        %7077 = vmatpush1.msra.mxu0 0.0
        %7078 = vmatprep.subr.mxu0 0.0
        %7079 = vmatpush1.msra.mxu0 0.0
        %7080 = vmatprep.subr.mxu0 0.0
        %7081 = vmatpush1.msra.mxu0 0.0
        %7082 = vmatprep.subr.mxu0 0.0
        %7083 = vmatpush1.msra.mxu0 0.0
        %7084 = vmatprep.subr.mxu0 0.0
        %7085 = vmatpush1.msra.mxu0 0.0
        %7086 = vmatprep.mubr.f32.mxu0 0.0
        %7087 = vmatmul.mubr.f32.gmra.mrb[0].mxu0 %v2081
        %v7088 = vpop.f32.mrb[0].mxu0
        %v7089 = vadd.f32 0.0, %v7088
        %v7090 = vpop.f32.mrb[0].mxu0
        %7091 = vmatprep.mubr.f32.mxu0 0.0
        %7092 = vmatmul.mubr.f32.gmra.mrb[0].mxu0 %v2084
        %v7093 = vpop.f32.mrb[0].mxu0
        %v7094 = vadd.f32 0.0, %v7093
        %v7095 = vpop.f32.mrb[0].mxu0
        %7096 = vmatprep.mubr.f32.mxu0 0.0
        %7097 = vmatmul.mubr.f32.gmra.mrb[0].mxu0 %v2087
        %v7098 = vpop.f32.mrb[0].mxu0
        %v7099 = vadd.f32 0.0, %v7098
        %v7100 = vpop.f32.mrb[0].mxu0
        %7101 = vmatprep.mubr.f32.mxu0 0.0
        %7102 = vmatmul.mubr.f32.gmra.mrb[0].mxu0 %v2090
        %v7103 = vpop.f32.mrb[0].mxu0
        %v7104 = vadd.f32 0.0, %v7103
        %v7105 = vpop.f32.mrb[0].mxu0
        %7106 = vmatprep.mubr.f32.mxu0 0.0
        %7107 = vmatmul.mubr.f32.gmra.mrb[0].mxu0 %v2093
        %v7108 = vpop.f32.mrb[0].mxu0
        %v7109 = vadd.f32 0.0, %v7108
        %v7110 = vpop.f32.mrb[0].mxu0
        %7111 = vmatprep.mubr.f32.mxu0 0.0
        %7112 = vmatmul.mubr.f32.gmra.mrb[0].mxu0 %v2096
        %v7113 = vpop.f32.mrb[0].mxu0
        %v7114 = vadd.f32 0.0, %v7113
        %v7115 = vpop.f32.mrb[0].mxu0
        %7116 = vmatprep.mubr.f32.mxu0 0.0
        %7117 = vmatmul.mubr.f32.gmra.mrb[0].mxu0 %v2099
        %v7118 = vpop.f32.mrb[0].mxu0
        %v7119 = vadd.f32 0.0, %v7118
        %v7120 = vpop.f32.mrb[0].mxu0
        %7121 = vmatprep.mubr.f32.mxu0 0.0
        %7122 = vmatmul.mubr.f32.gmra.mrb[0].mxu0 %v2102
        %v7123 = vpop.f32.mrb[0].mxu0
        %v7124 = vadd.f32 0.0, %v7123
        %v7125 = vpop.f32.mrb[0].mxu0
        %7126 = vmatprep.mubr.f32.mxu0 0.0
        %7127 = vmatmul.mubr.f32.gmra.mrb[0].mxu0 %v2105
        %v7128 = vpop.f32.mrb[0].mxu0
        %v7129 = vadd.f32 0.0, %v7128
        %v7130 = vpop.f32.mrb[0].mxu0
        %7131 = vmatprep.mubr.f32.mxu0 0.0
        %7132 = vmatmul.mubr.f32.gmra.mrb[0].mxu0 %v2108
        %v7133 = vpop.f32.mrb[0].mxu0
        %v7134 = vadd.f32 0.0, %v7133
        %v7135 = vpop.f32.mrb[0].mxu0
        %7136 = vmatprep.mubr.f32.mxu0 0.0
        %7137 = vmatmul.mubr.f32.gmra.mrb[0].mxu0 %v2111
        %v7138 = vpop.f32.mrb[0].mxu0
        %v7139 = vadd.f32 0.0, %v7138
        %v7140 = vpop.f32.mrb[0].mxu0
        %7141 = vmatprep.mubr.f32.mxu0 0.0
        %7142 = vmatmul.mubr.f32.gmra.mrb[0].mxu0 %v2114
        %v7143 = vpop.f32.mrb[0].mxu0
        %v7144 = vadd.f32 0.0, %v7143
        %v7145 = vpop.f32.mrb[0].mxu0
        %7146 = vmatprep.mubr.f32.mxu0 0.0
        %7147 = vmatmul.mubr.f32.gmra.mrb[0].mxu0 %v2117
        %v7148 = vpop.f32.mrb[0].mxu0
        %v7149 = vadd.f32 0.0, %v7148
        %v7150 = vpop.f32.mrb[0].mxu0
        %7151 = vmatprep.mubr.f32.mxu0 0.0
        %7152 = vmatmul.mubr.f32.gmra.mrb[0].mxu0 %v2120
        %v7153 = vpop.f32.mrb[0].mxu0
        %v7154 = vadd.f32 0.0, %v7153
        %v7155 = vpop.f32.mrb[0].mxu0
        %7156 = vmatprep.mubr.f32.mxu0 0.0
        %7157 = vmatmul.mubr.f32.gmra.mrb[0].mxu0 %v2123
        %v7158 = vpop.f32.mrb[0].mxu0
        %v7159 = vadd.f32 0.0, %v7158
        %v7160 = vpop.f32.mrb[0].mxu0
        %7161 = vmatprep.mubr.f32.mxu0 0.0
        %7162 = vmatmul.mubr.f32.gmra.mrb[0].mxu0 %v2126
        %v7163 = vpop.f32.mrb[0].mxu0
        %v7164 = vadd.f32 0.0, %v7163
        %v7165 = vpop.f32.mrb[0].mxu0
        %7166 = vdwg.mxu0
        %v7167 = vadd.f32 %v7005, %v7089
        %v7168 = vadd.f32 %v7006, %v7094
        %v7169 = vadd.f32 %v7007, %v7099
        %v7170 = vadd.f32 %v7008, %v7104
        %v7171 = vadd.f32 %v7009, %v7109
        %v7172 = vadd.f32 %v7010, %v7114
        %v7173 = vadd.f32 %v7011, %v7119
        %v7174 = vadd.f32 %v7012, %v7124
        %v7175 = vadd.f32 %v7013, %v7129
        %v7176 = vadd.f32 %v7014, %v7134
        %v7177 = vadd.f32 %v7015, %v7139
        %v7178 = vadd.f32 %v7016, %v7144
        %v7179 = vadd.f32 %v7017, %v7149
        %v7180 = vadd.f32 %v7018, %v7154
        %v7181 = vadd.f32 %v7019, %v7159
        %v7182 = vadd.f32 %v7020, %v7164
        %v7183 = vld [vmem:[%s2 + $0x3] sm:$0x1]
        %v7185 = vlaneseq
        %v7186 = vshrl.u32 %v7185, 7
        %v7187 = vsub.s32 0, %v7186
        %v7188 = vrot.slane %v7183, %v7187
        %v7190 = vadd.f32 %v7167, %v7188
        %v7191 = vadd.f32 %v7168, %v7188
        %v7192 = vadd.f32 %v7169, %v7188
        %v7193 = vadd.f32 %v7170, %v7188
        %v7194 = vadd.f32 %v7171, %v7188
        %v7195 = vadd.f32 %v7172, %v7188
        %v7196 = vadd.f32 %v7173, %v7188
        %v7197 = vadd.f32 %v7174, %v7188
        %v7198 = vadd.f32 %v7175, %v7188
        %v7199 = vadd.f32 %v7176, %v7188
        %v7200 = vadd.f32 %v7177, %v7188
        %v7201 = vadd.f32 %v7178, %v7188
        %v7202 = vadd.f32 %v7179, %v7188
        %v7203 = vadd.f32 %v7180, %v7188
        %v7204 = vadd.f32 %v7181, %v7188
        %v7205 = vadd.f32 %v7182, %v7188
        %v7206 = vmax.f32 %v7190, 0.0
        %v7207 = vmax.f32 %v7191, 0.0
        %v7208 = vmax.f32 %v7192, 0.0
        %v7209 = vmax.f32 %v7193, 0.0
        %v7210 = vmax.f32 %v7194, 0.0
        %v7211 = vmax.f32 %v7195, 0.0
        %v7212 = vmax.f32 %v7196, 0.0
        %v7213 = vmax.f32 %v7197, 0.0
        %v7214 = vmax.f32 %v7198, 0.0
        %v7215 = vmax.f32 %v7199, 0.0
        %v7216 = vmax.f32 %v7200, 0.0
        %v7217 = vmax.f32 %v7201, 0.0
        %v7218 = vmax.f32 %v7202, 0.0
        %v7219 = vmax.f32 %v7203, 0.0
        %v7220 = vmax.f32 %v7204, 0.0
        %v7221 = vmax.f32 %v7205, 0.0
        %v7222 = vld [vmem:[%s3 + $0x180] sm:$0xff]
        %v7223 = vld [vmem:[%s3 + $0x188] sm:$0xff]
        %v7224 = vld [vmem:[%s3 + $0x190] sm:$0xff]
        %v7225 = vld [vmem:[%s3 + $0x198] sm:$0xff]
        %v7226 = vld [vmem:[%s3 + $0x1a0] sm:$0xff]
        %v7227 = vld [vmem:[%s3 + $0x1a8] sm:$0xff]
        %v7228 = vld [vmem:[%s3 + $0x1b0] sm:$0xff]
        %v7229 = vld [vmem:[%s3 + $0x1b8] sm:$0xff]
        %v7230 = vld [vmem:[%s3 + $0x1c0] sm:$0xff]
        %v7231 = vld [vmem:[%s3 + $0x1c8] sm:$0xff]
        %v7232 = vld [vmem:[%s3 + $0x1d0] sm:$0xff]
        %v7233 = vld [vmem:[%s3 + $0x1d8] sm:$0xff]
        %v7234 = vld [vmem:[%s3 + $0x1e0] sm:$0xff]
        %v7235 = vld [vmem:[%s3 + $0x1e8] sm:$0xff]
        %v7236 = vld [vmem:[%s3 + $0x1f0] sm:$0xff]
        %v7237 = vld [vmem:[%s3 + $0x1f8] sm:$0xff]
        %7238 = vmatprep.subr.mxu0 0.0
        %7239 = vmatpush1.msra.mxu0 %v7222
        %7240 = vmatprep.subr.mxu0 0.0
        %7241 = vmatpush1.msra.mxu0 %v7223
        %7242 = vmatprep.subr.mxu0 0.0
        %7243 = vmatpush1.msra.mxu0 %v7224
        %7244 = vmatprep.subr.mxu0 0.0
        %7245 = vmatpush1.msra.mxu0 %v7225
        %7246 = vmatprep.subr.mxu0 0.0
        %7247 = vmatpush1.msra.mxu0 %v7226
        %7248 = vmatprep.subr.mxu0 0.0
        %7249 = vmatpush1.msra.mxu0 %v7227
        %7250 = vmatprep.subr.mxu0 0.0
        %7251 = vmatpush1.msra.mxu0 %v7228
        %7252 = vmatprep.subr.mxu0 0.0
        %7253 = vmatpush1.msra.mxu0 %v7229
        %7254 = vmatprep.subr.mxu0 0.0
        %7255 = vmatpush1.msra.mxu0 %v7230
        %7256 = vmatprep.subr.mxu0 0.0
        %7257 = vmatpush1.msra.mxu0 %v7231
        %7258 = vmatprep.subr.mxu0 0.0
        %7259 = vmatpush1.msra.mxu0 %v7232
        %7260 = vmatprep.subr.mxu0 0.0
        %7261 = vmatpush1.msra.mxu0 %v7233
        %7262 = vmatprep.subr.mxu0 0.0
        %7263 = vmatpush1.msra.mxu0 %v7234
        %7264 = vmatprep.subr.mxu0 0.0
        %7265 = vmatpush1.msra.mxu0 %v7235
        %7266 = vmatprep.subr.mxu0 0.0
        %7267 = vmatpush1.msra.mxu0 %v7236
        %7268 = vmatprep.subr.mxu0 0.0
        %7269 = vmatpush1.msra.mxu0 %v7237
        %7270 = vmatprep.subr.mxu0 0.0
        %7271 = vmatpush1.msra.mxu0 0.0
        %7272 = vmatprep.subr.mxu0 0.0
        %7273 = vmatpush1.msra.mxu0 0.0
        %7274 = vmatprep.subr.mxu0 0.0
        %7275 = vmatpush1.msra.mxu0 0.0
        %7276 = vmatprep.subr.mxu0 0.0
        %7277 = vmatpush1.msra.mxu0 0.0
        %7278 = vmatprep.subr.mxu0 0.0
        %7279 = vmatpush1.msra.mxu0 0.0
        %7280 = vmatprep.subr.mxu0 0.0
        %7281 = vmatpush1.msra.mxu0 0.0
        %7282 = vmatprep.subr.mxu0 0.0
        %7283 = vmatpush1.msra.mxu0 0.0
        %7284 = vmatprep.subr.mxu0 0.0
        %7285 = vmatpush1.msra.mxu0 0.0
        %7286 = vmatprep.subr.mxu0 0.0
        %7287 = vmatpush1.msra.mxu0 0.0
        %7288 = vmatprep.subr.mxu0 0.0
        %7289 = vmatpush1.msra.mxu0 0.0
        %7290 = vmatprep.subr.mxu0 0.0
        %7291 = vmatpush1.msra.mxu0 0.0
        %7292 = vmatprep.subr.mxu0 0.0
        %7293 = vmatpush1.msra.mxu0 0.0
        %7294 = vmatprep.subr.mxu0 0.0
        %7295 = vmatpush1.msra.mxu0 0.0
        %7296 = vmatprep.subr.mxu0 0.0
        %7297 = vmatpush1.msra.mxu0 0.0
        %7298 = vmatprep.subr.mxu0 0.0
        %7299 = vmatpush1.msra.mxu0 0.0
        %7300 = vmatprep.subr.mxu0 0.0
        %7301 = vmatpush1.msra.mxu0 0.0
        %7302 = vmatprep.mubr.f32.mxu0 0.0
        %7303 = vmatmul.mubr.f32.gmra.mrb[0].mxu0 %v7206
        %v7304 = vpop.f32.mrb[0].mxu0
        %v7305 = vadd.f32 0.0, %v7304
        %v7306 = vpop.f32.mrb[0].mxu0
        %7307 = vmatprep.mubr.f32.mxu0 0.0
        %7308 = vmatmul.mubr.f32.gmra.mrb[0].mxu0 %v7207
        %v7309 = vpop.f32.mrb[0].mxu0
        %v7310 = vadd.f32 0.0, %v7309
        %v7311 = vpop.f32.mrb[0].mxu0
        %7312 = vmatprep.mubr.f32.mxu0 0.0
        %7313 = vmatmul.mubr.f32.gmra.mrb[0].mxu0 %v7208
        %v7314 = vpop.f32.mrb[0].mxu0
        %v7315 = vadd.f32 0.0, %v7314
        %v7316 = vpop.f32.mrb[0].mxu0
        %7317 = vmatprep.mubr.f32.mxu0 0.0
        %7318 = vmatmul.mubr.f32.gmra.mrb[0].mxu0 %v7209
        %v7319 = vpop.f32.mrb[0].mxu0
        %v7320 = vadd.f32 0.0, %v7319
        %v7321 = vpop.f32.mrb[0].mxu0
        %7322 = vmatprep.mubr.f32.mxu0 0.0
        %7323 = vmatmul.mubr.f32.gmra.mrb[0].mxu0 %v7210
        %v7324 = vpop.f32.mrb[0].mxu0
        %v7325 = vadd.f32 0.0, %v7324
        %v7326 = vpop.f32.mrb[0].mxu0
        %7327 = vmatprep.mubr.f32.mxu0 0.0
        %7328 = vmatmul.mubr.f32.gmra.mrb[0].mxu0 %v7211
        %v7329 = vpop.f32.mrb[0].mxu0
        %v7330 = vadd.f32 0.0, %v7329
        %v7331 = vpop.f32.mrb[0].mxu0
        %7332 = vmatprep.mubr.f32.mxu0 0.0
        %7333 = vmatmul.mubr.f32.gmra.mrb[0].mxu0 %v7212
        %v7334 = vpop.f32.mrb[0].mxu0
        %v7335 = vadd.f32 0.0, %v7334
        %v7336 = vpop.f32.mrb[0].mxu0
        %7337 = vmatprep.mubr.f32.mxu0 0.0
        %7338 = vmatmul.mubr.f32.gmra.mrb[0].mxu0 %v7213
        %v7339 = vpop.f32.mrb[0].mxu0
        %v7340 = vadd.f32 0.0, %v7339
        %v7341 = vpop.f32.mrb[0].mxu0
        %7342 = vmatprep.mubr.f32.mxu0 0.0
        %7343 = vmatmul.mubr.f32.gmra.mrb[0].mxu0 %v7214
        %v7344 = vpop.f32.mrb[0].mxu0
        %v7345 = vadd.f32 0.0, %v7344
        %v7346 = vpop.f32.mrb[0].mxu0
        %7347 = vmatprep.mubr.f32.mxu0 0.0
        %7348 = vmatmul.mubr.f32.gmra.mrb[0].mxu0 %v7215
        %v7349 = vpop.f32.mrb[0].mxu0
        %v7350 = vadd.f32 0.0, %v7349
        %v7351 = vpop.f32.mrb[0].mxu0
        %7352 = vmatprep.mubr.f32.mxu0 0.0
        %7353 = vmatmul.mubr.f32.gmra.mrb[0].mxu0 %v7216
        %v7354 = vpop.f32.mrb[0].mxu0
        %v7355 = vadd.f32 0.0, %v7354
        %v7356 = vpop.f32.mrb[0].mxu0
        %7357 = vmatprep.mubr.f32.mxu0 0.0
        %7358 = vmatmul.mubr.f32.gmra.mrb[0].mxu0 %v7217
        %v7359 = vpop.f32.mrb[0].mxu0
        %v7360 = vadd.f32 0.0, %v7359
        %v7361 = vpop.f32.mrb[0].mxu0
        %7362 = vmatprep.mubr.f32.mxu0 0.0
        %7363 = vmatmul.mubr.f32.gmra.mrb[0].mxu0 %v7218
        %v7364 = vpop.f32.mrb[0].mxu0
        %v7365 = vadd.f32 0.0, %v7364
        %v7366 = vpop.f32.mrb[0].mxu0
        %7367 = vmatprep.mubr.f32.mxu0 0.0
        %7368 = vmatmul.mubr.f32.gmra.mrb[0].mxu0 %v7219
        %v7369 = vpop.f32.mrb[0].mxu0
        %v7370 = vadd.f32 0.0, %v7369
        %v7371 = vpop.f32.mrb[0].mxu0
        %7372 = vmatprep.mubr.f32.mxu0 0.0
        %7373 = vmatmul.mubr.f32.gmra.mrb[0].mxu0 %v7220
        %v7374 = vpop.f32.mrb[0].mxu0
        %v7375 = vadd.f32 0.0, %v7374
        %v7376 = vpop.f32.mrb[0].mxu0
        %7377 = vmatprep.mubr.f32.mxu0 0.0
        %7378 = vmatmul.mubr.f32.gmra.mrb[0].mxu0 %v7221
        %v7379 = vpop.f32.mrb[0].mxu0
        %v7380 = vadd.f32 0.0, %v7379
        %v7381 = vpop.f32.mrb[0].mxu0
        %7382 = vdwg.mxu0
        %v7383 = vadd.f32 %v5741, %v7305
        %v7384 = vadd.f32 %v5742, %v7310
        %v7385 = vadd.f32 %v5743, %v7315
        %v7386 = vadd.f32 %v5744, %v7320
        %v7387 = vadd.f32 %v5745, %v7325
        %v7388 = vadd.f32 %v5746, %v7330
        %v7389 = vadd.f32 %v5747, %v7335
        %v7390 = vadd.f32 %v5748, %v7340
        %v7391 = vadd.f32 %v5749, %v7345
        %v7392 = vadd.f32 %v5750, %v7350
        %v7393 = vadd.f32 %v5751, %v7355
        %v7394 = vadd.f32 %v5752, %v7360
        %v7395 = vadd.f32 %v5753, %v7365
        %v7396 = vadd.f32 %v5754, %v7370
        %v7397 = vadd.f32 %v5755, %v7375
        %v7398 = vadd.f32 %v5756, %v7380
        %v7399 = vld [vmem:[%s4] sm:$0x1]
        %v7401 = vlaneseq
        %v7402 = vshrl.u32 %v7401, 7
        %v7403 = vsub.s32 0, %v7402
        %v7404 = vrot.slane %v7399, %v7403
        %v7406 = vadd.f32 %v7383, %v7404
        %v7407 = vadd.f32 %v7384, %v7404
        %v7408 = vadd.f32 %v7385, %v7404
        %v7409 = vadd.f32 %v7386, %v7404
        %v7410 = vadd.f32 %v7387, %v7404
        %v7411 = vadd.f32 %v7388, %v7404
        %v7412 = vadd.f32 %v7389, %v7404
        %v7413 = vadd.f32 %v7390, %v7404
        %v7414 = vadd.f32 %v7391, %v7404
        %v7415 = vadd.f32 %v7392, %v7404
        %v7416 = vadd.f32 %v7393, %v7404
        %v7417 = vadd.f32 %v7394, %v7404
        %v7418 = vadd.f32 %v7395, %v7404
        %v7419 = vadd.f32 %v7396, %v7404
        %v7420 = vadd.f32 %v7397, %v7404
        %v7421 = vadd.f32 %v7398, %v7404
        %7422 = vxpose.xlu0.b32.start [1/16] %v7406, 128
        %7423 = vxpose.xlu0.b32.cont [2/16] %v7407, 128
        %7424 = vxpose.xlu0.b32.cont [3/16] %v7408, 128
        %7425 = vxpose.xlu0.b32.cont [4/16] %v7409, 128
        %7426 = vxpose.xlu0.b32.cont [5/16] %v7410, 128
        %7427 = vxpose.xlu0.b32.cont [6/16] %v7411, 128
        %7428 = vxpose.xlu0.b32.cont [7/16] %v7412, 128
        %7429 = vxpose.xlu0.b32.cont [8/16] %v7413, 128
        %7430 = vxpose.xlu0.b32.cont [9/16] %v7414, 128
        %7431 = vxpose.xlu0.b32.cont [10/16] %v7415, 128
        %7432 = vxpose.xlu0.b32.cont [11/16] %v7416, 128
        %7433 = vxpose.xlu0.b32.cont [12/16] %v7417, 128
        %7434 = vxpose.xlu0.b32.cont [13/16] %v7418, 128
        %7435 = vxpose.xlu0.b32.cont [14/16] %v7419, 128
        %7436 = vxpose.xlu0.b32.cont [15/16] %v7420, 128
        %7437 = vxpose.xlu0.b32.end [16/16] %v7421, 128
        %v7438 = vpop.trf.xlu0
        %v7439 = vpop.trf.xlu0
        %v7440 = vpop.trf.xlu0
        %v7441 = vpop.trf.xlu0
        %v7442 = vpop.trf.xlu0
        %v7443 = vpop.trf.xlu0
        %v7444 = vpop.trf.xlu0
        %v7445 = vpop.trf.xlu0
        %v7446 = vpop.trf.xlu0
        %v7447 = vpop.trf.xlu0
        %v7448 = vpop.trf.xlu0
        %v7449 = vpop.trf.xlu0
        %v7450 = vpop.trf.xlu0
        %v7451 = vpop.trf.xlu0
        %v7452 = vpop.trf.xlu0
        %v7453 = vpop.trf.xlu0
        %vm7456 = vcmask 1046528
        %v7457 = vrot.slane %v7439, 1
        %v7458 = vrot.slane %v7440, 1
        %v7459 = vsel %vm7456, %v7457, %v7458
        %v7462 = vmax.f32 %v7438, %v7459
        %v7463 = vmax.f32 %v7439, %v7458
        %v7464 = vsub.f32 %v7438, %v7462
        %v7465 = vsub.f32 %v7439, %v7463
        %v7466 = vmul.f32 %v7464, 1.442695
        %v7467 = vpow.pop %v7466
        %v7468 = vmul.f32 %v7465, 1.442695
        %v7469 = vpow.pop %v7468
        %vm7472 = vcmask 1040384
        %v7473 = vrot.slane %v7462, 7
        %v7474 = vrot.slane %v7463, 7
        %v7475 = vsel %vm7472, %v7473, %v7474
        %v7478 = vsub.f32 %v7439, %v7473
        %v7479 = vsub.f32 %v7440, %v7475
        %v7480 = vmul.f32 %v7478, 1.442695
        %v7481 = vpow.pop %v7480
        %v7482 = vmul.f32 %v7479, 1.442695
        %v7483 = vpow.pop %v7482
        %v7486 = vrot.slane %v7481, 1
        %v7487 = vrot.slane %v7483, 1
        %v7488 = vsel %vm7456, %v7486, %v7487
        %v7491 = vadd.f32 %v7467, %v7488
        %v7492 = vadd.f32 %v7469, %v7487
        %v7493 = vrcp.pop %v7491
        %v7494 = vrcp.pop %v7492
        %v7495 = vmul.f32 %v7467, %v7493
        %v7496 = vmul.f32 %v7469, %v7494
        %v7499 = vrot.slane %v7493, 7
        %v7500 = vrot.slane %v7494, 7
        %v7501 = vsel %vm7472, %v7499, %v7500
        %v7504 = vmul.f32 %v7481, %v7499
        %v7505 = vmul.f32 %v7483, %v7501
        %v7506 = vsel %vm7472, %v7496, %v7504
        %7507 = vst [vmem:[%s257] sm:$0xff] %v7495
        %7508 = vst [vmem:[%s257 + $0x8] sm:$0xff] %v7506
        %7509 = vst [vmem:[%s257 + $0x10] sm:$0x3] %v7505
        %7510 = vst [vmem:[%s263 - $0x2] sm:$0xfc] %v7440
        %7511 = vst [vmem:[%s263 + $0x6] sm:$0xff] %v7441
        %7512 = vst [vmem:[%s263 + $0xe] sm:$0xff] %v7442
        %7513 = vst [vmem:[%s263 + $0x16] sm:$0xff] %v7443
        %7514 = vst [vmem:[%s263 + $0x1e] sm:$0x3f] %v7444
        %s7515 = sand.u32 %s150, 1
        %s7516 = sand.u32 %s150, 1
        %s7517 = smul.addr %s7516, 24
        %s7518 = scalar_lea.vmem [#allocation2], %s7517
        %s7519 = sand.u32 %s178, 1
        %s7520 = sand.u32 %s178, 1
        %s7521 = smul.addr %s7520, 40
        %s7522 = scalar_lea.vmem [#allocation3], %s7521
        // Predicated region
        $region41: #{tpu_custom_call.1} parent=39 // pred_check
          %p7523 = pneg %p160
        $region42: #{tpu_custom_call.1} parent=39 // pred_check_branch
          %7525 = sbr.rel (%p7523) target = $region44
        $region43: #{tpu_custom_call.1} parent=39 // pred_region
          %s7526 = smul.addr %s22, 6
          %s7527 = sadd.s32 %s23, %s7526
          %s7528 = smul.addr %s7527, 8
          %s7529 = scalar_lea.vmem %s5, %s7528
          // Predicated region
          $region45: #{tpu_custom_call.1} parent=43 // pred_check
            _
          $region46: #{tpu_custom_call.1} parent=43 // pred_check_branch
            %7531 = sbr.rel (0) target = $region48
          $region47: #{tpu_custom_call.1} parent=43 // pred_region
            // Predicated region
            $region49: #{tpu_custom_call.1} parent=47 // pred_check
              _
            $region50: #{tpu_custom_call.1} parent=47 // pred_check_branch
              %7533 = sbr.rel (0) target = $region52
            $region51: #{tpu_custom_call.1} parent=47 // pred_region
              // Predicated region
              $region64: #{tpu_custom_call.1} parent=51 // pred_check
                _
              $region65: #{tpu_custom_call.1} parent=51 // pred_check_branch
                %7552 = sbr.rel (0) target = $region67
              $region66: #{tpu_custom_call.1} parent=51 // pred_region
                loop: start=0, step=1, limit=1
                $region68: #{tpu_custom_call.1} parent=66 // loop_pre_header
                  _
                $region69: #{tpu_custom_call.1} parent=66 // loop_header
                  %s7554 = sphi 0, %s7558
                  %p7555 = scmp.ge.s32.totalorder %s7554, 1
                  %s7559 = sphi %s7518, %s7518
                  %s7560 = sphi %s7529, %s7529
                $region70: #{tpu_custom_call.1} parent=66 // loop_header_branch
                  %7557 = sbr.rel (%p7555) target = $region74
                $region71: #{tpu_custom_call.1} parent=66 // loop_body
                  %v7561 = vld [vmem:[%s7559] sm:$0xff]
                  %7562 = vst [vmem:[%s7560] sm:$0xff] %v7561
                  %v7563 = vld [vmem:[%s7559 + $0x8] sm:$0xff]
                  %7564 = vst [vmem:[%s7560 + $0x10] sm:$0xff] %v7563
                  %v7565 = vld [vmem:[%s7559 + $0x10] sm:$0xff]
                  %7566 = vst [vmem:[%s7560 + $0x20] sm:$0xff] %v7565
                $region72: #{tpu_custom_call.1} parent=66 // loop_footer
                  %s7558 = sadd.s32 1, %s7554
                $region73: #{tpu_custom_call.1} parent=66 // loop_footer_branch
                  %7553 = sbr.rel target = $region69
                $region74: #{tpu_custom_call.1} parent=66 // loop_exit
                  _
              $region67: #{tpu_custom_call.1} parent=51 // pred_fallthru
                _
              // Predicated region
              $region75: #{tpu_custom_call.1} parent=51 // pred_check
                _
              $region76: #{tpu_custom_call.1} parent=51 // pred_check_branch
                %7568 = sbr.rel target = $region78
              $region77: #{tpu_custom_call.1} parent=51 // pred_region
                _
              $region78: #{tpu_custom_call.1} parent=51 // pred_fallthru
                _
            $region52: #{tpu_custom_call.1} parent=47 // pred_fallthru
              _
            // Predicated region
            $region53: #{tpu_custom_call.1} parent=47 // pred_check
              _
            $region54: #{tpu_custom_call.1} parent=47 // pred_check_branch
              %7535 = sbr.rel target = $region56
            $region55: #{tpu_custom_call.1} parent=47 // pred_region
              loop: start=0, step=1, limit=1
              $region57: #{tpu_custom_call.1} parent=55 // loop_pre_header
                _
              $region58: #{tpu_custom_call.1} parent=55 // loop_header
                %s7538 = sphi 0, %s7542
                %p7539 = scmp.ge.s32.totalorder %s7538, 1
                %s7543 = sphi %s7518, %s7518
                %s7544 = sphi %s7529, %s7529
              $region59: #{tpu_custom_call.1} parent=55 // loop_header_branch
                %7541 = sbr.rel (%p7539) target = $region63
              $region60: #{tpu_custom_call.1} parent=55 // loop_body
                %v7545 = vld [vmem:[%s7543] sm:$0xff]
                %7546 = vst [vmem:[%s7544] sm:$0xff] %v7545
                %v7547 = vld [vmem:[%s7543 + $0x8] sm:$0xff]
                %7548 = vst [vmem:[%s7544 + $0x10] sm:$0xff] %v7547
                %v7549 = vld [vmem:[%s7543 + $0x10] sm:$0xff]
                %7550 = vst [vmem:[%s7544 + $0x20] sm:$0xff] %v7549
              $region61: #{tpu_custom_call.1} parent=55 // loop_footer
                %s7542 = sadd.s32 1, %s7538
              $region62: #{tpu_custom_call.1} parent=55 // loop_footer_branch
                %7537 = sbr.rel target = $region58
              $region63: #{tpu_custom_call.1} parent=55 // loop_exit
                _
            $region56: #{tpu_custom_call.1} parent=47 // pred_fallthru
              _
          $region48: #{tpu_custom_call.1} parent=43 // pred_fallthru
            _
          %7569 = vnop
        $region44: #{tpu_custom_call.1} parent=39 // pred_fallthru
          _
        // Predicated region
        $region79: #{tpu_custom_call.1} parent=39 // pred_check
          %p7570 = pneg %p188
        $region80: #{tpu_custom_call.1} parent=39 // pred_check_branch
          %7572 = sbr.rel (%p7570) target = $region82
        $region81: #{tpu_custom_call.1} parent=39 // pred_region
          %s7573 = smul.addr %s22, 10
          %s7574 = sadd.s32 %s23, %s7573
          %s7575 = smul.addr %s7574, 8
          %s7576 = scalar_lea.vmem %s6, %s7575
          // Predicated region
          $region83: #{tpu_custom_call.1} parent=81 // pred_check
            _
          $region84: #{tpu_custom_call.1} parent=81 // pred_check_branch
            %7578 = sbr.rel (0) target = $region86
          $region85: #{tpu_custom_call.1} parent=81 // pred_region
            // Predicated region
            $region87: #{tpu_custom_call.1} parent=85 // pred_check
              _
            $region88: #{tpu_custom_call.1} parent=85 // pred_check_branch
              %7580 = sbr.rel (0) target = $region90
            $region89: #{tpu_custom_call.1} parent=85 // pred_region
              // Predicated region
              $region102: #{tpu_custom_call.1} parent=89 // pred_check
                _
              $region103: #{tpu_custom_call.1} parent=89 // pred_check_branch
                %7603 = sbr.rel (0) target = $region105
              $region104: #{tpu_custom_call.1} parent=89 // pred_region
                loop: start=0, step=1, limit=1
                $region106: #{tpu_custom_call.1} parent=104 // loop_pre_header
                  _
                $region107: #{tpu_custom_call.1} parent=104 // loop_header
                  %s7605 = sphi 0, %s7609
                  %p7606 = scmp.ge.s32.totalorder %s7605, 1
                  %s7610 = sphi %s7522, %s7522
                  %s7611 = sphi %s7576, %s7576
                $region108: #{tpu_custom_call.1} parent=104 // loop_header_branch
                  %7608 = sbr.rel (%p7606) target = $region112
                $region109: #{tpu_custom_call.1} parent=104 // loop_body
                  %v7612 = vld [vmem:[%s7610] sm:$0xff]
                  %7613 = vst [vmem:[%s7611] sm:$0xff] %v7612
                  %v7614 = vld [vmem:[%s7610 + $0x8] sm:$0xff]
                  %7615 = vst [vmem:[%s7611 + $0x10] sm:$0xff] %v7614
                  %v7616 = vld [vmem:[%s7610 + $0x10] sm:$0xff]
                  %7617 = vst [vmem:[%s7611 + $0x20] sm:$0xff] %v7616
                  %v7618 = vld [vmem:[%s7610 + $0x18] sm:$0xff]
                  %7619 = vst [vmem:[%s7611 + $0x30] sm:$0xff] %v7618
                  %v7620 = vld [vmem:[%s7610 + $0x20] sm:$0xff]
                  %7621 = vst [vmem:[%s7611 + $0x40] sm:$0xff] %v7620
                $region110: #{tpu_custom_call.1} parent=104 // loop_footer
                  %s7609 = sadd.s32 1, %s7605
                $region111: #{tpu_custom_call.1} parent=104 // loop_footer_branch
                  %7604 = sbr.rel target = $region107
                $region112: #{tpu_custom_call.1} parent=104 // loop_exit
                  _
              $region105: #{tpu_custom_call.1} parent=89 // pred_fallthru
                _
              // Predicated region
              $region113: #{tpu_custom_call.1} parent=89 // pred_check
                _
              $region114: #{tpu_custom_call.1} parent=89 // pred_check_branch
                %7623 = sbr.rel target = $region116
              $region115: #{tpu_custom_call.1} parent=89 // pred_region
                _
              $region116: #{tpu_custom_call.1} parent=89 // pred_fallthru
                _
            $region90: #{tpu_custom_call.1} parent=85 // pred_fallthru
              _
            // Predicated region
            $region91: #{tpu_custom_call.1} parent=85 // pred_check
              _
            $region92: #{tpu_custom_call.1} parent=85 // pred_check_branch
              %7582 = sbr.rel target = $region94
            $region93: #{tpu_custom_call.1} parent=85 // pred_region
              loop: start=0, step=1, limit=1
              $region95: #{tpu_custom_call.1} parent=93 // loop_pre_header
                _
              $region96: #{tpu_custom_call.1} parent=93 // loop_header
                %s7585 = sphi 0, %s7589
                %p7586 = scmp.ge.s32.totalorder %s7585, 1
                %s7590 = sphi %s7522, %s7522
                %s7591 = sphi %s7576, %s7576
              $region97: #{tpu_custom_call.1} parent=93 // loop_header_branch
                %7588 = sbr.rel (%p7586) target = $region101
              $region98: #{tpu_custom_call.1} parent=93 // loop_body
                %v7592 = vld [vmem:[%s7590] sm:$0xff]
                %7593 = vst [vmem:[%s7591] sm:$0xff] %v7592
                %v7594 = vld [vmem:[%s7590 + $0x8] sm:$0xff]
                %7595 = vst [vmem:[%s7591 + $0x10] sm:$0xff] %v7594
                %v7596 = vld [vmem:[%s7590 + $0x10] sm:$0xff]
                %7597 = vst [vmem:[%s7591 + $0x20] sm:$0xff] %v7596
                %v7598 = vld [vmem:[%s7590 + $0x18] sm:$0xff]
                %7599 = vst [vmem:[%s7591 + $0x30] sm:$0xff] %v7598
                %v7600 = vld [vmem:[%s7590 + $0x20] sm:$0xff]
                %7601 = vst [vmem:[%s7591 + $0x40] sm:$0xff] %v7600
              $region99: #{tpu_custom_call.1} parent=93 // loop_footer
                %s7589 = sadd.s32 1, %s7585
              $region100: #{tpu_custom_call.1} parent=93 // loop_footer_branch
                %7584 = sbr.rel target = $region96
              $region101: #{tpu_custom_call.1} parent=93 // loop_exit
                _
            $region94: #{tpu_custom_call.1} parent=85 // pred_fallthru
              _
          $region86: #{tpu_custom_call.1} parent=81 // pred_fallthru
            _
          %7624 = vnop
        $region82: #{tpu_custom_call.1} parent=39 // pred_fallthru
          _
      $region40: #{tpu_custom_call.1} parent=5 // pred_fallthru
        _
      %p7625 = scmp.le.s32.totalorder 2, %s13
      // Predicated region
      $region117: #{tpu_custom_call.1} parent=5 // pred_check
        %p7626 = pneg %p7625
      $region118: #{tpu_custom_call.1} parent=5 // pred_check_branch
        %7628 = sbr.rel (%p7626) target = $region120
      $region119: #{tpu_custom_call.1} parent=5 // pred_region
        %s7629 = ssub.s32 %s13, 2
        // Predicated region
        $region121: #{tpu_custom_call.1} parent=119 // pred_check
          %p7630 = pneg %p166
        $region122: #{tpu_custom_call.1} parent=119 // pred_check_branch
          %7632 = sbr.rel (%p7630) target = $region124
        $region123: #{tpu_custom_call.1} parent=119 // pred_region
          %s7633 = sand.u32 %s151, 1
          %s7634 = sand.u32 %s151, 1
          %s7635 = smul.addr %s7634, 24
          %s7636 = scalar_lea.vmem [#allocation2], %s7635
        $region124: #{tpu_custom_call.1} parent=119 // pred_fallthru
          _
        // Predicated region
        $region125: #{tpu_custom_call.1} parent=119 // pred_check
          %p7637 = pneg %p194
        $region126: #{tpu_custom_call.1} parent=119 // pred_check_branch
          %7639 = sbr.rel (%p7637) target = $region128
        $region127: #{tpu_custom_call.1} parent=119 // pred_region
          %s7640 = sand.u32 %s179, 1
          %s7641 = sand.u32 %s179, 1
          %s7642 = smul.addr %s7641, 40
          %s7643 = scalar_lea.vmem [#allocation3], %s7642
        $region128: #{tpu_custom_call.1} parent=119 // pred_fallthru
          _
      $region120: #{tpu_custom_call.1} parent=5 // pred_fallthru
        _
    $region6: #{tpu_custom_call.1} parent=1 // loop_footer
      %s17 = sadd.s32 1, %s13
    $region7: #{tpu_custom_call.1} parent=1 // loop_footer_branch
      %12 = sbr.rel target = $region3
    $region8: #{tpu_custom_call.1} parent=1 // loop_exit
      _

</llo_original>
